<compile_context>
chip_gen: v6e
topology: v6e:2x2x1
jax: 0.10.0
libtpu: 0.0.40
codegen_flags: <defaults>
</compile_context>

<pallas_src>
import functools

import numpy as np
import jax
import jax.numpy as jnp
from jax.experimental import pallas as pl
from jax.experimental.pallas import tpu as pltpu


# ----------------------------------------------------------------------------
# host-side (static, tiny) weight / selector transforms
# ----------------------------------------------------------------------------
def _band_weights(w_dhwio, H, W, dtype):
    """(3,3,3,Ci,Co) conv weights -> 3 banded block-Toeplitz matrices (one per
    depth tap kd), each (H*W*Ci, H*W*Co).

    M[kd, hi*W*Ci + wi*Ci + ci, ho*W*Co + wo*Co + co] = w[kd,kh,kw,ci,co] with
    hi = ho + kh - 1, wi = wo + kw - 1 (zero outside), i.e. the kh/kw taps AND
    the SAME h/w zero-padding are folded into one lane-dense matmul per kd.
    """
    Ci, Co = int(w_dhwio.shape[3]), int(w_dhwio.shape[4])
    sh = jnp.stack([jnp.eye(H, k=1 - kh, dtype=jnp.float32) for kh in range(3)])
    sw = jnp.stack([jnp.eye(W, k=1 - kw, dtype=jnp.float32) for kw in range(3)])
    # sh[a,i,j] = 1 iff i = j + a - 1 ; sw[b,k,l] = 1 iff k = l + b - 1
    m = jnp.einsum("aij,bkl,cabmn->cikmjln", sh, sw, w_dhwio.astype(jnp.float32))
    return m.reshape(3, H * W * Ci, H * W * Co).astype(dtype)


def _pool_selector(H, W, C, dtype):
    """0/1 selector (H*W*C, Hp*Wp*C) picking the even-(h, w) lane positions."""
    ph = (np.arange(H)[:, None] == 2 * np.arange(H // 2)[None, :]).astype(np.float32)
    pw = (np.arange(W)[:, None] == 2 * np.arange(W // 2)[None, :]).astype(np.float32)
    se = np.kron(ph, np.kron(pw, np.eye(C, dtype=np.float32)))
    return jnp.asarray(se, dtype=dtype)


# ----------------------------------------------------------------------------
# fused kernel
# ----------------------------------------------------------------------------
def luna_block_kernel(x_ref, m1_ref, b1_ref, m2_ref, b2_ref, se_ref,
                      o_ref, pool_ref, *, D, W, cmid, compute_dtype):
    rows = x_ref.shape[0]                              # Bb * D
    d_idx = jax.lax.broadcasted_iota(jnp.int32, (rows, 1), 0) % D
    first_d = d_idx == 0
    last_d = d_idx == (D - 1)

    def band_conv(x2, m_ref, bias_row):
        # 3x3x3 SAME conv. kh/kw (+ h/w padding) live in the band matrices;
        # the depth taps are two masked sublane rolls (XLU) of the input.
        # Tap accumulation is a plain SSA add-chain (registers / MRB).
        zero = jnp.zeros((), x2.dtype)
        x_dn = jnp.where(first_d, zero, pltpu.roll(x2, shift=1, axis=0))         # row d -> x[d-1]
        x_up = jnp.where(last_d, zero, pltpu.roll(x2, shift=rows - 1, axis=0))   # row d -> x[d+1]
        acc = jnp.dot(x_dn, m_ref[0], preferred_element_type=jnp.float32)
        acc = acc + jnp.dot(x2, m_ref[1], preferred_element_type=jnp.float32)
        acc = acc + jnp.dot(x_up, m_ref[2], preferred_element_type=jnp.float32)
        return jnp.maximum(acc + bias_row, 0.0)

    # ---- conv1 + relu, conv2 + relu ----
    y1 = band_conv(x_ref[...], m1_ref, b1_ref[...])
    y2 = band_conv(y1.astype(compute_dtype), m2_ref, b2_ref[...])

    # ---- fused 2x2x2 max-pool ----
    L = y2.shape[1]                                    # H * W * cmid
    # neighbour pre-max along w then h (lane rolls on the XLU); wrapped lanes
    # only pollute odd h/w positions, which the selector never picks.
    t = jnp.maximum(y2, pltpu.roll(y2, shift=L - cmid, axis=1))
    t = jnp.maximum(t, pltpu.roll(t, shift=L - W * cmid, axis=1))
    # pick the even-(h,w) lanes with one 0/1 selector matmul -> (rows, Hp*Wp*cmid)
    ph = jnp.dot(t, se_ref[...], preferred_element_type=jnp.float32)
    pool_ref[...] = ph
    # depth pairs via strided sublane loads (even rows vs odd rows)
    half = rows // 2
    o_ref[...] = jnp.maximum(pool_ref[pl.ds(0, half, stride=2), :],
                             pool_ref[pl.ds(1, half, stride=2), :]).astype(o_ref.dtype)


# ----------------------------------------------------------------------------
# core wrapper (lane-merged layout, chainable across stacked Luna blocks)
# ----------------------------------------------------------------------------
def luna_block_pallas_core(x2d, m1, b1_row, m2, b2_row, se, *,
                           B, D, H, W, cin, cmid, batch_block,
                           compute_dtype=jnp.float32):
    """x2d: (B*D, H*W*cin) -> (B*(D//2), (H//2)*(W//2)*cmid) float32."""
    Dp, Hp, Wp = D // 2, H // 2, W // 2
    Lin, Lmid, Lpool = H * W * cin, H * W * cmid, Hp * Wp * cmid
    Bb = batch_block
    assert B % Bb == 0
    assert D % 2 == 0 and H % 2 == 0 and W % 2 == 0
    assert (Bb * D) % 8 == 0, "batch_block * D must be a multiple of 8 (sublane tile)"

    kernel = functools.partial(luna_block_kernel, D=D, W=W, cmid=cmid,
                               compute_dtype=compute_dtype)

    # explicit VMEM budget: weights (x2 in case the single-buffer request falls
    # back), double-buffered activation blocks, pool scratch, + headroom for
    # compiler-managed temporaries.
    w_item = jnp.dtype(compute_dtype).itemsize
    weight_bytes = (m1.size + m2.size) * w_item + (b1_row.size + b2_row.size + se.size) * 4
    io_bytes = 2 * Bb * D * Lin * w_item + 2 * Bb * Dp * Lpool * 4
    scratch_bytes = Bb * D * Lpool * 4
    vmem_limit = int(min(100 * 1024 * 1024,
                         2 * weight_bytes + io_bytes + scratch_bytes + (24 << 20)))

    def build(weight_pipeline_mode):
        def const_spec(shape):
            index_map = (lambda b: (0, 0, 0)) if len(shape) == 3 else (lambda b: (0, 0))
            if weight_pipeline_mode is None:
                return pl.BlockSpec(shape, index_map)
            return pl.BlockSpec(shape, index_map, pipeline_mode=weight_pipeline_mode)

        grid_spec = pltpu.PrefetchScalarGridSpec(
            num_scalar_prefetch=0,
            grid=(B // Bb,),
            in_specs=[
                pl.BlockSpec((Bb * D, Lin), lambda b: (b, 0)),
                const_spec((3, Lin, Lmid)),
                const_spec((1, Lmid)),
                const_spec((3, Lmid, Lmid)),
                const_spec((1, Lmid)),
                const_spec((Lmid, Lpool)),
            ],
            out_specs=pl.BlockSpec((Bb * Dp, Lpool), lambda b: (b, 0)),
            scratch_shapes=[pltpu.VMEM((Bb * D, Lpool), jnp.float32)],
        )
        return pl.pallas_call(
            kernel,
            out_shape=jax.ShapeDtypeStruct((B * Dp, Lpool), jnp.float32),
            grid_spec=grid_spec,
            compiler_params=pltpu.CompilerParams(
                dimension_semantics=("parallel",),     # v7x: batch blocks over 2 TCs
                vmem_limit_bytes=vmem_limit,
            ),
        )

    args = (x2d, m1, b1_row, m2, b2_row, se)
    try:
        pm = pl.Buffered(1) if hasattr(pl, "Buffered") else None
        call = build(pm) if pm is not None else build(None)
        return jax.block_until_ready(call(*args))
    except Exception:
        # fall back to default (double-buffered) grid-invariant operands
        return jax.block_until_ready(build(None)(*args))


# ----------------------------------------------------------------------------
# NCDHW-facing wrapper (matches the PyTorch module interface)
# ----------------------------------------------------------------------------
def luna_block_pallas(x_ncdhw, w1_dhwio, b1, w2_dhwio, b2, *,
                      batch_block=None, compute_dtype=jnp.float32):
    """x_ncdhw: (B, Cin, D, H, W); weights in DHWIO (3,3,3,Cin,Cout) layout."""
    B, cin, D, H, W = map(int, x_ncdhw.shape)
    cmid = int(b1.shape[0])
    Dp, Hp, Wp = D // 2, H // 2, W // 2

    if batch_block is None:
        for bb in (8, 4, 2, 1):
            if B % bb == 0 and (bb * D) % 8 == 0:
                batch_block = bb
                break
        else:
            raise ValueError("need batch_block*D to be a multiple of 8")
    # v6e: raise batch_block so Bb*D >= 256 rows/matmul when VMEM allows.
    # v7x: keep batch_block modest; the parallel grid axis uses both TCs.

    # channels-last, h/w/c merged into the lane axis -> (B*D, H*W*Cin)
    x2d = jnp.transpose(x_ncdhw, (0, 2, 3, 4, 1)).reshape(B * D, H * W * cin)
    x2d = x2d.astype(compute_dtype)

    m1 = _band_weights(w1_dhwio, H, W, compute_dtype)        # (3, H*W*cin,  H*W*cmid)
    m2 = _band_weights(w2_dhwio, H, W, compute_dtype)        # (3, H*W*cmid, H*W*cmid)
    b1_row = jnp.tile(b1.astype(jnp.float32), H * W).reshape(1, H * W * cmid)
    b2_row = jnp.tile(b2.astype(jnp.float32), H * W).reshape(1, H * W * cmid)
    se = _pool_selector(H, W, cmid, jnp.float32)             # (H*W*cmid, Hp*Wp*cmid)

    out2d = luna_block_pallas_core(x2d, m1, b1_row, m2, b2_row, se,
                                   B=B, D=D, H=H, W=W, cin=cin, cmid=cmid,
                                   batch_block=batch_block,
                                   compute_dtype=compute_dtype)
    out = out2d.reshape(B, Dp, Hp, Wp, cmid)
    return jnp.transpose(out, (0, 4, 1, 2, 3))               # -> NCDHW


# ----------------------------------------------------------------------------
# pure-JAX reference (matches the PyTorch module)
# ----------------------------------------------------------------------------
def luna_block_reference(x_ncdhw, w1_dhwio, b1, w2_dhwio, b2):
    x = jnp.transpose(x_ncdhw, (0, 2, 3, 4, 1))
    dn = ("NDHWC", "DHWIO", "NDHWC")
    pad = ((1, 1), (1, 1), (1, 1))
    y = jax.lax.conv_general_dilated(x, w1_dhwio, (1, 1, 1), pad,
                                     dimension_numbers=dn,
                                     precision=jax.lax.Precision.HIGHEST) + b1
    y = jnp.maximum(y, 0.0)
    y = jax.lax.conv_general_dilated(y, w2_dhwio, (1, 1, 1), pad,
                                     dimension_numbers=dn,
                                     precision=jax.lax.Precision.HIGHEST) + b2
    y = jnp.maximum(y, 0.0)
    B, D, H, W, C = y.shape
    y = y.reshape(B, D // 2, 2, H // 2, 2, W // 2, 2, C).max(axis=(2, 4, 6))
    return jnp.transpose(y, (0, 4, 1, 2, 3))


if __name__ == "__main__":
    # Small shapes consistent with LunaBlock(in_channels=4, conv_channels=8)
    B, Cin, Cmid = 8, 4, 8
    D = H = W = 8

    key = jax.random.PRNGKey(0)
    kx, k1, k2, k3, k4 = jax.random.split(key, 5)

    x = jax.random.normal(kx, (B, Cin, D, H, W), jnp.float32)          # NCDHW
    # synthetic Conv3d params, already permuted (Cout,Cin,3,3,3) -> DHWIO
    w1 = jax.random.normal(k1, (3, 3, 3, Cin, Cmid), jnp.float32) / np.sqrt(Cin * 27)
    b1 = jax.random.normal(k2, (Cmid,), jnp.float32) * 0.01
    w2 = jax.random.normal(k3, (3, 3, 3, Cmid, Cmid), jnp.float32) / np.sqrt(Cmid * 27)
    b2 = jax.random.normal(k4, (Cmid,), jnp.float32) * 0.01

    out = luna_block_pallas(x, w1, b1, w2, b2, batch_block=4)
    out = jax.block_until_ready(out)

    ref = jax.block_until_ready(luna_block_reference(x, w1, b1, w2, b2))
    assert out.shape == (B, Cmid, D // 2, H // 2, W // 2), out.shape
    np.testing.assert_allclose(np.asarray(out), np.asarray(ref),
                               rtol=1e-2, atol=1e-2)

    print("KERNEL_OK")
</pallas_src>

<mosaic_0001>
module attributes {stable_mosaic.version = 11 : i64} {
  func.func @luna_block_kernel(%arg0: i32, %arg1: memref<32x256xf32, #tpu.memory_space<vmem>>, %arg2: memref<3x256x512xf32, #tpu.memory_space<vmem>>, %arg3: memref<1x512xf32, #tpu.memory_space<vmem>>, %arg4: memref<3x512x512xf32, #tpu.memory_space<vmem>>, %arg5: memref<1x512xf32, #tpu.memory_space<vmem>>, %arg6: memref<512x128xf32, #tpu.memory_space<vmem>>, %arg7: memref<16x128xf32, #tpu.memory_space<vmem>>, %arg8: memref<32x128xf32, #tpu.memory_space<vmem>>) attributes {dimension_semantics = [#tpu.dimension_semantics<parallel>], iteration_bounds = array<i64: 2>, scalar_prefetch = 0 : i64, scratch_operands = 1 : i64, tpu.core_type = #tpu.core_type<tc>, window_params = [{transform_indices = @transform_0, window_bounds = array<i64: 32, 256>}, {pipeline_mode = #tpu.pipeline_mode<synchronous>, transform_indices = @transform_1, window_bounds = array<i64: 3, 256, 512>}, {pipeline_mode = #tpu.pipeline_mode<synchronous>, transform_indices = @transform_2, window_bounds = array<i64: 1, 512>}, {pipeline_mode = #tpu.pipeline_mode<synchronous>, transform_indices = @transform_3, window_bounds = array<i64: 3, 512, 512>}, {pipeline_mode = #tpu.pipeline_mode<synchronous>, transform_indices = @transform_4, window_bounds = array<i64: 1, 512>}, {pipeline_mode = #tpu.pipeline_mode<synchronous>, transform_indices = @transform_5, window_bounds = array<i64: 512, 128>}, {transform_indices = @transform_6, window_bounds = array<i64: 16, 128>}]} {
    %0 = tpu.iota {dimensions = array<i32: 0>} : vector<32x1xi32>
    %c8_i32 = arith.constant 8 : i32
    %c0_i32 = arith.constant 0 : i32
    %1 = arith.cmpi eq, %c8_i32, %c0_i32 : i32
    %c1_i32 = arith.constant 1 : i32
    %2 = arith.select %1, %c1_i32, %c8_i32 : i32
    %3 = vector.broadcast %2 : i32 to vector<32x1xi32>
    %4 = arith.remsi %0, %3 : vector<32x1xi32>
    %c0_i32_0 = arith.constant 0 : i32
    %5 = vector.broadcast %c0_i32_0 : i32 to vector<32x1xi32>
    %6 = arith.cmpi ne, %4, %5 : vector<32x1xi32>
    %c0_i32_1 = arith.constant 0 : i32
    %7 = vector.broadcast %c0_i32_1 : i32 to vector<32x1xi32>
    %8 = arith.cmpi slt, %4, %7 : vector<32x1xi32>
    %c0_i32_2 = arith.constant 0 : i32
    %9 = arith.cmpi slt, %2, %c0_i32_2 : i32
    %10 = vector.broadcast %9 : i1 to vector<32x1xi1>
    %11 = vector.broadcast %10 : vector<32x1xi1> to vector<32x1xi1>
    %12 = arith.xori %8, %11 : vector<32x1xi1>
    %13 = arith.andi %12, %6 : vector<32x1xi1>
    %14 = vector.broadcast %2 : i32 to vector<32x1xi32>
    %15 = arith.addi %4, %14 : vector<32x1xi32>
    %16 = arith.select %13, %15, %4 : vector<32x1xi1>, vector<32x1xi32>
    %c0_i32_3 = arith.constant 0 : i32
    %17 = vector.broadcast %c0_i32_3 : i32 to vector<32x1xi32>
    %18 = arith.cmpi eq, %16, %17 : vector<32x1xi32>
    %c7_i32 = arith.constant 7 : i32
    %19 = vector.broadcast %c7_i32 : i32 to vector<32x1xi32>
    %20 = arith.cmpi eq, %16, %19 : vector<32x1xi32>
    %c0 = arith.constant 0 : index
    %c0_4 = arith.constant 0 : index
    %21 = vector.load %arg1[%c0, %c0_4] : memref<32x256xf32, #tpu.memory_space<vmem>>, vector<32x256xf32>
    %c0_5 = arith.constant 0 : index
    %c0_6 = arith.constant 0 : index
    %22 = vector.load %arg3[%c0_5, %c0_6] : memref<1x512xf32, #tpu.memory_space<vmem>>, vector<1x512xf32>
    %c1_i32_7 = arith.constant 1 : i32
    %23 = tpu.dynamic_rotate %21 by %c1_i32_7 dim 0 : vector<32x256xf32>, i32 -> vector<32x256xf32>
    %cst = arith.constant 0.000000e+00 : f32
    %24 = vector.shape_cast %18 : vector<32x1xi1> to vector<32x1xi1>
    %25 = vector.broadcast %24 : vector<32x1xi1> to vector<32x256xi1>
    %26 = vector.broadcast %cst : f32 to vector<32x256xf32>
    %27 = arith.select %25, %26, %23 : vector<32x256xi1>, vector<32x256xf32>
    %c31_i32 = arith.constant 31 : i32
    %28 = tpu.dynamic_rotate %21 by %c31_i32 dim 0 : vector<32x256xf32>, i32 -> vector<32x256xf32>
    %cst_8 = arith.constant 0.000000e+00 : f32
    %29 = vector.shape_cast %20 : vector<32x1xi1> to vector<32x1xi1>
    %30 = vector.broadcast %29 : vector<32x1xi1> to vector<32x256xi1>
    %31 = vector.broadcast %cst_8 : f32 to vector<32x256xf32>
    %32 = arith.select %30, %31, %28 : vector<32x256xi1>, vector<32x256xf32>
    %c0_9 = arith.constant 0 : index
    %c0_10 = arith.constant 0 : index
    %c0_11 = arith.constant 0 : index
    %33 = vector.load %arg2[%c0_9, %c0_10, %c0_11] : memref<3x256x512xf32, #tpu.memory_space<vmem>>, vector<1x256x512xf32>
    %34 = vector.shape_cast %33 : vector<1x256x512xf32> to vector<256x512xf32>
    %cst_12 = arith.constant dense<0.000000e+00> : vector<32x512xf32>
    %35 = tpu.matmul %27, %34, %cst_12 {dimension_numbers = #tpu.dot_dimension_numbers<[1], [0], [0], [1], [0, 0, 1, 1], [], []>} : vector<32x256xf32>, vector<256x512xf32>, vector<32x512xf32> -> vector<32x512xf32>
    %c1 = arith.constant 1 : index
    %c0_13 = arith.constant 0 : index
    %c0_14 = arith.constant 0 : index
    %36 = vector.load %arg2[%c1, %c0_13, %c0_14] : memref<3x256x512xf32, #tpu.memory_space<vmem>>, vector<1x256x512xf32>
    %37 = vector.shape_cast %36 : vector<1x256x512xf32> to vector<256x512xf32>
    %cst_15 = arith.constant dense<0.000000e+00> : vector<32x512xf32>
    %38 = tpu.matmul %21, %37, %cst_15 {dimension_numbers = #tpu.dot_dimension_numbers<[1], [0], [0], [1], [0, 0, 1, 1], [], []>} : vector<32x256xf32>, vector<256x512xf32>, vector<32x512xf32> -> vector<32x512xf32>
    %39 = arith.addf %35, %38 : vector<32x512xf32>
    %c2 = arith.constant 2 : index
    %c0_16 = arith.constant 0 : index
    %c0_17 = arith.constant 0 : index
    %40 = vector.load %arg2[%c2, %c0_16, %c0_17] : memref<3x256x512xf32, #tpu.memory_space<vmem>>, vector<1x256x512xf32>
    %41 = vector.shape_cast %40 : vector<1x256x512xf32> to vector<256x512xf32>
    %cst_18 = arith.constant dense<0.000000e+00> : vector<32x512xf32>
    %42 = tpu.matmul %32, %41, %cst_18 {dimension_numbers = #tpu.dot_dimension_numbers<[1], [0], [0], [1], [0, 0, 1, 1], [], []>} : vector<32x256xf32>, vector<256x512xf32>, vector<32x512xf32> -> vector<32x512xf32>
    %43 = arith.addf %39, %42 : vector<32x512xf32>
    %44 = vector.broadcast %22 : vector<1x512xf32> to vector<32x512xf32>
    %45 = arith.addf %43, %44 : vector<32x512xf32>
    %cst_19 = arith.constant 0.000000e+00 : f32
    %46 = vector.broadcast %cst_19 : f32 to vector<32x512xf32>
    %47 = arith.maximumf %45, %46 : vector<32x512xf32>
    %c0_20 = arith.constant 0 : index
    %c0_21 = arith.constant 0 : index
    %48 = vector.load %arg5[%c0_20, %c0_21] : memref<1x512xf32, #tpu.memory_space<vmem>>, vector<1x512xf32>
    %c1_i32_22 = arith.constant 1 : i32
    %49 = tpu.dynamic_rotate %47 by %c1_i32_22 dim 0 : vector<32x512xf32>, i32 -> vector<32x512xf32>
    %cst_23 = arith.constant 0.000000e+00 : f32
    %50 = vector.shape_cast %18 : vector<32x1xi1> to vector<32x1xi1>
    %51 = vector.broadcast %50 : vector<32x1xi1> to vector<32x512xi1>
    %52 = vector.broadcast %cst_23 : f32 to vector<32x512xf32>
    %53 = arith.select %51, %52, %49 : vector<32x512xi1>, vector<32x512xf32>
    %c31_i32_24 = arith.constant 31 : i32
    %54 = tpu.dynamic_rotate %47 by %c31_i32_24 dim 0 : vector<32x512xf32>, i32 -> vector<32x512xf32>
    %cst_25 = arith.constant 0.000000e+00 : f32
    %55 = vector.shape_cast %20 : vector<32x1xi1> to vector<32x1xi1>
    %56 = vector.broadcast %55 : vector<32x1xi1> to vector<32x512xi1>
    %57 = vector.broadcast %cst_25 : f32 to vector<32x512xf32>
    %58 = arith.select %56, %57, %54 : vector<32x512xi1>, vector<32x512xf32>
    %c0_26 = arith.constant 0 : index
    %c0_27 = arith.constant 0 : index
    %c0_28 = arith.constant 0 : index
    %59 = vector.load %arg4[%c0_26, %c0_27, %c0_28] : memref<3x512x512xf32, #tpu.memory_space<vmem>>, vector<1x512x512xf32>
    %60 = vector.shape_cast %59 : vector<1x512x512xf32> to vector<512x512xf32>
    %cst_29 = arith.constant dense<0.000000e+00> : vector<32x512xf32>
    %61 = tpu.matmul %53, %60, %cst_29 {dimension_numbers = #tpu.dot_dimension_numbers<[1], [0], [0], [1], [0, 0, 1, 1], [], []>} : vector<32x512xf32>, vector<512x512xf32>, vector<32x512xf32> -> vector<32x512xf32>
    %c1_30 = arith.constant 1 : index
    %c0_31 = arith.constant 0 : index
    %c0_32 = arith.constant 0 : index
    %62 = vector.load %arg4[%c1_30, %c0_31, %c0_32] : memref<3x512x512xf32, #tpu.memory_space<vmem>>, vector<1x512x512xf32>
    %63 = vector.shape_cast %62 : vector<1x512x512xf32> to vector<512x512xf32>
    %cst_33 = arith.constant dense<0.000000e+00> : vector<32x512xf32>
    %64 = tpu.matmul %47, %63, %cst_33 {dimension_numbers = #tpu.dot_dimension_numbers<[1], [0], [0], [1], [0, 0, 1, 1], [], []>} : vector<32x512xf32>, vector<512x512xf32>, vector<32x512xf32> -> vector<32x512xf32>
    %65 = arith.addf %61, %64 : vector<32x512xf32>
    %c2_34 = arith.constant 2 : index
    %c0_35 = arith.constant 0 : index
    %c0_36 = arith.constant 0 : index
    %66 = vector.load %arg4[%c2_34, %c0_35, %c0_36] : memref<3x512x512xf32, #tpu.memory_space<vmem>>, vector<1x512x512xf32>
    %67 = vector.shape_cast %66 : vector<1x512x512xf32> to vector<512x512xf32>
    %cst_37 = arith.constant dense<0.000000e+00> : vector<32x512xf32>
    %68 = tpu.matmul %58, %67, %cst_37 {dimension_numbers = #tpu.dot_dimension_numbers<[1], [0], [0], [1], [0, 0, 1, 1], [], []>} : vector<32x512xf32>, vector<512x512xf32>, vector<32x512xf32> -> vector<32x512xf32>
    %69 = arith.addf %65, %68 : vector<32x512xf32>
    %70 = vector.broadcast %48 : vector<1x512xf32> to vector<32x512xf32>
    %71 = arith.addf %69, %70 : vector<32x512xf32>
    %cst_38 = arith.constant 0.000000e+00 : f32
    %72 = vector.broadcast %cst_38 : f32 to vector<32x512xf32>
    %73 = arith.maximumf %71, %72 : vector<32x512xf32>
    %c504_i32 = arith.constant 504 : i32
    %74 = tpu.dynamic_rotate %73 by %c504_i32 dim 1 : vector<32x512xf32>, i32 -> vector<32x512xf32>
    %75 = arith.maximumf %73, %74 : vector<32x512xf32>
    %c448_i32 = arith.constant 448 : i32
    %76 = tpu.dynamic_rotate %75 by %c448_i32 dim 1 : vector<32x512xf32>, i32 -> vector<32x512xf32>
    %77 = arith.maximumf %75, %76 : vector<32x512xf32>
    %c0_39 = arith.constant 0 : index
    %c0_40 = arith.constant 0 : index
    %78 = vector.load %arg6[%c0_39, %c0_40] : memref<512x128xf32, #tpu.memory_space<vmem>>, vector<512x128xf32>
    %cst_41 = arith.constant dense<0.000000e+00> : vector<32x128xf32>
    %79 = tpu.matmul %77, %78, %cst_41 {dimension_numbers = #tpu.dot_dimension_numbers<[1], [0], [0], [1], [0, 0, 1, 1], [], []>} : vector<32x512xf32>, vector<512x128xf32>, vector<32x128xf32> -> vector<32x128xf32>
    %c0_42 = arith.constant 0 : index
    %c0_43 = arith.constant 0 : index
    %80 = vector.load %arg8[%c0_42, %c0_43] : memref<32x128xf32, #tpu.memory_space<vmem>>, vector<32x128xf32>
    tpu.vector_store %arg8[%c0_42, %c0_43], %79 {strides = array<i32>} : memref<32x128xf32, #tpu.memory_space<vmem>>, vector<32x128xf32>,
    %c0_44 = arith.constant 0 : index
    %c0_45 = arith.constant 0 : index
    %81 = tpu.strided_load %arg8[%c0_44, %c0_45] {strides = array<i32: 2, 1>} : memref<32x128xf32, #tpu.memory_space<vmem>>, vector<16x128xf32>
    %c1_46 = arith.constant 1 : index
    %c0_47 = arith.constant 0 : index
    %82 = tpu.strided_load %arg8[%c1_46, %c0_47] {strides = array<i32: 2, 1>} : memref<32x128xf32, #tpu.memory_space<vmem>>, vector<16x128xf32>
    %83 = arith.maximumf %81, %82 : vector<16x128xf32>
    %c0_48 = arith.constant 0 : index
    %c0_49 = arith.constant 0 : index
    %84 = vector.load %arg7[%c0_48, %c0_49] : memref<16x128xf32, #tpu.memory_space<vmem>>, vector<16x128xf32>
    tpu.vector_store %arg7[%c0_48, %c0_49], %83 {strides = array<i32>} : memref<16x128xf32, #tpu.memory_space<vmem>>, vector<16x128xf32>,
    return
  }
  func.func @transform_0(%arg0: i32) -> (i32, i32) {
    %c0_i32 = arith.constant 0 : i32
    %c0_i32_0 = arith.constant 0 : i32
    return %arg0, %c0_i32 : i32, i32
  }
  func.func @transform_1(%arg0: i32) -> (i32, i32, i32) {
    %c0_i32 = arith.constant 0 : i32
    %c0_i32_0 = arith.constant 0 : i32
    %c0_i32_1 = arith.constant 0 : i32
    %c0_i32_2 = arith.constant 0 : i32
    return %c0_i32, %c0_i32_0, %c0_i32_1 : i32, i32, i32
  }
  func.func @transform_2(%arg0: i32) -> (i32, i32) {
    %c0_i32 = arith.constant 0 : i32
    %c0_i32_0 = arith.constant 0 : i32
    %c0_i32_1 = arith.constant 0 : i32
    return %c0_i32, %c0_i32_0 : i32, i32
  }
  func.func @transform_3(%arg0: i32) -> (i32, i32, i32) {
    %c0_i32 = arith.constant 0 : i32
    %c0_i32_0 = arith.constant 0 : i32
    %c0_i32_1 = arith.constant 0 : i32
    %c0_i32_2 = arith.constant 0 : i32
    return %c0_i32, %c0_i32_0, %c0_i32_1 : i32, i32, i32
  }
  func.func @transform_4(%arg0: i32) -> (i32, i32) {
    %c0_i32 = arith.constant 0 : i32
    %c0_i32_0 = arith.constant 0 : i32
    %c0_i32_1 = arith.constant 0 : i32
    return %c0_i32, %c0_i32_0 : i32, i32
  }
  func.func @transform_5(%arg0: i32) -> (i32, i32) {
    %c0_i32 = arith.constant 0 : i32
    %c0_i32_0 = arith.constant 0 : i32
    %c0_i32_1 = arith.constant 0 : i32
    return %c0_i32, %c0_i32_0 : i32, i32
  }
  func.func @transform_6(%arg0: i32) -> (i32, i32) {
    %c0_i32 = arith.constant 0 : i32
    %c0_i32_0 = arith.constant 0 : i32
    return %arg0, %c0_i32 : i32, i32
  }
}

module attributes {stable_mosaic.version = 11 : i64} {
  func.func @luna_block_kernel(%arg0: i32, %arg1: memref<32x256xf32, #tpu.memory_space<vmem>>, %arg2: memref<3x256x512xf32, #tpu.memory_space<vmem>>, %arg3: memref<1x512xf32, #tpu.memory_space<vmem>>, %arg4: memref<3x512x512xf32, #tpu.memory_space<vmem>>, %arg5: memref<1x512xf32, #tpu.memory_space<vmem>>, %arg6: memref<512x128xf32, #tpu.memory_space<vmem>>, %arg7: memref<16x128xf32, #tpu.memory_space<vmem>>, %arg8: memref<32x128xf32, #tpu.memory_space<vmem>>) attributes {dimension_semantics = [#tpu.dimension_semantics<parallel>], iteration_bounds = array<i64: 2>, scalar_prefetch = 0 : i64, scratch_operands = 1 : i64, tpu.core_type = #tpu.core_type<tc>, window_params = [{transform_indices = @transform_0, window_bounds = array<i64: 32, 256>}, {pipeline_mode = #tpu.pipeline_mode<synchronous>, transform_indices = @transform_1, window_bounds = array<i64: 3, 256, 512>}, {pipeline_mode = #tpu.pipeline_mode<synchronous>, transform_indices = @transform_2, window_bounds = array<i64: 1, 512>}, {pipeline_mode = #tpu.pipeline_mode<synchronous>, transform_indices = @transform_3, window_bounds = array<i64: 3, 512, 512>}, {pipeline_mode = #tpu.pipeline_mode<synchronous>, transform_indices = @transform_4, window_bounds = array<i64: 1, 512>}, {pipeline_mode = #tpu.pipeline_mode<synchronous>, transform_indices = @transform_5, window_bounds = array<i64: 512, 128>}, {transform_indices = @transform_6, window_bounds = array<i64: 16, 128>}]} {
    %0 = tpu.iota {dimensions = array<i32: 0>} : vector<32x1xi32>
    %c8_i32 = arith.constant 8 : i32
    %c0_i32 = arith.constant 0 : i32
    %1 = arith.cmpi eq, %c8_i32, %c0_i32 : i32
    %c1_i32 = arith.constant 1 : i32
    %2 = arith.select %1, %c1_i32, %c8_i32 : i32
    %3 = vector.broadcast %2 : i32 to vector<32x1xi32>
    %4 = arith.remsi %0, %3 : vector<32x1xi32>
    %c0_i32_0 = arith.constant 0 : i32
    %5 = vector.broadcast %c0_i32_0 : i32 to vector<32x1xi32>
    %6 = arith.cmpi ne, %4, %5 : vector<32x1xi32>
    %c0_i32_1 = arith.constant 0 : i32
    %7 = vector.broadcast %c0_i32_1 : i32 to vector<32x1xi32>
    %8 = arith.cmpi slt, %4, %7 : vector<32x1xi32>
    %c0_i32_2 = arith.constant 0 : i32
    %9 = arith.cmpi slt, %2, %c0_i32_2 : i32
    %10 = vector.broadcast %9 : i1 to vector<32x1xi1>
    %11 = vector.broadcast %10 : vector<32x1xi1> to vector<32x1xi1>
    %12 = arith.xori %8, %11 : vector<32x1xi1>
    %13 = arith.andi %12, %6 : vector<32x1xi1>
    %14 = vector.broadcast %2 : i32 to vector<32x1xi32>
    %15 = arith.addi %4, %14 : vector<32x1xi32>
    %16 = arith.select %13, %15, %4 : vector<32x1xi1>, vector<32x1xi32>
    %c0_i32_3 = arith.constant 0 : i32
    %17 = vector.broadcast %c0_i32_3 : i32 to vector<32x1xi32>
    %18 = arith.cmpi eq, %16, %17 : vector<32x1xi32>
    %c7_i32 = arith.constant 7 : i32
    %19 = vector.broadcast %c7_i32 : i32 to vector<32x1xi32>
    %20 = arith.cmpi eq, %16, %19 : vector<32x1xi32>
    %c0 = arith.constant 0 : index
    %c0_4 = arith.constant 0 : index
    %21 = vector.load %arg1[%c0, %c0_4] : memref<32x256xf32, #tpu.memory_space<vmem>>, vector<32x256xf32>
    %c0_5 = arith.constant 0 : index
    %c0_6 = arith.constant 0 : index
    %22 = vector.load %arg3[%c0_5, %c0_6] : memref<1x512xf32, #tpu.memory_space<vmem>>, vector<1x512xf32>
    %c1_i32_7 = arith.constant 1 : i32
    %23 = tpu.dynamic_rotate %21 by %c1_i32_7 dim 0 : vector<32x256xf32>, i32 -> vector<32x256xf32>
    %cst = arith.constant 0.000000e+00 : f32
    %24 = vector.shape_cast %18 : vector<32x1xi1> to vector<32x1xi1>
    %25 = vector.broadcast %24 : vector<32x1xi1> to vector<32x256xi1>
    %26 = vector.broadcast %cst : f32 to vector<32x256xf32>
    %27 = arith.select %25, %26, %23 : vector<32x256xi1>, vector<32x256xf32>
    %c31_i32 = arith.constant 31 : i32
    %28 = tpu.dynamic_rotate %21 by %c31_i32 dim 0 : vector<32x256xf32>, i32 -> vector<32x256xf32>
    %cst_8 = arith.constant 0.000000e+00 : f32
    %29 = vector.shape_cast %20 : vector<32x1xi1> to vector<32x1xi1>
    %30 = vector.broadcast %29 : vector<32x1xi1> to vector<32x256xi1>
    %31 = vector.broadcast %cst_8 : f32 to vector<32x256xf32>
    %32 = arith.select %30, %31, %28 : vector<32x256xi1>, vector<32x256xf32>
    %c0_9 = arith.constant 0 : index
    %c0_10 = arith.constant 0 : index
    %c0_11 = arith.constant 0 : index
    %33 = vector.load %arg2[%c0_9, %c0_10, %c0_11] : memref<3x256x512xf32, #tpu.memory_space<vmem>>, vector<1x256x512xf32>
    %34 = vector.shape_cast %33 : vector<1x256x512xf32> to vector<256x512xf32>
    %cst_12 = arith.constant dense<0.000000e+00> : vector<32x512xf32>
    %35 = tpu.matmul %27, %34, %cst_12 {dimension_numbers = #tpu.dot_dimension_numbers<[1], [0], [0], [1], [0, 0, 1, 1], [], []>} : vector<32x256xf32>, vector<256x512xf32>, vector<32x512xf32> -> vector<32x512xf32>
    %c1 = arith.constant 1 : index
    %c0_13 = arith.constant 0 : index
    %c0_14 = arith.constant 0 : index
    %36 = vector.load %arg2[%c1, %c0_13, %c0_14] : memref<3x256x512xf32, #tpu.memory_space<vmem>>, vector<1x256x512xf32>
    %37 = vector.shape_cast %36 : vector<1x256x512xf32> to vector<256x512xf32>
    %cst_15 = arith.constant dense<0.000000e+00> : vector<32x512xf32>
    %38 = tpu.matmul %21, %37, %cst_15 {dimension_numbers = #tpu.dot_dimension_numbers<[1], [0], [0], [1], [0, 0, 1, 1], [], []>} : vector<32x256xf32>, vector<256x512xf32>, vector<32x512xf32> -> vector<32x512xf32>
    %39 = arith.addf %35, %38 : vector<32x512xf32>
    %c2 = arith.constant 2 : index
    %c0_16 = arith.constant 0 : index
    %c0_17 = arith.constant 0 : index
    %40 = vector.load %arg2[%c2, %c0_16, %c0_17] : memref<3x256x512xf32, #tpu.memory_space<vmem>>, vector<1x256x512xf32>
    %41 = vector.shape_cast %40 : vector<1x256x512xf32> to vector<256x512xf32>
    %cst_18 = arith.constant dense<0.000000e+00> : vector<32x512xf32>
    %42 = tpu.matmul %32, %41, %cst_18 {dimension_numbers = #tpu.dot_dimension_numbers<[1], [0], [0], [1], [0, 0, 1, 1], [], []>} : vector<32x256xf32>, vector<256x512xf32>, vector<32x512xf32> -> vector<32x512xf32>
    %43 = arith.addf %39, %42 : vector<32x512xf32>
    %44 = vector.broadcast %22 : vector<1x512xf32> to vector<32x512xf32>
    %45 = arith.addf %43, %44 : vector<32x512xf32>
    %cst_19 = arith.constant 0.000000e+00 : f32
    %46 = vector.broadcast %cst_19 : f32 to vector<32x512xf32>
    %47 = arith.maximumf %45, %46 : vector<32x512xf32>
    %c0_20 = arith.constant 0 : index
    %c0_21 = arith.constant 0 : index
    %48 = vector.load %arg5[%c0_20, %c0_21] : memref<1x512xf32, #tpu.memory_space<vmem>>, vector<1x512xf32>
    %c1_i32_22 = arith.constant 1 : i32
    %49 = tpu.dynamic_rotate %47 by %c1_i32_22 dim 0 : vector<32x512xf32>, i32 -> vector<32x512xf32>
    %cst_23 = arith.constant 0.000000e+00 : f32
    %50 = vector.shape_cast %18 : vector<32x1xi1> to vector<32x1xi1>
    %51 = vector.broadcast %50 : vector<32x1xi1> to vector<32x512xi1>
    %52 = vector.broadcast %cst_23 : f32 to vector<32x512xf32>
    %53 = arith.select %51, %52, %49 : vector<32x512xi1>, vector<32x512xf32>
    %c31_i32_24 = arith.constant 31 : i32
    %54 = tpu.dynamic_rotate %47 by %c31_i32_24 dim 0 : vector<32x512xf32>, i32 -> vector<32x512xf32>
    %cst_25 = arith.constant 0.000000e+00 : f32
    %55 = vector.shape_cast %20 : vector<32x1xi1> to vector<32x1xi1>
    %56 = vector.broadcast %55 : vector<32x1xi1> to vector<32x512xi1>
    %57 = vector.broadcast %cst_25 : f32 to vector<32x512xf32>
    %58 = arith.select %56, %57, %54 : vector<32x512xi1>, vector<32x512xf32>
    %c0_26 = arith.constant 0 : index
    %c0_27 = arith.constant 0 : index
    %c0_28 = arith.constant 0 : index
    %59 = vector.load %arg4[%c0_26, %c0_27, %c0_28] : memref<3x512x512xf32, #tpu.memory_space<vmem>>, vector<1x512x512xf32>
    %60 = vector.shape_cast %59 : vector<1x512x512xf32> to vector<512x512xf32>
    %cst_29 = arith.constant dense<0.000000e+00> : vector<32x512xf32>
    %61 = tpu.matmul %53, %60, %cst_29 {dimension_numbers = #tpu.dot_dimension_numbers<[1], [0], [0], [1], [0, 0, 1, 1], [], []>} : vector<32x512xf32>, vector<512x512xf32>, vector<32x512xf32> -> vector<32x512xf32>
    %c1_30 = arith.constant 1 : index
    %c0_31 = arith.constant 0 : index
    %c0_32 = arith.constant 0 : index
    %62 = vector.load %arg4[%c1_30, %c0_31, %c0_32] : memref<3x512x512xf32, #tpu.memory_space<vmem>>, vector<1x512x512xf32>
    %63 = vector.shape_cast %62 : vector<1x512x512xf32> to vector<512x512xf32>
    %cst_33 = arith.constant dense<0.000000e+00> : vector<32x512xf32>
    %64 = tpu.matmul %47, %63, %cst_33 {dimension_numbers = #tpu.dot_dimension_numbers<[1], [0], [0], [1], [0, 0, 1, 1], [], []>} : vector<32x512xf32>, vector<512x512xf32>, vector<32x512xf32> -> vector<32x512xf32>
    %65 = arith.addf %61, %64 : vector<32x512xf32>
    %c2_34 = arith.constant 2 : index
    %c0_35 = arith.constant 0 : index
    %c0_36 = arith.constant 0 : index
    %66 = vector.load %arg4[%c2_34, %c0_35, %c0_36] : memref<3x512x512xf32, #tpu.memory_space<vmem>>, vector<1x512x512xf32>
    %67 = vector.shape_cast %66 : vector<1x512x512xf32> to vector<512x512xf32>
    %cst_37 = arith.constant dense<0.000000e+00> : vector<32x512xf32>
    %68 = tpu.matmul %58, %67, %cst_37 {dimension_numbers = #tpu.dot_dimension_numbers<[1], [0], [0], [1], [0, 0, 1, 1], [], []>} : vector<32x512xf32>, vector<512x512xf32>, vector<32x512xf32> -> vector<32x512xf32>
    %69 = arith.addf %65, %68 : vector<32x512xf32>
    %70 = vector.broadcast %48 : vector<1x512xf32> to vector<32x512xf32>
    %71 = arith.addf %69, %70 : vector<32x512xf32>
    %cst_38 = arith.constant 0.000000e+00 : f32
    %72 = vector.broadcast %cst_38 : f32 to vector<32x512xf32>
    %73 = arith.maximumf %71, %72 : vector<32x512xf32>
    %c504_i32 = arith.constant 504 : i32
    %74 = tpu.dynamic_rotate %73 by %c504_i32 dim 1 : vector<32x512xf32>, i32 -> vector<32x512xf32>
    %75 = arith.maximumf %73, %74 : vector<32x512xf32>
    %c448_i32 = arith.constant 448 : i32
    %76 = tpu.dynamic_rotate %75 by %c448_i32 dim 1 : vector<32x512xf32>, i32 -> vector<32x512xf32>
    %77 = arith.maximumf %75, %76 : vector<32x512xf32>
    %c0_39 = arith.constant 0 : index
    %c0_40 = arith.constant 0 : index
    %78 = vector.load %arg6[%c0_39, %c0_40] : memref<512x128xf32, #tpu.memory_space<vmem>>, vector<512x128xf32>
    %cst_41 = arith.constant dense<0.000000e+00> : vector<32x128xf32>
    %79 = tpu.matmul %77, %78, %cst_41 {dimension_numbers = #tpu.dot_dimension_numbers<[1], [0], [0], [1], [0, 0, 1, 1], [], []>} : vector<32x512xf32>, vector<512x128xf32>, vector<32x128xf32> -> vector<32x128xf32>
    %c0_42 = arith.constant 0 : index
    %c0_43 = arith.constant 0 : index
    %80 = vector.load %arg8[%c0_42, %c0_43] : memref<32x128xf32, #tpu.memory_space<vmem>>, vector<32x128xf32>
    tpu.vector_store %arg8[%c0_42, %c0_43], %79 {strides = array<i32>} : memref<32x128xf32, #tpu.memory_space<vmem>>, vector<32x128xf32>,
    %c0_44 = arith.constant 0 : index
    %c0_45 = arith.constant 0 : index
    %81 = tpu.strided_load %arg8[%c0_44, %c0_45] {strides = array<i32: 2, 1>} : memref<32x128xf32, #tpu.memory_space<vmem>>, vector<16x128xf32>
    %c1_46 = arith.constant 1 : index
    %c0_47 = arith.constant 0 : index
    %82 = tpu.strided_load %arg8[%c1_46, %c0_47] {strides = array<i32: 2, 1>} : memref<32x128xf32, #tpu.memory_space<vmem>>, vector<16x128xf32>
    %83 = arith.maximumf %81, %82 : vector<16x128xf32>
    %c0_48 = arith.constant 0 : index
    %c0_49 = arith.constant 0 : index
    %84 = vector.load %arg7[%c0_48, %c0_49] : memref<16x128xf32, #tpu.memory_space<vmem>>, vector<16x128xf32>
    tpu.vector_store %arg7[%c0_48, %c0_49], %83 {strides = array<i32>} : memref<16x128xf32, #tpu.memory_space<vmem>>, vector<16x128xf32>,
    return
  }
  func.func @transform_0(%arg0: i32) -> (i32, i32) {
    %c0_i32 = arith.constant 0 : i32
    %c0_i32_0 = arith.constant 0 : i32
    return %arg0, %c0_i32 : i32, i32
  }
  func.func @transform_1(%arg0: i32) -> (i32, i32, i32) {
    %c0_i32 = arith.constant 0 : i32
    %c0_i32_0 = arith.constant 0 : i32
    %c0_i32_1 = arith.constant 0 : i32
    %c0_i32_2 = arith.constant 0 : i32
    return %c0_i32, %c0_i32_0, %c0_i32_1 : i32, i32, i32
  }
  func.func @transform_2(%arg0: i32) -> (i32, i32) {
    %c0_i32 = arith.constant 0 : i32
    %c0_i32_0 = arith.constant 0 : i32
    %c0_i32_1 = arith.constant 0 : i32
    return %c0_i32, %c0_i32_0 : i32, i32
  }
  func.func @transform_3(%arg0: i32) -> (i32, i32, i32) {
    %c0_i32 = arith.constant 0 : i32
    %c0_i32_0 = arith.constant 0 : i32
    %c0_i32_1 = arith.constant 0 : i32
    %c0_i32_2 = arith.constant 0 : i32
    return %c0_i32, %c0_i32_0, %c0_i32_1 : i32, i32, i32
  }
  func.func @transform_4(%arg0: i32) -> (i32, i32) {
    %c0_i32 = arith.constant 0 : i32
    %c0_i32_0 = arith.constant 0 : i32
    %c0_i32_1 = arith.constant 0 : i32
    return %c0_i32, %c0_i32_0 : i32, i32
  }
  func.func @transform_5(%arg0: i32) -> (i32, i32) {
    %c0_i32 = arith.constant 0 : i32
    %c0_i32_0 = arith.constant 0 : i32
    %c0_i32_1 = arith.constant 0 : i32
    return %c0_i32, %c0_i32_0 : i32, i32
  }
  func.func @transform_6(%arg0: i32) -> (i32, i32) {
    %c0_i32 = arith.constant 0 : i32
    %c0_i32_0 = arith.constant 0 : i32
    return %arg0, %c0_i32 : i32, i32
  }
}

</mosaic_0001>

<llo_original>
// kernel: tpu_custom_call.1
$region0: #{tpu_custom_call.1}
  #allocation0 [shape = 'u32[]', space=smem, size = 0x4, offset = 0x4, fixed_abs, tag = 'smem constant byte address 0x4 - core index']
  #allocation1 [shape = 'u32[144,128]{1,0:T(1,128)}', space=vmem, size = 0x12000, scoped, tag = 'internal scratch']
  #allocation2 [shape = 'f32[32,128]{1,0:T(8,128)}', space=vmem, size = 0x4000, scoped, tag = 'scratch operand']
  %s0 = inlined_call_operand.hbm [shape: f32[64,256], index: 0, kind: input, shape index: {}]
  %s1 = inlined_call_operand.hbm [shape: f32[3,256,512], index: 1, kind: input, shape index: {}]
  %s2 = inlined_call_operand.hbm [shape: f32[1,512], index: 2, kind: input, shape index: {}]
  %s3 = inlined_call_operand.hbm [shape: f32[3,512,512], index: 3, kind: input, shape index: {}]
  %s4 = inlined_call_operand.hbm [shape: f32[1,512], index: 4, kind: input, shape index: {}]
  %s5 = inlined_call_operand.hbm [shape: f32[512,128], index: 5, kind: input, shape index: {}]
  %s6 = inlined_call_operand.hbm [shape: f32[32,128], index: 6, kind: output, shape index: {}]
  %s7 = sld [smem:[#allocation0]]
  $region81: #{tpu_custom_call.1} parent=0
    _
  %s9 = ssub.s32 1, %s7
  %s10 = scalar_select 0, %s9, %s7
  $region1: #{tpu_custom_call.1} parent=0
    #allocation3 [shape = 'u8[65536]{0}', space=vmem, size = 0x10000, scoped, tag = 'input window, operand 0']
    #allocation4 [shape = 's32[2]{0}', space=sflag, size = 0x8, scoped, tag = 'scoped memory for tpu_custom_call.1']
    #allocation5 [shape = 's32[2]{0}', space=sflag, size = 0x8, scoped, tag = 'scoped memory for tpu_custom_call.1']
    #allocation6 [shape = 'u8[1572864]{0}', space=vmem, size = 0x180000, scoped, tag = 'input window, operand 1, single buffered']
    #allocation7 [shape = 's32[1]{0}', space=sflag, size = 0x4, scoped, tag = 'scoped memory for tpu_custom_call.1']
    #allocation8 [shape = 'u8[2048]{0}', space=vmem, size = 0x800, scoped, tag = 'input window, operand 2, single buffered']
    #allocation9 [shape = 'u8[3145728]{0}', space=vmem, size = 0x300000, scoped, tag = 'input window, operand 3, single buffered']
    #allocation10 [shape = 's32[1]{0}', space=sflag, size = 0x4, scoped, tag = 'scoped memory for tpu_custom_call.1']
    #allocation11 [shape = 'u8[2048]{0}', space=vmem, size = 0x800, scoped, tag = 'input window, operand 4, single buffered']
    #allocation12 [shape = 'u8[262144]{0}', space=vmem, size = 0x40000, scoped, tag = 'input window, operand 5, single buffered']
    #allocation13 [shape = 's32[1]{0}', space=sflag, size = 0x4, scoped, tag = 'scoped memory for tpu_custom_call.1']
    #allocation14 [shape = 'u8[16384]{0}', space=vmem, size = 0x4000, scoped, tag = 'output window, operand 0']
    %11 = vsyncpa [#allocation4], 0
    %s12 = scalar_lea.sflag [#allocation4], 1
    %13 = vsyncpa %s12, 0
    %14 = vsyncpa [#allocation7], 0
    %15 = vsyncpa [#allocation10], 0
    %16 = vsyncpa [#allocation13], 0
    %17 = vsyncpa [#allocation5], 0
    %s18 = scalar_lea.sflag [#allocation5], 1
    %19 = vsyncpa %s18, 0
    loop: start=0, step=1, limit=4
    $region2: #{tpu_custom_call.1} parent=1 // loop_pre_header
      _
    $region3: #{tpu_custom_call.1} parent=1 // loop_header
      %s21 = sphi 0, %s25
      %p22 = scmp.ge.s32.totalorder %s21, 4
      %s31 = sphi 0, %s33
      %s34 = sphi 0, %s31
      %s35 = sphi 0, %s34
      %s51 = sphi 0, %s35
      %s55 = sphi 0, %s55
      %s57 = sphi 0, %s55
      %s58 = sphi 0, %s57
      %s72 = sphi 0, %s58
      %s76 = sphi 0, %s76
      %s78 = sphi 0, %s76
      %s79 = sphi 0, %s78
      %s93 = sphi 0, %s79
      %s97 = sphi 0, %s97
      %s99 = sphi 0, %s97
      %s100 = sphi 0, %s99
      %s114 = sphi 0, %s100
      %s118 = sphi 0, %s118
      %s120 = sphi 0, %s118
      %s121 = sphi 0, %s120
      %s135 = sphi 0, %s121
      %s139 = sphi 0, %s139
      %s141 = sphi 0, %s139
      %s142 = sphi 0, %s141
      %s156 = sphi 0, %s142
      %s162 = sphi 0, %s164
      %s165 = sphi 0, %s162
      %s166 = sphi 0, %s165
      %s182 = sphi 0, %s166
    $region4: #{tpu_custom_call.1} parent=1 // loop_header_branch
      %24 = sbr.rel (%p22) target = $region8
    $region5: #{tpu_custom_call.1} parent=1 // loop_body
      %s26 = ssub.s32 %s21, 1
      %s27 = ssub.s32 %s21, 2
      %s28 = sadd.s32 %s21, 1
      %s29 = ssub.s32 %s21, %s28
      %p30 = scmp.eq.s32.totalorder %s29, 0
      %s32 = sadd.s32 %s31, 1
      %s33 = scalar_select %p30, %s31, %s32
      %p36 = pneg %p30
      %p37 = scmp.eq.s32.totalorder %s21, 1
      %p38 = por %p36, %p37
      %p39 = scmp.ne.s32.totalorder %s31, %s34
      %p40 = scmp.eq.s32.totalorder %s21, 0
      %p41 = por %p39, %p40
      %p42 = scmp.ne.s32.totalorder %s31, %s34
      %p43 = scmp.eq.s32.totalorder %s26, 1
      %p44 = por %p42, %p43
      %p45 = scmp.ne.s32.totalorder %s34, %s35
      %p46 = scmp.eq.s32.totalorder %s26, 0
      %p47 = por %p45, %p46
      %p48 = scmp.ne.s32.totalorder %s34, %s35
      %p49 = scmp.eq.s32.totalorder %s27, 1
      %p50 = por %p48, %p49
      %p52 = scmp.ne.s32.totalorder %s35, %s51
      %p53 = scmp.eq.s32.totalorder %s27, 0
      %p54 = por %p52, %p53
      %s56 = sadd.s32 %s55, 1
      %p59 = scmp.eq.s32.totalorder %s21, 1
      %p60 = scmp.ne.s32.totalorder %s55, %s57
      %p61 = scmp.eq.s32.totalorder %s21, 0
      %p62 = por %p60, %p61
      %p63 = scmp.ne.s32.totalorder %s55, %s57
      %p64 = scmp.eq.s32.totalorder %s26, 1
      %p65 = por %p63, %p64
      %p66 = scmp.ne.s32.totalorder %s57, %s58
      %p67 = scmp.eq.s32.totalorder %s26, 0
      %p68 = por %p66, %p67
      %p69 = scmp.ne.s32.totalorder %s57, %s58
      %p70 = scmp.eq.s32.totalorder %s27, 1
      %p71 = por %p69, %p70
      %p73 = scmp.ne.s32.totalorder %s58, %s72
      %p74 = scmp.eq.s32.totalorder %s27, 0
      %p75 = por %p73, %p74
      %s77 = sadd.s32 %s76, 1
      %p80 = scmp.eq.s32.totalorder %s21, 1
      %p81 = scmp.ne.s32.totalorder %s76, %s78
      %p82 = scmp.eq.s32.totalorder %s21, 0
      %p83 = por %p81, %p82
      %p84 = scmp.ne.s32.totalorder %s76, %s78
      %p85 = scmp.eq.s32.totalorder %s26, 1
      %p86 = por %p84, %p85
      %p87 = scmp.ne.s32.totalorder %s78, %s79
      %p88 = scmp.eq.s32.totalorder %s26, 0
      %p89 = por %p87, %p88
      %p90 = scmp.ne.s32.totalorder %s78, %s79
      %p91 = scmp.eq.s32.totalorder %s27, 1
      %p92 = por %p90, %p91
      %p94 = scmp.ne.s32.totalorder %s79, %s93
      %p95 = scmp.eq.s32.totalorder %s27, 0
      %p96 = por %p94, %p95
      %s98 = sadd.s32 %s97, 1
      %p101 = scmp.eq.s32.totalorder %s21, 1
      %p102 = scmp.ne.s32.totalorder %s97, %s99
      %p103 = scmp.eq.s32.totalorder %s21, 0
      %p104 = por %p102, %p103
      %p105 = scmp.ne.s32.totalorder %s97, %s99
      %p106 = scmp.eq.s32.totalorder %s26, 1
      %p107 = por %p105, %p106
      %p108 = scmp.ne.s32.totalorder %s99, %s100
      %p109 = scmp.eq.s32.totalorder %s26, 0
      %p110 = por %p108, %p109
      %p111 = scmp.ne.s32.totalorder %s99, %s100
      %p112 = scmp.eq.s32.totalorder %s27, 1
      %p113 = por %p111, %p112
      %p115 = scmp.ne.s32.totalorder %s100, %s114
      %p116 = scmp.eq.s32.totalorder %s27, 0
      %p117 = por %p115, %p116
      %s119 = sadd.s32 %s118, 1
      %p122 = scmp.eq.s32.totalorder %s21, 1
      %p123 = scmp.ne.s32.totalorder %s118, %s120
      %p124 = scmp.eq.s32.totalorder %s21, 0
      %p125 = por %p123, %p124
      %p126 = scmp.ne.s32.totalorder %s118, %s120
      %p127 = scmp.eq.s32.totalorder %s26, 1
      %p128 = por %p126, %p127
      %p129 = scmp.ne.s32.totalorder %s120, %s121
      %p130 = scmp.eq.s32.totalorder %s26, 0
      %p131 = por %p129, %p130
      %p132 = scmp.ne.s32.totalorder %s120, %s121
      %p133 = scmp.eq.s32.totalorder %s27, 1
      %p134 = por %p132, %p133
      %p136 = scmp.ne.s32.totalorder %s121, %s135
      %p137 = scmp.eq.s32.totalorder %s27, 0
      %p138 = por %p136, %p137
      %s140 = sadd.s32 %s139, 1
      %p143 = scmp.eq.s32.totalorder %s21, 1
      %p144 = scmp.ne.s32.totalorder %s139, %s141
      %p145 = scmp.eq.s32.totalorder %s21, 0
      %p146 = por %p144, %p145
      %p147 = scmp.ne.s32.totalorder %s139, %s141
      %p148 = scmp.eq.s32.totalorder %s26, 1
      %p149 = por %p147, %p148
      %p150 = scmp.ne.s32.totalorder %s141, %s142
      %p151 = scmp.eq.s32.totalorder %s26, 0
      %p152 = por %p150, %p151
      %p153 = scmp.ne.s32.totalorder %s141, %s142
      %p154 = scmp.eq.s32.totalorder %s27, 1
      %p155 = por %p153, %p154
      %p157 = scmp.ne.s32.totalorder %s142, %s156
      %p158 = scmp.eq.s32.totalorder %s27, 0
      %p159 = por %p157, %p158
      %s160 = ssub.s32 %s21, %s28
      %p161 = scmp.eq.s32.totalorder %s160, 0
      %s163 = sadd.s32 %s162, 1
      %s164 = scalar_select %p161, %s162, %s163
      %p167 = pneg %p161
      %p168 = scmp.eq.s32.totalorder %s21, 1
      %p169 = por %p167, %p168
      %p170 = scmp.ne.s32.totalorder %s162, %s165
      %p171 = scmp.eq.s32.totalorder %s21, 0
      %p172 = por %p170, %p171
      %p173 = scmp.ne.s32.totalorder %s162, %s165
      %p174 = scmp.eq.s32.totalorder %s26, 1
      %p175 = por %p173, %p174
      %p176 = scmp.ne.s32.totalorder %s165, %s166
      %p177 = scmp.eq.s32.totalorder %s26, 0
      %p178 = por %p176, %p177
      %p179 = scmp.ne.s32.totalorder %s165, %s166
      %p180 = scmp.eq.s32.totalorder %s27, 1
      %p181 = por %p179, %p180
      %p183 = scmp.ne.s32.totalorder %s166, %s182
      %p184 = scmp.eq.s32.totalorder %s27, 0
      %p185 = por %p183, %p184
      %p186 = scmp.le.s32.totalorder 1, %s21
      %p187 = scmp.lt.s32.totalorder %s21, 3
      %p188 = pnand %p186, %p187
      %p189 = pneg %p188
      // Predicated region
      $region9: #{tpu_custom_call.1} parent=5 // pred_check
        _
      $region10: #{tpu_custom_call.1} parent=5 // pred_check_branch
        %191 = sbr.rel (%p188) target = $region12
      $region11: #{tpu_custom_call.1} parent=5 // pred_region
        %s192 = ssub.s32 %s21, 1
        // Predicated region
        $region13: #{tpu_custom_call.1} parent=11 // pred_check
          %p193 = pneg %p68
        $region14: #{tpu_custom_call.1} parent=11 // pred_check_branch
          %195 = sbr.rel (%p193) target = $region16
        $region15: #{tpu_custom_call.1} parent=11 // pred_region
          %s197 = ssub.s32 49152, 49152
          %198 = vsyncadd [#allocation7], %s197
          %s199 = sshll.u32 [#allocation6], 4
          %s200 = int_to_ptr.vmem [resolvable:$true] %s199
          %205 = dma.hbm_to_vmem [thread:$0]  %s1, 49152, %s200, [#allocation7], 512, 512, 32
        $region16: #{tpu_custom_call.1} parent=11 // pred_fallthru
          _
        // Predicated region
        $region17: #{tpu_custom_call.1} parent=11 // pred_check
          %p206 = pneg %p89
        $region18: #{tpu_custom_call.1} parent=11 // pred_check_branch
          %208 = sbr.rel (%p206) target = $region20
        $region19: #{tpu_custom_call.1} parent=11 // pred_region
          %s210 = ssub.s32 64, 64
          %211 = vsyncadd [#allocation7], %s210
          %s213 = sshll.u32 [#allocation8], 4
          %s214 = int_to_ptr.vmem [resolvable:$true] %s213
          %216 = dma.hbm_to_vmem [thread:$0]  %s2, 64, %s214, [#allocation7]
        $region20: #{tpu_custom_call.1} parent=11 // pred_fallthru
          _
        // Predicated region
        $region21: #{tpu_custom_call.1} parent=11 // pred_check
          %p217 = pneg %p110
        $region22: #{tpu_custom_call.1} parent=11 // pred_check_branch
          %219 = sbr.rel (%p217) target = $region24
        $region23: #{tpu_custom_call.1} parent=11 // pred_region
          %s221 = ssub.s32 98304, 98304
          %222 = vsyncadd [#allocation10], %s221
          %s223 = sshll.u32 [#allocation9], 4
          %s224 = int_to_ptr.vmem [resolvable:$true] %s223
          %229 = dma.hbm_to_vmem [thread:$0]  %s3, 98304, %s224, [#allocation10], 512, 512, 32
        $region24: #{tpu_custom_call.1} parent=11 // pred_fallthru
          _
        // Predicated region
        $region25: #{tpu_custom_call.1} parent=11 // pred_check
          %p230 = pneg %p131
        $region26: #{tpu_custom_call.1} parent=11 // pred_check_branch
          %232 = sbr.rel (%p230) target = $region28
        $region27: #{tpu_custom_call.1} parent=11 // pred_region
          %s234 = ssub.s32 64, 64
          %235 = vsyncadd [#allocation10], %s234
          %s237 = sshll.u32 [#allocation11], 4
          %s238 = int_to_ptr.vmem [resolvable:$true] %s237
          %240 = dma.hbm_to_vmem [thread:$0]  %s4, 64, %s238, [#allocation10]
        $region28: #{tpu_custom_call.1} parent=11 // pred_fallthru
          _
        // Predicated region
        $region29: #{tpu_custom_call.1} parent=11 // pred_check
          %p241 = pneg %p152
        $region30: #{tpu_custom_call.1} parent=11 // pred_check_branch
          %243 = sbr.rel (%p241) target = $region32
        $region31: #{tpu_custom_call.1} parent=11 // pred_region
          %s245 = ssub.s32 8192, 8192
          %246 = vsyncadd [#allocation13], %s245
          %s247 = sshll.u32 [#allocation12], 4
          %s248 = int_to_ptr.vmem [resolvable:$true] %s247
          %253 = dma.hbm_to_vmem [thread:$0]  %s5, 8192, %s248, [#allocation13], 128, 128, 8
        $region32: #{tpu_custom_call.1} parent=11 // pred_fallthru
          _
      $region12: #{tpu_custom_call.1} parent=5 // pred_fallthru
        _
      %p254 = scmp.lt.s32.totalorder %s21, 2
      // Predicated region
      $region33: #{tpu_custom_call.1} parent=5 // pred_check
        %p255 = pneg %p254
      $region34: #{tpu_custom_call.1} parent=5 // pred_check_branch
        %257 = sbr.rel (%p255) target = $region36
      $region35: #{tpu_custom_call.1} parent=5 // pred_region
        // Predicated region
        $region37: #{tpu_custom_call.1} parent=35 // pred_check
          %p258 = pneg %p41
        $region38: #{tpu_custom_call.1} parent=35 // pred_check_branch
          %260 = sbr.rel (%p258) target = $region40
        $region39: #{tpu_custom_call.1} parent=35 // pred_region
          %s261 = sand.u32 %s31, 1
          %s262 = scalar_lea.sflag [#allocation4], %s261
          %s263 = sand.u32 %s31, 1
          %s264 = smul.addr %s263, 64
          %s265 = scalar_lea.vmem [#allocation3], %s264
          %s266 = smul.u32 4, %s21
          %s268 = ssub.s32 1024, 1024
          %269 = vsyncadd %s262, %s268
          %s270 = smul.addr %s266, 2
          %s271 = smul.addr %s270, 128
          %s272 = scalar_lea.hbm %s0, %s271
          %s273 = sshll.u32 %s265, 4
          %s274 = int_to_ptr.vmem [resolvable:$true] %s273
          %279 = dma.hbm_to_vmem [thread:$0]  %s272, 1024, %s274, %s262, 256, 256, 16
        $region40: #{tpu_custom_call.1} parent=35 // pred_fallthru
          _
      $region36: #{tpu_custom_call.1} parent=5 // pred_fallthru
        _
      %p280 = scmp.le.s32.totalorder 1, %s21
      %p281 = scmp.lt.s32.totalorder %s21, 3
      %p282 = pnand %p280, %p281
      %p283 = pneg %p282
      // Predicated region
      $region41: #{tpu_custom_call.1} parent=5 // pred_check
        _
      $region42: #{tpu_custom_call.1} parent=5 // pred_check_branch
        %285 = sbr.rel (%p282) target = $region44
      $region43: #{tpu_custom_call.1} parent=5 // pred_region
        %s286 = ssub.s32 %s21, 1
        %s287 = sand.u32 %s34, 1
        %s288 = scalar_lea.sflag [#allocation4], %s287
        %s289 = sand.u32 %s34, 1
        %s290 = smul.addr %s289, 64
        %s291 = scalar_lea.vmem [#allocation3], %s290
        // Predicated region
        $region45: #{tpu_custom_call.1} parent=43 // pred_check
          %p292 = pneg %p47
        $region46: #{tpu_custom_call.1} parent=43 // pred_check_branch
          %294 = sbr.rel (%p292) target = $region48
        $region47: #{tpu_custom_call.1} parent=43 // pred_region
          %295 = dma.done %s288, 1024
        $region48: #{tpu_custom_call.1} parent=43 // pred_fallthru
          _
        // Predicated region
        $region49: #{tpu_custom_call.1} parent=43 // pred_check
          %p296 = pneg %p68
        $region50: #{tpu_custom_call.1} parent=43 // pred_check_branch
          %298 = sbr.rel (%p296) target = $region52
        $region51: #{tpu_custom_call.1} parent=43 // pred_region
          %299 = dma.done [#allocation7], 49152
        $region52: #{tpu_custom_call.1} parent=43 // pred_fallthru
          _
        // Predicated region
        $region53: #{tpu_custom_call.1} parent=43 // pred_check
          %p300 = pneg %p89
        $region54: #{tpu_custom_call.1} parent=43 // pred_check_branch
          %302 = sbr.rel (%p300) target = $region56
        $region55: #{tpu_custom_call.1} parent=43 // pred_region
          %303 = dma.done [#allocation7], 64
        $region56: #{tpu_custom_call.1} parent=43 // pred_fallthru
          _
        // Predicated region
        $region57: #{tpu_custom_call.1} parent=43 // pred_check
          %p304 = pneg %p110
        $region58: #{tpu_custom_call.1} parent=43 // pred_check_branch
          %306 = sbr.rel (%p304) target = $region60
        $region59: #{tpu_custom_call.1} parent=43 // pred_region
          %307 = dma.done [#allocation10], 98304
        $region60: #{tpu_custom_call.1} parent=43 // pred_fallthru
          _
        // Predicated region
        $region61: #{tpu_custom_call.1} parent=43 // pred_check
          %p308 = pneg %p131
        $region62: #{tpu_custom_call.1} parent=43 // pred_check_branch
          %310 = sbr.rel (%p308) target = $region64
        $region63: #{tpu_custom_call.1} parent=43 // pred_region
          %311 = dma.done [#allocation10], 64
        $region64: #{tpu_custom_call.1} parent=43 // pred_fallthru
          _
        // Predicated region
        $region65: #{tpu_custom_call.1} parent=43 // pred_check
          %p312 = pneg %p152
        $region66: #{tpu_custom_call.1} parent=43 // pred_check_branch
          %314 = sbr.rel (%p312) target = $region68
        $region67: #{tpu_custom_call.1} parent=43 // pred_region
          %315 = dma.done [#allocation13], 8192
        $region68: #{tpu_custom_call.1} parent=43 // pred_fallthru
          _
        %s316 = sand.u32 %s34, 1
        %s317 = scalar_lea.sflag [#allocation4], %s316
        %s318 = sand.u32 %s34, 1
        %s319 = smul.addr %s318, 64
        %s320 = scalar_lea.vmem [#allocation3], %s319
        %p321 = pneg %p47
        %p322 = pneg %p44
        %p323 = pneg %p68
        %p324 = pneg %p65
        %p325 = pneg %p89
        %p326 = pneg %p86
        %p327 = pneg %p110
        %p328 = pneg %p107
        %p329 = pneg %p131
        %p330 = pneg %p128
        %p331 = pneg %p152
        %p332 = pneg %p149
        %p333 = pneg %p178
        %p334 = pneg %p175
        %s335 = sand.u32 %s165, 1
        %s336 = scalar_lea.sflag [#allocation5], %s335
        %s337 = sand.u32 %s165, 1
        %s338 = smul.addr %s337, 16
        %s339 = scalar_lea.vmem [#allocation14], %s338
        %s340 = smul.u32 4, %s26
        %s341 = smul.u32 2, %s26
        %v342 = vlaneseq
        %v343 = vshrl.u32 %v342, 7
        %v344 = vadd.s32 %v343, 8
        %v345 = vadd.s32 %v343, 16
        %v346 = vadd.s32 %v343, 24
        %vm347 = vcmp.lt.s32.totalorder %v343, 0
        %v348 = vsub.s32 0, %v343
        %v349 = vsel %vm347, %v348, %v343
        %v350 = vshrl.u32 %v349, 3
        %v351 = vand.u32 %v349, 7
        %v352 = vsub.s32 0, %v351
        %v353 = vsel %vm347, %v352, %v351
        %vm354 = vcmp.lt.s32.totalorder %v344, 0
        %v355 = vsub.s32 0, %v344
        %v356 = vsel %vm354, %v355, %v344
        %v357 = vshrl.u32 %v356, 3
        %v358 = vand.u32 %v356, 7
        %v359 = vsub.s32 0, %v358
        %v360 = vsel %vm354, %v359, %v358
        %vm361 = vcmp.lt.s32.totalorder %v345, 0
        %v362 = vsub.s32 0, %v345
        %v363 = vsel %vm361, %v362, %v345
        %v364 = vshrl.u32 %v363, 3
        %v365 = vand.u32 %v363, 7
        %v366 = vsub.s32 0, %v365
        %v367 = vsel %vm361, %v366, %v365
        %vm368 = vcmp.lt.s32.totalorder %v346, 0
        %v369 = vsub.s32 0, %v346
        %v370 = vsel %vm368, %v369, %v346
        %v371 = vshrl.u32 %v370, 3
        %v372 = vand.u32 %v370, 7
        %v373 = vsub.s32 0, %v372
        %v374 = vsel %vm368, %v373, %v372
        %vm375 = vcmp.ne.s32.totalorder %v353, 0
        %vm376 = vcmp.ne.s32.totalorder %v360, 0
        %vm377 = vcmp.ne.s32.totalorder %v367, 0
        %vm378 = vcmp.ne.s32.totalorder %v374, 0
        %vm379 = vcmp.lt.s32.totalorder %v353, 0
        %vm380 = vcmp.lt.s32.totalorder %v360, 0
        %vm381 = vcmp.lt.s32.totalorder %v367, 0
        %vm382 = vcmp.lt.s32.totalorder %v374, 0
        %vm383 = vmand %vm379, %vm375
        %vm384 = vmand %vm380, %vm376
        %vm385 = vmand %vm381, %vm377
        %vm386 = vmand %vm382, %vm378
        %v387 = vadd.s32 %v353, 8
        %v388 = vadd.s32 %v360, 8
        %v389 = vadd.s32 %v367, 8
        %v390 = vadd.s32 %v374, 8
        %v391 = vsel %vm383, %v387, %v353
        %v392 = vsel %vm384, %v388, %v360
        %v393 = vsel %vm385, %v389, %v367
        %v394 = vsel %vm386, %v390, %v374
        %vm395 = vcmp.eq.s32.totalorder %v391, 0
        %vm396 = vcmp.eq.s32.totalorder %v392, 0
        %vm397 = vcmp.eq.s32.totalorder %v393, 0
        %vm398 = vcmp.eq.s32.totalorder %v394, 0
        %vm399 = vcmp.eq.s32.totalorder %v391, 7
        %vm400 = vcmp.eq.s32.totalorder %v392, 7
        %vm401 = vcmp.eq.s32.totalorder %v393, 7
        %vm402 = vcmp.eq.s32.totalorder %v394, 7
        %v403 = vld [vmem:[%s291] sm:$0xff]
        %v404 = vld [vmem:[%s291 + $0x8] sm:$0xff]
        %v405 = vld [vmem:[%s291 + $0x10] sm:$0xff]
        %v406 = vld [vmem:[%s291 + $0x18] sm:$0xff]
        %v407 = vld [vmem:[%s291 + $0x20] sm:$0xff]
        %v408 = vld [vmem:[%s291 + $0x28] sm:$0xff]
        %v409 = vld [vmem:[%s291 + $0x30] sm:$0xff]
        %v410 = vld [vmem:[%s291 + $0x38] sm:$0xff]
        %v411 = vld [vmem:[#allocation8] sm:$0xf]
        %v412 = vrot.slane %v403, 7
        %v413 = vrot.slane %v404, 7
        %v414 = vrot.slane %v405, 7
        %v415 = vrot.slane %v406, 7
        %v416 = vrot.slane %v407, 7
        %v417 = vrot.slane %v408, 7
        %v418 = vrot.slane %v409, 7
        %v419 = vrot.slane %v410, 7
        %vm420 = vcmp.lt.s32.totalorder %v343, 1
        %v421 = vsel %vm420, %v416, %v418
        %v422 = vsel %vm420, %v417, %v419
        %v423 = vsel %vm420, %v414, %v416
        %v424 = vsel %vm420, %v415, %v417
        %v425 = vsel %vm420, %v412, %v414
        %v426 = vsel %vm420, %v413, %v415
        %v427 = vsel %vm420, %v418, %v412
        %v428 = vsel %vm420, %v419, %v413
        %v429 = vsel %vm395, 1, 0
        %v430 = vsel %vm396, 1, 0
        %v431 = vsel %vm397, 1, 0
        %v432 = vsel %vm398, 1, 0
        %vm433 = vcmp.eq.s32.totalorder %v429, 1
        %vm434 = vcmp.eq.s32.totalorder %v430, 1
        %vm435 = vcmp.eq.s32.totalorder %v431, 1
        %vm436 = vcmp.eq.s32.totalorder %v432, 1
        %v437 = vsel %vm433, 0.0, %v427
        %v438 = vsel %vm433, 0.0, %v428
        %v439 = vsel %vm434, 0.0, %v425
        %v440 = vsel %vm434, 0.0, %v426
        %v441 = vsel %vm435, 0.0, %v423
        %v442 = vsel %vm435, 0.0, %v424
        %v443 = vsel %vm436, 0.0, %v421
        %v444 = vsel %vm436, 0.0, %v422
        %v445 = vrot.slane %v403, 1
        %v446 = vrot.slane %v404, 1
        %v447 = vrot.slane %v405, 1
        %v448 = vrot.slane %v406, 1
        %v449 = vrot.slane %v407, 1
        %v450 = vrot.slane %v408, 1
        %v451 = vrot.slane %v409, 1
        %v452 = vrot.slane %v410, 1
        %vm453 = vcmp.lt.s32.totalorder %v343, 7
        %v454 = vsel %vm453, %v449, %v451
        %v455 = vsel %vm453, %v450, %v452
        %v456 = vsel %vm453, %v447, %v449
        %v457 = vsel %vm453, %v448, %v450
        %v458 = vsel %vm453, %v445, %v447
        %v459 = vsel %vm453, %v446, %v448
        %v460 = vsel %vm453, %v451, %v445
        %v461 = vsel %vm453, %v452, %v446
        %v462 = vsel %vm399, 1, 0
        %v463 = vsel %vm400, 1, 0
        %v464 = vsel %vm401, 1, 0
        %v465 = vsel %vm402, 1, 0
        %vm466 = vcmp.eq.s32.totalorder %v462, 1
        %vm467 = vcmp.eq.s32.totalorder %v463, 1
        %vm468 = vcmp.eq.s32.totalorder %v464, 1
        %vm469 = vcmp.eq.s32.totalorder %v465, 1
        %v470 = vsel %vm466, 0.0, %v458
        %v471 = vsel %vm466, 0.0, %v459
        %v472 = vsel %vm467, 0.0, %v456
        %v473 = vsel %vm467, 0.0, %v457
        %v474 = vsel %vm468, 0.0, %v454
        %v475 = vsel %vm468, 0.0, %v455
        %v476 = vsel %vm469, 0.0, %v460
        %v477 = vsel %vm469, 0.0, %v461
        %v478 = vld [vmem:[#allocation6] sm:$0xff]
        %v479 = vld [vmem:[#allocation6 + $0x8] sm:$0xff]
        %v480 = vld [vmem:[#allocation6 + $0x10] sm:$0xff]
        %v481 = vld [vmem:[#allocation6 + $0x18] sm:$0xff]
        %v482 = vld [vmem:[#allocation6 + $0x20] sm:$0xff]
        %v483 = vld [vmem:[#allocation6 + $0x28] sm:$0xff]
        %v484 = vld [vmem:[#allocation6 + $0x30] sm:$0xff]
        %v485 = vld [vmem:[#allocation6 + $0x38] sm:$0xff]
        %v486 = vld [vmem:[#allocation6 + $0x40] sm:$0xff]
        %v487 = vld [vmem:[#allocation6 + $0x48] sm:$0xff]
        %v488 = vld [vmem:[#allocation6 + $0x50] sm:$0xff]
        %v489 = vld [vmem:[#allocation6 + $0x58] sm:$0xff]
        %v490 = vld [vmem:[#allocation6 + $0x60] sm:$0xff]
        %v491 = vld [vmem:[#allocation6 + $0x68] sm:$0xff]
        %v492 = vld [vmem:[#allocation6 + $0x70] sm:$0xff]
        %v493 = vld [vmem:[#allocation6 + $0x78] sm:$0xff]
        %v494 = vld [vmem:[#allocation6 + $0x80] sm:$0xff]
        %v495 = vld [vmem:[#allocation6 + $0x88] sm:$0xff]
        %v496 = vld [vmem:[#allocation6 + $0x90] sm:$0xff]
        %v497 = vld [vmem:[#allocation6 + $0x98] sm:$0xff]
        %v498 = vld [vmem:[#allocation6 + $0xa0] sm:$0xff]
        %v499 = vld [vmem:[#allocation6 + $0xa8] sm:$0xff]
        %v500 = vld [vmem:[#allocation6 + $0xb0] sm:$0xff]
        %v501 = vld [vmem:[#allocation6 + $0xb8] sm:$0xff]
        %v502 = vld [vmem:[#allocation6 + $0xc0] sm:$0xff]
        %v503 = vld [vmem:[#allocation6 + $0xc8] sm:$0xff]
        %v504 = vld [vmem:[#allocation6 + $0xd0] sm:$0xff]
        %v505 = vld [vmem:[#allocation6 + $0xd8] sm:$0xff]
        %v506 = vld [vmem:[#allocation6 + $0xe0] sm:$0xff]
        %v507 = vld [vmem:[#allocation6 + $0xe8] sm:$0xff]
        %v508 = vld [vmem:[#allocation6 + $0xf0] sm:$0xff]
        %v509 = vld [vmem:[#allocation6 + $0xf8] sm:$0xff]
        %v510 = vld [vmem:[#allocation6 + $0x100] sm:$0xff]
        %v511 = vld [vmem:[#allocation6 + $0x108] sm:$0xff]
        %v512 = vld [vmem:[#allocation6 + $0x110] sm:$0xff]
        %v513 = vld [vmem:[#allocation6 + $0x118] sm:$0xff]
        %v514 = vld [vmem:[#allocation6 + $0x120] sm:$0xff]
        %v515 = vld [vmem:[#allocation6 + $0x128] sm:$0xff]
        %v516 = vld [vmem:[#allocation6 + $0x130] sm:$0xff]
        %v517 = vld [vmem:[#allocation6 + $0x138] sm:$0xff]
        %v518 = vld [vmem:[#allocation6 + $0x140] sm:$0xff]
        %v519 = vld [vmem:[#allocation6 + $0x148] sm:$0xff]
        %v520 = vld [vmem:[#allocation6 + $0x150] sm:$0xff]
        %v521 = vld [vmem:[#allocation6 + $0x158] sm:$0xff]
        %v522 = vld [vmem:[#allocation6 + $0x160] sm:$0xff]
        %v523 = vld [vmem:[#allocation6 + $0x168] sm:$0xff]
        %v524 = vld [vmem:[#allocation6 + $0x170] sm:$0xff]
        %v525 = vld [vmem:[#allocation6 + $0x178] sm:$0xff]
        %v526 = vld [vmem:[#allocation6 + $0x180] sm:$0xff]
        %v527 = vld [vmem:[#allocation6 + $0x188] sm:$0xff]
        %v528 = vld [vmem:[#allocation6 + $0x190] sm:$0xff]
        %v529 = vld [vmem:[#allocation6 + $0x198] sm:$0xff]
        %v530 = vld [vmem:[#allocation6 + $0x1a0] sm:$0xff]
        %v531 = vld [vmem:[#allocation6 + $0x1a8] sm:$0xff]
        %v532 = vld [vmem:[#allocation6 + $0x1b0] sm:$0xff]
        %v533 = vld [vmem:[#allocation6 + $0x1b8] sm:$0xff]
        %v534 = vld [vmem:[#allocation6 + $0x1c0] sm:$0xff]
        %v535 = vld [vmem:[#allocation6 + $0x1c8] sm:$0xff]
        %v536 = vld [vmem:[#allocation6 + $0x1d0] sm:$0xff]
        %v537 = vld [vmem:[#allocation6 + $0x1d8] sm:$0xff]
        %v538 = vld [vmem:[#allocation6 + $0x1e0] sm:$0xff]
        %v539 = vld [vmem:[#allocation6 + $0x1e8] sm:$0xff]
        %v540 = vld [vmem:[#allocation6 + $0x1f0] sm:$0xff]
        %v541 = vld [vmem:[#allocation6 + $0x1f8] sm:$0xff]
        %v542 = vld [vmem:[#allocation6 + $0x200] sm:$0xff]
        %v543 = vld [vmem:[#allocation6 + $0x208] sm:$0xff]
        %v544 = vld [vmem:[#allocation6 + $0x210] sm:$0xff]
        %v545 = vld [vmem:[#allocation6 + $0x218] sm:$0xff]
        %v546 = vld [vmem:[#allocation6 + $0x220] sm:$0xff]
        %v547 = vld [vmem:[#allocation6 + $0x228] sm:$0xff]
        %v548 = vld [vmem:[#allocation6 + $0x230] sm:$0xff]
        %v549 = vld [vmem:[#allocation6 + $0x238] sm:$0xff]
        %v550 = vld [vmem:[#allocation6 + $0x240] sm:$0xff]
        %v551 = vld [vmem:[#allocation6 + $0x248] sm:$0xff]
        %v552 = vld [vmem:[#allocation6 + $0x250] sm:$0xff]
        %v553 = vld [vmem:[#allocation6 + $0x258] sm:$0xff]
        %v554 = vld [vmem:[#allocation6 + $0x260] sm:$0xff]
        %v555 = vld [vmem:[#allocation6 + $0x268] sm:$0xff]
        %v556 = vld [vmem:[#allocation6 + $0x270] sm:$0xff]
        %v557 = vld [vmem:[#allocation6 + $0x278] sm:$0xff]
        %v558 = vld [vmem:[#allocation6 + $0x280] sm:$0xff]
        %v559 = vld [vmem:[#allocation6 + $0x288] sm:$0xff]
        %v560 = vld [vmem:[#allocation6 + $0x290] sm:$0xff]
        %v561 = vld [vmem:[#allocation6 + $0x298] sm:$0xff]
        %v562 = vld [vmem:[#allocation6 + $0x2a0] sm:$0xff]
        %v563 = vld [vmem:[#allocation6 + $0x2a8] sm:$0xff]
        %v564 = vld [vmem:[#allocation6 + $0x2b0] sm:$0xff]
        %v565 = vld [vmem:[#allocation6 + $0x2b8] sm:$0xff]
        %v566 = vld [vmem:[#allocation6 + $0x2c0] sm:$0xff]
        %v567 = vld [vmem:[#allocation6 + $0x2c8] sm:$0xff]
        %v568 = vld [vmem:[#allocation6 + $0x2d0] sm:$0xff]
        %v569 = vld [vmem:[#allocation6 + $0x2d8] sm:$0xff]
        %v570 = vld [vmem:[#allocation6 + $0x2e0] sm:$0xff]
        %v571 = vld [vmem:[#allocation6 + $0x2e8] sm:$0xff]
        %v572 = vld [vmem:[#allocation6 + $0x2f0] sm:$0xff]
        %v573 = vld [vmem:[#allocation6 + $0x2f8] sm:$0xff]
        %v574 = vld [vmem:[#allocation6 + $0x300] sm:$0xff]
        %v575 = vld [vmem:[#allocation6 + $0x308] sm:$0xff]
        %v576 = vld [vmem:[#allocation6 + $0x310] sm:$0xff]
        %v577 = vld [vmem:[#allocation6 + $0x318] sm:$0xff]
        %v578 = vld [vmem:[#allocation6 + $0x320] sm:$0xff]
        %v579 = vld [vmem:[#allocation6 + $0x328] sm:$0xff]
        %v580 = vld [vmem:[#allocation6 + $0x330] sm:$0xff]
        %v581 = vld [vmem:[#allocation6 + $0x338] sm:$0xff]
        %v582 = vld [vmem:[#allocation6 + $0x340] sm:$0xff]
        %v583 = vld [vmem:[#allocation6 + $0x348] sm:$0xff]
        %v584 = vld [vmem:[#allocation6 + $0x350] sm:$0xff]
        %v585 = vld [vmem:[#allocation6 + $0x358] sm:$0xff]
        %v586 = vld [vmem:[#allocation6 + $0x360] sm:$0xff]
        %v587 = vld [vmem:[#allocation6 + $0x368] sm:$0xff]
        %v588 = vld [vmem:[#allocation6 + $0x370] sm:$0xff]
        %v589 = vld [vmem:[#allocation6 + $0x378] sm:$0xff]
        %v590 = vld [vmem:[#allocation6 + $0x380] sm:$0xff]
        %v591 = vld [vmem:[#allocation6 + $0x388] sm:$0xff]
        %v592 = vld [vmem:[#allocation6 + $0x390] sm:$0xff]
        %v593 = vld [vmem:[#allocation6 + $0x398] sm:$0xff]
        %v594 = vld [vmem:[#allocation6 + $0x3a0] sm:$0xff]
        %v595 = vld [vmem:[#allocation6 + $0x3a8] sm:$0xff]
        %v596 = vld [vmem:[#allocation6 + $0x3b0] sm:$0xff]
        %v597 = vld [vmem:[#allocation6 + $0x3b8] sm:$0xff]
        %v598 = vld [vmem:[#allocation6 + $0x3c0] sm:$0xff]
        %v599 = vld [vmem:[#allocation6 + $0x3c8] sm:$0xff]
        %v600 = vld [vmem:[#allocation6 + $0x3d0] sm:$0xff]
        %v601 = vld [vmem:[#allocation6 + $0x3d8] sm:$0xff]
        %v602 = vld [vmem:[#allocation6 + $0x3e0] sm:$0xff]
        %v603 = vld [vmem:[#allocation6 + $0x3e8] sm:$0xff]
        %v604 = vld [vmem:[#allocation6 + $0x3f0] sm:$0xff]
        %v605 = vld [vmem:[#allocation6 + $0x3f8] sm:$0xff]
        %s606 = scalar_lea.vmem [#allocation6], 1024
        %v607 = vld [vmem:[%s606] sm:$0xff]
        %v608 = vld [vmem:[%s606 + $0x8] sm:$0xff]
        %v609 = vld [vmem:[%s606 + $0x10] sm:$0xff]
        %v610 = vld [vmem:[%s606 + $0x18] sm:$0xff]
        %v611 = vld [vmem:[%s606 + $0x20] sm:$0xff]
        %v612 = vld [vmem:[%s606 + $0x28] sm:$0xff]
        %v613 = vld [vmem:[%s606 + $0x30] sm:$0xff]
        %v614 = vld [vmem:[%s606 + $0x38] sm:$0xff]
        %v615 = vld [vmem:[%s606 + $0x40] sm:$0xff]
        %v616 = vld [vmem:[%s606 + $0x48] sm:$0xff]
        %v617 = vld [vmem:[%s606 + $0x50] sm:$0xff]
        %v618 = vld [vmem:[%s606 + $0x58] sm:$0xff]
        %v619 = vld [vmem:[%s606 + $0x60] sm:$0xff]
        %v620 = vld [vmem:[%s606 + $0x68] sm:$0xff]
        %v621 = vld [vmem:[%s606 + $0x70] sm:$0xff]
        %v622 = vld [vmem:[%s606 + $0x78] sm:$0xff]
        %v623 = vld [vmem:[%s606 + $0x80] sm:$0xff]
        %v624 = vld [vmem:[%s606 + $0x88] sm:$0xff]
        %v625 = vld [vmem:[%s606 + $0x90] sm:$0xff]
        %v626 = vld [vmem:[%s606 + $0x98] sm:$0xff]
        %v627 = vld [vmem:[%s606 + $0xa0] sm:$0xff]
        %v628 = vld [vmem:[%s606 + $0xa8] sm:$0xff]
        %v629 = vld [vmem:[%s606 + $0xb0] sm:$0xff]
        %v630 = vld [vmem:[%s606 + $0xb8] sm:$0xff]
        %v631 = vld [vmem:[%s606 + $0xc0] sm:$0xff]
        %v632 = vld [vmem:[%s606 + $0xc8] sm:$0xff]
        %v633 = vld [vmem:[%s606 + $0xd0] sm:$0xff]
        %v634 = vld [vmem:[%s606 + $0xd8] sm:$0xff]
        %v635 = vld [vmem:[%s606 + $0xe0] sm:$0xff]
        %v636 = vld [vmem:[%s606 + $0xe8] sm:$0xff]
        %v637 = vld [vmem:[%s606 + $0xf0] sm:$0xff]
        %v638 = vld [vmem:[%s606 + $0xf8] sm:$0xff]
        %v639 = vld [vmem:[%s606 + $0x100] sm:$0xff]
        %v640 = vld [vmem:[%s606 + $0x108] sm:$0xff]
        %v641 = vld [vmem:[%s606 + $0x110] sm:$0xff]
        %v642 = vld [vmem:[%s606 + $0x118] sm:$0xff]
        %v643 = vld [vmem:[%s606 + $0x120] sm:$0xff]
        %v644 = vld [vmem:[%s606 + $0x128] sm:$0xff]
        %v645 = vld [vmem:[%s606 + $0x130] sm:$0xff]
        %v646 = vld [vmem:[%s606 + $0x138] sm:$0xff]
        %v647 = vld [vmem:[%s606 + $0x140] sm:$0xff]
        %v648 = vld [vmem:[%s606 + $0x148] sm:$0xff]
        %v649 = vld [vmem:[%s606 + $0x150] sm:$0xff]
        %v650 = vld [vmem:[%s606 + $0x158] sm:$0xff]
        %v651 = vld [vmem:[%s606 + $0x160] sm:$0xff]
        %v652 = vld [vmem:[%s606 + $0x168] sm:$0xff]
        %v653 = vld [vmem:[%s606 + $0x170] sm:$0xff]
        %v654 = vld [vmem:[%s606 + $0x178] sm:$0xff]
        %v655 = vld [vmem:[%s606 + $0x180] sm:$0xff]
        %v656 = vld [vmem:[%s606 + $0x188] sm:$0xff]
        %v657 = vld [vmem:[%s606 + $0x190] sm:$0xff]
        %v658 = vld [vmem:[%s606 + $0x198] sm:$0xff]
        %v659 = vld [vmem:[%s606 + $0x1a0] sm:$0xff]
        %v660 = vld [vmem:[%s606 + $0x1a8] sm:$0xff]
        %v661 = vld [vmem:[%s606 + $0x1b0] sm:$0xff]
        %v662 = vld [vmem:[%s606 + $0x1b8] sm:$0xff]
        %v663 = vld [vmem:[%s606 + $0x1c0] sm:$0xff]
        %v664 = vld [vmem:[%s606 + $0x1c8] sm:$0xff]
        %v665 = vld [vmem:[%s606 + $0x1d0] sm:$0xff]
        %v666 = vld [vmem:[%s606 + $0x1d8] sm:$0xff]
        %v667 = vld [vmem:[%s606 + $0x1e0] sm:$0xff]
        %v668 = vld [vmem:[%s606 + $0x1e8] sm:$0xff]
        %v669 = vld [vmem:[%s606 + $0x1f0] sm:$0xff]
        %v670 = vld [vmem:[%s606 + $0x1f8] sm:$0xff]
        %v671 = vld [vmem:[%s606 + $0x200] sm:$0xff]
        %v672 = vld [vmem:[%s606 + $0x208] sm:$0xff]
        %v673 = vld [vmem:[%s606 + $0x210] sm:$0xff]
        %v674 = vld [vmem:[%s606 + $0x218] sm:$0xff]
        %v675 = vld [vmem:[%s606 + $0x220] sm:$0xff]
        %v676 = vld [vmem:[%s606 + $0x228] sm:$0xff]
        %v677 = vld [vmem:[%s606 + $0x230] sm:$0xff]
        %v678 = vld [vmem:[%s606 + $0x238] sm:$0xff]
        %v679 = vld [vmem:[%s606 + $0x240] sm:$0xff]
        %v680 = vld [vmem:[%s606 + $0x248] sm:$0xff]
        %v681 = vld [vmem:[%s606 + $0x250] sm:$0xff]
        %v682 = vld [vmem:[%s606 + $0x258] sm:$0xff]
        %v683 = vld [vmem:[%s606 + $0x260] sm:$0xff]
        %v684 = vld [vmem:[%s606 + $0x268] sm:$0xff]
        %v685 = vld [vmem:[%s606 + $0x270] sm:$0xff]
        %v686 = vld [vmem:[%s606 + $0x278] sm:$0xff]
        %v687 = vld [vmem:[%s606 + $0x280] sm:$0xff]
        %v688 = vld [vmem:[%s606 + $0x288] sm:$0xff]
        %v689 = vld [vmem:[%s606 + $0x290] sm:$0xff]
        %v690 = vld [vmem:[%s606 + $0x298] sm:$0xff]
        %v691 = vld [vmem:[%s606 + $0x2a0] sm:$0xff]
        %v692 = vld [vmem:[%s606 + $0x2a8] sm:$0xff]
        %v693 = vld [vmem:[%s606 + $0x2b0] sm:$0xff]
        %v694 = vld [vmem:[%s606 + $0x2b8] sm:$0xff]
        %v695 = vld [vmem:[%s606 + $0x2c0] sm:$0xff]
        %v696 = vld [vmem:[%s606 + $0x2c8] sm:$0xff]
        %v697 = vld [vmem:[%s606 + $0x2d0] sm:$0xff]
        %v698 = vld [vmem:[%s606 + $0x2d8] sm:$0xff]
        %v699 = vld [vmem:[%s606 + $0x2e0] sm:$0xff]
        %v700 = vld [vmem:[%s606 + $0x2e8] sm:$0xff]
        %v701 = vld [vmem:[%s606 + $0x2f0] sm:$0xff]
        %v702 = vld [vmem:[%s606 + $0x2f8] sm:$0xff]
        %v703 = vld [vmem:[%s606 + $0x300] sm:$0xff]
        %v704 = vld [vmem:[%s606 + $0x308] sm:$0xff]
        %v705 = vld [vmem:[%s606 + $0x310] sm:$0xff]
        %v706 = vld [vmem:[%s606 + $0x318] sm:$0xff]
        %v707 = vld [vmem:[%s606 + $0x320] sm:$0xff]
        %v708 = vld [vmem:[%s606 + $0x328] sm:$0xff]
        %v709 = vld [vmem:[%s606 + $0x330] sm:$0xff]
        %v710 = vld [vmem:[%s606 + $0x338] sm:$0xff]
        %v711 = vld [vmem:[%s606 + $0x340] sm:$0xff]
        %v712 = vld [vmem:[%s606 + $0x348] sm:$0xff]
        %v713 = vld [vmem:[%s606 + $0x350] sm:$0xff]
        %v714 = vld [vmem:[%s606 + $0x358] sm:$0xff]
        %v715 = vld [vmem:[%s606 + $0x360] sm:$0xff]
        %v716 = vld [vmem:[%s606 + $0x368] sm:$0xff]
        %v717 = vld [vmem:[%s606 + $0x370] sm:$0xff]
        %v718 = vld [vmem:[%s606 + $0x378] sm:$0xff]
        %v719 = vld [vmem:[%s606 + $0x380] sm:$0xff]
        %v720 = vld [vmem:[%s606 + $0x388] sm:$0xff]
        %v721 = vld [vmem:[%s606 + $0x390] sm:$0xff]
        %v722 = vld [vmem:[%s606 + $0x398] sm:$0xff]
        %v723 = vld [vmem:[%s606 + $0x3a0] sm:$0xff]
        %v724 = vld [vmem:[%s606 + $0x3a8] sm:$0xff]
        %v725 = vld [vmem:[%s606 + $0x3b0] sm:$0xff]
        %v726 = vld [vmem:[%s606 + $0x3b8] sm:$0xff]
        %v727 = vld [vmem:[%s606 + $0x3c0] sm:$0xff]
        %v728 = vld [vmem:[%s606 + $0x3c8] sm:$0xff]
        %v729 = vld [vmem:[%s606 + $0x3d0] sm:$0xff]
        %v730 = vld [vmem:[%s606 + $0x3d8] sm:$0xff]
        %v731 = vld [vmem:[%s606 + $0x3e0] sm:$0xff]
        %v732 = vld [vmem:[%s606 + $0x3e8] sm:$0xff]
        %v733 = vld [vmem:[%s606 + $0x3f0] sm:$0xff]
        %v734 = vld [vmem:[%s606 + $0x3f8] sm:$0xff]
        %735 = vmatprep.subr.mxu0 %v668
        %736 = vmatpush1.msra.mxu0 %v667
        %737 = vmatprep.subr.mxu0 %v664
        %738 = vmatpush1.msra.mxu0 %v663
        %739 = vmatprep.subr.mxu0 %v660
        %740 = vmatpush1.msra.mxu0 %v659
        %741 = vmatprep.subr.mxu0 %v656
        %742 = vmatpush1.msra.mxu0 %v655
        %743 = vmatprep.subr.mxu0 %v652
        %744 = vmatpush1.msra.mxu0 %v651
        %745 = vmatprep.subr.mxu0 %v648
        %746 = vmatpush1.msra.mxu0 %v647
        %747 = vmatprep.subr.mxu0 %v644
        %748 = vmatpush1.msra.mxu0 %v643
        %749 = vmatprep.subr.mxu0 %v640
        %750 = vmatpush1.msra.mxu0 %v639
        %751 = vmatprep.subr.mxu0 %v636
        %752 = vmatpush1.msra.mxu0 %v635
        %753 = vmatprep.subr.mxu0 %v632
        %754 = vmatpush1.msra.mxu0 %v631
        %755 = vmatprep.subr.mxu0 %v628
        %756 = vmatpush1.msra.mxu0 %v627
        %757 = vmatprep.subr.mxu0 %v624
        %758 = vmatpush1.msra.mxu0 %v623
        %759 = vmatprep.subr.mxu0 %v620
        %760 = vmatpush1.msra.mxu0 %v619
        %761 = vmatprep.subr.mxu0 %v616
        %762 = vmatpush1.msra.mxu0 %v615
        %763 = vmatprep.subr.mxu0 %v612
        %764 = vmatpush1.msra.mxu0 %v611
        %765 = vmatprep.subr.mxu0 %v608
        %766 = vmatpush1.msra.mxu0 %v607
        %767 = vmatprep.subr.mxu0 %v732
        %768 = vmatpush2.msra.mxu0 %v731
        %769 = vmatprep.subr.mxu0 %v728
        %770 = vmatpush2.msra.mxu0 %v727
        %771 = vmatprep.subr.mxu0 %v724
        %772 = vmatpush2.msra.mxu0 %v723
        %773 = vmatprep.subr.mxu0 %v720
        %774 = vmatpush2.msra.mxu0 %v719
        %775 = vmatprep.subr.mxu0 %v716
        %776 = vmatpush2.msra.mxu0 %v715
        %777 = vmatprep.subr.mxu0 %v712
        %778 = vmatpush2.msra.mxu0 %v711
        %779 = vmatprep.subr.mxu0 %v708
        %780 = vmatpush2.msra.mxu0 %v707
        %781 = vmatprep.subr.mxu0 %v704
        %782 = vmatpush2.msra.mxu0 %v703
        %783 = vmatprep.subr.mxu0 %v700
        %784 = vmatpush2.msra.mxu0 %v699
        %785 = vmatprep.subr.mxu0 %v696
        %786 = vmatpush2.msra.mxu0 %v695
        %787 = vmatprep.subr.mxu0 %v692
        %788 = vmatpush2.msra.mxu0 %v691
        %789 = vmatprep.subr.mxu0 %v688
        %790 = vmatpush2.msra.mxu0 %v687
        %791 = vmatprep.subr.mxu0 %v684
        %792 = vmatpush2.msra.mxu0 %v683
        %793 = vmatprep.subr.mxu0 %v680
        %794 = vmatpush2.msra.mxu0 %v679
        %795 = vmatprep.subr.mxu0 %v676
        %796 = vmatpush2.msra.mxu0 %v675
        %797 = vmatprep.subr.mxu0 %v672
        %798 = vmatpush2.msra.mxu0 %v671
        %799 = vmatprep.mubr.f32.mxu0 %v404
        %800 = vmatmul.mubr.f32.gmra.mxu0 %v403
        %v801 = vpop.f32.mrf.mxu0
        %v802 = vadd.f32 0.0, %v801
        %v803 = vpop.f32.mrf.mxu0
        %v804 = vadd.f32 0.0, %v803
        %805 = vmatprep.mubr.f32.mxu0 %v406
        %806 = vmatmul.mubr.f32.gmra.mxu0 %v405
        %v807 = vpop.f32.mrf.mxu0
        %v808 = vadd.f32 0.0, %v807
        %v809 = vpop.f32.mrf.mxu0
        %v810 = vadd.f32 0.0, %v809
        %811 = vmatprep.mubr.f32.mxu0 %v408
        %812 = vmatmul.mubr.f32.gmra.mxu0 %v407
        %v813 = vpop.f32.mrf.mxu0
        %v814 = vadd.f32 0.0, %v813
        %v815 = vpop.f32.mrf.mxu0
        %v816 = vadd.f32 0.0, %v815
        %817 = vmatprep.mubr.f32.mxu0 %v410
        %818 = vmatmul.mubr.f32.gmra.mxu0 %v409
        %v819 = vpop.f32.mrf.mxu0
        %v820 = vadd.f32 0.0, %v819
        %v821 = vpop.f32.mrf.mxu0
        %v822 = vadd.f32 0.0, %v821
        %823 = vdwg.mxu0
        %824 = vmatprep.subr.mxu0 %v670
        %825 = vmatpush1.msra.mxu0 %v669
        %826 = vmatprep.subr.mxu0 %v666
        %827 = vmatpush1.msra.mxu0 %v665
        %828 = vmatprep.subr.mxu0 %v662
        %829 = vmatpush1.msra.mxu0 %v661
        %830 = vmatprep.subr.mxu0 %v658
        %831 = vmatpush1.msra.mxu0 %v657
        %832 = vmatprep.subr.mxu0 %v654
        %833 = vmatpush1.msra.mxu0 %v653
        %834 = vmatprep.subr.mxu0 %v650
        %835 = vmatpush1.msra.mxu0 %v649
        %836 = vmatprep.subr.mxu0 %v646
        %837 = vmatpush1.msra.mxu0 %v645
        %838 = vmatprep.subr.mxu0 %v642
        %839 = vmatpush1.msra.mxu0 %v641
        %840 = vmatprep.subr.mxu0 %v638
        %841 = vmatpush1.msra.mxu0 %v637
        %842 = vmatprep.subr.mxu0 %v634
        %843 = vmatpush1.msra.mxu0 %v633
        %844 = vmatprep.subr.mxu0 %v630
        %845 = vmatpush1.msra.mxu0 %v629
        %846 = vmatprep.subr.mxu0 %v626
        %847 = vmatpush1.msra.mxu0 %v625
        %848 = vmatprep.subr.mxu0 %v622
        %849 = vmatpush1.msra.mxu0 %v621
        %850 = vmatprep.subr.mxu0 %v618
        %851 = vmatpush1.msra.mxu0 %v617
        %852 = vmatprep.subr.mxu0 %v614
        %853 = vmatpush1.msra.mxu0 %v613
        %854 = vmatprep.subr.mxu0 %v610
        %855 = vmatpush1.msra.mxu0 %v609
        %856 = vmatprep.subr.mxu0 %v734
        %857 = vmatpush2.msra.mxu0 %v733
        %858 = vmatprep.subr.mxu0 %v730
        %859 = vmatpush2.msra.mxu0 %v729
        %860 = vmatprep.subr.mxu0 %v726
        %861 = vmatpush2.msra.mxu0 %v725
        %862 = vmatprep.subr.mxu0 %v722
        %863 = vmatpush2.msra.mxu0 %v721
        %864 = vmatprep.subr.mxu0 %v718
        %865 = vmatpush2.msra.mxu0 %v717
        %866 = vmatprep.subr.mxu0 %v714
        %867 = vmatpush2.msra.mxu0 %v713
        %868 = vmatprep.subr.mxu0 %v710
        %869 = vmatpush2.msra.mxu0 %v709
        %870 = vmatprep.subr.mxu0 %v706
        %871 = vmatpush2.msra.mxu0 %v705
        %872 = vmatprep.subr.mxu0 %v702
        %873 = vmatpush2.msra.mxu0 %v701
        %874 = vmatprep.subr.mxu0 %v698
        %875 = vmatpush2.msra.mxu0 %v697
        %876 = vmatprep.subr.mxu0 %v694
        %877 = vmatpush2.msra.mxu0 %v693
        %878 = vmatprep.subr.mxu0 %v690
        %879 = vmatpush2.msra.mxu0 %v689
        %880 = vmatprep.subr.mxu0 %v686
        %881 = vmatpush2.msra.mxu0 %v685
        %882 = vmatprep.subr.mxu0 %v682
        %883 = vmatpush2.msra.mxu0 %v681
        %884 = vmatprep.subr.mxu0 %v678
        %885 = vmatpush2.msra.mxu0 %v677
        %886 = vmatprep.subr.mxu0 %v674
        %887 = vmatpush2.msra.mxu0 %v673
        %888 = vmatprep.mubr.f32.mxu0 %v404
        %889 = vmatmul.mubr.f32.gmra.mxu0 %v403
        %v890 = vpop.f32.mrf.mxu0
        %v891 = vadd.f32 0.0, %v890
        %v892 = vpop.f32.mrf.mxu0
        %v893 = vadd.f32 0.0, %v892
        %894 = vmatprep.mubr.f32.mxu0 %v406
        %895 = vmatmul.mubr.f32.gmra.mxu0 %v405
        %v896 = vpop.f32.mrf.mxu0
        %v897 = vadd.f32 0.0, %v896
        %v898 = vpop.f32.mrf.mxu0
        %v899 = vadd.f32 0.0, %v898
        %900 = vmatprep.mubr.f32.mxu0 %v408
        %901 = vmatmul.mubr.f32.gmra.mxu0 %v407
        %v902 = vpop.f32.mrf.mxu0
        %v903 = vadd.f32 0.0, %v902
        %v904 = vpop.f32.mrf.mxu0
        %v905 = vadd.f32 0.0, %v904
        %906 = vmatprep.mubr.f32.mxu0 %v410
        %907 = vmatmul.mubr.f32.gmra.mxu0 %v409
        %v908 = vpop.f32.mrf.mxu0
        %v909 = vadd.f32 0.0, %v908
        %v910 = vpop.f32.mrf.mxu0
        %v911 = vadd.f32 0.0, %v910
        %912 = vdwg.mxu0
        %913 = vmatprep.subr.mxu0 %v539
        %914 = vmatpush1.msra.mxu0 %v538
        %915 = vmatprep.subr.mxu0 %v535
        %916 = vmatpush1.msra.mxu0 %v534
        %917 = vmatprep.subr.mxu0 %v531
        %918 = vmatpush1.msra.mxu0 %v530
        %919 = vmatprep.subr.mxu0 %v527
        %920 = vmatpush1.msra.mxu0 %v526
        %921 = vmatprep.subr.mxu0 %v523
        %922 = vmatpush1.msra.mxu0 %v522
        %923 = vmatprep.subr.mxu0 %v519
        %924 = vmatpush1.msra.mxu0 %v518
        %925 = vmatprep.subr.mxu0 %v515
        %926 = vmatpush1.msra.mxu0 %v514
        %927 = vmatprep.subr.mxu0 %v511
        %928 = vmatpush1.msra.mxu0 %v510
        %929 = vmatprep.subr.mxu0 %v507
        %930 = vmatpush1.msra.mxu0 %v506
        %931 = vmatprep.subr.mxu0 %v503
        %932 = vmatpush1.msra.mxu0 %v502
        %933 = vmatprep.subr.mxu0 %v499
        %934 = vmatpush1.msra.mxu0 %v498
        %935 = vmatprep.subr.mxu0 %v495
        %936 = vmatpush1.msra.mxu0 %v494
        %937 = vmatprep.subr.mxu0 %v491
        %938 = vmatpush1.msra.mxu0 %v490
        %939 = vmatprep.subr.mxu0 %v487
        %940 = vmatpush1.msra.mxu0 %v486
        %941 = vmatprep.subr.mxu0 %v483
        %942 = vmatpush1.msra.mxu0 %v482
        %943 = vmatprep.subr.mxu0 %v479
        %944 = vmatpush1.msra.mxu0 %v478
        %945 = vmatprep.subr.mxu0 %v603
        %946 = vmatpush2.msra.mxu0 %v602
        %947 = vmatprep.subr.mxu0 %v599
        %948 = vmatpush2.msra.mxu0 %v598
        %949 = vmatprep.subr.mxu0 %v595
        %950 = vmatpush2.msra.mxu0 %v594
        %951 = vmatprep.subr.mxu0 %v591
        %952 = vmatpush2.msra.mxu0 %v590
        %953 = vmatprep.subr.mxu0 %v587
        %954 = vmatpush2.msra.mxu0 %v586
        %955 = vmatprep.subr.mxu0 %v583
        %956 = vmatpush2.msra.mxu0 %v582
        %957 = vmatprep.subr.mxu0 %v579
        %958 = vmatpush2.msra.mxu0 %v578
        %959 = vmatprep.subr.mxu0 %v575
        %960 = vmatpush2.msra.mxu0 %v574
        %961 = vmatprep.subr.mxu0 %v571
        %962 = vmatpush2.msra.mxu0 %v570
        %963 = vmatprep.subr.mxu0 %v567
        %964 = vmatpush2.msra.mxu0 %v566
        %965 = vmatprep.subr.mxu0 %v563
        %966 = vmatpush2.msra.mxu0 %v562
        %967 = vmatprep.subr.mxu0 %v559
        %968 = vmatpush2.msra.mxu0 %v558
        %969 = vmatprep.subr.mxu0 %v555
        %970 = vmatpush2.msra.mxu0 %v554
        %971 = vmatprep.subr.mxu0 %v551
        %972 = vmatpush2.msra.mxu0 %v550
        %973 = vmatprep.subr.mxu0 %v547
        %974 = vmatpush2.msra.mxu0 %v546
        %975 = vmatprep.subr.mxu0 %v543
        %976 = vmatpush2.msra.mxu0 %v542
        %977 = vmatprep.mubr.f32.mxu0 %v438
        %978 = vmatmul.mubr.f32.gmra.mxu0 %v437
        %v979 = vpop.f32.mrf.mxu0
        %v980 = vadd.f32 %v802, %v979
        %v981 = vpop.f32.mrf.mxu0
        %v982 = vadd.f32 %v804, %v981
        %983 = vmatprep.mubr.f32.mxu0 %v440
        %984 = vmatmul.mubr.f32.gmra.mxu0 %v439
        %v985 = vpop.f32.mrf.mxu0
        %v986 = vadd.f32 %v808, %v985
        %v987 = vpop.f32.mrf.mxu0
        %v988 = vadd.f32 %v810, %v987
        %989 = vmatprep.mubr.f32.mxu0 %v442
        %990 = vmatmul.mubr.f32.gmra.mxu0 %v441
        %v991 = vpop.f32.mrf.mxu0
        %v992 = vadd.f32 %v814, %v991
        %v993 = vpop.f32.mrf.mxu0
        %v994 = vadd.f32 %v816, %v993
        %995 = vmatprep.mubr.f32.mxu0 %v444
        %996 = vmatmul.mubr.f32.gmra.mxu0 %v443
        %v997 = vpop.f32.mrf.mxu0
        %v998 = vadd.f32 %v820, %v997
        %v999 = vpop.f32.mrf.mxu0
        %v1000 = vadd.f32 %v822, %v999
        %1001 = vdwg.mxu0
        %1002 = vmatprep.subr.mxu0 %v541
        %1003 = vmatpush1.msra.mxu0 %v540
        %1004 = vmatprep.subr.mxu0 %v537
        %1005 = vmatpush1.msra.mxu0 %v536
        %1006 = vmatprep.subr.mxu0 %v533
        %1007 = vmatpush1.msra.mxu0 %v532
        %1008 = vmatprep.subr.mxu0 %v529
        %1009 = vmatpush1.msra.mxu0 %v528
        %1010 = vmatprep.subr.mxu0 %v525
        %1011 = vmatpush1.msra.mxu0 %v524
        %1012 = vmatprep.subr.mxu0 %v521
        %1013 = vmatpush1.msra.mxu0 %v520
        %1014 = vmatprep.subr.mxu0 %v517
        %1015 = vmatpush1.msra.mxu0 %v516
        %1016 = vmatprep.subr.mxu0 %v513
        %1017 = vmatpush1.msra.mxu0 %v512
        %1018 = vmatprep.subr.mxu0 %v509
        %1019 = vmatpush1.msra.mxu0 %v508
        %1020 = vmatprep.subr.mxu0 %v505
        %1021 = vmatpush1.msra.mxu0 %v504
        %1022 = vmatprep.subr.mxu0 %v501
        %1023 = vmatpush1.msra.mxu0 %v500
        %1024 = vmatprep.subr.mxu0 %v497
        %1025 = vmatpush1.msra.mxu0 %v496
        %1026 = vmatprep.subr.mxu0 %v493
        %1027 = vmatpush1.msra.mxu0 %v492
        %1028 = vmatprep.subr.mxu0 %v489
        %1029 = vmatpush1.msra.mxu0 %v488
        %1030 = vmatprep.subr.mxu0 %v485
        %1031 = vmatpush1.msra.mxu0 %v484
        %1032 = vmatprep.subr.mxu0 %v481
        %1033 = vmatpush1.msra.mxu0 %v480
        %1034 = vmatprep.subr.mxu0 %v605
        %1035 = vmatpush2.msra.mxu0 %v604
        %1036 = vmatprep.subr.mxu0 %v601
        %1037 = vmatpush2.msra.mxu0 %v600
        %1038 = vmatprep.subr.mxu0 %v597
        %1039 = vmatpush2.msra.mxu0 %v596
        %1040 = vmatprep.subr.mxu0 %v593
        %1041 = vmatpush2.msra.mxu0 %v592
        %1042 = vmatprep.subr.mxu0 %v589
        %1043 = vmatpush2.msra.mxu0 %v588
        %1044 = vmatprep.subr.mxu0 %v585
        %1045 = vmatpush2.msra.mxu0 %v584
        %1046 = vmatprep.subr.mxu0 %v581
        %1047 = vmatpush2.msra.mxu0 %v580
        %1048 = vmatprep.subr.mxu0 %v577
        %1049 = vmatpush2.msra.mxu0 %v576
        %1050 = vmatprep.subr.mxu0 %v573
        %1051 = vmatpush2.msra.mxu0 %v572
        %1052 = vmatprep.subr.mxu0 %v569
        %1053 = vmatpush2.msra.mxu0 %v568
        %1054 = vmatprep.subr.mxu0 %v565
        %1055 = vmatpush2.msra.mxu0 %v564
        %1056 = vmatprep.subr.mxu0 %v561
        %1057 = vmatpush2.msra.mxu0 %v560
        %1058 = vmatprep.subr.mxu0 %v557
        %1059 = vmatpush2.msra.mxu0 %v556
        %1060 = vmatprep.subr.mxu0 %v553
        %1061 = vmatpush2.msra.mxu0 %v552
        %1062 = vmatprep.subr.mxu0 %v549
        %1063 = vmatpush2.msra.mxu0 %v548
        %1064 = vmatprep.subr.mxu0 %v545
        %1065 = vmatpush2.msra.mxu0 %v544
        %1066 = vmatprep.mubr.f32.mxu0 %v438
        %1067 = vmatmul.mubr.f32.gmra.mxu0 %v437
        %v1068 = vpop.f32.mrf.mxu0
        %v1069 = vadd.f32 %v891, %v1068
        %v1070 = vpop.f32.mrf.mxu0
        %v1071 = vadd.f32 %v893, %v1070
        %1072 = vmatprep.mubr.f32.mxu0 %v440
        %1073 = vmatmul.mubr.f32.gmra.mxu0 %v439
        %v1074 = vpop.f32.mrf.mxu0
        %v1075 = vadd.f32 %v897, %v1074
        %v1076 = vpop.f32.mrf.mxu0
        %v1077 = vadd.f32 %v899, %v1076
        %1078 = vmatprep.mubr.f32.mxu0 %v442
        %1079 = vmatmul.mubr.f32.gmra.mxu0 %v441
        %v1080 = vpop.f32.mrf.mxu0
        %v1081 = vadd.f32 %v903, %v1080
        %v1082 = vpop.f32.mrf.mxu0
        %v1083 = vadd.f32 %v905, %v1082
        %1084 = vmatprep.mubr.f32.mxu0 %v444
        %1085 = vmatmul.mubr.f32.gmra.mxu0 %v443
        %v1086 = vpop.f32.mrf.mxu0
        %v1087 = vadd.f32 %v909, %v1086
        %v1088 = vpop.f32.mrf.mxu0
        %v1089 = vadd.f32 %v911, %v1088
        %1090 = vdwg.mxu0
        %s1091 = scalar_lea.vmem [#allocation6], 2048
        %v1092 = vld [vmem:[%s1091] sm:$0xff]
        %v1093 = vld [vmem:[%s1091 + $0x8] sm:$0xff]
        %v1094 = vld [vmem:[%s1091 + $0x10] sm:$0xff]
        %v1095 = vld [vmem:[%s1091 + $0x18] sm:$0xff]
        %v1096 = vld [vmem:[%s1091 + $0x20] sm:$0xff]
        %v1097 = vld [vmem:[%s1091 + $0x28] sm:$0xff]
        %v1098 = vld [vmem:[%s1091 + $0x30] sm:$0xff]
        %v1099 = vld [vmem:[%s1091 + $0x38] sm:$0xff]
        %v1100 = vld [vmem:[%s1091 + $0x40] sm:$0xff]
        %v1101 = vld [vmem:[%s1091 + $0x48] sm:$0xff]
        %v1102 = vld [vmem:[%s1091 + $0x50] sm:$0xff]
        %v1103 = vld [vmem:[%s1091 + $0x58] sm:$0xff]
        %v1104 = vld [vmem:[%s1091 + $0x60] sm:$0xff]
        %v1105 = vld [vmem:[%s1091 + $0x68] sm:$0xff]
        %v1106 = vld [vmem:[%s1091 + $0x70] sm:$0xff]
        %v1107 = vld [vmem:[%s1091 + $0x78] sm:$0xff]
        %v1108 = vld [vmem:[%s1091 + $0x80] sm:$0xff]
        %v1109 = vld [vmem:[%s1091 + $0x88] sm:$0xff]
        %v1110 = vld [vmem:[%s1091 + $0x90] sm:$0xff]
        %v1111 = vld [vmem:[%s1091 + $0x98] sm:$0xff]
        %v1112 = vld [vmem:[%s1091 + $0xa0] sm:$0xff]
        %v1113 = vld [vmem:[%s1091 + $0xa8] sm:$0xff]
        %v1114 = vld [vmem:[%s1091 + $0xb0] sm:$0xff]
        %v1115 = vld [vmem:[%s1091 + $0xb8] sm:$0xff]
        %v1116 = vld [vmem:[%s1091 + $0xc0] sm:$0xff]
        %v1117 = vld [vmem:[%s1091 + $0xc8] sm:$0xff]
        %v1118 = vld [vmem:[%s1091 + $0xd0] sm:$0xff]
        %v1119 = vld [vmem:[%s1091 + $0xd8] sm:$0xff]
        %v1120 = vld [vmem:[%s1091 + $0xe0] sm:$0xff]
        %v1121 = vld [vmem:[%s1091 + $0xe8] sm:$0xff]
        %v1122 = vld [vmem:[%s1091 + $0xf0] sm:$0xff]
        %v1123 = vld [vmem:[%s1091 + $0xf8] sm:$0xff]
        %v1124 = vld [vmem:[%s1091 + $0x100] sm:$0xff]
        %v1125 = vld [vmem:[%s1091 + $0x108] sm:$0xff]
        %v1126 = vld [vmem:[%s1091 + $0x110] sm:$0xff]
        %v1127 = vld [vmem:[%s1091 + $0x118] sm:$0xff]
        %v1128 = vld [vmem:[%s1091 + $0x120] sm:$0xff]
        %v1129 = vld [vmem:[%s1091 + $0x128] sm:$0xff]
        %v1130 = vld [vmem:[%s1091 + $0x130] sm:$0xff]
        %v1131 = vld [vmem:[%s1091 + $0x138] sm:$0xff]
        %v1132 = vld [vmem:[%s1091 + $0x140] sm:$0xff]
        %v1133 = vld [vmem:[%s1091 + $0x148] sm:$0xff]
        %v1134 = vld [vmem:[%s1091 + $0x150] sm:$0xff]
        %v1135 = vld [vmem:[%s1091 + $0x158] sm:$0xff]
        %v1136 = vld [vmem:[%s1091 + $0x160] sm:$0xff]
        %v1137 = vld [vmem:[%s1091 + $0x168] sm:$0xff]
        %v1138 = vld [vmem:[%s1091 + $0x170] sm:$0xff]
        %v1139 = vld [vmem:[%s1091 + $0x178] sm:$0xff]
        %v1140 = vld [vmem:[%s1091 + $0x180] sm:$0xff]
        %v1141 = vld [vmem:[%s1091 + $0x188] sm:$0xff]
        %v1142 = vld [vmem:[%s1091 + $0x190] sm:$0xff]
        %v1143 = vld [vmem:[%s1091 + $0x198] sm:$0xff]
        %v1144 = vld [vmem:[%s1091 + $0x1a0] sm:$0xff]
        %v1145 = vld [vmem:[%s1091 + $0x1a8] sm:$0xff]
        %v1146 = vld [vmem:[%s1091 + $0x1b0] sm:$0xff]
        %v1147 = vld [vmem:[%s1091 + $0x1b8] sm:$0xff]
        %v1148 = vld [vmem:[%s1091 + $0x1c0] sm:$0xff]
        %v1149 = vld [vmem:[%s1091 + $0x1c8] sm:$0xff]
        %v1150 = vld [vmem:[%s1091 + $0x1d0] sm:$0xff]
        %v1151 = vld [vmem:[%s1091 + $0x1d8] sm:$0xff]
        %v1152 = vld [vmem:[%s1091 + $0x1e0] sm:$0xff]
        %v1153 = vld [vmem:[%s1091 + $0x1e8] sm:$0xff]
        %v1154 = vld [vmem:[%s1091 + $0x1f0] sm:$0xff]
        %v1155 = vld [vmem:[%s1091 + $0x1f8] sm:$0xff]
        %v1156 = vld [vmem:[%s1091 + $0x200] sm:$0xff]
        %v1157 = vld [vmem:[%s1091 + $0x208] sm:$0xff]
        %v1158 = vld [vmem:[%s1091 + $0x210] sm:$0xff]
        %v1159 = vld [vmem:[%s1091 + $0x218] sm:$0xff]
        %v1160 = vld [vmem:[%s1091 + $0x220] sm:$0xff]
        %v1161 = vld [vmem:[%s1091 + $0x228] sm:$0xff]
        %v1162 = vld [vmem:[%s1091 + $0x230] sm:$0xff]
        %v1163 = vld [vmem:[%s1091 + $0x238] sm:$0xff]
        %v1164 = vld [vmem:[%s1091 + $0x240] sm:$0xff]
        %v1165 = vld [vmem:[%s1091 + $0x248] sm:$0xff]
        %v1166 = vld [vmem:[%s1091 + $0x250] sm:$0xff]
        %v1167 = vld [vmem:[%s1091 + $0x258] sm:$0xff]
        %v1168 = vld [vmem:[%s1091 + $0x260] sm:$0xff]
        %v1169 = vld [vmem:[%s1091 + $0x268] sm:$0xff]
        %v1170 = vld [vmem:[%s1091 + $0x270] sm:$0xff]
        %v1171 = vld [vmem:[%s1091 + $0x278] sm:$0xff]
        %v1172 = vld [vmem:[%s1091 + $0x280] sm:$0xff]
        %v1173 = vld [vmem:[%s1091 + $0x288] sm:$0xff]
        %v1174 = vld [vmem:[%s1091 + $0x290] sm:$0xff]
        %v1175 = vld [vmem:[%s1091 + $0x298] sm:$0xff]
        %v1176 = vld [vmem:[%s1091 + $0x2a0] sm:$0xff]
        %v1177 = vld [vmem:[%s1091 + $0x2a8] sm:$0xff]
        %v1178 = vld [vmem:[%s1091 + $0x2b0] sm:$0xff]
        %v1179 = vld [vmem:[%s1091 + $0x2b8] sm:$0xff]
        %v1180 = vld [vmem:[%s1091 + $0x2c0] sm:$0xff]
        %v1181 = vld [vmem:[%s1091 + $0x2c8] sm:$0xff]
        %v1182 = vld [vmem:[%s1091 + $0x2d0] sm:$0xff]
        %v1183 = vld [vmem:[%s1091 + $0x2d8] sm:$0xff]
        %v1184 = vld [vmem:[%s1091 + $0x2e0] sm:$0xff]
        %v1185 = vld [vmem:[%s1091 + $0x2e8] sm:$0xff]
        %v1186 = vld [vmem:[%s1091 + $0x2f0] sm:$0xff]
        %v1187 = vld [vmem:[%s1091 + $0x2f8] sm:$0xff]
        %v1188 = vld [vmem:[%s1091 + $0x300] sm:$0xff]
        %v1189 = vld [vmem:[%s1091 + $0x308] sm:$0xff]
        %v1190 = vld [vmem:[%s1091 + $0x310] sm:$0xff]
        %v1191 = vld [vmem:[%s1091 + $0x318] sm:$0xff]
        %v1192 = vld [vmem:[%s1091 + $0x320] sm:$0xff]
        %v1193 = vld [vmem:[%s1091 + $0x328] sm:$0xff]
        %v1194 = vld [vmem:[%s1091 + $0x330] sm:$0xff]
        %v1195 = vld [vmem:[%s1091 + $0x338] sm:$0xff]
        %v1196 = vld [vmem:[%s1091 + $0x340] sm:$0xff]
        %v1197 = vld [vmem:[%s1091 + $0x348] sm:$0xff]
        %v1198 = vld [vmem:[%s1091 + $0x350] sm:$0xff]
        %v1199 = vld [vmem:[%s1091 + $0x358] sm:$0xff]
        %v1200 = vld [vmem:[%s1091 + $0x360] sm:$0xff]
        %v1201 = vld [vmem:[%s1091 + $0x368] sm:$0xff]
        %v1202 = vld [vmem:[%s1091 + $0x370] sm:$0xff]
        %v1203 = vld [vmem:[%s1091 + $0x378] sm:$0xff]
        %v1204 = vld [vmem:[%s1091 + $0x380] sm:$0xff]
        %v1205 = vld [vmem:[%s1091 + $0x388] sm:$0xff]
        %v1206 = vld [vmem:[%s1091 + $0x390] sm:$0xff]
        %v1207 = vld [vmem:[%s1091 + $0x398] sm:$0xff]
        %v1208 = vld [vmem:[%s1091 + $0x3a0] sm:$0xff]
        %v1209 = vld [vmem:[%s1091 + $0x3a8] sm:$0xff]
        %v1210 = vld [vmem:[%s1091 + $0x3b0] sm:$0xff]
        %v1211 = vld [vmem:[%s1091 + $0x3b8] sm:$0xff]
        %v1212 = vld [vmem:[%s1091 + $0x3c0] sm:$0xff]
        %v1213 = vld [vmem:[%s1091 + $0x3c8] sm:$0xff]
        %v1214 = vld [vmem:[%s1091 + $0x3d0] sm:$0xff]
        %v1215 = vld [vmem:[%s1091 + $0x3d8] sm:$0xff]
        %v1216 = vld [vmem:[%s1091 + $0x3e0] sm:$0xff]
        %v1217 = vld [vmem:[%s1091 + $0x3e8] sm:$0xff]
        %v1218 = vld [vmem:[%s1091 + $0x3f0] sm:$0xff]
        %v1219 = vld [vmem:[%s1091 + $0x3f8] sm:$0xff]
        %1220 = vmatprep.subr.mxu0 %v1153
        %1221 = vmatpush1.msra.mxu0 %v1152
        %1222 = vmatprep.subr.mxu0 %v1149
        %1223 = vmatpush1.msra.mxu0 %v1148
        %1224 = vmatprep.subr.mxu0 %v1145
        %1225 = vmatpush1.msra.mxu0 %v1144
        %1226 = vmatprep.subr.mxu0 %v1141
        %1227 = vmatpush1.msra.mxu0 %v1140
        %1228 = vmatprep.subr.mxu0 %v1137
        %1229 = vmatpush1.msra.mxu0 %v1136
        %1230 = vmatprep.subr.mxu0 %v1133
        %1231 = vmatpush1.msra.mxu0 %v1132
        %1232 = vmatprep.subr.mxu0 %v1129
        %1233 = vmatpush1.msra.mxu0 %v1128
        %1234 = vmatprep.subr.mxu0 %v1125
        %1235 = vmatpush1.msra.mxu0 %v1124
        %1236 = vmatprep.subr.mxu0 %v1121
        %1237 = vmatpush1.msra.mxu0 %v1120
        %1238 = vmatprep.subr.mxu0 %v1117
        %1239 = vmatpush1.msra.mxu0 %v1116
        %1240 = vmatprep.subr.mxu0 %v1113
        %1241 = vmatpush1.msra.mxu0 %v1112
        %1242 = vmatprep.subr.mxu0 %v1109
        %1243 = vmatpush1.msra.mxu0 %v1108
        %1244 = vmatprep.subr.mxu0 %v1105
        %1245 = vmatpush1.msra.mxu0 %v1104
        %1246 = vmatprep.subr.mxu0 %v1101
        %1247 = vmatpush1.msra.mxu0 %v1100
        %1248 = vmatprep.subr.mxu0 %v1097
        %1249 = vmatpush1.msra.mxu0 %v1096
        %1250 = vmatprep.subr.mxu0 %v1093
        %1251 = vmatpush1.msra.mxu0 %v1092
        %1252 = vmatprep.subr.mxu0 %v1217
        %1253 = vmatpush2.msra.mxu0 %v1216
        %1254 = vmatprep.subr.mxu0 %v1213
        %1255 = vmatpush2.msra.mxu0 %v1212
        %1256 = vmatprep.subr.mxu0 %v1209
        %1257 = vmatpush2.msra.mxu0 %v1208
        %1258 = vmatprep.subr.mxu0 %v1205
        %1259 = vmatpush2.msra.mxu0 %v1204
        %1260 = vmatprep.subr.mxu0 %v1201
        %1261 = vmatpush2.msra.mxu0 %v1200
        %1262 = vmatprep.subr.mxu0 %v1197
        %1263 = vmatpush2.msra.mxu0 %v1196
        %1264 = vmatprep.subr.mxu0 %v1193
        %1265 = vmatpush2.msra.mxu0 %v1192
        %1266 = vmatprep.subr.mxu0 %v1189
        %1267 = vmatpush2.msra.mxu0 %v1188
        %1268 = vmatprep.subr.mxu0 %v1185
        %1269 = vmatpush2.msra.mxu0 %v1184
        %1270 = vmatprep.subr.mxu0 %v1181
        %1271 = vmatpush2.msra.mxu0 %v1180
        %1272 = vmatprep.subr.mxu0 %v1177
        %1273 = vmatpush2.msra.mxu0 %v1176
        %1274 = vmatprep.subr.mxu0 %v1173
        %1275 = vmatpush2.msra.mxu0 %v1172
        %1276 = vmatprep.subr.mxu0 %v1169
        %1277 = vmatpush2.msra.mxu0 %v1168
        %1278 = vmatprep.subr.mxu0 %v1165
        %1279 = vmatpush2.msra.mxu0 %v1164
        %1280 = vmatprep.subr.mxu0 %v1161
        %1281 = vmatpush2.msra.mxu0 %v1160
        %1282 = vmatprep.subr.mxu0 %v1157
        %1283 = vmatpush2.msra.mxu0 %v1156
        %1284 = vmatprep.mubr.f32.mxu0 %v471
        %1285 = vmatmul.mubr.f32.gmra.mxu0 %v470
        %v1286 = vpop.f32.mrf.mxu0
        %v1287 = vadd.f32 0.0, %v1286
        %v1288 = vpop.f32.mrf.mxu0
        %v1289 = vadd.f32 0.0, %v1288
        %1290 = vmatprep.mubr.f32.mxu0 %v473
        %1291 = vmatmul.mubr.f32.gmra.mxu0 %v472
        %v1292 = vpop.f32.mrf.mxu0
        %v1293 = vadd.f32 0.0, %v1292
        %v1294 = vpop.f32.mrf.mxu0
        %v1295 = vadd.f32 0.0, %v1294
        %1296 = vmatprep.mubr.f32.mxu0 %v475
        %1297 = vmatmul.mubr.f32.gmra.mxu0 %v474
        %v1298 = vpop.f32.mrf.mxu0
        %v1299 = vadd.f32 0.0, %v1298
        %v1300 = vpop.f32.mrf.mxu0
        %v1301 = vadd.f32 0.0, %v1300
        %1302 = vmatprep.mubr.f32.mxu0 %v477
        %1303 = vmatmul.mubr.f32.gmra.mxu0 %v476
        %v1304 = vpop.f32.mrf.mxu0
        %v1305 = vadd.f32 0.0, %v1304
        %v1306 = vpop.f32.mrf.mxu0
        %v1307 = vadd.f32 0.0, %v1306
        %1308 = vdwg.mxu0
        %1309 = vmatprep.subr.mxu0 %v1155
        %1310 = vmatpush1.msra.mxu0 %v1154
        %1311 = vmatprep.subr.mxu0 %v1151
        %1312 = vmatpush1.msra.mxu0 %v1150
        %1313 = vmatprep.subr.mxu0 %v1147
        %1314 = vmatpush1.msra.mxu0 %v1146
        %1315 = vmatprep.subr.mxu0 %v1143
        %1316 = vmatpush1.msra.mxu0 %v1142
        %1317 = vmatprep.subr.mxu0 %v1139
        %1318 = vmatpush1.msra.mxu0 %v1138
        %1319 = vmatprep.subr.mxu0 %v1135
        %1320 = vmatpush1.msra.mxu0 %v1134
        %1321 = vmatprep.subr.mxu0 %v1131
        %1322 = vmatpush1.msra.mxu0 %v1130
        %1323 = vmatprep.subr.mxu0 %v1127
        %1324 = vmatpush1.msra.mxu0 %v1126
        %1325 = vmatprep.subr.mxu0 %v1123
        %1326 = vmatpush1.msra.mxu0 %v1122
        %1327 = vmatprep.subr.mxu0 %v1119
        %1328 = vmatpush1.msra.mxu0 %v1118
        %1329 = vmatprep.subr.mxu0 %v1115
        %1330 = vmatpush1.msra.mxu0 %v1114
        %1331 = vmatprep.subr.mxu0 %v1111
        %1332 = vmatpush1.msra.mxu0 %v1110
        %1333 = vmatprep.subr.mxu0 %v1107
        %1334 = vmatpush1.msra.mxu0 %v1106
        %1335 = vmatprep.subr.mxu0 %v1103
        %1336 = vmatpush1.msra.mxu0 %v1102
        %1337 = vmatprep.subr.mxu0 %v1099
        %1338 = vmatpush1.msra.mxu0 %v1098
        %1339 = vmatprep.subr.mxu0 %v1095
        %1340 = vmatpush1.msra.mxu0 %v1094
        %1341 = vmatprep.subr.mxu0 %v1219
        %1342 = vmatpush2.msra.mxu0 %v1218
        %1343 = vmatprep.subr.mxu0 %v1215
        %1344 = vmatpush2.msra.mxu0 %v1214
        %1345 = vmatprep.subr.mxu0 %v1211
        %1346 = vmatpush2.msra.mxu0 %v1210
        %1347 = vmatprep.subr.mxu0 %v1207
        %1348 = vmatpush2.msra.mxu0 %v1206
        %1349 = vmatprep.subr.mxu0 %v1203
        %1350 = vmatpush2.msra.mxu0 %v1202
        %1351 = vmatprep.subr.mxu0 %v1199
        %1352 = vmatpush2.msra.mxu0 %v1198
        %1353 = vmatprep.subr.mxu0 %v1195
        %1354 = vmatpush2.msra.mxu0 %v1194
        %1355 = vmatprep.subr.mxu0 %v1191
        %1356 = vmatpush2.msra.mxu0 %v1190
        %1357 = vmatprep.subr.mxu0 %v1187
        %1358 = vmatpush2.msra.mxu0 %v1186
        %1359 = vmatprep.subr.mxu0 %v1183
        %1360 = vmatpush2.msra.mxu0 %v1182
        %1361 = vmatprep.subr.mxu0 %v1179
        %1362 = vmatpush2.msra.mxu0 %v1178
        %1363 = vmatprep.subr.mxu0 %v1175
        %1364 = vmatpush2.msra.mxu0 %v1174
        %1365 = vmatprep.subr.mxu0 %v1171
        %1366 = vmatpush2.msra.mxu0 %v1170
        %1367 = vmatprep.subr.mxu0 %v1167
        %1368 = vmatpush2.msra.mxu0 %v1166
        %1369 = vmatprep.subr.mxu0 %v1163
        %1370 = vmatpush2.msra.mxu0 %v1162
        %1371 = vmatprep.subr.mxu0 %v1159
        %1372 = vmatpush2.msra.mxu0 %v1158
        %1373 = vmatprep.mubr.f32.mxu0 %v471
        %1374 = vmatmul.mubr.f32.gmra.mxu0 %v470
        %v1375 = vpop.f32.mrf.mxu0
        %v1376 = vadd.f32 0.0, %v1375
        %v1377 = vpop.f32.mrf.mxu0
        %v1378 = vadd.f32 0.0, %v1377
        %1379 = vmatprep.mubr.f32.mxu0 %v473
        %1380 = vmatmul.mubr.f32.gmra.mxu0 %v472
        %v1381 = vpop.f32.mrf.mxu0
        %v1382 = vadd.f32 0.0, %v1381
        %v1383 = vpop.f32.mrf.mxu0
        %v1384 = vadd.f32 0.0, %v1383
        %1385 = vmatprep.mubr.f32.mxu0 %v475
        %1386 = vmatmul.mubr.f32.gmra.mxu0 %v474
        %v1387 = vpop.f32.mrf.mxu0
        %v1388 = vadd.f32 0.0, %v1387
        %v1389 = vpop.f32.mrf.mxu0
        %v1390 = vadd.f32 0.0, %v1389
        %1391 = vmatprep.mubr.f32.mxu0 %v477
        %1392 = vmatmul.mubr.f32.gmra.mxu0 %v476
        %v1393 = vpop.f32.mrf.mxu0
        %v1394 = vadd.f32 0.0, %v1393
        %v1395 = vpop.f32.mrf.mxu0
        %v1396 = vadd.f32 0.0, %v1395
        %1397 = vdwg.mxu0
        %v1398 = vadd.f32 %v980, %v1287
        %v1399 = vadd.f32 %v982, %v1289
        %v1400 = vadd.f32 %v1069, %v1376
        %v1401 = vadd.f32 %v1071, %v1378
        %v1402 = vadd.f32 %v986, %v1293
        %v1403 = vadd.f32 %v988, %v1295
        %v1404 = vadd.f32 %v1075, %v1382
        %v1405 = vadd.f32 %v1077, %v1384
        %v1406 = vadd.f32 %v992, %v1299
        %v1407 = vadd.f32 %v994, %v1301
        %v1408 = vadd.f32 %v1081, %v1388
        %v1409 = vadd.f32 %v1083, %v1390
        %v1410 = vadd.f32 %v998, %v1305
        %v1411 = vadd.f32 %v1000, %v1307
        %v1412 = vadd.f32 %v1087, %v1394
        %v1413 = vadd.f32 %v1089, %v1396
        %v1415 = vlaneseq
        %v1416 = vshrl.u32 %v1415, 7
        %v1417 = vsub.s32 0, %v1416
        %v1418 = vrot.slane %v411, %v1417
        %v1419 = vlaneseq
        %v1420 = vshrl.u32 %v1419, 7
        %v1421 = vsub.s32 1, %v1420
        %v1422 = vrot.slane %v411, %v1421
        %v1423 = vlaneseq
        %v1424 = vshrl.u32 %v1423, 7
        %v1425 = vsub.s32 2, %v1424
        %v1426 = vrot.slane %v411, %v1425
        %v1427 = vlaneseq
        %v1428 = vshrl.u32 %v1427, 7
        %v1429 = vsub.s32 3, %v1428
        %v1430 = vrot.slane %v411, %v1429
        %v1435 = vadd.f32 %v1398, %v1418
        %v1436 = vadd.f32 %v1399, %v1422
        %v1437 = vadd.f32 %v1400, %v1426
        %v1438 = vadd.f32 %v1401, %v1430
        %v1439 = vadd.f32 %v1402, %v1418
        %v1440 = vadd.f32 %v1403, %v1422
        %v1441 = vadd.f32 %v1404, %v1426
        %v1442 = vadd.f32 %v1405, %v1430
        %v1443 = vadd.f32 %v1406, %v1418
        %v1444 = vadd.f32 %v1407, %v1422
        %v1445 = vadd.f32 %v1408, %v1426
        %v1446 = vadd.f32 %v1409, %v1430
        %v1447 = vadd.f32 %v1410, %v1418
        %v1448 = vadd.f32 %v1411, %v1422
        %v1449 = vadd.f32 %v1412, %v1426
        %v1450 = vadd.f32 %v1413, %v1430
        %v1451 = vmax.f32 %v1435, 0.0
        %v1452 = vmax.f32 %v1436, 0.0
        %v1453 = vmax.f32 %v1437, 0.0
        %v1454 = vmax.f32 %v1438, 0.0
        %v1455 = vmax.f32 %v1439, 0.0
        %v1456 = vmax.f32 %v1440, 0.0
        %v1457 = vmax.f32 %v1441, 0.0
        %v1458 = vmax.f32 %v1442, 0.0
        %v1459 = vmax.f32 %v1443, 0.0
        %v1460 = vmax.f32 %v1444, 0.0
        %v1461 = vmax.f32 %v1445, 0.0
        %v1462 = vmax.f32 %v1446, 0.0
        %v1463 = vmax.f32 %v1447, 0.0
        %v1464 = vmax.f32 %v1448, 0.0
        %v1465 = vmax.f32 %v1449, 0.0
        %v1466 = vmax.f32 %v1450, 0.0
        %v1467 = vld [vmem:[#allocation11] sm:$0xf]
        %v1468 = vrot.slane %v1451, 7
        %v1469 = vrot.slane %v1452, 7
        %v1470 = vrot.slane %v1453, 7
        %v1471 = vrot.slane %v1454, 7
        %v1472 = vrot.slane %v1455, 7
        %v1473 = vrot.slane %v1456, 7
        %v1474 = vrot.slane %v1457, 7
        %v1475 = vrot.slane %v1458, 7
        %v1476 = vrot.slane %v1459, 7
        %v1477 = vrot.slane %v1460, 7
        %v1478 = vrot.slane %v1461, 7
        %v1479 = vrot.slane %v1462, 7
        %v1480 = vrot.slane %v1463, 7
        %v1481 = vrot.slane %v1464, 7
        %v1482 = vrot.slane %v1465, 7
        %v1483 = vrot.slane %v1466, 7
        %v1484 = vsel %vm420, %v1476, %v1480
        %v1485 = vsel %vm420, %v1477, %v1481
        %v1486 = vsel %vm420, %v1478, %v1482
        %v1487 = vsel %vm420, %v1479, %v1483
        %v1488 = vsel %vm420, %v1472, %v1476
        %v1489 = vsel %vm420, %v1473, %v1477
        %v1490 = vsel %vm420, %v1474, %v1478
        %v1491 = vsel %vm420, %v1475, %v1479
        %v1492 = vsel %vm420, %v1468, %v1472
        %v1493 = vsel %vm420, %v1469, %v1473
        %v1494 = vsel %vm420, %v1470, %v1474
        %v1495 = vsel %vm420, %v1471, %v1475
        %v1496 = vsel %vm420, %v1480, %v1468
        %v1497 = vsel %vm420, %v1481, %v1469
        %v1498 = vsel %vm420, %v1482, %v1470
        %v1499 = vsel %vm420, %v1483, %v1471
        %v1500 = vsel %vm433, 0.0, %v1496
        %v1501 = vsel %vm433, 0.0, %v1497
        %v1502 = vsel %vm433, 0.0, %v1498
        %v1503 = vsel %vm433, 0.0, %v1499
        %v1504 = vsel %vm434, 0.0, %v1492
        %v1505 = vsel %vm434, 0.0, %v1493
        %v1506 = vsel %vm434, 0.0, %v1494
        %v1507 = vsel %vm434, 0.0, %v1495
        %v1508 = vsel %vm435, 0.0, %v1488
        %v1509 = vsel %vm435, 0.0, %v1489
        %v1510 = vsel %vm435, 0.0, %v1490
        %v1511 = vsel %vm435, 0.0, %v1491
        %v1512 = vsel %vm436, 0.0, %v1484
        %v1513 = vsel %vm436, 0.0, %v1485
        %v1514 = vsel %vm436, 0.0, %v1486
        %v1515 = vsel %vm436, 0.0, %v1487
        %v1516 = vrot.slane %v1451, 1
        %v1517 = vrot.slane %v1452, 1
        %v1518 = vrot.slane %v1453, 1
        %v1519 = vrot.slane %v1454, 1
        %v1520 = vrot.slane %v1455, 1
        %v1521 = vrot.slane %v1456, 1
        %v1522 = vrot.slane %v1457, 1
        %v1523 = vrot.slane %v1458, 1
        %v1524 = vrot.slane %v1459, 1
        %v1525 = vrot.slane %v1460, 1
        %v1526 = vrot.slane %v1461, 1
        %v1527 = vrot.slane %v1462, 1
        %v1528 = vrot.slane %v1463, 1
        %v1529 = vrot.slane %v1464, 1
        %v1530 = vrot.slane %v1465, 1
        %v1531 = vrot.slane %v1466, 1
        %v1532 = vsel %vm453, %v1524, %v1528
        %v1533 = vsel %vm453, %v1525, %v1529
        %v1534 = vsel %vm453, %v1526, %v1530
        %v1535 = vsel %vm453, %v1527, %v1531
        %v1536 = vsel %vm453, %v1520, %v1524
        %v1537 = vsel %vm453, %v1521, %v1525
        %v1538 = vsel %vm453, %v1522, %v1526
        %v1539 = vsel %vm453, %v1523, %v1527
        %v1540 = vsel %vm453, %v1516, %v1520
        %v1541 = vsel %vm453, %v1517, %v1521
        %v1542 = vsel %vm453, %v1518, %v1522
        %v1543 = vsel %vm453, %v1519, %v1523
        %v1544 = vsel %vm453, %v1528, %v1516
        %v1545 = vsel %vm453, %v1529, %v1517
        %v1546 = vsel %vm453, %v1530, %v1518
        %v1547 = vsel %vm453, %v1531, %v1519
        %v1548 = vsel %vm466, 0.0, %v1540
        %v1549 = vsel %vm466, 0.0, %v1541
        %v1550 = vsel %vm466, 0.0, %v1542
        %v1551 = vsel %vm466, 0.0, %v1543
        %v1552 = vsel %vm467, 0.0, %v1536
        %v1553 = vsel %vm467, 0.0, %v1537
        %v1554 = vsel %vm467, 0.0, %v1538
        %v1555 = vsel %vm467, 0.0, %v1539
        %v1556 = vsel %vm468, 0.0, %v1532
        %v1557 = vsel %vm468, 0.0, %v1533
        %v1558 = vsel %vm468, 0.0, %v1534
        %v1559 = vsel %vm468, 0.0, %v1535
        %v1560 = vsel %vm469, 0.0, %v1544
        %v1561 = vsel %vm469, 0.0, %v1545
        %v1562 = vsel %vm469, 0.0, %v1546
        %v1563 = vsel %vm469, 0.0, %v1547
        %v1564 = vld [vmem:[#allocation9] sm:$0xff]
        %v1565 = vld [vmem:[#allocation9 + $0x8] sm:$0xff]
        %v1566 = vld [vmem:[#allocation9 + $0x10] sm:$0xff]
        %v1567 = vld [vmem:[#allocation9 + $0x18] sm:$0xff]
        %v1568 = vld [vmem:[#allocation9 + $0x20] sm:$0xff]
        %v1569 = vld [vmem:[#allocation9 + $0x28] sm:$0xff]
        %v1570 = vld [vmem:[#allocation9 + $0x30] sm:$0xff]
        %v1571 = vld [vmem:[#allocation9 + $0x38] sm:$0xff]
        %v1572 = vld [vmem:[#allocation9 + $0x40] sm:$0xff]
        %v1573 = vld [vmem:[#allocation9 + $0x48] sm:$0xff]
        %v1574 = vld [vmem:[#allocation9 + $0x50] sm:$0xff]
        %v1575 = vld [vmem:[#allocation9 + $0x58] sm:$0xff]
        %v1576 = vld [vmem:[#allocation9 + $0x60] sm:$0xff]
        %v1577 = vld [vmem:[#allocation9 + $0x68] sm:$0xff]
        %v1578 = vld [vmem:[#allocation9 + $0x70] sm:$0xff]
        %v1579 = vld [vmem:[#allocation9 + $0x78] sm:$0xff]
        %v1580 = vld [vmem:[#allocation9 + $0x80] sm:$0xff]
        %v1581 = vld [vmem:[#allocation9 + $0x88] sm:$0xff]
        %v1582 = vld [vmem:[#allocation9 + $0x90] sm:$0xff]
        %v1583 = vld [vmem:[#allocation9 + $0x98] sm:$0xff]
        %v1584 = vld [vmem:[#allocation9 + $0xa0] sm:$0xff]
        %v1585 = vld [vmem:[#allocation9 + $0xa8] sm:$0xff]
        %v1586 = vld [vmem:[#allocation9 + $0xb0] sm:$0xff]
        %v1587 = vld [vmem:[#allocation9 + $0xb8] sm:$0xff]
        %v1588 = vld [vmem:[#allocation9 + $0xc0] sm:$0xff]
        %v1589 = vld [vmem:[#allocation9 + $0xc8] sm:$0xff]
        %v1590 = vld [vmem:[#allocation9 + $0xd0] sm:$0xff]
        %v1591 = vld [vmem:[#allocation9 + $0xd8] sm:$0xff]
        %v1592 = vld [vmem:[#allocation9 + $0xe0] sm:$0xff]
        %v1593 = vld [vmem:[#allocation9 + $0xe8] sm:$0xff]
        %v1594 = vld [vmem:[#allocation9 + $0xf0] sm:$0xff]
        %v1595 = vld [vmem:[#allocation9 + $0xf8] sm:$0xff]
        %v1596 = vld [vmem:[#allocation9 + $0x100] sm:$0xff]
        %v1597 = vld [vmem:[#allocation9 + $0x108] sm:$0xff]
        %v1598 = vld [vmem:[#allocation9 + $0x110] sm:$0xff]
        %v1599 = vld [vmem:[#allocation9 + $0x118] sm:$0xff]
        %v1600 = vld [vmem:[#allocation9 + $0x120] sm:$0xff]
        %v1601 = vld [vmem:[#allocation9 + $0x128] sm:$0xff]
        %v1602 = vld [vmem:[#allocation9 + $0x130] sm:$0xff]
        %v1603 = vld [vmem:[#allocation9 + $0x138] sm:$0xff]
        %v1604 = vld [vmem:[#allocation9 + $0x140] sm:$0xff]
        %v1605 = vld [vmem:[#allocation9 + $0x148] sm:$0xff]
        %v1606 = vld [vmem:[#allocation9 + $0x150] sm:$0xff]
        %v1607 = vld [vmem:[#allocation9 + $0x158] sm:$0xff]
        %v1608 = vld [vmem:[#allocation9 + $0x160] sm:$0xff]
        %v1609 = vld [vmem:[#allocation9 + $0x168] sm:$0xff]
        %v1610 = vld [vmem:[#allocation9 + $0x170] sm:$0xff]
        %v1611 = vld [vmem:[#allocation9 + $0x178] sm:$0xff]
        %v1612 = vld [vmem:[#allocation9 + $0x180] sm:$0xff]
        %v1613 = vld [vmem:[#allocation9 + $0x188] sm:$0xff]
        %v1614 = vld [vmem:[#allocation9 + $0x190] sm:$0xff]
        %v1615 = vld [vmem:[#allocation9 + $0x198] sm:$0xff]
        %v1616 = vld [vmem:[#allocation9 + $0x1a0] sm:$0xff]
        %v1617 = vld [vmem:[#allocation9 + $0x1a8] sm:$0xff]
        %v1618 = vld [vmem:[#allocation9 + $0x1b0] sm:$0xff]
        %v1619 = vld [vmem:[#allocation9 + $0x1b8] sm:$0xff]
        %v1620 = vld [vmem:[#allocation9 + $0x1c0] sm:$0xff]
        %v1621 = vld [vmem:[#allocation9 + $0x1c8] sm:$0xff]
        %v1622 = vld [vmem:[#allocation9 + $0x1d0] sm:$0xff]
        %v1623 = vld [vmem:[#allocation9 + $0x1d8] sm:$0xff]
        %v1624 = vld [vmem:[#allocation9 + $0x1e0] sm:$0xff]
        %v1625 = vld [vmem:[#allocation9 + $0x1e8] sm:$0xff]
        %v1626 = vld [vmem:[#allocation9 + $0x1f0] sm:$0xff]
        %v1627 = vld [vmem:[#allocation9 + $0x1f8] sm:$0xff]
        %v1628 = vld [vmem:[#allocation9 + $0x200] sm:$0xff]
        %v1629 = vld [vmem:[#allocation9 + $0x208] sm:$0xff]
        %v1630 = vld [vmem:[#allocation9 + $0x210] sm:$0xff]
        %v1631 = vld [vmem:[#allocation9 + $0x218] sm:$0xff]
        %v1632 = vld [vmem:[#allocation9 + $0x220] sm:$0xff]
        %v1633 = vld [vmem:[#allocation9 + $0x228] sm:$0xff]
        %v1634 = vld [vmem:[#allocation9 + $0x230] sm:$0xff]
        %v1635 = vld [vmem:[#allocation9 + $0x238] sm:$0xff]
        %v1636 = vld [vmem:[#allocation9 + $0x240] sm:$0xff]
        %v1637 = vld [vmem:[#allocation9 + $0x248] sm:$0xff]
        %v1638 = vld [vmem:[#allocation9 + $0x250] sm:$0xff]
        %v1639 = vld [vmem:[#allocation9 + $0x258] sm:$0xff]
        %v1640 = vld [vmem:[#allocation9 + $0x260] sm:$0xff]
        %v1641 = vld [vmem:[#allocation9 + $0x268] sm:$0xff]
        %v1642 = vld [vmem:[#allocation9 + $0x270] sm:$0xff]
        %v1643 = vld [vmem:[#allocation9 + $0x278] sm:$0xff]
        %v1644 = vld [vmem:[#allocation9 + $0x280] sm:$0xff]
        %v1645 = vld [vmem:[#allocation9 + $0x288] sm:$0xff]
        %v1646 = vld [vmem:[#allocation9 + $0x290] sm:$0xff]
        %v1647 = vld [vmem:[#allocation9 + $0x298] sm:$0xff]
        %v1648 = vld [vmem:[#allocation9 + $0x2a0] sm:$0xff]
        %v1649 = vld [vmem:[#allocation9 + $0x2a8] sm:$0xff]
        %v1650 = vld [vmem:[#allocation9 + $0x2b0] sm:$0xff]
        %v1651 = vld [vmem:[#allocation9 + $0x2b8] sm:$0xff]
        %v1652 = vld [vmem:[#allocation9 + $0x2c0] sm:$0xff]
        %v1653 = vld [vmem:[#allocation9 + $0x2c8] sm:$0xff]
        %v1654 = vld [vmem:[#allocation9 + $0x2d0] sm:$0xff]
        %v1655 = vld [vmem:[#allocation9 + $0x2d8] sm:$0xff]
        %v1656 = vld [vmem:[#allocation9 + $0x2e0] sm:$0xff]
        %v1657 = vld [vmem:[#allocation9 + $0x2e8] sm:$0xff]
        %v1658 = vld [vmem:[#allocation9 + $0x2f0] sm:$0xff]
        %v1659 = vld [vmem:[#allocation9 + $0x2f8] sm:$0xff]
        %v1660 = vld [vmem:[#allocation9 + $0x300] sm:$0xff]
        %v1661 = vld [vmem:[#allocation9 + $0x308] sm:$0xff]
        %v1662 = vld [vmem:[#allocation9 + $0x310] sm:$0xff]
        %v1663 = vld [vmem:[#allocation9 + $0x318] sm:$0xff]
        %v1664 = vld [vmem:[#allocation9 + $0x320] sm:$0xff]
        %v1665 = vld [vmem:[#allocation9 + $0x328] sm:$0xff]
        %v1666 = vld [vmem:[#allocation9 + $0x330] sm:$0xff]
        %v1667 = vld [vmem:[#allocation9 + $0x338] sm:$0xff]
        %v1668 = vld [vmem:[#allocation9 + $0x340] sm:$0xff]
        %v1669 = vld [vmem:[#allocation9 + $0x348] sm:$0xff]
        %v1670 = vld [vmem:[#allocation9 + $0x350] sm:$0xff]
        %v1671 = vld [vmem:[#allocation9 + $0x358] sm:$0xff]
        %v1672 = vld [vmem:[#allocation9 + $0x360] sm:$0xff]
        %v1673 = vld [vmem:[#allocation9 + $0x368] sm:$0xff]
        %v1674 = vld [vmem:[#allocation9 + $0x370] sm:$0xff]
        %v1675 = vld [vmem:[#allocation9 + $0x378] sm:$0xff]
        %v1676 = vld [vmem:[#allocation9 + $0x380] sm:$0xff]
        %v1677 = vld [vmem:[#allocation9 + $0x388] sm:$0xff]
        %v1678 = vld [vmem:[#allocation9 + $0x390] sm:$0xff]
        %v1679 = vld [vmem:[#allocation9 + $0x398] sm:$0xff]
        %v1680 = vld [vmem:[#allocation9 + $0x3a0] sm:$0xff]
        %v1681 = vld [vmem:[#allocation9 + $0x3a8] sm:$0xff]
        %v1682 = vld [vmem:[#allocation9 + $0x3b0] sm:$0xff]
        %v1683 = vld [vmem:[#allocation9 + $0x3b8] sm:$0xff]
        %v1684 = vld [vmem:[#allocation9 + $0x3c0] sm:$0xff]
        %v1685 = vld [vmem:[#allocation9 + $0x3c8] sm:$0xff]
        %v1686 = vld [vmem:[#allocation9 + $0x3d0] sm:$0xff]
        %v1687 = vld [vmem:[#allocation9 + $0x3d8] sm:$0xff]
        %v1688 = vld [vmem:[#allocation9 + $0x3e0] sm:$0xff]
        %v1689 = vld [vmem:[#allocation9 + $0x3e8] sm:$0xff]
        %v1690 = vld [vmem:[#allocation9 + $0x3f0] sm:$0xff]
        %v1691 = vld [vmem:[#allocation9 + $0x3f8] sm:$0xff]
        %v1692 = vld [vmem:[#allocation9 + $0x400] sm:$0xff]
        %v1693 = vld [vmem:[#allocation9 + $0x408] sm:$0xff]
        %v1694 = vld [vmem:[#allocation9 + $0x410] sm:$0xff]
        %v1695 = vld [vmem:[#allocation9 + $0x418] sm:$0xff]
        %v1696 = vld [vmem:[#allocation9 + $0x420] sm:$0xff]
        %v1697 = vld [vmem:[#allocation9 + $0x428] sm:$0xff]
        %v1698 = vld [vmem:[#allocation9 + $0x430] sm:$0xff]
        %v1699 = vld [vmem:[#allocation9 + $0x438] sm:$0xff]
        %v1700 = vld [vmem:[#allocation9 + $0x440] sm:$0xff]
        %v1701 = vld [vmem:[#allocation9 + $0x448] sm:$0xff]
        %v1702 = vld [vmem:[#allocation9 + $0x450] sm:$0xff]
        %v1703 = vld [vmem:[#allocation9 + $0x458] sm:$0xff]
        %v1704 = vld [vmem:[#allocation9 + $0x460] sm:$0xff]
        %v1705 = vld [vmem:[#allocation9 + $0x468] sm:$0xff]
        %v1706 = vld [vmem:[#allocation9 + $0x470] sm:$0xff]
        %v1707 = vld [vmem:[#allocation9 + $0x478] sm:$0xff]
        %v1708 = vld [vmem:[#allocation9 + $0x480] sm:$0xff]
        %v1709 = vld [vmem:[#allocation9 + $0x488] sm:$0xff]
        %v1710 = vld [vmem:[#allocation9 + $0x490] sm:$0xff]
        %v1711 = vld [vmem:[#allocation9 + $0x498] sm:$0xff]
        %v1712 = vld [vmem:[#allocation9 + $0x4a0] sm:$0xff]
        %v1713 = vld [vmem:[#allocation9 + $0x4a8] sm:$0xff]
        %v1714 = vld [vmem:[#allocation9 + $0x4b0] sm:$0xff]
        %v1715 = vld [vmem:[#allocation9 + $0x4b8] sm:$0xff]
        %v1716 = vld [vmem:[#allocation9 + $0x4c0] sm:$0xff]
        %v1717 = vld [vmem:[#allocation9 + $0x4c8] sm:$0xff]
        %v1718 = vld [vmem:[#allocation9 + $0x4d0] sm:$0xff]
        %v1719 = vld [vmem:[#allocation9 + $0x4d8] sm:$0xff]
        %v1720 = vld [vmem:[#allocation9 + $0x4e0] sm:$0xff]
        %v1721 = vld [vmem:[#allocation9 + $0x4e8] sm:$0xff]
        %v1722 = vld [vmem:[#allocation9 + $0x4f0] sm:$0xff]
        %v1723 = vld [vmem:[#allocation9 + $0x4f8] sm:$0xff]
        %v1724 = vld [vmem:[#allocation9 + $0x500] sm:$0xff]
        %v1725 = vld [vmem:[#allocation9 + $0x508] sm:$0xff]
        %v1726 = vld [vmem:[#allocation9 + $0x510] sm:$0xff]
        %v1727 = vld [vmem:[#allocation9 + $0x518] sm:$0xff]
        %v1728 = vld [vmem:[#allocation9 + $0x520] sm:$0xff]
        %v1729 = vld [vmem:[#allocation9 + $0x528] sm:$0xff]
        %v1730 = vld [vmem:[#allocation9 + $0x530] sm:$0xff]
        %v1731 = vld [vmem:[#allocation9 + $0x538] sm:$0xff]
        %v1732 = vld [vmem:[#allocation9 + $0x540] sm:$0xff]
        %v1733 = vld [vmem:[#allocation9 + $0x548] sm:$0xff]
        %v1734 = vld [vmem:[#allocation9 + $0x550] sm:$0xff]
        %v1735 = vld [vmem:[#allocation9 + $0x558] sm:$0xff]
        %v1736 = vld [vmem:[#allocation9 + $0x560] sm:$0xff]
        %v1737 = vld [vmem:[#allocation9 + $0x568] sm:$0xff]
        %v1738 = vld [vmem:[#allocation9 + $0x570] sm:$0xff]
        %v1739 = vld [vmem:[#allocation9 + $0x578] sm:$0xff]
        %v1740 = vld [vmem:[#allocation9 + $0x580] sm:$0xff]
        %v1741 = vld [vmem:[#allocation9 + $0x588] sm:$0xff]
        %v1742 = vld [vmem:[#allocation9 + $0x590] sm:$0xff]
        %v1743 = vld [vmem:[#allocation9 + $0x598] sm:$0xff]
        %v1744 = vld [vmem:[#allocation9 + $0x5a0] sm:$0xff]
        %v1745 = vld [vmem:[#allocation9 + $0x5a8] sm:$0xff]
        %v1746 = vld [vmem:[#allocation9 + $0x5b0] sm:$0xff]
        %v1747 = vld [vmem:[#allocation9 + $0x5b8] sm:$0xff]
        %v1748 = vld [vmem:[#allocation9 + $0x5c0] sm:$0xff]
        %v1749 = vld [vmem:[#allocation9 + $0x5c8] sm:$0xff]
        %v1750 = vld [vmem:[#allocation9 + $0x5d0] sm:$0xff]
        %v1751 = vld [vmem:[#allocation9 + $0x5d8] sm:$0xff]
        %v1752 = vld [vmem:[#allocation9 + $0x5e0] sm:$0xff]
        %v1753 = vld [vmem:[#allocation9 + $0x5e8] sm:$0xff]
        %v1754 = vld [vmem:[#allocation9 + $0x5f0] sm:$0xff]
        %v1755 = vld [vmem:[#allocation9 + $0x5f8] sm:$0xff]
        %v1756 = vld [vmem:[#allocation9 + $0x600] sm:$0xff]
        %v1757 = vld [vmem:[#allocation9 + $0x608] sm:$0xff]
        %v1758 = vld [vmem:[#allocation9 + $0x610] sm:$0xff]
        %v1759 = vld [vmem:[#allocation9 + $0x618] sm:$0xff]
        %v1760 = vld [vmem:[#allocation9 + $0x620] sm:$0xff]
        %v1761 = vld [vmem:[#allocation9 + $0x628] sm:$0xff]
        %v1762 = vld [vmem:[#allocation9 + $0x630] sm:$0xff]
        %v1763 = vld [vmem:[#allocation9 + $0x638] sm:$0xff]
        %v1764 = vld [vmem:[#allocation9 + $0x640] sm:$0xff]
        %v1765 = vld [vmem:[#allocation9 + $0x648] sm:$0xff]
        %v1766 = vld [vmem:[#allocation9 + $0x650] sm:$0xff]
        %v1767 = vld [vmem:[#allocation9 + $0x658] sm:$0xff]
        %v1768 = vld [vmem:[#allocation9 + $0x660] sm:$0xff]
        %v1769 = vld [vmem:[#allocation9 + $0x668] sm:$0xff]
        %v1770 = vld [vmem:[#allocation9 + $0x670] sm:$0xff]
        %v1771 = vld [vmem:[#allocation9 + $0x678] sm:$0xff]
        %v1772 = vld [vmem:[#allocation9 + $0x680] sm:$0xff]
        %v1773 = vld [vmem:[#allocation9 + $0x688] sm:$0xff]
        %v1774 = vld [vmem:[#allocation9 + $0x690] sm:$0xff]
        %v1775 = vld [vmem:[#allocation9 + $0x698] sm:$0xff]
        %v1776 = vld [vmem:[#allocation9 + $0x6a0] sm:$0xff]
        %v1777 = vld [vmem:[#allocation9 + $0x6a8] sm:$0xff]
        %v1778 = vld [vmem:[#allocation9 + $0x6b0] sm:$0xff]
        %v1779 = vld [vmem:[#allocation9 + $0x6b8] sm:$0xff]
        %v1780 = vld [vmem:[#allocation9 + $0x6c0] sm:$0xff]
        %v1781 = vld [vmem:[#allocation9 + $0x6c8] sm:$0xff]
        %v1782 = vld [vmem:[#allocation9 + $0x6d0] sm:$0xff]
        %v1783 = vld [vmem:[#allocation9 + $0x6d8] sm:$0xff]
        %v1784 = vld [vmem:[#allocation9 + $0x6e0] sm:$0xff]
        %v1785 = vld [vmem:[#allocation9 + $0x6e8] sm:$0xff]
        %v1786 = vld [vmem:[#allocation9 + $0x6f0] sm:$0xff]
        %v1787 = vld [vmem:[#allocation9 + $0x6f8] sm:$0xff]
        %v1788 = vld [vmem:[#allocation9 + $0x700] sm:$0xff]
        %v1789 = vld [vmem:[#allocation9 + $0x708] sm:$0xff]
        %v1790 = vld [vmem:[#allocation9 + $0x710] sm:$0xff]
        %v1791 = vld [vmem:[#allocation9 + $0x718] sm:$0xff]
        %v1792 = vld [vmem:[#allocation9 + $0x720] sm:$0xff]
        %v1793 = vld [vmem:[#allocation9 + $0x728] sm:$0xff]
        %v1794 = vld [vmem:[#allocation9 + $0x730] sm:$0xff]
        %v1795 = vld [vmem:[#allocation9 + $0x738] sm:$0xff]
        %v1796 = vld [vmem:[#allocation9 + $0x740] sm:$0xff]
        %v1797 = vld [vmem:[#allocation9 + $0x748] sm:$0xff]
        %v1798 = vld [vmem:[#allocation9 + $0x750] sm:$0xff]
        %v1799 = vld [vmem:[#allocation9 + $0x758] sm:$0xff]
        %v1800 = vld [vmem:[#allocation9 + $0x760] sm:$0xff]
        %v1801 = vld [vmem:[#allocation9 + $0x768] sm:$0xff]
        %v1802 = vld [vmem:[#allocation9 + $0x770] sm:$0xff]
        %v1803 = vld [vmem:[#allocation9 + $0x778] sm:$0xff]
        %v1804 = vld [vmem:[#allocation9 + $0x780] sm:$0xff]
        %v1805 = vld [vmem:[#allocation9 + $0x788] sm:$0xff]
        %v1806 = vld [vmem:[#allocation9 + $0x790] sm:$0xff]
        %v1807 = vld [vmem:[#allocation9 + $0x798] sm:$0xff]
        %v1808 = vld [vmem:[#allocation9 + $0x7a0] sm:$0xff]
        %v1809 = vld [vmem:[#allocation9 + $0x7a8] sm:$0xff]
        %v1810 = vld [vmem:[#allocation9 + $0x7b0] sm:$0xff]
        %v1811 = vld [vmem:[#allocation9 + $0x7b8] sm:$0xff]
        %v1812 = vld [vmem:[#allocation9 + $0x7c0] sm:$0xff]
        %v1813 = vld [vmem:[#allocation9 + $0x7c8] sm:$0xff]
        %v1814 = vld [vmem:[#allocation9 + $0x7d0] sm:$0xff]
        %v1815 = vld [vmem:[#allocation9 + $0x7d8] sm:$0xff]
        %v1816 = vld [vmem:[#allocation9 + $0x7e0] sm:$0xff]
        %v1817 = vld [vmem:[#allocation9 + $0x7e8] sm:$0xff]
        %v1818 = vld [vmem:[#allocation9 + $0x7f0] sm:$0xff]
        %v1819 = vld [vmem:[#allocation9 + $0x7f8] sm:$0xff]
        %s1820 = scalar_lea.vmem [#allocation9], 2048
        %v1821 = vld [vmem:[%s1820] sm:$0xff]
        %v1822 = vld [vmem:[%s1820 + $0x8] sm:$0xff]
        %v1823 = vld [vmem:[%s1820 + $0x10] sm:$0xff]
        %v1824 = vld [vmem:[%s1820 + $0x18] sm:$0xff]
        %v1825 = vld [vmem:[%s1820 + $0x20] sm:$0xff]
        %v1826 = vld [vmem:[%s1820 + $0x28] sm:$0xff]
        %v1827 = vld [vmem:[%s1820 + $0x30] sm:$0xff]
        %v1828 = vld [vmem:[%s1820 + $0x38] sm:$0xff]
        %v1829 = vld [vmem:[%s1820 + $0x40] sm:$0xff]
        %v1830 = vld [vmem:[%s1820 + $0x48] sm:$0xff]
        %v1831 = vld [vmem:[%s1820 + $0x50] sm:$0xff]
        %v1832 = vld [vmem:[%s1820 + $0x58] sm:$0xff]
        %v1833 = vld [vmem:[%s1820 + $0x60] sm:$0xff]
        %v1834 = vld [vmem:[%s1820 + $0x68] sm:$0xff]
        %v1835 = vld [vmem:[%s1820 + $0x70] sm:$0xff]
        %v1836 = vld [vmem:[%s1820 + $0x78] sm:$0xff]
        %v1837 = vld [vmem:[%s1820 + $0x80] sm:$0xff]
        %v1838 = vld [vmem:[%s1820 + $0x88] sm:$0xff]
        %v1839 = vld [vmem:[%s1820 + $0x90] sm:$0xff]
        %v1840 = vld [vmem:[%s1820 + $0x98] sm:$0xff]
        %v1841 = vld [vmem:[%s1820 + $0xa0] sm:$0xff]
        %v1842 = vld [vmem:[%s1820 + $0xa8] sm:$0xff]
        %v1843 = vld [vmem:[%s1820 + $0xb0] sm:$0xff]
        %v1844 = vld [vmem:[%s1820 + $0xb8] sm:$0xff]
        %v1845 = vld [vmem:[%s1820 + $0xc0] sm:$0xff]
        %v1846 = vld [vmem:[%s1820 + $0xc8] sm:$0xff]
        %v1847 = vld [vmem:[%s1820 + $0xd0] sm:$0xff]
        %v1848 = vld [vmem:[%s1820 + $0xd8] sm:$0xff]
        %v1849 = vld [vmem:[%s1820 + $0xe0] sm:$0xff]
        %v1850 = vld [vmem:[%s1820 + $0xe8] sm:$0xff]
        %v1851 = vld [vmem:[%s1820 + $0xf0] sm:$0xff]
        %v1852 = vld [vmem:[%s1820 + $0xf8] sm:$0xff]
        %v1853 = vld [vmem:[%s1820 + $0x100] sm:$0xff]
        %v1854 = vld [vmem:[%s1820 + $0x108] sm:$0xff]
        %v1855 = vld [vmem:[%s1820 + $0x110] sm:$0xff]
        %v1856 = vld [vmem:[%s1820 + $0x118] sm:$0xff]
        %v1857 = vld [vmem:[%s1820 + $0x120] sm:$0xff]
        %v1858 = vld [vmem:[%s1820 + $0x128] sm:$0xff]
        %v1859 = vld [vmem:[%s1820 + $0x130] sm:$0xff]
        %v1860 = vld [vmem:[%s1820 + $0x138] sm:$0xff]
        %v1861 = vld [vmem:[%s1820 + $0x140] sm:$0xff]
        %v1862 = vld [vmem:[%s1820 + $0x148] sm:$0xff]
        %v1863 = vld [vmem:[%s1820 + $0x150] sm:$0xff]
        %v1864 = vld [vmem:[%s1820 + $0x158] sm:$0xff]
        %v1865 = vld [vmem:[%s1820 + $0x160] sm:$0xff]
        %v1866 = vld [vmem:[%s1820 + $0x168] sm:$0xff]
        %v1867 = vld [vmem:[%s1820 + $0x170] sm:$0xff]
        %v1868 = vld [vmem:[%s1820 + $0x178] sm:$0xff]
        %v1869 = vld [vmem:[%s1820 + $0x180] sm:$0xff]
        %v1870 = vld [vmem:[%s1820 + $0x188] sm:$0xff]
        %v1871 = vld [vmem:[%s1820 + $0x190] sm:$0xff]
        %v1872 = vld [vmem:[%s1820 + $0x198] sm:$0xff]
        %v1873 = vld [vmem:[%s1820 + $0x1a0] sm:$0xff]
        %v1874 = vld [vmem:[%s1820 + $0x1a8] sm:$0xff]
        %v1875 = vld [vmem:[%s1820 + $0x1b0] sm:$0xff]
        %v1876 = vld [vmem:[%s1820 + $0x1b8] sm:$0xff]
        %v1877 = vld [vmem:[%s1820 + $0x1c0] sm:$0xff]
        %v1878 = vld [vmem:[%s1820 + $0x1c8] sm:$0xff]
        %v1879 = vld [vmem:[%s1820 + $0x1d0] sm:$0xff]
        %v1880 = vld [vmem:[%s1820 + $0x1d8] sm:$0xff]
        %v1881 = vld [vmem:[%s1820 + $0x1e0] sm:$0xff]
        %v1882 = vld [vmem:[%s1820 + $0x1e8] sm:$0xff]
        %v1883 = vld [vmem:[%s1820 + $0x1f0] sm:$0xff]
        %v1884 = vld [vmem:[%s1820 + $0x1f8] sm:$0xff]
        %v1885 = vld [vmem:[%s1820 + $0x200] sm:$0xff]
        %v1886 = vld [vmem:[%s1820 + $0x208] sm:$0xff]
        %v1887 = vld [vmem:[%s1820 + $0x210] sm:$0xff]
        %v1888 = vld [vmem:[%s1820 + $0x218] sm:$0xff]
        %v1889 = vld [vmem:[%s1820 + $0x220] sm:$0xff]
        %v1890 = vld [vmem:[%s1820 + $0x228] sm:$0xff]
        %v1891 = vld [vmem:[%s1820 + $0x230] sm:$0xff]
        %v1892 = vld [vmem:[%s1820 + $0x238] sm:$0xff]
        %v1893 = vld [vmem:[%s1820 + $0x240] sm:$0xff]
        %v1894 = vld [vmem:[%s1820 + $0x248] sm:$0xff]
        %v1895 = vld [vmem:[%s1820 + $0x250] sm:$0xff]
        %v1896 = vld [vmem:[%s1820 + $0x258] sm:$0xff]
        %v1897 = vld [vmem:[%s1820 + $0x260] sm:$0xff]
        %v1898 = vld [vmem:[%s1820 + $0x268] sm:$0xff]
        %v1899 = vld [vmem:[%s1820 + $0x270] sm:$0xff]
        %v1900 = vld [vmem:[%s1820 + $0x278] sm:$0xff]
        %v1901 = vld [vmem:[%s1820 + $0x280] sm:$0xff]
        %v1902 = vld [vmem:[%s1820 + $0x288] sm:$0xff]
        %v1903 = vld [vmem:[%s1820 + $0x290] sm:$0xff]
        %v1904 = vld [vmem:[%s1820 + $0x298] sm:$0xff]
        %v1905 = vld [vmem:[%s1820 + $0x2a0] sm:$0xff]
        %v1906 = vld [vmem:[%s1820 + $0x2a8] sm:$0xff]
        %v1907 = vld [vmem:[%s1820 + $0x2b0] sm:$0xff]
        %v1908 = vld [vmem:[%s1820 + $0x2b8] sm:$0xff]
        %v1909 = vld [vmem:[%s1820 + $0x2c0] sm:$0xff]
        %v1910 = vld [vmem:[%s1820 + $0x2c8] sm:$0xff]
        %v1911 = vld [vmem:[%s1820 + $0x2d0] sm:$0xff]
        %v1912 = vld [vmem:[%s1820 + $0x2d8] sm:$0xff]
        %v1913 = vld [vmem:[%s1820 + $0x2e0] sm:$0xff]
        %v1914 = vld [vmem:[%s1820 + $0x2e8] sm:$0xff]
        %v1915 = vld [vmem:[%s1820 + $0x2f0] sm:$0xff]
        %v1916 = vld [vmem:[%s1820 + $0x2f8] sm:$0xff]
        %v1917 = vld [vmem:[%s1820 + $0x300] sm:$0xff]
        %v1918 = vld [vmem:[%s1820 + $0x308] sm:$0xff]
        %v1919 = vld [vmem:[%s1820 + $0x310] sm:$0xff]
        %v1920 = vld [vmem:[%s1820 + $0x318] sm:$0xff]
        %v1921 = vld [vmem:[%s1820 + $0x320] sm:$0xff]
        %v1922 = vld [vmem:[%s1820 + $0x328] sm:$0xff]
        %v1923 = vld [vmem:[%s1820 + $0x330] sm:$0xff]
        %v1924 = vld [vmem:[%s1820 + $0x338] sm:$0xff]
        %v1925 = vld [vmem:[%s1820 + $0x340] sm:$0xff]
        %v1926 = vld [vmem:[%s1820 + $0x348] sm:$0xff]
        %v1927 = vld [vmem:[%s1820 + $0x350] sm:$0xff]
        %v1928 = vld [vmem:[%s1820 + $0x358] sm:$0xff]
        %v1929 = vld [vmem:[%s1820 + $0x360] sm:$0xff]
        %v1930 = vld [vmem:[%s1820 + $0x368] sm:$0xff]
        %v1931 = vld [vmem:[%s1820 + $0x370] sm:$0xff]
        %v1932 = vld [vmem:[%s1820 + $0x378] sm:$0xff]
        %v1933 = vld [vmem:[%s1820 + $0x380] sm:$0xff]
        %v1934 = vld [vmem:[%s1820 + $0x388] sm:$0xff]
        %v1935 = vld [vmem:[%s1820 + $0x390] sm:$0xff]
        %v1936 = vld [vmem:[%s1820 + $0x398] sm:$0xff]
        %v1937 = vld [vmem:[%s1820 + $0x3a0] sm:$0xff]
        %v1938 = vld [vmem:[%s1820 + $0x3a8] sm:$0xff]
        %v1939 = vld [vmem:[%s1820 + $0x3b0] sm:$0xff]
        %v1940 = vld [vmem:[%s1820 + $0x3b8] sm:$0xff]
        %v1941 = vld [vmem:[%s1820 + $0x3c0] sm:$0xff]
        %v1942 = vld [vmem:[%s1820 + $0x3c8] sm:$0xff]
        %v1943 = vld [vmem:[%s1820 + $0x3d0] sm:$0xff]
        %v1944 = vld [vmem:[%s1820 + $0x3d8] sm:$0xff]
        %v1945 = vld [vmem:[%s1820 + $0x3e0] sm:$0xff]
        %v1946 = vld [vmem:[%s1820 + $0x3e8] sm:$0xff]
        %v1947 = vld [vmem:[%s1820 + $0x3f0] sm:$0xff]
        %v1948 = vld [vmem:[%s1820 + $0x3f8] sm:$0xff]
        %v1949 = vld [vmem:[%s1820 + $0x400] sm:$0xff]
        %v1950 = vld [vmem:[%s1820 + $0x408] sm:$0xff]
        %v1951 = vld [vmem:[%s1820 + $0x410] sm:$0xff]
        %v1952 = vld [vmem:[%s1820 + $0x418] sm:$0xff]
        %v1953 = vld [vmem:[%s1820 + $0x420] sm:$0xff]
        %v1954 = vld [vmem:[%s1820 + $0x428] sm:$0xff]
        %v1955 = vld [vmem:[%s1820 + $0x430] sm:$0xff]
        %v1956 = vld [vmem:[%s1820 + $0x438] sm:$0xff]
        %v1957 = vld [vmem:[%s1820 + $0x440] sm:$0xff]
        %v1958 = vld [vmem:[%s1820 + $0x448] sm:$0xff]
        %v1959 = vld [vmem:[%s1820 + $0x450] sm:$0xff]
        %v1960 = vld [vmem:[%s1820 + $0x458] sm:$0xff]
        %v1961 = vld [vmem:[%s1820 + $0x460] sm:$0xff]
        %v1962 = vld [vmem:[%s1820 + $0x468] sm:$0xff]
        %v1963 = vld [vmem:[%s1820 + $0x470] sm:$0xff]
        %v1964 = vld [vmem:[%s1820 + $0x478] sm:$0xff]
        %v1965 = vld [vmem:[%s1820 + $0x480] sm:$0xff]
        %v1966 = vld [vmem:[%s1820 + $0x488] sm:$0xff]
        %v1967 = vld [vmem:[%s1820 + $0x490] sm:$0xff]
        %v1968 = vld [vmem:[%s1820 + $0x498] sm:$0xff]
        %v1969 = vld [vmem:[%s1820 + $0x4a0] sm:$0xff]
        %v1970 = vld [vmem:[%s1820 + $0x4a8] sm:$0xff]
        %v1971 = vld [vmem:[%s1820 + $0x4b0] sm:$0xff]
        %v1972 = vld [vmem:[%s1820 + $0x4b8] sm:$0xff]
        %v1973 = vld [vmem:[%s1820 + $0x4c0] sm:$0xff]
        %v1974 = vld [vmem:[%s1820 + $0x4c8] sm:$0xff]
        %v1975 = vld [vmem:[%s1820 + $0x4d0] sm:$0xff]
        %v1976 = vld [vmem:[%s1820 + $0x4d8] sm:$0xff]
        %v1977 = vld [vmem:[%s1820 + $0x4e0] sm:$0xff]
        %v1978 = vld [vmem:[%s1820 + $0x4e8] sm:$0xff]
        %v1979 = vld [vmem:[%s1820 + $0x4f0] sm:$0xff]
        %v1980 = vld [vmem:[%s1820 + $0x4f8] sm:$0xff]
        %v1981 = vld [vmem:[%s1820 + $0x500] sm:$0xff]
        %v1982 = vld [vmem:[%s1820 + $0x508] sm:$0xff]
        %v1983 = vld [vmem:[%s1820 + $0x510] sm:$0xff]
        %v1984 = vld [vmem:[%s1820 + $0x518] sm:$0xff]
        %v1985 = vld [vmem:[%s1820 + $0x520] sm:$0xff]
        %v1986 = vld [vmem:[%s1820 + $0x528] sm:$0xff]
        %v1987 = vld [vmem:[%s1820 + $0x530] sm:$0xff]
        %v1988 = vld [vmem:[%s1820 + $0x538] sm:$0xff]
        %v1989 = vld [vmem:[%s1820 + $0x540] sm:$0xff]
        %v1990 = vld [vmem:[%s1820 + $0x548] sm:$0xff]
        %v1991 = vld [vmem:[%s1820 + $0x550] sm:$0xff]
        %v1992 = vld [vmem:[%s1820 + $0x558] sm:$0xff]
        %v1993 = vld [vmem:[%s1820 + $0x560] sm:$0xff]
        %v1994 = vld [vmem:[%s1820 + $0x568] sm:$0xff]
        %v1995 = vld [vmem:[%s1820 + $0x570] sm:$0xff]
        %v1996 = vld [vmem:[%s1820 + $0x578] sm:$0xff]
        %v1997 = vld [vmem:[%s1820 + $0x580] sm:$0xff]
        %v1998 = vld [vmem:[%s1820 + $0x588] sm:$0xff]
        %v1999 = vld [vmem:[%s1820 + $0x590] sm:$0xff]
        %v2000 = vld [vmem:[%s1820 + $0x598] sm:$0xff]
        %v2001 = vld [vmem:[%s1820 + $0x5a0] sm:$0xff]
        %v2002 = vld [vmem:[%s1820 + $0x5a8] sm:$0xff]
        %v2003 = vld [vmem:[%s1820 + $0x5b0] sm:$0xff]
        %v2004 = vld [vmem:[%s1820 + $0x5b8] sm:$0xff]
        %v2005 = vld [vmem:[%s1820 + $0x5c0] sm:$0xff]
        %v2006 = vld [vmem:[%s1820 + $0x5c8] sm:$0xff]
        %v2007 = vld [vmem:[%s1820 + $0x5d0] sm:$0xff]
        %v2008 = vld [vmem:[%s1820 + $0x5d8] sm:$0xff]
        %v2009 = vld [vmem:[%s1820 + $0x5e0] sm:$0xff]
        %v2010 = vld [vmem:[%s1820 + $0x5e8] sm:$0xff]
        %v2011 = vld [vmem:[%s1820 + $0x5f0] sm:$0xff]
        %v2012 = vld [vmem:[%s1820 + $0x5f8] sm:$0xff]
        %v2013 = vld [vmem:[%s1820 + $0x600] sm:$0xff]
        %v2014 = vld [vmem:[%s1820 + $0x608] sm:$0xff]
        %v2015 = vld [vmem:[%s1820 + $0x610] sm:$0xff]
        %v2016 = vld [vmem:[%s1820 + $0x618] sm:$0xff]
        %v2017 = vld [vmem:[%s1820 + $0x620] sm:$0xff]
        %v2018 = vld [vmem:[%s1820 + $0x628] sm:$0xff]
        %v2019 = vld [vmem:[%s1820 + $0x630] sm:$0xff]
        %v2020 = vld [vmem:[%s1820 + $0x638] sm:$0xff]
        %v2021 = vld [vmem:[%s1820 + $0x640] sm:$0xff]
        %v2022 = vld [vmem:[%s1820 + $0x648] sm:$0xff]
        %v2023 = vld [vmem:[%s1820 + $0x650] sm:$0xff]
        %v2024 = vld [vmem:[%s1820 + $0x658] sm:$0xff]
        %v2025 = vld [vmem:[%s1820 + $0x660] sm:$0xff]
        %v2026 = vld [vmem:[%s1820 + $0x668] sm:$0xff]
        %v2027 = vld [vmem:[%s1820 + $0x670] sm:$0xff]
        %v2028 = vld [vmem:[%s1820 + $0x678] sm:$0xff]
        %v2029 = vld [vmem:[%s1820 + $0x680] sm:$0xff]
        %v2030 = vld [vmem:[%s1820 + $0x688] sm:$0xff]
        %v2031 = vld [vmem:[%s1820 + $0x690] sm:$0xff]
        %v2032 = vld [vmem:[%s1820 + $0x698] sm:$0xff]
        %v2033 = vld [vmem:[%s1820 + $0x6a0] sm:$0xff]
        %v2034 = vld [vmem:[%s1820 + $0x6a8] sm:$0xff]
        %v2035 = vld [vmem:[%s1820 + $0x6b0] sm:$0xff]
        %v2036 = vld [vmem:[%s1820 + $0x6b8] sm:$0xff]
        %v2037 = vld [vmem:[%s1820 + $0x6c0] sm:$0xff]
        %v2038 = vld [vmem:[%s1820 + $0x6c8] sm:$0xff]
        %v2039 = vld [vmem:[%s1820 + $0x6d0] sm:$0xff]
        %v2040 = vld [vmem:[%s1820 + $0x6d8] sm:$0xff]
        %v2041 = vld [vmem:[%s1820 + $0x6e0] sm:$0xff]
        %v2042 = vld [vmem:[%s1820 + $0x6e8] sm:$0xff]
        %v2043 = vld [vmem:[%s1820 + $0x6f0] sm:$0xff]
        %v2044 = vld [vmem:[%s1820 + $0x6f8] sm:$0xff]
        %v2045 = vld [vmem:[%s1820 + $0x700] sm:$0xff]
        %v2046 = vld [vmem:[%s1820 + $0x708] sm:$0xff]
        %v2047 = vld [vmem:[%s1820 + $0x710] sm:$0xff]
        %v2048 = vld [vmem:[%s1820 + $0x718] sm:$0xff]
        %v2049 = vld [vmem:[%s1820 + $0x720] sm:$0xff]
        %v2050 = vld [vmem:[%s1820 + $0x728] sm:$0xff]
        %v2051 = vld [vmem:[%s1820 + $0x730] sm:$0xff]
        %v2052 = vld [vmem:[%s1820 + $0x738] sm:$0xff]
        %v2053 = vld [vmem:[%s1820 + $0x740] sm:$0xff]
        %v2054 = vld [vmem:[%s1820 + $0x748] sm:$0xff]
        %v2055 = vld [vmem:[%s1820 + $0x750] sm:$0xff]
        %v2056 = vld [vmem:[%s1820 + $0x758] sm:$0xff]
        %v2057 = vld [vmem:[%s1820 + $0x760] sm:$0xff]
        %v2058 = vld [vmem:[%s1820 + $0x768] sm:$0xff]
        %v2059 = vld [vmem:[%s1820 + $0x770] sm:$0xff]
        %v2060 = vld [vmem:[%s1820 + $0x778] sm:$0xff]
        %v2061 = vld [vmem:[%s1820 + $0x780] sm:$0xff]
        %v2062 = vld [vmem:[%s1820 + $0x788] sm:$0xff]
        %v2063 = vld [vmem:[%s1820 + $0x790] sm:$0xff]
        %v2064 = vld [vmem:[%s1820 + $0x798] sm:$0xff]
        %v2065 = vld [vmem:[%s1820 + $0x7a0] sm:$0xff]
        %v2066 = vld [vmem:[%s1820 + $0x7a8] sm:$0xff]
        %v2067 = vld [vmem:[%s1820 + $0x7b0] sm:$0xff]
        %v2068 = vld [vmem:[%s1820 + $0x7b8] sm:$0xff]
        %v2069 = vld [vmem:[%s1820 + $0x7c0] sm:$0xff]
        %v2070 = vld [vmem:[%s1820 + $0x7c8] sm:$0xff]
        %v2071 = vld [vmem:[%s1820 + $0x7d0] sm:$0xff]
        %v2072 = vld [vmem:[%s1820 + $0x7d8] sm:$0xff]
        %v2073 = vld [vmem:[%s1820 + $0x7e0] sm:$0xff]
        %v2074 = vld [vmem:[%s1820 + $0x7e8] sm:$0xff]
        %v2075 = vld [vmem:[%s1820 + $0x7f0] sm:$0xff]
        %v2076 = vld [vmem:[%s1820 + $0x7f8] sm:$0xff]
        %2077 = vmatprep.subr.mxu0 %v1882
        %2078 = vmatpush1.msra.mxu0 %v1881
        %2079 = vmatprep.subr.mxu0 %v1878
        %2080 = vmatpush1.msra.mxu0 %v1877
        %2081 = vmatprep.subr.mxu0 %v1874
        %2082 = vmatpush1.msra.mxu0 %v1873
        %2083 = vmatprep.subr.mxu0 %v1870
        %2084 = vmatpush1.msra.mxu0 %v1869
        %2085 = vmatprep.subr.mxu0 %v1866
        %2086 = vmatpush1.msra.mxu0 %v1865
        %2087 = vmatprep.subr.mxu0 %v1862
        %2088 = vmatpush1.msra.mxu0 %v1861
        %2089 = vmatprep.subr.mxu0 %v1858
        %2090 = vmatpush1.msra.mxu0 %v1857
        %2091 = vmatprep.subr.mxu0 %v1854
        %2092 = vmatpush1.msra.mxu0 %v1853
        %2093 = vmatprep.subr.mxu0 %v1850
        %2094 = vmatpush1.msra.mxu0 %v1849
        %2095 = vmatprep.subr.mxu0 %v1846
        %2096 = vmatpush1.msra.mxu0 %v1845
        %2097 = vmatprep.subr.mxu0 %v1842
        %2098 = vmatpush1.msra.mxu0 %v1841
        %2099 = vmatprep.subr.mxu0 %v1838
        %2100 = vmatpush1.msra.mxu0 %v1837
        %2101 = vmatprep.subr.mxu0 %v1834
        %2102 = vmatpush1.msra.mxu0 %v1833
        %2103 = vmatprep.subr.mxu0 %v1830
        %2104 = vmatpush1.msra.mxu0 %v1829
        %2105 = vmatprep.subr.mxu0 %v1826
        %2106 = vmatpush1.msra.mxu0 %v1825
        %2107 = vmatprep.subr.mxu0 %v1822
        %2108 = vmatpush1.msra.mxu0 %v1821
        %2109 = vmatprep.subr.mxu0 %v1946
        %2110 = vmatpush2.msra.mxu0 %v1945
        %2111 = vmatprep.subr.mxu0 %v1942
        %2112 = vmatpush2.msra.mxu0 %v1941
        %2113 = vmatprep.subr.mxu0 %v1938
        %2114 = vmatpush2.msra.mxu0 %v1937
        %2115 = vmatprep.subr.mxu0 %v1934
        %2116 = vmatpush2.msra.mxu0 %v1933
        %2117 = vmatprep.subr.mxu0 %v1930
        %2118 = vmatpush2.msra.mxu0 %v1929
        %2119 = vmatprep.subr.mxu0 %v1926
        %2120 = vmatpush2.msra.mxu0 %v1925
        %2121 = vmatprep.subr.mxu0 %v1922
        %2122 = vmatpush2.msra.mxu0 %v1921
        %2123 = vmatprep.subr.mxu0 %v1918
        %2124 = vmatpush2.msra.mxu0 %v1917
        %2125 = vmatprep.subr.mxu0 %v1914
        %2126 = vmatpush2.msra.mxu0 %v1913
        %2127 = vmatprep.subr.mxu0 %v1910
        %2128 = vmatpush2.msra.mxu0 %v1909
        %2129 = vmatprep.subr.mxu0 %v1906
        %2130 = vmatpush2.msra.mxu0 %v1905
        %2131 = vmatprep.subr.mxu0 %v1902
        %2132 = vmatpush2.msra.mxu0 %v1901
        %2133 = vmatprep.subr.mxu0 %v1898
        %2134 = vmatpush2.msra.mxu0 %v1897
        %2135 = vmatprep.subr.mxu0 %v1894
        %2136 = vmatpush2.msra.mxu0 %v1893
        %2137 = vmatprep.subr.mxu0 %v1890
        %2138 = vmatpush2.msra.mxu0 %v1889
        %2139 = vmatprep.subr.mxu0 %v1886
        %2140 = vmatpush2.msra.mxu0 %v1885
        %2141 = vmatprep.mubr.f32.mxu0 %v1452
        %2142 = vmatmul.mubr.f32.gmra.mxu0 %v1451
        %v2143 = vpop.f32.mrf.mxu0
        %v2144 = vadd.f32 0.0, %v2143
        %v2145 = vpop.f32.mrf.mxu0
        %v2146 = vadd.f32 0.0, %v2145
        %2147 = vmatprep.mubr.f32.mxu0 %v1456
        %2148 = vmatmul.mubr.f32.gmra.mxu0 %v1455
        %v2149 = vpop.f32.mrf.mxu0
        %v2150 = vadd.f32 0.0, %v2149
        %v2151 = vpop.f32.mrf.mxu0
        %v2152 = vadd.f32 0.0, %v2151
        %2153 = vmatprep.mubr.f32.mxu0 %v1460
        %2154 = vmatmul.mubr.f32.gmra.mxu0 %v1459
        %v2155 = vpop.f32.mrf.mxu0
        %v2156 = vadd.f32 0.0, %v2155
        %v2157 = vpop.f32.mrf.mxu0
        %v2158 = vadd.f32 0.0, %v2157
        %2159 = vmatprep.mubr.f32.mxu0 %v1464
        %2160 = vmatmul.mubr.f32.gmra.mxu0 %v1463
        %v2161 = vpop.f32.mrf.mxu0
        %v2162 = vadd.f32 0.0, %v2161
        %v2163 = vpop.f32.mrf.mxu0
        %v2164 = vadd.f32 0.0, %v2163
        %2165 = vdwg.mxu0
        %2166 = vmatprep.subr.mxu0 %v2010
        %2167 = vmatpush1.msra.mxu0 %v2009
        %2168 = vmatprep.subr.mxu0 %v2006
        %2169 = vmatpush1.msra.mxu0 %v2005
        %2170 = vmatprep.subr.mxu0 %v2002
        %2171 = vmatpush1.msra.mxu0 %v2001
        %2172 = vmatprep.subr.mxu0 %v1998
        %2173 = vmatpush1.msra.mxu0 %v1997
        %2174 = vmatprep.subr.mxu0 %v1994
        %2175 = vmatpush1.msra.mxu0 %v1993
        %2176 = vmatprep.subr.mxu0 %v1990
        %2177 = vmatpush1.msra.mxu0 %v1989
        %2178 = vmatprep.subr.mxu0 %v1986
        %2179 = vmatpush1.msra.mxu0 %v1985
        %2180 = vmatprep.subr.mxu0 %v1982
        %2181 = vmatpush1.msra.mxu0 %v1981
        %2182 = vmatprep.subr.mxu0 %v1978
        %2183 = vmatpush1.msra.mxu0 %v1977
        %2184 = vmatprep.subr.mxu0 %v1974
        %2185 = vmatpush1.msra.mxu0 %v1973
        %2186 = vmatprep.subr.mxu0 %v1970
        %2187 = vmatpush1.msra.mxu0 %v1969
        %2188 = vmatprep.subr.mxu0 %v1966
        %2189 = vmatpush1.msra.mxu0 %v1965
        %2190 = vmatprep.subr.mxu0 %v1962
        %2191 = vmatpush1.msra.mxu0 %v1961
        %2192 = vmatprep.subr.mxu0 %v1958
        %2193 = vmatpush1.msra.mxu0 %v1957
        %2194 = vmatprep.subr.mxu0 %v1954
        %2195 = vmatpush1.msra.mxu0 %v1953
        %2196 = vmatprep.subr.mxu0 %v1950
        %2197 = vmatpush1.msra.mxu0 %v1949
        %2198 = vmatprep.subr.mxu0 %v2074
        %2199 = vmatpush2.msra.mxu0 %v2073
        %2200 = vmatprep.subr.mxu0 %v2070
        %2201 = vmatpush2.msra.mxu0 %v2069
        %2202 = vmatprep.subr.mxu0 %v2066
        %2203 = vmatpush2.msra.mxu0 %v2065
        %2204 = vmatprep.subr.mxu0 %v2062
        %2205 = vmatpush2.msra.mxu0 %v2061
        %2206 = vmatprep.subr.mxu0 %v2058
        %2207 = vmatpush2.msra.mxu0 %v2057
        %2208 = vmatprep.subr.mxu0 %v2054
        %2209 = vmatpush2.msra.mxu0 %v2053
        %2210 = vmatprep.subr.mxu0 %v2050
        %2211 = vmatpush2.msra.mxu0 %v2049
        %2212 = vmatprep.subr.mxu0 %v2046
        %2213 = vmatpush2.msra.mxu0 %v2045
        %2214 = vmatprep.subr.mxu0 %v2042
        %2215 = vmatpush2.msra.mxu0 %v2041
        %2216 = vmatprep.subr.mxu0 %v2038
        %2217 = vmatpush2.msra.mxu0 %v2037
        %2218 = vmatprep.subr.mxu0 %v2034
        %2219 = vmatpush2.msra.mxu0 %v2033
        %2220 = vmatprep.subr.mxu0 %v2030
        %2221 = vmatpush2.msra.mxu0 %v2029
        %2222 = vmatprep.subr.mxu0 %v2026
        %2223 = vmatpush2.msra.mxu0 %v2025
        %2224 = vmatprep.subr.mxu0 %v2022
        %2225 = vmatpush2.msra.mxu0 %v2021
        %2226 = vmatprep.subr.mxu0 %v2018
        %2227 = vmatpush2.msra.mxu0 %v2017
        %2228 = vmatprep.subr.mxu0 %v2014
        %2229 = vmatpush2.msra.mxu0 %v2013
        %2230 = vmatprep.mubr.f32.mxu0 %v1454
        %2231 = vmatmul.mubr.f32.gmra.mxu0 %v1453
        %v2232 = vpop.f32.mrf.mxu0
        %v2233 = vadd.f32 %v2144, %v2232
        %v2234 = vpop.f32.mrf.mxu0
        %v2235 = vadd.f32 %v2146, %v2234
        %2236 = vmatprep.mubr.f32.mxu0 %v1458
        %2237 = vmatmul.mubr.f32.gmra.mxu0 %v1457
        %v2238 = vpop.f32.mrf.mxu0
        %v2239 = vadd.f32 %v2150, %v2238
        %v2240 = vpop.f32.mrf.mxu0
        %v2241 = vadd.f32 %v2152, %v2240
        %2242 = vmatprep.mubr.f32.mxu0 %v1462
        %2243 = vmatmul.mubr.f32.gmra.mxu0 %v1461
        %v2244 = vpop.f32.mrf.mxu0
        %v2245 = vadd.f32 %v2156, %v2244
        %v2246 = vpop.f32.mrf.mxu0
        %v2247 = vadd.f32 %v2158, %v2246
        %2248 = vmatprep.mubr.f32.mxu0 %v1466
        %2249 = vmatmul.mubr.f32.gmra.mxu0 %v1465
        %v2250 = vpop.f32.mrf.mxu0
        %v2251 = vadd.f32 %v2162, %v2250
        %v2252 = vpop.f32.mrf.mxu0
        %v2253 = vadd.f32 %v2164, %v2252
        %2254 = vdwg.mxu0
        %2255 = vmatprep.subr.mxu0 %v1884
        %2256 = vmatpush1.msra.mxu0 %v1883
        %2257 = vmatprep.subr.mxu0 %v1880
        %2258 = vmatpush1.msra.mxu0 %v1879
        %2259 = vmatprep.subr.mxu0 %v1876
        %2260 = vmatpush1.msra.mxu0 %v1875
        %2261 = vmatprep.subr.mxu0 %v1872
        %2262 = vmatpush1.msra.mxu0 %v1871
        %2263 = vmatprep.subr.mxu0 %v1868
        %2264 = vmatpush1.msra.mxu0 %v1867
        %2265 = vmatprep.subr.mxu0 %v1864
        %2266 = vmatpush1.msra.mxu0 %v1863
        %2267 = vmatprep.subr.mxu0 %v1860
        %2268 = vmatpush1.msra.mxu0 %v1859
        %2269 = vmatprep.subr.mxu0 %v1856
        %2270 = vmatpush1.msra.mxu0 %v1855
        %2271 = vmatprep.subr.mxu0 %v1852
        %2272 = vmatpush1.msra.mxu0 %v1851
        %2273 = vmatprep.subr.mxu0 %v1848
        %2274 = vmatpush1.msra.mxu0 %v1847
        %2275 = vmatprep.subr.mxu0 %v1844
        %2276 = vmatpush1.msra.mxu0 %v1843
        %2277 = vmatprep.subr.mxu0 %v1840
        %2278 = vmatpush1.msra.mxu0 %v1839
        %2279 = vmatprep.subr.mxu0 %v1836
        %2280 = vmatpush1.msra.mxu0 %v1835
        %2281 = vmatprep.subr.mxu0 %v1832
        %2282 = vmatpush1.msra.mxu0 %v1831
        %2283 = vmatprep.subr.mxu0 %v1828
        %2284 = vmatpush1.msra.mxu0 %v1827
        %2285 = vmatprep.subr.mxu0 %v1824
        %2286 = vmatpush1.msra.mxu0 %v1823
        %2287 = vmatprep.subr.mxu0 %v1948
        %2288 = vmatpush2.msra.mxu0 %v1947
        %2289 = vmatprep.subr.mxu0 %v1944
        %2290 = vmatpush2.msra.mxu0 %v1943
        %2291 = vmatprep.subr.mxu0 %v1940
        %2292 = vmatpush2.msra.mxu0 %v1939
        %2293 = vmatprep.subr.mxu0 %v1936
        %2294 = vmatpush2.msra.mxu0 %v1935
        %2295 = vmatprep.subr.mxu0 %v1932
        %2296 = vmatpush2.msra.mxu0 %v1931
        %2297 = vmatprep.subr.mxu0 %v1928
        %2298 = vmatpush2.msra.mxu0 %v1927
        %2299 = vmatprep.subr.mxu0 %v1924
        %2300 = vmatpush2.msra.mxu0 %v1923
        %2301 = vmatprep.subr.mxu0 %v1920
        %2302 = vmatpush2.msra.mxu0 %v1919
        %2303 = vmatprep.subr.mxu0 %v1916
        %2304 = vmatpush2.msra.mxu0 %v1915
        %2305 = vmatprep.subr.mxu0 %v1912
        %2306 = vmatpush2.msra.mxu0 %v1911
        %2307 = vmatprep.subr.mxu0 %v1908
        %2308 = vmatpush2.msra.mxu0 %v1907
        %2309 = vmatprep.subr.mxu0 %v1904
        %2310 = vmatpush2.msra.mxu0 %v1903
        %2311 = vmatprep.subr.mxu0 %v1900
        %2312 = vmatpush2.msra.mxu0 %v1899
        %2313 = vmatprep.subr.mxu0 %v1896
        %2314 = vmatpush2.msra.mxu0 %v1895
        %2315 = vmatprep.subr.mxu0 %v1892
        %2316 = vmatpush2.msra.mxu0 %v1891
        %2317 = vmatprep.subr.mxu0 %v1888
        %2318 = vmatpush2.msra.mxu0 %v1887
        %2319 = vmatprep.mubr.f32.mxu0 %v1452
        %2320 = vmatmul.mubr.f32.gmra.mxu0 %v1451
        %v2321 = vpop.f32.mrf.mxu0
        %v2322 = vadd.f32 0.0, %v2321
        %v2323 = vpop.f32.mrf.mxu0
        %v2324 = vadd.f32 0.0, %v2323
        %2325 = vmatprep.mubr.f32.mxu0 %v1456
        %2326 = vmatmul.mubr.f32.gmra.mxu0 %v1455
        %v2327 = vpop.f32.mrf.mxu0
        %v2328 = vadd.f32 0.0, %v2327
        %v2329 = vpop.f32.mrf.mxu0
        %v2330 = vadd.f32 0.0, %v2329
        %2331 = vmatprep.mubr.f32.mxu0 %v1460
        %2332 = vmatmul.mubr.f32.gmra.mxu0 %v1459
        %v2333 = vpop.f32.mrf.mxu0
        %v2334 = vadd.f32 0.0, %v2333
        %v2335 = vpop.f32.mrf.mxu0
        %v2336 = vadd.f32 0.0, %v2335
        %2337 = vmatprep.mubr.f32.mxu0 %v1464
        %2338 = vmatmul.mubr.f32.gmra.mxu0 %v1463
        %v2339 = vpop.f32.mrf.mxu0
        %v2340 = vadd.f32 0.0, %v2339
        %v2341 = vpop.f32.mrf.mxu0
        %v2342 = vadd.f32 0.0, %v2341
        %2343 = vdwg.mxu0
        %2344 = vmatprep.subr.mxu0 %v2012
        %2345 = vmatpush1.msra.mxu0 %v2011
        %2346 = vmatprep.subr.mxu0 %v2008
        %2347 = vmatpush1.msra.mxu0 %v2007
        %2348 = vmatprep.subr.mxu0 %v2004
        %2349 = vmatpush1.msra.mxu0 %v2003
        %2350 = vmatprep.subr.mxu0 %v2000
        %2351 = vmatpush1.msra.mxu0 %v1999
        %2352 = vmatprep.subr.mxu0 %v1996
        %2353 = vmatpush1.msra.mxu0 %v1995
        %2354 = vmatprep.subr.mxu0 %v1992
        %2355 = vmatpush1.msra.mxu0 %v1991
        %2356 = vmatprep.subr.mxu0 %v1988
        %2357 = vmatpush1.msra.mxu0 %v1987
        %2358 = vmatprep.subr.mxu0 %v1984
        %2359 = vmatpush1.msra.mxu0 %v1983
        %2360 = vmatprep.subr.mxu0 %v1980
        %2361 = vmatpush1.msra.mxu0 %v1979
        %2362 = vmatprep.subr.mxu0 %v1976
        %2363 = vmatpush1.msra.mxu0 %v1975
        %2364 = vmatprep.subr.mxu0 %v1972
        %2365 = vmatpush1.msra.mxu0 %v1971
        %2366 = vmatprep.subr.mxu0 %v1968
        %2367 = vmatpush1.msra.mxu0 %v1967
        %2368 = vmatprep.subr.mxu0 %v1964
        %2369 = vmatpush1.msra.mxu0 %v1963
        %2370 = vmatprep.subr.mxu0 %v1960
        %2371 = vmatpush1.msra.mxu0 %v1959
        %2372 = vmatprep.subr.mxu0 %v1956
        %2373 = vmatpush1.msra.mxu0 %v1955
        %2374 = vmatprep.subr.mxu0 %v1952
        %2375 = vmatpush1.msra.mxu0 %v1951
        %2376 = vmatprep.subr.mxu0 %v2076
        %2377 = vmatpush2.msra.mxu0 %v2075
        %2378 = vmatprep.subr.mxu0 %v2072
        %2379 = vmatpush2.msra.mxu0 %v2071
        %2380 = vmatprep.subr.mxu0 %v2068
        %2381 = vmatpush2.msra.mxu0 %v2067
        %2382 = vmatprep.subr.mxu0 %v2064
        %2383 = vmatpush2.msra.mxu0 %v2063
        %2384 = vmatprep.subr.mxu0 %v2060
        %2385 = vmatpush2.msra.mxu0 %v2059
        %2386 = vmatprep.subr.mxu0 %v2056
        %2387 = vmatpush2.msra.mxu0 %v2055
        %2388 = vmatprep.subr.mxu0 %v2052
        %2389 = vmatpush2.msra.mxu0 %v2051
        %2390 = vmatprep.subr.mxu0 %v2048
        %2391 = vmatpush2.msra.mxu0 %v2047
        %2392 = vmatprep.subr.mxu0 %v2044
        %2393 = vmatpush2.msra.mxu0 %v2043
        %2394 = vmatprep.subr.mxu0 %v2040
        %2395 = vmatpush2.msra.mxu0 %v2039
        %2396 = vmatprep.subr.mxu0 %v2036
        %2397 = vmatpush2.msra.mxu0 %v2035
        %2398 = vmatprep.subr.mxu0 %v2032
        %2399 = vmatpush2.msra.mxu0 %v2031
        %2400 = vmatprep.subr.mxu0 %v2028
        %2401 = vmatpush2.msra.mxu0 %v2027
        %2402 = vmatprep.subr.mxu0 %v2024
        %2403 = vmatpush2.msra.mxu0 %v2023
        %2404 = vmatprep.subr.mxu0 %v2020
        %2405 = vmatpush2.msra.mxu0 %v2019
        %2406 = vmatprep.subr.mxu0 %v2016
        %2407 = vmatpush2.msra.mxu0 %v2015
        %2408 = vmatprep.mubr.f32.mxu0 %v1454
        %2409 = vmatmul.mubr.f32.gmra.mxu0 %v1453
        %v2410 = vpop.f32.mrf.mxu0
        %v2411 = vadd.f32 %v2322, %v2410
        %v2412 = vpop.f32.mrf.mxu0
        %v2413 = vadd.f32 %v2324, %v2412
        %2414 = vmatprep.mubr.f32.mxu0 %v1458
        %2415 = vmatmul.mubr.f32.gmra.mxu0 %v1457
        %v2416 = vpop.f32.mrf.mxu0
        %v2417 = vadd.f32 %v2328, %v2416
        %v2418 = vpop.f32.mrf.mxu0
        %v2419 = vadd.f32 %v2330, %v2418
        %2420 = vmatprep.mubr.f32.mxu0 %v1462
        %2421 = vmatmul.mubr.f32.gmra.mxu0 %v1461
        %v2422 = vpop.f32.mrf.mxu0
        %v2423 = vadd.f32 %v2334, %v2422
        %v2424 = vpop.f32.mrf.mxu0
        %v2425 = vadd.f32 %v2336, %v2424
        %2426 = vmatprep.mubr.f32.mxu0 %v1466
        %2427 = vmatmul.mubr.f32.gmra.mxu0 %v1465
        %v2428 = vpop.f32.mrf.mxu0
        %v2429 = vadd.f32 %v2340, %v2428
        %v2430 = vpop.f32.mrf.mxu0
        %v2431 = vadd.f32 %v2342, %v2430
        %2432 = vdwg.mxu0
        %2433 = vmatprep.subr.mxu0 %v1625
        %2434 = vmatpush1.msra.mxu0 %v1624
        %2435 = vmatprep.subr.mxu0 %v1621
        %2436 = vmatpush1.msra.mxu0 %v1620
        %2437 = vmatprep.subr.mxu0 %v1617
        %2438 = vmatpush1.msra.mxu0 %v1616
        %2439 = vmatprep.subr.mxu0 %v1613
        %2440 = vmatpush1.msra.mxu0 %v1612
        %2441 = vmatprep.subr.mxu0 %v1609
        %2442 = vmatpush1.msra.mxu0 %v1608
        %2443 = vmatprep.subr.mxu0 %v1605
        %2444 = vmatpush1.msra.mxu0 %v1604
        %2445 = vmatprep.subr.mxu0 %v1601
        %2446 = vmatpush1.msra.mxu0 %v1600
        %2447 = vmatprep.subr.mxu0 %v1597
        %2448 = vmatpush1.msra.mxu0 %v1596
        %2449 = vmatprep.subr.mxu0 %v1593
        %2450 = vmatpush1.msra.mxu0 %v1592
        %2451 = vmatprep.subr.mxu0 %v1589
        %2452 = vmatpush1.msra.mxu0 %v1588
        %2453 = vmatprep.subr.mxu0 %v1585
        %2454 = vmatpush1.msra.mxu0 %v1584
        %2455 = vmatprep.subr.mxu0 %v1581
        %2456 = vmatpush1.msra.mxu0 %v1580
        %2457 = vmatprep.subr.mxu0 %v1577
        %2458 = vmatpush1.msra.mxu0 %v1576
        %2459 = vmatprep.subr.mxu0 %v1573
        %2460 = vmatpush1.msra.mxu0 %v1572
        %2461 = vmatprep.subr.mxu0 %v1569
        %2462 = vmatpush1.msra.mxu0 %v1568
        %2463 = vmatprep.subr.mxu0 %v1565
        %2464 = vmatpush1.msra.mxu0 %v1564
        %2465 = vmatprep.subr.mxu0 %v1689
        %2466 = vmatpush2.msra.mxu0 %v1688
        %2467 = vmatprep.subr.mxu0 %v1685
        %2468 = vmatpush2.msra.mxu0 %v1684
        %2469 = vmatprep.subr.mxu0 %v1681
        %2470 = vmatpush2.msra.mxu0 %v1680
        %2471 = vmatprep.subr.mxu0 %v1677
        %2472 = vmatpush2.msra.mxu0 %v1676
        %2473 = vmatprep.subr.mxu0 %v1673
        %2474 = vmatpush2.msra.mxu0 %v1672
        %2475 = vmatprep.subr.mxu0 %v1669
        %2476 = vmatpush2.msra.mxu0 %v1668
        %2477 = vmatprep.subr.mxu0 %v1665
        %2478 = vmatpush2.msra.mxu0 %v1664
        %2479 = vmatprep.subr.mxu0 %v1661
        %2480 = vmatpush2.msra.mxu0 %v1660
        %2481 = vmatprep.subr.mxu0 %v1657
        %2482 = vmatpush2.msra.mxu0 %v1656
        %2483 = vmatprep.subr.mxu0 %v1653
        %2484 = vmatpush2.msra.mxu0 %v1652
        %2485 = vmatprep.subr.mxu0 %v1649
        %2486 = vmatpush2.msra.mxu0 %v1648
        %2487 = vmatprep.subr.mxu0 %v1645
        %2488 = vmatpush2.msra.mxu0 %v1644
        %2489 = vmatprep.subr.mxu0 %v1641
        %2490 = vmatpush2.msra.mxu0 %v1640
        %2491 = vmatprep.subr.mxu0 %v1637
        %2492 = vmatpush2.msra.mxu0 %v1636
        %2493 = vmatprep.subr.mxu0 %v1633
        %2494 = vmatpush2.msra.mxu0 %v1632
        %2495 = vmatprep.subr.mxu0 %v1629
        %2496 = vmatpush2.msra.mxu0 %v1628
        %2497 = vmatprep.mubr.f32.mxu0 %v1501
        %2498 = vmatmul.mubr.f32.gmra.mxu0 %v1500
        %v2499 = vpop.f32.mrf.mxu0
        %v2500 = vadd.f32 %v2233, %v2499
        %v2501 = vpop.f32.mrf.mxu0
        %v2502 = vadd.f32 %v2235, %v2501
        %2503 = vmatprep.mubr.f32.mxu0 %v1505
        %2504 = vmatmul.mubr.f32.gmra.mxu0 %v1504
        %v2505 = vpop.f32.mrf.mxu0
        %v2506 = vadd.f32 %v2239, %v2505
        %v2507 = vpop.f32.mrf.mxu0
        %v2508 = vadd.f32 %v2241, %v2507
        %2509 = vmatprep.mubr.f32.mxu0 %v1509
        %2510 = vmatmul.mubr.f32.gmra.mxu0 %v1508
        %v2511 = vpop.f32.mrf.mxu0
        %v2512 = vadd.f32 %v2245, %v2511
        %v2513 = vpop.f32.mrf.mxu0
        %v2514 = vadd.f32 %v2247, %v2513
        %2515 = vmatprep.mubr.f32.mxu0 %v1513
        %2516 = vmatmul.mubr.f32.gmra.mxu0 %v1512
        %v2517 = vpop.f32.mrf.mxu0
        %v2518 = vadd.f32 %v2251, %v2517
        %v2519 = vpop.f32.mrf.mxu0
        %v2520 = vadd.f32 %v2253, %v2519
        %2521 = vdwg.mxu0
        %2522 = vmatprep.subr.mxu0 %v1753
        %2523 = vmatpush1.msra.mxu0 %v1752
        %2524 = vmatprep.subr.mxu0 %v1749
        %2525 = vmatpush1.msra.mxu0 %v1748
        %2526 = vmatprep.subr.mxu0 %v1745
        %2527 = vmatpush1.msra.mxu0 %v1744
        %2528 = vmatprep.subr.mxu0 %v1741
        %2529 = vmatpush1.msra.mxu0 %v1740
        %2530 = vmatprep.subr.mxu0 %v1737
        %2531 = vmatpush1.msra.mxu0 %v1736
        %2532 = vmatprep.subr.mxu0 %v1733
        %2533 = vmatpush1.msra.mxu0 %v1732
        %2534 = vmatprep.subr.mxu0 %v1729
        %2535 = vmatpush1.msra.mxu0 %v1728
        %2536 = vmatprep.subr.mxu0 %v1725
        %2537 = vmatpush1.msra.mxu0 %v1724
        %2538 = vmatprep.subr.mxu0 %v1721
        %2539 = vmatpush1.msra.mxu0 %v1720
        %2540 = vmatprep.subr.mxu0 %v1717
        %2541 = vmatpush1.msra.mxu0 %v1716
        %2542 = vmatprep.subr.mxu0 %v1713
        %2543 = vmatpush1.msra.mxu0 %v1712
        %2544 = vmatprep.subr.mxu0 %v1709
        %2545 = vmatpush1.msra.mxu0 %v1708
        %2546 = vmatprep.subr.mxu0 %v1705
        %2547 = vmatpush1.msra.mxu0 %v1704
        %2548 = vmatprep.subr.mxu0 %v1701
        %2549 = vmatpush1.msra.mxu0 %v1700
        %2550 = vmatprep.subr.mxu0 %v1697
        %2551 = vmatpush1.msra.mxu0 %v1696
        %2552 = vmatprep.subr.mxu0 %v1693
        %2553 = vmatpush1.msra.mxu0 %v1692
        %2554 = vmatprep.subr.mxu0 %v1817
        %2555 = vmatpush2.msra.mxu0 %v1816
        %2556 = vmatprep.subr.mxu0 %v1813
        %2557 = vmatpush2.msra.mxu0 %v1812
        %2558 = vmatprep.subr.mxu0 %v1809
        %2559 = vmatpush2.msra.mxu0 %v1808
        %2560 = vmatprep.subr.mxu0 %v1805
        %2561 = vmatpush2.msra.mxu0 %v1804
        %2562 = vmatprep.subr.mxu0 %v1801
        %2563 = vmatpush2.msra.mxu0 %v1800
        %2564 = vmatprep.subr.mxu0 %v1797
        %2565 = vmatpush2.msra.mxu0 %v1796
        %2566 = vmatprep.subr.mxu0 %v1793
        %2567 = vmatpush2.msra.mxu0 %v1792
        %2568 = vmatprep.subr.mxu0 %v1789
        %2569 = vmatpush2.msra.mxu0 %v1788
        %2570 = vmatprep.subr.mxu0 %v1785
        %2571 = vmatpush2.msra.mxu0 %v1784
        %2572 = vmatprep.subr.mxu0 %v1781
        %2573 = vmatpush2.msra.mxu0 %v1780
        %2574 = vmatprep.subr.mxu0 %v1777
        %2575 = vmatpush2.msra.mxu0 %v1776
        %2576 = vmatprep.subr.mxu0 %v1773
        %2577 = vmatpush2.msra.mxu0 %v1772
        %2578 = vmatprep.subr.mxu0 %v1769
        %2579 = vmatpush2.msra.mxu0 %v1768
        %2580 = vmatprep.subr.mxu0 %v1765
        %2581 = vmatpush2.msra.mxu0 %v1764
        %2582 = vmatprep.subr.mxu0 %v1761
        %2583 = vmatpush2.msra.mxu0 %v1760
        %2584 = vmatprep.subr.mxu0 %v1757
        %2585 = vmatpush2.msra.mxu0 %v1756
        %2586 = vmatprep.mubr.f32.mxu0 %v1503
        %2587 = vmatmul.mubr.f32.gmra.mxu0 %v1502
        %v2588 = vpop.f32.mrf.mxu0
        %v2589 = vadd.f32 %v2500, %v2588
        %v2590 = vpop.f32.mrf.mxu0
        %v2591 = vadd.f32 %v2502, %v2590
        %2592 = vmatprep.mubr.f32.mxu0 %v1507
        %2593 = vmatmul.mubr.f32.gmra.mxu0 %v1506
        %v2594 = vpop.f32.mrf.mxu0
        %v2595 = vadd.f32 %v2506, %v2594
        %v2596 = vpop.f32.mrf.mxu0
        %v2597 = vadd.f32 %v2508, %v2596
        %2598 = vmatprep.mubr.f32.mxu0 %v1511
        %2599 = vmatmul.mubr.f32.gmra.mxu0 %v1510
        %v2600 = vpop.f32.mrf.mxu0
        %v2601 = vadd.f32 %v2512, %v2600
        %v2602 = vpop.f32.mrf.mxu0
        %v2603 = vadd.f32 %v2514, %v2602
        %2604 = vmatprep.mubr.f32.mxu0 %v1515
        %2605 = vmatmul.mubr.f32.gmra.mxu0 %v1514
        %v2606 = vpop.f32.mrf.mxu0
        %v2607 = vadd.f32 %v2518, %v2606
        %v2608 = vpop.f32.mrf.mxu0
        %v2609 = vadd.f32 %v2520, %v2608
        %2610 = vdwg.mxu0
        %2611 = vmatprep.subr.mxu0 %v1627
        %2612 = vmatpush1.msra.mxu0 %v1626
        %2613 = vmatprep.subr.mxu0 %v1623
        %2614 = vmatpush1.msra.mxu0 %v1622
        %2615 = vmatprep.subr.mxu0 %v1619
        %2616 = vmatpush1.msra.mxu0 %v1618
        %2617 = vmatprep.subr.mxu0 %v1615
        %2618 = vmatpush1.msra.mxu0 %v1614
        %2619 = vmatprep.subr.mxu0 %v1611
        %2620 = vmatpush1.msra.mxu0 %v1610
        %2621 = vmatprep.subr.mxu0 %v1607
        %2622 = vmatpush1.msra.mxu0 %v1606
        %2623 = vmatprep.subr.mxu0 %v1603
        %2624 = vmatpush1.msra.mxu0 %v1602
        %2625 = vmatprep.subr.mxu0 %v1599
        %2626 = vmatpush1.msra.mxu0 %v1598
        %2627 = vmatprep.subr.mxu0 %v1595
        %2628 = vmatpush1.msra.mxu0 %v1594
        %2629 = vmatprep.subr.mxu0 %v1591
        %2630 = vmatpush1.msra.mxu0 %v1590
        %2631 = vmatprep.subr.mxu0 %v1587
        %2632 = vmatpush1.msra.mxu0 %v1586
        %2633 = vmatprep.subr.mxu0 %v1583
        %2634 = vmatpush1.msra.mxu0 %v1582
        %2635 = vmatprep.subr.mxu0 %v1579
        %2636 = vmatpush1.msra.mxu0 %v1578
        %2637 = vmatprep.subr.mxu0 %v1575
        %2638 = vmatpush1.msra.mxu0 %v1574
        %2639 = vmatprep.subr.mxu0 %v1571
        %2640 = vmatpush1.msra.mxu0 %v1570
        %2641 = vmatprep.subr.mxu0 %v1567
        %2642 = vmatpush1.msra.mxu0 %v1566
        %2643 = vmatprep.subr.mxu0 %v1691
        %2644 = vmatpush2.msra.mxu0 %v1690
        %2645 = vmatprep.subr.mxu0 %v1687
        %2646 = vmatpush2.msra.mxu0 %v1686
        %2647 = vmatprep.subr.mxu0 %v1683
        %2648 = vmatpush2.msra.mxu0 %v1682
        %2649 = vmatprep.subr.mxu0 %v1679
        %2650 = vmatpush2.msra.mxu0 %v1678
        %2651 = vmatprep.subr.mxu0 %v1675
        %2652 = vmatpush2.msra.mxu0 %v1674
        %2653 = vmatprep.subr.mxu0 %v1671
        %2654 = vmatpush2.msra.mxu0 %v1670
        %2655 = vmatprep.subr.mxu0 %v1667
        %2656 = vmatpush2.msra.mxu0 %v1666
        %2657 = vmatprep.subr.mxu0 %v1663
        %2658 = vmatpush2.msra.mxu0 %v1662
        %2659 = vmatprep.subr.mxu0 %v1659
        %2660 = vmatpush2.msra.mxu0 %v1658
        %2661 = vmatprep.subr.mxu0 %v1655
        %2662 = vmatpush2.msra.mxu0 %v1654
        %2663 = vmatprep.subr.mxu0 %v1651
        %2664 = vmatpush2.msra.mxu0 %v1650
        %2665 = vmatprep.subr.mxu0 %v1647
        %2666 = vmatpush2.msra.mxu0 %v1646
        %2667 = vmatprep.subr.mxu0 %v1643
        %2668 = vmatpush2.msra.mxu0 %v1642
        %2669 = vmatprep.subr.mxu0 %v1639
        %2670 = vmatpush2.msra.mxu0 %v1638
        %2671 = vmatprep.subr.mxu0 %v1635
        %2672 = vmatpush2.msra.mxu0 %v1634
        %2673 = vmatprep.subr.mxu0 %v1631
        %2674 = vmatpush2.msra.mxu0 %v1630
        %2675 = vmatprep.mubr.f32.mxu0 %v1501
        %2676 = vmatmul.mubr.f32.gmra.mxu0 %v1500
        %v2677 = vpop.f32.mrf.mxu0
        %v2678 = vadd.f32 %v2411, %v2677
        %v2679 = vpop.f32.mrf.mxu0
        %v2680 = vadd.f32 %v2413, %v2679
        %2681 = vmatprep.mubr.f32.mxu0 %v1505
        %2682 = vmatmul.mubr.f32.gmra.mxu0 %v1504
        %v2683 = vpop.f32.mrf.mxu0
        %v2684 = vadd.f32 %v2417, %v2683
        %v2685 = vpop.f32.mrf.mxu0
        %v2686 = vadd.f32 %v2419, %v2685
        %2687 = vmatprep.mubr.f32.mxu0 %v1509
        %2688 = vmatmul.mubr.f32.gmra.mxu0 %v1508
        %v2689 = vpop.f32.mrf.mxu0
        %v2690 = vadd.f32 %v2423, %v2689
        %v2691 = vpop.f32.mrf.mxu0
        %v2692 = vadd.f32 %v2425, %v2691
        %2693 = vmatprep.mubr.f32.mxu0 %v1513
        %2694 = vmatmul.mubr.f32.gmra.mxu0 %v1512
        %v2695 = vpop.f32.mrf.mxu0
        %v2696 = vadd.f32 %v2429, %v2695
        %v2697 = vpop.f32.mrf.mxu0
        %v2698 = vadd.f32 %v2431, %v2697
        %2699 = vdwg.mxu0
        %2700 = vmatprep.subr.mxu0 %v1755
        %2701 = vmatpush1.msra.mxu0 %v1754
        %2702 = vmatprep.subr.mxu0 %v1751
        %2703 = vmatpush1.msra.mxu0 %v1750
        %2704 = vmatprep.subr.mxu0 %v1747
        %2705 = vmatpush1.msra.mxu0 %v1746
        %2706 = vmatprep.subr.mxu0 %v1743
        %2707 = vmatpush1.msra.mxu0 %v1742
        %2708 = vmatprep.subr.mxu0 %v1739
        %2709 = vmatpush1.msra.mxu0 %v1738
        %2710 = vmatprep.subr.mxu0 %v1735
        %2711 = vmatpush1.msra.mxu0 %v1734
        %2712 = vmatprep.subr.mxu0 %v1731
        %2713 = vmatpush1.msra.mxu0 %v1730
        %2714 = vmatprep.subr.mxu0 %v1727
        %2715 = vmatpush1.msra.mxu0 %v1726
        %2716 = vmatprep.subr.mxu0 %v1723
        %2717 = vmatpush1.msra.mxu0 %v1722
        %2718 = vmatprep.subr.mxu0 %v1719
        %2719 = vmatpush1.msra.mxu0 %v1718
        %2720 = vmatprep.subr.mxu0 %v1715
        %2721 = vmatpush1.msra.mxu0 %v1714
        %2722 = vmatprep.subr.mxu0 %v1711
        %2723 = vmatpush1.msra.mxu0 %v1710
        %2724 = vmatprep.subr.mxu0 %v1707
        %2725 = vmatpush1.msra.mxu0 %v1706
        %2726 = vmatprep.subr.mxu0 %v1703
        %2727 = vmatpush1.msra.mxu0 %v1702
        %2728 = vmatprep.subr.mxu0 %v1699
        %2729 = vmatpush1.msra.mxu0 %v1698
        %2730 = vmatprep.subr.mxu0 %v1695
        %2731 = vmatpush1.msra.mxu0 %v1694
        %2732 = vmatprep.subr.mxu0 %v1819
        %2733 = vmatpush2.msra.mxu0 %v1818
        %2734 = vmatprep.subr.mxu0 %v1815
        %2735 = vmatpush2.msra.mxu0 %v1814
        %2736 = vmatprep.subr.mxu0 %v1811
        %2737 = vmatpush2.msra.mxu0 %v1810
        %2738 = vmatprep.subr.mxu0 %v1807
        %2739 = vmatpush2.msra.mxu0 %v1806
        %2740 = vmatprep.subr.mxu0 %v1803
        %2741 = vmatpush2.msra.mxu0 %v1802
        %2742 = vmatprep.subr.mxu0 %v1799
        %2743 = vmatpush2.msra.mxu0 %v1798
        %2744 = vmatprep.subr.mxu0 %v1795
        %2745 = vmatpush2.msra.mxu0 %v1794
        %2746 = vmatprep.subr.mxu0 %v1791
        %2747 = vmatpush2.msra.mxu0 %v1790
        %2748 = vmatprep.subr.mxu0 %v1787
        %2749 = vmatpush2.msra.mxu0 %v1786
        %2750 = vmatprep.subr.mxu0 %v1783
        %2751 = vmatpush2.msra.mxu0 %v1782
        %2752 = vmatprep.subr.mxu0 %v1779
        %2753 = vmatpush2.msra.mxu0 %v1778
        %2754 = vmatprep.subr.mxu0 %v1775
        %2755 = vmatpush2.msra.mxu0 %v1774
        %2756 = vmatprep.subr.mxu0 %v1771
        %2757 = vmatpush2.msra.mxu0 %v1770
        %2758 = vmatprep.subr.mxu0 %v1767
        %2759 = vmatpush2.msra.mxu0 %v1766
        %2760 = vmatprep.subr.mxu0 %v1763
        %2761 = vmatpush2.msra.mxu0 %v1762
        %2762 = vmatprep.subr.mxu0 %v1759
        %2763 = vmatpush2.msra.mxu0 %v1758
        %2764 = vmatprep.mubr.f32.mxu0 %v1503
        %2765 = vmatmul.mubr.f32.gmra.mxu0 %v1502
        %v2766 = vpop.f32.mrf.mxu0
        %v2767 = vadd.f32 %v2678, %v2766
        %v2768 = vpop.f32.mrf.mxu0
        %v2769 = vadd.f32 %v2680, %v2768
        %2770 = vmatprep.mubr.f32.mxu0 %v1507
        %2771 = vmatmul.mubr.f32.gmra.mxu0 %v1506
        %v2772 = vpop.f32.mrf.mxu0
        %v2773 = vadd.f32 %v2684, %v2772
        %v2774 = vpop.f32.mrf.mxu0
        %v2775 = vadd.f32 %v2686, %v2774
        %2776 = vmatprep.mubr.f32.mxu0 %v1511
        %2777 = vmatmul.mubr.f32.gmra.mxu0 %v1510
        %v2778 = vpop.f32.mrf.mxu0
        %v2779 = vadd.f32 %v2690, %v2778
        %v2780 = vpop.f32.mrf.mxu0
        %v2781 = vadd.f32 %v2692, %v2780
        %2782 = vmatprep.mubr.f32.mxu0 %v1515
        %2783 = vmatmul.mubr.f32.gmra.mxu0 %v1514
        %v2784 = vpop.f32.mrf.mxu0
        %v2785 = vadd.f32 %v2696, %v2784
        %v2786 = vpop.f32.mrf.mxu0
        %v2787 = vadd.f32 %v2698, %v2786
        %2788 = vdwg.mxu0
        %s2789 = scalar_lea.vmem [#allocation9], 4096
        %v2790 = vld [vmem:[%s2789] sm:$0xff]
        %v2791 = vld [vmem:[%s2789 + $0x8] sm:$0xff]
        %v2792 = vld [vmem:[%s2789 + $0x10] sm:$0xff]
        %v2793 = vld [vmem:[%s2789 + $0x18] sm:$0xff]
        %v2794 = vld [vmem:[%s2789 + $0x20] sm:$0xff]
        %v2795 = vld [vmem:[%s2789 + $0x28] sm:$0xff]
        %v2796 = vld [vmem:[%s2789 + $0x30] sm:$0xff]
        %v2797 = vld [vmem:[%s2789 + $0x38] sm:$0xff]
        %v2798 = vld [vmem:[%s2789 + $0x40] sm:$0xff]
        %v2799 = vld [vmem:[%s2789 + $0x48] sm:$0xff]
        %v2800 = vld [vmem:[%s2789 + $0x50] sm:$0xff]
        %v2801 = vld [vmem:[%s2789 + $0x58] sm:$0xff]
        %v2802 = vld [vmem:[%s2789 + $0x60] sm:$0xff]
        %v2803 = vld [vmem:[%s2789 + $0x68] sm:$0xff]
        %v2804 = vld [vmem:[%s2789 + $0x70] sm:$0xff]
        %v2805 = vld [vmem:[%s2789 + $0x78] sm:$0xff]
        %v2806 = vld [vmem:[%s2789 + $0x80] sm:$0xff]
        %v2807 = vld [vmem:[%s2789 + $0x88] sm:$0xff]
        %v2808 = vld [vmem:[%s2789 + $0x90] sm:$0xff]
        %v2809 = vld [vmem:[%s2789 + $0x98] sm:$0xff]
        %v2810 = vld [vmem:[%s2789 + $0xa0] sm:$0xff]
        %v2811 = vld [vmem:[%s2789 + $0xa8] sm:$0xff]
        %v2812 = vld [vmem:[%s2789 + $0xb0] sm:$0xff]
        %v2813 = vld [vmem:[%s2789 + $0xb8] sm:$0xff]
        %v2814 = vld [vmem:[%s2789 + $0xc0] sm:$0xff]
        %v2815 = vld [vmem:[%s2789 + $0xc8] sm:$0xff]
        %v2816 = vld [vmem:[%s2789 + $0xd0] sm:$0xff]
        %v2817 = vld [vmem:[%s2789 + $0xd8] sm:$0xff]
        %v2818 = vld [vmem:[%s2789 + $0xe0] sm:$0xff]
        %v2819 = vld [vmem:[%s2789 + $0xe8] sm:$0xff]
        %v2820 = vld [vmem:[%s2789 + $0xf0] sm:$0xff]
        %v2821 = vld [vmem:[%s2789 + $0xf8] sm:$0xff]
        %v2822 = vld [vmem:[%s2789 + $0x100] sm:$0xff]
        %v2823 = vld [vmem:[%s2789 + $0x108] sm:$0xff]
        %v2824 = vld [vmem:[%s2789 + $0x110] sm:$0xff]
        %v2825 = vld [vmem:[%s2789 + $0x118] sm:$0xff]
        %v2826 = vld [vmem:[%s2789 + $0x120] sm:$0xff]
        %v2827 = vld [vmem:[%s2789 + $0x128] sm:$0xff]
        %v2828 = vld [vmem:[%s2789 + $0x130] sm:$0xff]
        %v2829 = vld [vmem:[%s2789 + $0x138] sm:$0xff]
        %v2830 = vld [vmem:[%s2789 + $0x140] sm:$0xff]
        %v2831 = vld [vmem:[%s2789 + $0x148] sm:$0xff]
        %v2832 = vld [vmem:[%s2789 + $0x150] sm:$0xff]
        %v2833 = vld [vmem:[%s2789 + $0x158] sm:$0xff]
        %v2834 = vld [vmem:[%s2789 + $0x160] sm:$0xff]
        %v2835 = vld [vmem:[%s2789 + $0x168] sm:$0xff]
        %v2836 = vld [vmem:[%s2789 + $0x170] sm:$0xff]
        %v2837 = vld [vmem:[%s2789 + $0x178] sm:$0xff]
        %v2838 = vld [vmem:[%s2789 + $0x180] sm:$0xff]
        %v2839 = vld [vmem:[%s2789 + $0x188] sm:$0xff]
        %v2840 = vld [vmem:[%s2789 + $0x190] sm:$0xff]
        %v2841 = vld [vmem:[%s2789 + $0x198] sm:$0xff]
        %v2842 = vld [vmem:[%s2789 + $0x1a0] sm:$0xff]
        %v2843 = vld [vmem:[%s2789 + $0x1a8] sm:$0xff]
        %v2844 = vld [vmem:[%s2789 + $0x1b0] sm:$0xff]
        %v2845 = vld [vmem:[%s2789 + $0x1b8] sm:$0xff]
        %v2846 = vld [vmem:[%s2789 + $0x1c0] sm:$0xff]
        %v2847 = vld [vmem:[%s2789 + $0x1c8] sm:$0xff]
        %v2848 = vld [vmem:[%s2789 + $0x1d0] sm:$0xff]
        %v2849 = vld [vmem:[%s2789 + $0x1d8] sm:$0xff]
        %v2850 = vld [vmem:[%s2789 + $0x1e0] sm:$0xff]
        %v2851 = vld [vmem:[%s2789 + $0x1e8] sm:$0xff]
        %v2852 = vld [vmem:[%s2789 + $0x1f0] sm:$0xff]
        %v2853 = vld [vmem:[%s2789 + $0x1f8] sm:$0xff]
        %v2854 = vld [vmem:[%s2789 + $0x200] sm:$0xff]
        %v2855 = vld [vmem:[%s2789 + $0x208] sm:$0xff]
        %v2856 = vld [vmem:[%s2789 + $0x210] sm:$0xff]
        %v2857 = vld [vmem:[%s2789 + $0x218] sm:$0xff]
        %v2858 = vld [vmem:[%s2789 + $0x220] sm:$0xff]
        %v2859 = vld [vmem:[%s2789 + $0x228] sm:$0xff]
        %v2860 = vld [vmem:[%s2789 + $0x230] sm:$0xff]
        %v2861 = vld [vmem:[%s2789 + $0x238] sm:$0xff]
        %v2862 = vld [vmem:[%s2789 + $0x240] sm:$0xff]
        %v2863 = vld [vmem:[%s2789 + $0x248] sm:$0xff]
        %v2864 = vld [vmem:[%s2789 + $0x250] sm:$0xff]
        %v2865 = vld [vmem:[%s2789 + $0x258] sm:$0xff]
        %v2866 = vld [vmem:[%s2789 + $0x260] sm:$0xff]
        %v2867 = vld [vmem:[%s2789 + $0x268] sm:$0xff]
        %v2868 = vld [vmem:[%s2789 + $0x270] sm:$0xff]
        %v2869 = vld [vmem:[%s2789 + $0x278] sm:$0xff]
        %v2870 = vld [vmem:[%s2789 + $0x280] sm:$0xff]
        %v2871 = vld [vmem:[%s2789 + $0x288] sm:$0xff]
        %v2872 = vld [vmem:[%s2789 + $0x290] sm:$0xff]
        %v2873 = vld [vmem:[%s2789 + $0x298] sm:$0xff]
        %v2874 = vld [vmem:[%s2789 + $0x2a0] sm:$0xff]
        %v2875 = vld [vmem:[%s2789 + $0x2a8] sm:$0xff]
        %v2876 = vld [vmem:[%s2789 + $0x2b0] sm:$0xff]
        %v2877 = vld [vmem:[%s2789 + $0x2b8] sm:$0xff]
        %v2878 = vld [vmem:[%s2789 + $0x2c0] sm:$0xff]
        %v2879 = vld [vmem:[%s2789 + $0x2c8] sm:$0xff]
        %v2880 = vld [vmem:[%s2789 + $0x2d0] sm:$0xff]
        %v2881 = vld [vmem:[%s2789 + $0x2d8] sm:$0xff]
        %v2882 = vld [vmem:[%s2789 + $0x2e0] sm:$0xff]
        %v2883 = vld [vmem:[%s2789 + $0x2e8] sm:$0xff]
        %v2884 = vld [vmem:[%s2789 + $0x2f0] sm:$0xff]
        %v2885 = vld [vmem:[%s2789 + $0x2f8] sm:$0xff]
        %v2886 = vld [vmem:[%s2789 + $0x300] sm:$0xff]
        %v2887 = vld [vmem:[%s2789 + $0x308] sm:$0xff]
        %v2888 = vld [vmem:[%s2789 + $0x310] sm:$0xff]
        %v2889 = vld [vmem:[%s2789 + $0x318] sm:$0xff]
        %v2890 = vld [vmem:[%s2789 + $0x320] sm:$0xff]
        %v2891 = vld [vmem:[%s2789 + $0x328] sm:$0xff]
        %v2892 = vld [vmem:[%s2789 + $0x330] sm:$0xff]
        %v2893 = vld [vmem:[%s2789 + $0x338] sm:$0xff]
        %v2894 = vld [vmem:[%s2789 + $0x340] sm:$0xff]
        %v2895 = vld [vmem:[%s2789 + $0x348] sm:$0xff]
        %v2896 = vld [vmem:[%s2789 + $0x350] sm:$0xff]
        %v2897 = vld [vmem:[%s2789 + $0x358] sm:$0xff]
        %v2898 = vld [vmem:[%s2789 + $0x360] sm:$0xff]
        %v2899 = vld [vmem:[%s2789 + $0x368] sm:$0xff]
        %v2900 = vld [vmem:[%s2789 + $0x370] sm:$0xff]
        %v2901 = vld [vmem:[%s2789 + $0x378] sm:$0xff]
        %v2902 = vld [vmem:[%s2789 + $0x380] sm:$0xff]
        %v2903 = vld [vmem:[%s2789 + $0x388] sm:$0xff]
        %v2904 = vld [vmem:[%s2789 + $0x390] sm:$0xff]
        %v2905 = vld [vmem:[%s2789 + $0x398] sm:$0xff]
        %v2906 = vld [vmem:[%s2789 + $0x3a0] sm:$0xff]
        %v2907 = vld [vmem:[%s2789 + $0x3a8] sm:$0xff]
        %v2908 = vld [vmem:[%s2789 + $0x3b0] sm:$0xff]
        %v2909 = vld [vmem:[%s2789 + $0x3b8] sm:$0xff]
        %v2910 = vld [vmem:[%s2789 + $0x3c0] sm:$0xff]
        %v2911 = vld [vmem:[%s2789 + $0x3c8] sm:$0xff]
        %v2912 = vld [vmem:[%s2789 + $0x3d0] sm:$0xff]
        %v2913 = vld [vmem:[%s2789 + $0x3d8] sm:$0xff]
        %v2914 = vld [vmem:[%s2789 + $0x3e0] sm:$0xff]
        %v2915 = vld [vmem:[%s2789 + $0x3e8] sm:$0xff]
        %v2916 = vld [vmem:[%s2789 + $0x3f0] sm:$0xff]
        %v2917 = vld [vmem:[%s2789 + $0x3f8] sm:$0xff]
        %v2918 = vld [vmem:[%s2789 + $0x400] sm:$0xff]
        %v2919 = vld [vmem:[%s2789 + $0x408] sm:$0xff]
        %v2920 = vld [vmem:[%s2789 + $0x410] sm:$0xff]
        %v2921 = vld [vmem:[%s2789 + $0x418] sm:$0xff]
        %v2922 = vld [vmem:[%s2789 + $0x420] sm:$0xff]
        %v2923 = vld [vmem:[%s2789 + $0x428] sm:$0xff]
        %v2924 = vld [vmem:[%s2789 + $0x430] sm:$0xff]
        %v2925 = vld [vmem:[%s2789 + $0x438] sm:$0xff]
        %v2926 = vld [vmem:[%s2789 + $0x440] sm:$0xff]
        %v2927 = vld [vmem:[%s2789 + $0x448] sm:$0xff]
        %v2928 = vld [vmem:[%s2789 + $0x450] sm:$0xff]
        %v2929 = vld [vmem:[%s2789 + $0x458] sm:$0xff]
        %v2930 = vld [vmem:[%s2789 + $0x460] sm:$0xff]
        %v2931 = vld [vmem:[%s2789 + $0x468] sm:$0xff]
        %v2932 = vld [vmem:[%s2789 + $0x470] sm:$0xff]
        %v2933 = vld [vmem:[%s2789 + $0x478] sm:$0xff]
        %v2934 = vld [vmem:[%s2789 + $0x480] sm:$0xff]
        %v2935 = vld [vmem:[%s2789 + $0x488] sm:$0xff]
        %v2936 = vld [vmem:[%s2789 + $0x490] sm:$0xff]
        %v2937 = vld [vmem:[%s2789 + $0x498] sm:$0xff]
        %v2938 = vld [vmem:[%s2789 + $0x4a0] sm:$0xff]
        %v2939 = vld [vmem:[%s2789 + $0x4a8] sm:$0xff]
        %v2940 = vld [vmem:[%s2789 + $0x4b0] sm:$0xff]
        %v2941 = vld [vmem:[%s2789 + $0x4b8] sm:$0xff]
        %v2942 = vld [vmem:[%s2789 + $0x4c0] sm:$0xff]
        %v2943 = vld [vmem:[%s2789 + $0x4c8] sm:$0xff]
        %v2944 = vld [vmem:[%s2789 + $0x4d0] sm:$0xff]
        %v2945 = vld [vmem:[%s2789 + $0x4d8] sm:$0xff]
        %v2946 = vld [vmem:[%s2789 + $0x4e0] sm:$0xff]
        %v2947 = vld [vmem:[%s2789 + $0x4e8] sm:$0xff]
        %v2948 = vld [vmem:[%s2789 + $0x4f0] sm:$0xff]
        %v2949 = vld [vmem:[%s2789 + $0x4f8] sm:$0xff]
        %v2950 = vld [vmem:[%s2789 + $0x500] sm:$0xff]
        %v2951 = vld [vmem:[%s2789 + $0x508] sm:$0xff]
        %v2952 = vld [vmem:[%s2789 + $0x510] sm:$0xff]
        %v2953 = vld [vmem:[%s2789 + $0x518] sm:$0xff]
        %v2954 = vld [vmem:[%s2789 + $0x520] sm:$0xff]
        %v2955 = vld [vmem:[%s2789 + $0x528] sm:$0xff]
        %v2956 = vld [vmem:[%s2789 + $0x530] sm:$0xff]
        %v2957 = vld [vmem:[%s2789 + $0x538] sm:$0xff]
        %v2958 = vld [vmem:[%s2789 + $0x540] sm:$0xff]
        %v2959 = vld [vmem:[%s2789 + $0x548] sm:$0xff]
        %v2960 = vld [vmem:[%s2789 + $0x550] sm:$0xff]
        %v2961 = vld [vmem:[%s2789 + $0x558] sm:$0xff]
        %v2962 = vld [vmem:[%s2789 + $0x560] sm:$0xff]
        %v2963 = vld [vmem:[%s2789 + $0x568] sm:$0xff]
        %v2964 = vld [vmem:[%s2789 + $0x570] sm:$0xff]
        %v2965 = vld [vmem:[%s2789 + $0x578] sm:$0xff]
        %v2966 = vld [vmem:[%s2789 + $0x580] sm:$0xff]
        %v2967 = vld [vmem:[%s2789 + $0x588] sm:$0xff]
        %v2968 = vld [vmem:[%s2789 + $0x590] sm:$0xff]
        %v2969 = vld [vmem:[%s2789 + $0x598] sm:$0xff]
        %v2970 = vld [vmem:[%s2789 + $0x5a0] sm:$0xff]
        %v2971 = vld [vmem:[%s2789 + $0x5a8] sm:$0xff]
        %v2972 = vld [vmem:[%s2789 + $0x5b0] sm:$0xff]
        %v2973 = vld [vmem:[%s2789 + $0x5b8] sm:$0xff]
        %v2974 = vld [vmem:[%s2789 + $0x5c0] sm:$0xff]
        %v2975 = vld [vmem:[%s2789 + $0x5c8] sm:$0xff]
        %v2976 = vld [vmem:[%s2789 + $0x5d0] sm:$0xff]
        %v2977 = vld [vmem:[%s2789 + $0x5d8] sm:$0xff]
        %v2978 = vld [vmem:[%s2789 + $0x5e0] sm:$0xff]
        %v2979 = vld [vmem:[%s2789 + $0x5e8] sm:$0xff]
        %v2980 = vld [vmem:[%s2789 + $0x5f0] sm:$0xff]
        %v2981 = vld [vmem:[%s2789 + $0x5f8] sm:$0xff]
        %v2982 = vld [vmem:[%s2789 + $0x600] sm:$0xff]
        %v2983 = vld [vmem:[%s2789 + $0x608] sm:$0xff]
        %v2984 = vld [vmem:[%s2789 + $0x610] sm:$0xff]
        %v2985 = vld [vmem:[%s2789 + $0x618] sm:$0xff]
        %v2986 = vld [vmem:[%s2789 + $0x620] sm:$0xff]
        %v2987 = vld [vmem:[%s2789 + $0x628] sm:$0xff]
        %v2988 = vld [vmem:[%s2789 + $0x630] sm:$0xff]
        %v2989 = vld [vmem:[%s2789 + $0x638] sm:$0xff]
        %v2990 = vld [vmem:[%s2789 + $0x640] sm:$0xff]
        %v2991 = vld [vmem:[%s2789 + $0x648] sm:$0xff]
        %v2992 = vld [vmem:[%s2789 + $0x650] sm:$0xff]
        %v2993 = vld [vmem:[%s2789 + $0x658] sm:$0xff]
        %v2994 = vld [vmem:[%s2789 + $0x660] sm:$0xff]
        %v2995 = vld [vmem:[%s2789 + $0x668] sm:$0xff]
        %v2996 = vld [vmem:[%s2789 + $0x670] sm:$0xff]
        %v2997 = vld [vmem:[%s2789 + $0x678] sm:$0xff]
        %v2998 = vld [vmem:[%s2789 + $0x680] sm:$0xff]
        %v2999 = vld [vmem:[%s2789 + $0x688] sm:$0xff]
        %v3000 = vld [vmem:[%s2789 + $0x690] sm:$0xff]
        %v3001 = vld [vmem:[%s2789 + $0x698] sm:$0xff]
        %v3002 = vld [vmem:[%s2789 + $0x6a0] sm:$0xff]
        %v3003 = vld [vmem:[%s2789 + $0x6a8] sm:$0xff]
        %v3004 = vld [vmem:[%s2789 + $0x6b0] sm:$0xff]
        %v3005 = vld [vmem:[%s2789 + $0x6b8] sm:$0xff]
        %v3006 = vld [vmem:[%s2789 + $0x6c0] sm:$0xff]
        %v3007 = vld [vmem:[%s2789 + $0x6c8] sm:$0xff]
        %v3008 = vld [vmem:[%s2789 + $0x6d0] sm:$0xff]
        %v3009 = vld [vmem:[%s2789 + $0x6d8] sm:$0xff]
        %v3010 = vld [vmem:[%s2789 + $0x6e0] sm:$0xff]
        %v3011 = vld [vmem:[%s2789 + $0x6e8] sm:$0xff]
        %v3012 = vld [vmem:[%s2789 + $0x6f0] sm:$0xff]
        %v3013 = vld [vmem:[%s2789 + $0x6f8] sm:$0xff]
        %v3014 = vld [vmem:[%s2789 + $0x700] sm:$0xff]
        %v3015 = vld [vmem:[%s2789 + $0x708] sm:$0xff]
        %v3016 = vld [vmem:[%s2789 + $0x710] sm:$0xff]
        %v3017 = vld [vmem:[%s2789 + $0x718] sm:$0xff]
        %v3018 = vld [vmem:[%s2789 + $0x720] sm:$0xff]
        %v3019 = vld [vmem:[%s2789 + $0x728] sm:$0xff]
        %v3020 = vld [vmem:[%s2789 + $0x730] sm:$0xff]
        %v3021 = vld [vmem:[%s2789 + $0x738] sm:$0xff]
        %v3022 = vld [vmem:[%s2789 + $0x740] sm:$0xff]
        %v3023 = vld [vmem:[%s2789 + $0x748] sm:$0xff]
        %v3024 = vld [vmem:[%s2789 + $0x750] sm:$0xff]
        %v3025 = vld [vmem:[%s2789 + $0x758] sm:$0xff]
        %v3026 = vld [vmem:[%s2789 + $0x760] sm:$0xff]
        %v3027 = vld [vmem:[%s2789 + $0x768] sm:$0xff]
        %v3028 = vld [vmem:[%s2789 + $0x770] sm:$0xff]
        %v3029 = vld [vmem:[%s2789 + $0x778] sm:$0xff]
        %v3030 = vld [vmem:[%s2789 + $0x780] sm:$0xff]
        %v3031 = vld [vmem:[%s2789 + $0x788] sm:$0xff]
        %v3032 = vld [vmem:[%s2789 + $0x790] sm:$0xff]
        %v3033 = vld [vmem:[%s2789 + $0x798] sm:$0xff]
        %v3034 = vld [vmem:[%s2789 + $0x7a0] sm:$0xff]
        %v3035 = vld [vmem:[%s2789 + $0x7a8] sm:$0xff]
        %v3036 = vld [vmem:[%s2789 + $0x7b0] sm:$0xff]
        %v3037 = vld [vmem:[%s2789 + $0x7b8] sm:$0xff]
        %v3038 = vld [vmem:[%s2789 + $0x7c0] sm:$0xff]
        %v3039 = vld [vmem:[%s2789 + $0x7c8] sm:$0xff]
        %v3040 = vld [vmem:[%s2789 + $0x7d0] sm:$0xff]
        %v3041 = vld [vmem:[%s2789 + $0x7d8] sm:$0xff]
        %v3042 = vld [vmem:[%s2789 + $0x7e0] sm:$0xff]
        %v3043 = vld [vmem:[%s2789 + $0x7e8] sm:$0xff]
        %v3044 = vld [vmem:[%s2789 + $0x7f0] sm:$0xff]
        %v3045 = vld [vmem:[%s2789 + $0x7f8] sm:$0xff]
        %3046 = vmatprep.subr.mxu0 %v2851
        %3047 = vmatpush1.msra.mxu0 %v2850
        %3048 = vmatprep.subr.mxu0 %v2847
        %3049 = vmatpush1.msra.mxu0 %v2846
        %3050 = vmatprep.subr.mxu0 %v2843
        %3051 = vmatpush1.msra.mxu0 %v2842
        %3052 = vmatprep.subr.mxu0 %v2839
        %3053 = vmatpush1.msra.mxu0 %v2838
        %3054 = vmatprep.subr.mxu0 %v2835
        %3055 = vmatpush1.msra.mxu0 %v2834
        %3056 = vmatprep.subr.mxu0 %v2831
        %3057 = vmatpush1.msra.mxu0 %v2830
        %3058 = vmatprep.subr.mxu0 %v2827
        %3059 = vmatpush1.msra.mxu0 %v2826
        %3060 = vmatprep.subr.mxu0 %v2823
        %3061 = vmatpush1.msra.mxu0 %v2822
        %3062 = vmatprep.subr.mxu0 %v2819
        %3063 = vmatpush1.msra.mxu0 %v2818
        %3064 = vmatprep.subr.mxu0 %v2815
        %3065 = vmatpush1.msra.mxu0 %v2814
        %3066 = vmatprep.subr.mxu0 %v2811
        %3067 = vmatpush1.msra.mxu0 %v2810
        %3068 = vmatprep.subr.mxu0 %v2807
        %3069 = vmatpush1.msra.mxu0 %v2806
        %3070 = vmatprep.subr.mxu0 %v2803
        %3071 = vmatpush1.msra.mxu0 %v2802
        %3072 = vmatprep.subr.mxu0 %v2799
        %3073 = vmatpush1.msra.mxu0 %v2798
        %3074 = vmatprep.subr.mxu0 %v2795
        %3075 = vmatpush1.msra.mxu0 %v2794
        %3076 = vmatprep.subr.mxu0 %v2791
        %3077 = vmatpush1.msra.mxu0 %v2790
        %3078 = vmatprep.subr.mxu0 %v2915
        %3079 = vmatpush2.msra.mxu0 %v2914
        %3080 = vmatprep.subr.mxu0 %v2911
        %3081 = vmatpush2.msra.mxu0 %v2910
        %3082 = vmatprep.subr.mxu0 %v2907
        %3083 = vmatpush2.msra.mxu0 %v2906
        %3084 = vmatprep.subr.mxu0 %v2903
        %3085 = vmatpush2.msra.mxu0 %v2902
        %3086 = vmatprep.subr.mxu0 %v2899
        %3087 = vmatpush2.msra.mxu0 %v2898
        %3088 = vmatprep.subr.mxu0 %v2895
        %3089 = vmatpush2.msra.mxu0 %v2894
        %3090 = vmatprep.subr.mxu0 %v2891
        %3091 = vmatpush2.msra.mxu0 %v2890
        %3092 = vmatprep.subr.mxu0 %v2887
        %3093 = vmatpush2.msra.mxu0 %v2886
        %3094 = vmatprep.subr.mxu0 %v2883
        %3095 = vmatpush2.msra.mxu0 %v2882
        %3096 = vmatprep.subr.mxu0 %v2879
        %3097 = vmatpush2.msra.mxu0 %v2878
        %3098 = vmatprep.subr.mxu0 %v2875
        %3099 = vmatpush2.msra.mxu0 %v2874
        %3100 = vmatprep.subr.mxu0 %v2871
        %3101 = vmatpush2.msra.mxu0 %v2870
        %3102 = vmatprep.subr.mxu0 %v2867
        %3103 = vmatpush2.msra.mxu0 %v2866
        %3104 = vmatprep.subr.mxu0 %v2863
        %3105 = vmatpush2.msra.mxu0 %v2862
        %3106 = vmatprep.subr.mxu0 %v2859
        %3107 = vmatpush2.msra.mxu0 %v2858
        %3108 = vmatprep.subr.mxu0 %v2855
        %3109 = vmatpush2.msra.mxu0 %v2854
        %3110 = vmatprep.mubr.f32.mxu0 %v1549
        %3111 = vmatmul.mubr.f32.gmra.mxu0 %v1548
        %v3112 = vpop.f32.mrf.mxu0
        %v3113 = vadd.f32 0.0, %v3112
        %v3114 = vpop.f32.mrf.mxu0
        %v3115 = vadd.f32 0.0, %v3114
        %3116 = vmatprep.mubr.f32.mxu0 %v1553
        %3117 = vmatmul.mubr.f32.gmra.mxu0 %v1552
        %v3118 = vpop.f32.mrf.mxu0
        %v3119 = vadd.f32 0.0, %v3118
        %v3120 = vpop.f32.mrf.mxu0
        %v3121 = vadd.f32 0.0, %v3120
        %3122 = vmatprep.mubr.f32.mxu0 %v1557
        %3123 = vmatmul.mubr.f32.gmra.mxu0 %v1556
        %v3124 = vpop.f32.mrf.mxu0
        %v3125 = vadd.f32 0.0, %v3124
        %v3126 = vpop.f32.mrf.mxu0
        %v3127 = vadd.f32 0.0, %v3126
        %3128 = vmatprep.mubr.f32.mxu0 %v1561
        %3129 = vmatmul.mubr.f32.gmra.mxu0 %v1560
        %v3130 = vpop.f32.mrf.mxu0
        %v3131 = vadd.f32 0.0, %v3130
        %v3132 = vpop.f32.mrf.mxu0
        %v3133 = vadd.f32 0.0, %v3132
        %3134 = vdwg.mxu0
        %3135 = vmatprep.subr.mxu0 %v2979
        %3136 = vmatpush1.msra.mxu0 %v2978
        %3137 = vmatprep.subr.mxu0 %v2975
        %3138 = vmatpush1.msra.mxu0 %v2974
        %3139 = vmatprep.subr.mxu0 %v2971
        %3140 = vmatpush1.msra.mxu0 %v2970
        %3141 = vmatprep.subr.mxu0 %v2967
        %3142 = vmatpush1.msra.mxu0 %v2966
        %3143 = vmatprep.subr.mxu0 %v2963
        %3144 = vmatpush1.msra.mxu0 %v2962
        %3145 = vmatprep.subr.mxu0 %v2959
        %3146 = vmatpush1.msra.mxu0 %v2958
        %3147 = vmatprep.subr.mxu0 %v2955
        %3148 = vmatpush1.msra.mxu0 %v2954
        %3149 = vmatprep.subr.mxu0 %v2951
        %3150 = vmatpush1.msra.mxu0 %v2950
        %3151 = vmatprep.subr.mxu0 %v2947
        %3152 = vmatpush1.msra.mxu0 %v2946
        %3153 = vmatprep.subr.mxu0 %v2943
        %3154 = vmatpush1.msra.mxu0 %v2942
        %3155 = vmatprep.subr.mxu0 %v2939
        %3156 = vmatpush1.msra.mxu0 %v2938
        %3157 = vmatprep.subr.mxu0 %v2935
        %3158 = vmatpush1.msra.mxu0 %v2934
        %3159 = vmatprep.subr.mxu0 %v2931
        %3160 = vmatpush1.msra.mxu0 %v2930
        %3161 = vmatprep.subr.mxu0 %v2927
        %3162 = vmatpush1.msra.mxu0 %v2926
        %3163 = vmatprep.subr.mxu0 %v2923
        %3164 = vmatpush1.msra.mxu0 %v2922
        %3165 = vmatprep.subr.mxu0 %v2919
        %3166 = vmatpush1.msra.mxu0 %v2918
        %3167 = vmatprep.subr.mxu0 %v3043
        %3168 = vmatpush2.msra.mxu0 %v3042
        %3169 = vmatprep.subr.mxu0 %v3039
        %3170 = vmatpush2.msra.mxu0 %v3038
        %3171 = vmatprep.subr.mxu0 %v3035
        %3172 = vmatpush2.msra.mxu0 %v3034
        %3173 = vmatprep.subr.mxu0 %v3031
        %3174 = vmatpush2.msra.mxu0 %v3030
        %3175 = vmatprep.subr.mxu0 %v3027
        %3176 = vmatpush2.msra.mxu0 %v3026
        %3177 = vmatprep.subr.mxu0 %v3023
        %3178 = vmatpush2.msra.mxu0 %v3022
        %3179 = vmatprep.subr.mxu0 %v3019
        %3180 = vmatpush2.msra.mxu0 %v3018
        %3181 = vmatprep.subr.mxu0 %v3015
        %3182 = vmatpush2.msra.mxu0 %v3014
        %3183 = vmatprep.subr.mxu0 %v3011
        %3184 = vmatpush2.msra.mxu0 %v3010
        %3185 = vmatprep.subr.mxu0 %v3007
        %3186 = vmatpush2.msra.mxu0 %v3006
        %3187 = vmatprep.subr.mxu0 %v3003
        %3188 = vmatpush2.msra.mxu0 %v3002
        %3189 = vmatprep.subr.mxu0 %v2999
        %3190 = vmatpush2.msra.mxu0 %v2998
        %3191 = vmatprep.subr.mxu0 %v2995
        %3192 = vmatpush2.msra.mxu0 %v2994
        %3193 = vmatprep.subr.mxu0 %v2991
        %3194 = vmatpush2.msra.mxu0 %v2990
        %3195 = vmatprep.subr.mxu0 %v2987
        %3196 = vmatpush2.msra.mxu0 %v2986
        %3197 = vmatprep.subr.mxu0 %v2983
        %3198 = vmatpush2.msra.mxu0 %v2982
        %3199 = vmatprep.mubr.f32.mxu0 %v1551
        %3200 = vmatmul.mubr.f32.gmra.mxu0 %v1550
        %v3201 = vpop.f32.mrf.mxu0
        %v3202 = vadd.f32 %v3113, %v3201
        %v3203 = vpop.f32.mrf.mxu0
        %v3204 = vadd.f32 %v3115, %v3203
        %3205 = vmatprep.mubr.f32.mxu0 %v1555
        %3206 = vmatmul.mubr.f32.gmra.mxu0 %v1554
        %v3207 = vpop.f32.mrf.mxu0
        %v3208 = vadd.f32 %v3119, %v3207
        %v3209 = vpop.f32.mrf.mxu0
        %v3210 = vadd.f32 %v3121, %v3209
        %3211 = vmatprep.mubr.f32.mxu0 %v1559
        %3212 = vmatmul.mubr.f32.gmra.mxu0 %v1558
        %v3213 = vpop.f32.mrf.mxu0
        %v3214 = vadd.f32 %v3125, %v3213
        %v3215 = vpop.f32.mrf.mxu0
        %v3216 = vadd.f32 %v3127, %v3215
        %3217 = vmatprep.mubr.f32.mxu0 %v1563
        %3218 = vmatmul.mubr.f32.gmra.mxu0 %v1562
        %v3219 = vpop.f32.mrf.mxu0
        %v3220 = vadd.f32 %v3131, %v3219
        %v3221 = vpop.f32.mrf.mxu0
        %v3222 = vadd.f32 %v3133, %v3221
        %3223 = vdwg.mxu0
        %3224 = vmatprep.subr.mxu0 %v2853
        %3225 = vmatpush1.msra.mxu0 %v2852
        %3226 = vmatprep.subr.mxu0 %v2849
        %3227 = vmatpush1.msra.mxu0 %v2848
        %3228 = vmatprep.subr.mxu0 %v2845
        %3229 = vmatpush1.msra.mxu0 %v2844
        %3230 = vmatprep.subr.mxu0 %v2841
        %3231 = vmatpush1.msra.mxu0 %v2840
        %3232 = vmatprep.subr.mxu0 %v2837
        %3233 = vmatpush1.msra.mxu0 %v2836
        %3234 = vmatprep.subr.mxu0 %v2833
        %3235 = vmatpush1.msra.mxu0 %v2832
        %3236 = vmatprep.subr.mxu0 %v2829
        %3237 = vmatpush1.msra.mxu0 %v2828
        %3238 = vmatprep.subr.mxu0 %v2825
        %3239 = vmatpush1.msra.mxu0 %v2824
        %3240 = vmatprep.subr.mxu0 %v2821
        %3241 = vmatpush1.msra.mxu0 %v2820
        %3242 = vmatprep.subr.mxu0 %v2817
        %3243 = vmatpush1.msra.mxu0 %v2816
        %3244 = vmatprep.subr.mxu0 %v2813
        %3245 = vmatpush1.msra.mxu0 %v2812
        %3246 = vmatprep.subr.mxu0 %v2809
        %3247 = vmatpush1.msra.mxu0 %v2808
        %3248 = vmatprep.subr.mxu0 %v2805
        %3249 = vmatpush1.msra.mxu0 %v2804
        %3250 = vmatprep.subr.mxu0 %v2801
        %3251 = vmatpush1.msra.mxu0 %v2800
        %3252 = vmatprep.subr.mxu0 %v2797
        %3253 = vmatpush1.msra.mxu0 %v2796
        %3254 = vmatprep.subr.mxu0 %v2793
        %3255 = vmatpush1.msra.mxu0 %v2792
        %3256 = vmatprep.subr.mxu0 %v2917
        %3257 = vmatpush2.msra.mxu0 %v2916
        %3258 = vmatprep.subr.mxu0 %v2913
        %3259 = vmatpush2.msra.mxu0 %v2912
        %3260 = vmatprep.subr.mxu0 %v2909
        %3261 = vmatpush2.msra.mxu0 %v2908
        %3262 = vmatprep.subr.mxu0 %v2905
        %3263 = vmatpush2.msra.mxu0 %v2904
        %3264 = vmatprep.subr.mxu0 %v2901
        %3265 = vmatpush2.msra.mxu0 %v2900
        %3266 = vmatprep.subr.mxu0 %v2897
        %3267 = vmatpush2.msra.mxu0 %v2896
        %3268 = vmatprep.subr.mxu0 %v2893
        %3269 = vmatpush2.msra.mxu0 %v2892
        %3270 = vmatprep.subr.mxu0 %v2889
        %3271 = vmatpush2.msra.mxu0 %v2888
        %3272 = vmatprep.subr.mxu0 %v2885
        %3273 = vmatpush2.msra.mxu0 %v2884
        %3274 = vmatprep.subr.mxu0 %v2881
        %3275 = vmatpush2.msra.mxu0 %v2880
        %3276 = vmatprep.subr.mxu0 %v2877
        %3277 = vmatpush2.msra.mxu0 %v2876
        %3278 = vmatprep.subr.mxu0 %v2873
        %3279 = vmatpush2.msra.mxu0 %v2872
        %3280 = vmatprep.subr.mxu0 %v2869
        %3281 = vmatpush2.msra.mxu0 %v2868
        %3282 = vmatprep.subr.mxu0 %v2865
        %3283 = vmatpush2.msra.mxu0 %v2864
        %3284 = vmatprep.subr.mxu0 %v2861
        %3285 = vmatpush2.msra.mxu0 %v2860
        %3286 = vmatprep.subr.mxu0 %v2857
        %3287 = vmatpush2.msra.mxu0 %v2856
        %3288 = vmatprep.mubr.f32.mxu0 %v1549
        %3289 = vmatmul.mubr.f32.gmra.mxu0 %v1548
        %v3290 = vpop.f32.mrf.mxu0
        %v3291 = vadd.f32 0.0, %v3290
        %v3292 = vpop.f32.mrf.mxu0
        %v3293 = vadd.f32 0.0, %v3292
        %3294 = vmatprep.mubr.f32.mxu0 %v1553
        %3295 = vmatmul.mubr.f32.gmra.mxu0 %v1552
        %v3296 = vpop.f32.mrf.mxu0
        %v3297 = vadd.f32 0.0, %v3296
        %v3298 = vpop.f32.mrf.mxu0
        %v3299 = vadd.f32 0.0, %v3298
        %3300 = vmatprep.mubr.f32.mxu0 %v1557
        %3301 = vmatmul.mubr.f32.gmra.mxu0 %v1556
        %v3302 = vpop.f32.mrf.mxu0
        %v3303 = vadd.f32 0.0, %v3302
        %v3304 = vpop.f32.mrf.mxu0
        %v3305 = vadd.f32 0.0, %v3304
        %3306 = vmatprep.mubr.f32.mxu0 %v1561
        %3307 = vmatmul.mubr.f32.gmra.mxu0 %v1560
        %v3308 = vpop.f32.mrf.mxu0
        %v3309 = vadd.f32 0.0, %v3308
        %v3310 = vpop.f32.mrf.mxu0
        %v3311 = vadd.f32 0.0, %v3310
        %3312 = vdwg.mxu0
        %3313 = vmatprep.subr.mxu0 %v2981
        %3314 = vmatpush1.msra.mxu0 %v2980
        %3315 = vmatprep.subr.mxu0 %v2977
        %3316 = vmatpush1.msra.mxu0 %v2976
        %3317 = vmatprep.subr.mxu0 %v2973
        %3318 = vmatpush1.msra.mxu0 %v2972
        %3319 = vmatprep.subr.mxu0 %v2969
        %3320 = vmatpush1.msra.mxu0 %v2968
        %3321 = vmatprep.subr.mxu0 %v2965
        %3322 = vmatpush1.msra.mxu0 %v2964
        %3323 = vmatprep.subr.mxu0 %v2961
        %3324 = vmatpush1.msra.mxu0 %v2960
        %3325 = vmatprep.subr.mxu0 %v2957
        %3326 = vmatpush1.msra.mxu0 %v2956
        %3327 = vmatprep.subr.mxu0 %v2953
        %3328 = vmatpush1.msra.mxu0 %v2952
        %3329 = vmatprep.subr.mxu0 %v2949
        %3330 = vmatpush1.msra.mxu0 %v2948
        %3331 = vmatprep.subr.mxu0 %v2945
        %3332 = vmatpush1.msra.mxu0 %v2944
        %3333 = vmatprep.subr.mxu0 %v2941
        %3334 = vmatpush1.msra.mxu0 %v2940
        %3335 = vmatprep.subr.mxu0 %v2937
        %3336 = vmatpush1.msra.mxu0 %v2936
        %3337 = vmatprep.subr.mxu0 %v2933
        %3338 = vmatpush1.msra.mxu0 %v2932
        %3339 = vmatprep.subr.mxu0 %v2929
        %3340 = vmatpush1.msra.mxu0 %v2928
        %3341 = vmatprep.subr.mxu0 %v2925
        %3342 = vmatpush1.msra.mxu0 %v2924
        %3343 = vmatprep.subr.mxu0 %v2921
        %3344 = vmatpush1.msra.mxu0 %v2920
        %3345 = vmatprep.subr.mxu0 %v3045
        %3346 = vmatpush2.msra.mxu0 %v3044
        %3347 = vmatprep.subr.mxu0 %v3041
        %3348 = vmatpush2.msra.mxu0 %v3040
        %3349 = vmatprep.subr.mxu0 %v3037
        %3350 = vmatpush2.msra.mxu0 %v3036
        %3351 = vmatprep.subr.mxu0 %v3033
        %3352 = vmatpush2.msra.mxu0 %v3032
        %3353 = vmatprep.subr.mxu0 %v3029
        %3354 = vmatpush2.msra.mxu0 %v3028
        %3355 = vmatprep.subr.mxu0 %v3025
        %3356 = vmatpush2.msra.mxu0 %v3024
        %3357 = vmatprep.subr.mxu0 %v3021
        %3358 = vmatpush2.msra.mxu0 %v3020
        %3359 = vmatprep.subr.mxu0 %v3017
        %3360 = vmatpush2.msra.mxu0 %v3016
        %3361 = vmatprep.subr.mxu0 %v3013
        %3362 = vmatpush2.msra.mxu0 %v3012
        %3363 = vmatprep.subr.mxu0 %v3009
        %3364 = vmatpush2.msra.mxu0 %v3008
        %3365 = vmatprep.subr.mxu0 %v3005
        %3366 = vmatpush2.msra.mxu0 %v3004
        %3367 = vmatprep.subr.mxu0 %v3001
        %3368 = vmatpush2.msra.mxu0 %v3000
        %3369 = vmatprep.subr.mxu0 %v2997
        %3370 = vmatpush2.msra.mxu0 %v2996
        %3371 = vmatprep.subr.mxu0 %v2993
        %3372 = vmatpush2.msra.mxu0 %v2992
        %3373 = vmatprep.subr.mxu0 %v2989
        %3374 = vmatpush2.msra.mxu0 %v2988
        %3375 = vmatprep.subr.mxu0 %v2985
        %3376 = vmatpush2.msra.mxu0 %v2984
        %3377 = vmatprep.mubr.f32.mxu0 %v1551
        %3378 = vmatmul.mubr.f32.gmra.mxu0 %v1550
        %v3379 = vpop.f32.mrf.mxu0
        %v3380 = vadd.f32 %v3291, %v3379
        %v3381 = vpop.f32.mrf.mxu0
        %v3382 = vadd.f32 %v3293, %v3381
        %3383 = vmatprep.mubr.f32.mxu0 %v1555
        %3384 = vmatmul.mubr.f32.gmra.mxu0 %v1554
        %v3385 = vpop.f32.mrf.mxu0
        %v3386 = vadd.f32 %v3297, %v3385
        %v3387 = vpop.f32.mrf.mxu0
        %v3388 = vadd.f32 %v3299, %v3387
        %3389 = vmatprep.mubr.f32.mxu0 %v1559
        %3390 = vmatmul.mubr.f32.gmra.mxu0 %v1558
        %v3391 = vpop.f32.mrf.mxu0
        %v3392 = vadd.f32 %v3303, %v3391
        %v3393 = vpop.f32.mrf.mxu0
        %v3394 = vadd.f32 %v3305, %v3393
        %3395 = vmatprep.mubr.f32.mxu0 %v1563
        %3396 = vmatmul.mubr.f32.gmra.mxu0 %v1562
        %v3397 = vpop.f32.mrf.mxu0
        %v3398 = vadd.f32 %v3309, %v3397
        %v3399 = vpop.f32.mrf.mxu0
        %v3400 = vadd.f32 %v3311, %v3399
        %3401 = vdwg.mxu0
        %v3402 = vadd.f32 %v2589, %v3202
        %v3403 = vadd.f32 %v2591, %v3204
        %v3404 = vadd.f32 %v2767, %v3380
        %v3405 = vadd.f32 %v2769, %v3382
        %v3406 = vadd.f32 %v2595, %v3208
        %v3407 = vadd.f32 %v2597, %v3210
        %v3408 = vadd.f32 %v2773, %v3386
        %v3409 = vadd.f32 %v2775, %v3388
        %v3410 = vadd.f32 %v2601, %v3214
        %v3411 = vadd.f32 %v2603, %v3216
        %v3412 = vadd.f32 %v2779, %v3392
        %v3413 = vadd.f32 %v2781, %v3394
        %v3414 = vadd.f32 %v2607, %v3220
        %v3415 = vadd.f32 %v2609, %v3222
        %v3416 = vadd.f32 %v2785, %v3398
        %v3417 = vadd.f32 %v2787, %v3400
        %v3419 = vlaneseq
        %v3420 = vshrl.u32 %v3419, 7
        %v3421 = vsub.s32 0, %v3420
        %v3422 = vrot.slane %v1467, %v3421
        %v3423 = vlaneseq
        %v3424 = vshrl.u32 %v3423, 7
        %v3425 = vsub.s32 1, %v3424
        %v3426 = vrot.slane %v1467, %v3425
        %v3427 = vlaneseq
        %v3428 = vshrl.u32 %v3427, 7
        %v3429 = vsub.s32 2, %v3428
        %v3430 = vrot.slane %v1467, %v3429
        %v3431 = vlaneseq
        %v3432 = vshrl.u32 %v3431, 7
        %v3433 = vsub.s32 3, %v3432
        %v3434 = vrot.slane %v1467, %v3433
        %v3439 = vadd.f32 %v3402, %v3422
        %v3440 = vadd.f32 %v3403, %v3426
        %v3441 = vadd.f32 %v3404, %v3430
        %v3442 = vadd.f32 %v3405, %v3434
        %v3443 = vadd.f32 %v3406, %v3422
        %v3444 = vadd.f32 %v3407, %v3426
        %v3445 = vadd.f32 %v3408, %v3430
        %v3446 = vadd.f32 %v3409, %v3434
        %v3447 = vadd.f32 %v3410, %v3422
        %v3448 = vadd.f32 %v3411, %v3426
        %v3449 = vadd.f32 %v3412, %v3430
        %v3450 = vadd.f32 %v3413, %v3434
        %v3451 = vadd.f32 %v3414, %v3422
        %v3452 = vadd.f32 %v3415, %v3426
        %v3453 = vadd.f32 %v3416, %v3430
        %v3454 = vadd.f32 %v3417, %v3434
        %v3455 = vmax.f32 %v3439, 0.0
        %v3456 = vmax.f32 %v3440, 0.0
        %v3457 = vmax.f32 %v3441, 0.0
        %v3458 = vmax.f32 %v3442, 0.0
        %v3459 = vmax.f32 %v3443, 0.0
        %v3460 = vmax.f32 %v3444, 0.0
        %v3461 = vmax.f32 %v3445, 0.0
        %v3462 = vmax.f32 %v3446, 0.0
        %v3463 = vmax.f32 %v3447, 0.0
        %v3464 = vmax.f32 %v3448, 0.0
        %v3465 = vmax.f32 %v3449, 0.0
        %v3466 = vmax.f32 %v3450, 0.0
        %v3467 = vmax.f32 %v3451, 0.0
        %v3468 = vmax.f32 %v3452, 0.0
        %v3469 = vmax.f32 %v3453, 0.0
        %v3470 = vmax.f32 %v3454, 0.0
        %3471 = vrot.lane.b32.xlu0 %v3455, 120
        %v3472 = vpop.permute.xlu0 %3471
        %3473 = vrot.lane.b32.xlu0 %v3459, 120
        %v3474 = vpop.permute.xlu0 %3473
        %3475 = vrot.lane.b32.xlu0 %v3463, 120
        %v3476 = vpop.permute.xlu0 %3475
        %3477 = vrot.lane.b32.xlu0 %v3467, 120
        %v3478 = vpop.permute.xlu0 %3477
        %3479 = vrot.lane.b32.xlu0 %v3456, 120
        %v3480 = vpop.permute.xlu0 %3479
        %3481 = vrot.lane.b32.xlu0 %v3460, 120
        %v3482 = vpop.permute.xlu0 %3481
        %3483 = vrot.lane.b32.xlu0 %v3464, 120
        %v3484 = vpop.permute.xlu0 %3483
        %3485 = vrot.lane.b32.xlu0 %v3468, 120
        %v3486 = vpop.permute.xlu0 %3485
        %3487 = vrot.lane.b32.xlu0 %v3457, 120
        %v3488 = vpop.permute.xlu0 %3487
        %3489 = vrot.lane.b32.xlu0 %v3461, 120
        %v3490 = vpop.permute.xlu0 %3489
        %3491 = vrot.lane.b32.xlu0 %v3465, 120
        %v3492 = vpop.permute.xlu0 %3491
        %3493 = vrot.lane.b32.xlu0 %v3469, 120
        %v3494 = vpop.permute.xlu0 %3493
        %3495 = vrot.lane.b32.xlu0 %v3458, 120
        %v3496 = vpop.permute.xlu0 %3495
        %3497 = vrot.lane.b32.xlu0 %v3462, 120
        %v3498 = vpop.permute.xlu0 %3497
        %3499 = vrot.lane.b32.xlu0 %v3466, 120
        %v3500 = vpop.permute.xlu0 %3499
        %3501 = vrot.lane.b32.xlu0 %v3470, 120
        %v3502 = vpop.permute.xlu0 %3501
        %v3503 = vlaneseq
        %v3504 = vand.u32 %v3503, 127
        %vm3505 = vcmp.lt.s32.totalorder %v3504, 120
        %v3506 = vsel %vm3505, %v3488, %v3496
        %v3507 = vsel %vm3505, %v3490, %v3498
        %v3508 = vsel %vm3505, %v3492, %v3500
        %v3509 = vsel %vm3505, %v3494, %v3502
        %v3510 = vsel %vm3505, %v3480, %v3488
        %v3511 = vsel %vm3505, %v3482, %v3490
        %v3512 = vsel %vm3505, %v3484, %v3492
        %v3513 = vsel %vm3505, %v3486, %v3494
        %v3514 = vsel %vm3505, %v3472, %v3480
        %v3515 = vsel %vm3505, %v3474, %v3482
        %v3516 = vsel %vm3505, %v3476, %v3484
        %v3517 = vsel %vm3505, %v3478, %v3486
        %v3518 = vsel %vm3505, %v3496, %v3472
        %v3519 = vsel %vm3505, %v3498, %v3474
        %v3520 = vsel %vm3505, %v3500, %v3476
        %v3521 = vsel %vm3505, %v3502, %v3478
        %v3522 = vmax.f32 %v3455, %v3514
        %v3523 = vmax.f32 %v3456, %v3510
        %v3524 = vmax.f32 %v3457, %v3506
        %v3525 = vmax.f32 %v3458, %v3518
        %v3526 = vmax.f32 %v3459, %v3515
        %v3527 = vmax.f32 %v3460, %v3511
        %v3528 = vmax.f32 %v3461, %v3507
        %v3529 = vmax.f32 %v3462, %v3519
        %v3530 = vmax.f32 %v3463, %v3516
        %v3531 = vmax.f32 %v3464, %v3512
        %v3532 = vmax.f32 %v3465, %v3508
        %v3533 = vmax.f32 %v3466, %v3520
        %v3534 = vmax.f32 %v3467, %v3517
        %v3535 = vmax.f32 %v3468, %v3513
        %v3536 = vmax.f32 %v3469, %v3509
        %v3537 = vmax.f32 %v3470, %v3521
        %3538 = vrot.lane.b32.xlu0 %v3522, 64
        %v3539 = vpop.permute.xlu0 %3538
        %3540 = vrot.lane.b32.xlu0 %v3526, 64
        %v3541 = vpop.permute.xlu0 %3540
        %3542 = vrot.lane.b32.xlu0 %v3530, 64
        %v3543 = vpop.permute.xlu0 %3542
        %3544 = vrot.lane.b32.xlu0 %v3534, 64
        %v3545 = vpop.permute.xlu0 %3544
        %3546 = vrot.lane.b32.xlu0 %v3523, 64
        %v3547 = vpop.permute.xlu0 %3546
        %3548 = vrot.lane.b32.xlu0 %v3527, 64
        %v3549 = vpop.permute.xlu0 %3548
        %3550 = vrot.lane.b32.xlu0 %v3531, 64
        %v3551 = vpop.permute.xlu0 %3550
        %3552 = vrot.lane.b32.xlu0 %v3535, 64
        %v3553 = vpop.permute.xlu0 %3552
        %3554 = vrot.lane.b32.xlu0 %v3524, 64
        %v3555 = vpop.permute.xlu0 %3554
        %3556 = vrot.lane.b32.xlu0 %v3528, 64
        %v3557 = vpop.permute.xlu0 %3556
        %3558 = vrot.lane.b32.xlu0 %v3532, 64
        %v3559 = vpop.permute.xlu0 %3558
        %3560 = vrot.lane.b32.xlu0 %v3536, 64
        %v3561 = vpop.permute.xlu0 %3560
        %3562 = vrot.lane.b32.xlu0 %v3525, 64
        %v3563 = vpop.permute.xlu0 %3562
        %3564 = vrot.lane.b32.xlu0 %v3529, 64
        %v3565 = vpop.permute.xlu0 %3564
        %3566 = vrot.lane.b32.xlu0 %v3533, 64
        %v3567 = vpop.permute.xlu0 %3566
        %3568 = vrot.lane.b32.xlu0 %v3537, 64
        %v3569 = vpop.permute.xlu0 %3568
        %vm3570 = vcmp.lt.s32.totalorder %v3504, 64
        %v3571 = vsel %vm3570, %v3555, %v3563
        %v3572 = vsel %vm3570, %v3557, %v3565
        %v3573 = vsel %vm3570, %v3559, %v3567
        %v3574 = vsel %vm3570, %v3561, %v3569
        %v3575 = vsel %vm3570, %v3547, %v3555
        %v3576 = vsel %vm3570, %v3549, %v3557
        %v3577 = vsel %vm3570, %v3551, %v3559
        %v3578 = vsel %vm3570, %v3553, %v3561
        %v3579 = vsel %vm3570, %v3539, %v3547
        %v3580 = vsel %vm3570, %v3541, %v3549
        %v3581 = vsel %vm3570, %v3543, %v3551
        %v3582 = vsel %vm3570, %v3545, %v3553
        %v3583 = vsel %vm3570, %v3563, %v3539
        %v3584 = vsel %vm3570, %v3565, %v3541
        %v3585 = vsel %vm3570, %v3567, %v3543
        %v3586 = vsel %vm3570, %v3569, %v3545
        %v3587 = vmax.f32 %v3522, %v3579
        %v3588 = vmax.f32 %v3523, %v3575
        %v3589 = vmax.f32 %v3524, %v3571
        %v3590 = vmax.f32 %v3525, %v3583
        %v3591 = vmax.f32 %v3526, %v3580
        %v3592 = vmax.f32 %v3527, %v3576
        %v3593 = vmax.f32 %v3528, %v3572
        %v3594 = vmax.f32 %v3529, %v3584
        %v3595 = vmax.f32 %v3530, %v3581
        %v3596 = vmax.f32 %v3531, %v3577
        %v3597 = vmax.f32 %v3532, %v3573
        %v3598 = vmax.f32 %v3533, %v3585
        %v3599 = vmax.f32 %v3534, %v3582
        %v3600 = vmax.f32 %v3535, %v3578
        %v3601 = vmax.f32 %v3536, %v3574
        %v3602 = vmax.f32 %v3537, %v3586
        %v3603 = vld [vmem:[#allocation12] sm:$0xff]
        %v3604 = vld [vmem:[#allocation12 + $0x8] sm:$0xff]
        %v3605 = vld [vmem:[#allocation12 + $0x10] sm:$0xff]
        %v3606 = vld [vmem:[#allocation12 + $0x18] sm:$0xff]
        %v3607 = vld [vmem:[#allocation12 + $0x20] sm:$0xff]
        %v3608 = vld [vmem:[#allocation12 + $0x28] sm:$0xff]
        %v3609 = vld [vmem:[#allocation12 + $0x30] sm:$0xff]
        %v3610 = vld [vmem:[#allocation12 + $0x38] sm:$0xff]
        %v3611 = vld [vmem:[#allocation12 + $0x40] sm:$0xff]
        %v3612 = vld [vmem:[#allocation12 + $0x48] sm:$0xff]
        %v3613 = vld [vmem:[#allocation12 + $0x50] sm:$0xff]
        %v3614 = vld [vmem:[#allocation12 + $0x58] sm:$0xff]
        %v3615 = vld [vmem:[#allocation12 + $0x60] sm:$0xff]
        %v3616 = vld [vmem:[#allocation12 + $0x68] sm:$0xff]
        %v3617 = vld [vmem:[#allocation12 + $0x70] sm:$0xff]
        %v3618 = vld [vmem:[#allocation12 + $0x78] sm:$0xff]
        %v3619 = vld [vmem:[#allocation12 + $0x80] sm:$0xff]
        %v3620 = vld [vmem:[#allocation12 + $0x88] sm:$0xff]
        %v3621 = vld [vmem:[#allocation12 + $0x90] sm:$0xff]
        %v3622 = vld [vmem:[#allocation12 + $0x98] sm:$0xff]
        %v3623 = vld [vmem:[#allocation12 + $0xa0] sm:$0xff]
        %v3624 = vld [vmem:[#allocation12 + $0xa8] sm:$0xff]
        %v3625 = vld [vmem:[#allocation12 + $0xb0] sm:$0xff]
        %v3626 = vld [vmem:[#allocation12 + $0xb8] sm:$0xff]
        %v3627 = vld [vmem:[#allocation12 + $0xc0] sm:$0xff]
        %v3628 = vld [vmem:[#allocation12 + $0xc8] sm:$0xff]
        %v3629 = vld [vmem:[#allocation12 + $0xd0] sm:$0xff]
        %v3630 = vld [vmem:[#allocation12 + $0xd8] sm:$0xff]
        %v3631 = vld [vmem:[#allocation12 + $0xe0] sm:$0xff]
        %v3632 = vld [vmem:[#allocation12 + $0xe8] sm:$0xff]
        %v3633 = vld [vmem:[#allocation12 + $0xf0] sm:$0xff]
        %v3634 = vld [vmem:[#allocation12 + $0xf8] sm:$0xff]
        %v3635 = vld [vmem:[#allocation12 + $0x100] sm:$0xff]
        %v3636 = vld [vmem:[#allocation12 + $0x108] sm:$0xff]
        %v3637 = vld [vmem:[#allocation12 + $0x110] sm:$0xff]
        %v3638 = vld [vmem:[#allocation12 + $0x118] sm:$0xff]
        %v3639 = vld [vmem:[#allocation12 + $0x120] sm:$0xff]
        %v3640 = vld [vmem:[#allocation12 + $0x128] sm:$0xff]
        %v3641 = vld [vmem:[#allocation12 + $0x130] sm:$0xff]
        %v3642 = vld [vmem:[#allocation12 + $0x138] sm:$0xff]
        %v3643 = vld [vmem:[#allocation12 + $0x140] sm:$0xff]
        %v3644 = vld [vmem:[#allocation12 + $0x148] sm:$0xff]
        %v3645 = vld [vmem:[#allocation12 + $0x150] sm:$0xff]
        %v3646 = vld [vmem:[#allocation12 + $0x158] sm:$0xff]
        %v3647 = vld [vmem:[#allocation12 + $0x160] sm:$0xff]
        %v3648 = vld [vmem:[#allocation12 + $0x168] sm:$0xff]
        %v3649 = vld [vmem:[#allocation12 + $0x170] sm:$0xff]
        %v3650 = vld [vmem:[#allocation12 + $0x178] sm:$0xff]
        %v3651 = vld [vmem:[#allocation12 + $0x180] sm:$0xff]
        %v3652 = vld [vmem:[#allocation12 + $0x188] sm:$0xff]
        %v3653 = vld [vmem:[#allocation12 + $0x190] sm:$0xff]
        %v3654 = vld [vmem:[#allocation12 + $0x198] sm:$0xff]
        %v3655 = vld [vmem:[#allocation12 + $0x1a0] sm:$0xff]
        %v3656 = vld [vmem:[#allocation12 + $0x1a8] sm:$0xff]
        %v3657 = vld [vmem:[#allocation12 + $0x1b0] sm:$0xff]
        %v3658 = vld [vmem:[#allocation12 + $0x1b8] sm:$0xff]
        %v3659 = vld [vmem:[#allocation12 + $0x1c0] sm:$0xff]
        %v3660 = vld [vmem:[#allocation12 + $0x1c8] sm:$0xff]
        %v3661 = vld [vmem:[#allocation12 + $0x1d0] sm:$0xff]
        %v3662 = vld [vmem:[#allocation12 + $0x1d8] sm:$0xff]
        %v3663 = vld [vmem:[#allocation12 + $0x1e0] sm:$0xff]
        %v3664 = vld [vmem:[#allocation12 + $0x1e8] sm:$0xff]
        %v3665 = vld [vmem:[#allocation12 + $0x1f0] sm:$0xff]
        %v3666 = vld [vmem:[#allocation12 + $0x1f8] sm:$0xff]
        %3667 = vmatprep.subr.mxu0 0.0
        %3668 = vmatpush1.msra.mxu0 %v3618
        %3669 = vmatprep.subr.mxu0 0.0
        %3670 = vmatpush1.msra.mxu0 %v3617
        %3671 = vmatprep.subr.mxu0 0.0
        %3672 = vmatpush1.msra.mxu0 %v3616
        %3673 = vmatprep.subr.mxu0 0.0
        %3674 = vmatpush1.msra.mxu0 %v3615
        %3675 = vmatprep.subr.mxu0 0.0
        %3676 = vmatpush1.msra.mxu0 %v3614
        %3677 = vmatprep.subr.mxu0 0.0
        %3678 = vmatpush1.msra.mxu0 %v3613
        %3679 = vmatprep.subr.mxu0 0.0
        %3680 = vmatpush1.msra.mxu0 %v3612
        %3681 = vmatprep.subr.mxu0 0.0
        %3682 = vmatpush1.msra.mxu0 %v3611
        %3683 = vmatprep.subr.mxu0 0.0
        %3684 = vmatpush1.msra.mxu0 %v3610
        %3685 = vmatprep.subr.mxu0 0.0
        %3686 = vmatpush1.msra.mxu0 %v3609
        %3687 = vmatprep.subr.mxu0 0.0
        %3688 = vmatpush1.msra.mxu0 %v3608
        %3689 = vmatprep.subr.mxu0 0.0
        %3690 = vmatpush1.msra.mxu0 %v3607
        %3691 = vmatprep.subr.mxu0 0.0
        %3692 = vmatpush1.msra.mxu0 %v3606
        %3693 = vmatprep.subr.mxu0 0.0
        %3694 = vmatpush1.msra.mxu0 %v3605
        %3695 = vmatprep.subr.mxu0 0.0
        %3696 = vmatpush1.msra.mxu0 %v3604
        %3697 = vmatprep.subr.mxu0 0.0
        %3698 = vmatpush1.msra.mxu0 %v3603
        %3699 = vmatprep.subr.mxu0 0.0
        %3700 = vmatpush2.msra.mxu0 %v3634
        %3701 = vmatprep.subr.mxu0 0.0
        %3702 = vmatpush2.msra.mxu0 %v3633
        %3703 = vmatprep.subr.mxu0 0.0
        %3704 = vmatpush2.msra.mxu0 %v3632
        %3705 = vmatprep.subr.mxu0 0.0
        %3706 = vmatpush2.msra.mxu0 %v3631
        %3707 = vmatprep.subr.mxu0 0.0
        %3708 = vmatpush2.msra.mxu0 %v3630
        %3709 = vmatprep.subr.mxu0 0.0
        %3710 = vmatpush2.msra.mxu0 %v3629
        %3711 = vmatprep.subr.mxu0 0.0
        %3712 = vmatpush2.msra.mxu0 %v3628
        %3713 = vmatprep.subr.mxu0 0.0
        %3714 = vmatpush2.msra.mxu0 %v3627
        %3715 = vmatprep.subr.mxu0 0.0
        %3716 = vmatpush2.msra.mxu0 %v3626
        %3717 = vmatprep.subr.mxu0 0.0
        %3718 = vmatpush2.msra.mxu0 %v3625
        %3719 = vmatprep.subr.mxu0 0.0
        %3720 = vmatpush2.msra.mxu0 %v3624
        %3721 = vmatprep.subr.mxu0 0.0
        %3722 = vmatpush2.msra.mxu0 %v3623
        %3723 = vmatprep.subr.mxu0 0.0
        %3724 = vmatpush2.msra.mxu0 %v3622
        %3725 = vmatprep.subr.mxu0 0.0
        %3726 = vmatpush2.msra.mxu0 %v3621
        %3727 = vmatprep.subr.mxu0 0.0
        %3728 = vmatpush2.msra.mxu0 %v3620
        %3729 = vmatprep.subr.mxu0 0.0
        %3730 = vmatpush2.msra.mxu0 %v3619
        %3731 = vmatprep.mubr.f32.mxu0 %v3588
        %3732 = vmatmul.mubr.f32.gmra.mxu0 %v3587
        %v3733 = vpop.f32.mrf.mxu0
        %v3734 = vadd.f32 0.0, %v3733
        %v3735 = vpop.f32.mrf.mxu0
        %3736 = vmatprep.mubr.f32.mxu0 %v3592
        %3737 = vmatmul.mubr.f32.gmra.mxu0 %v3591
        %v3738 = vpop.f32.mrf.mxu0
        %v3739 = vadd.f32 0.0, %v3738
        %v3740 = vpop.f32.mrf.mxu0
        %3741 = vmatprep.mubr.f32.mxu0 %v3596
        %3742 = vmatmul.mubr.f32.gmra.mxu0 %v3595
        %v3743 = vpop.f32.mrf.mxu0
        %v3744 = vadd.f32 0.0, %v3743
        %v3745 = vpop.f32.mrf.mxu0
        %3746 = vmatprep.mubr.f32.mxu0 %v3600
        %3747 = vmatmul.mubr.f32.gmra.mxu0 %v3599
        %v3748 = vpop.f32.mrf.mxu0
        %v3749 = vadd.f32 0.0, %v3748
        %v3750 = vpop.f32.mrf.mxu0
        %3751 = vdwg.mxu0
        %3752 = vmatprep.subr.mxu0 0.0
        %3753 = vmatpush1.msra.mxu0 %v3650
        %3754 = vmatprep.subr.mxu0 0.0
        %3755 = vmatpush1.msra.mxu0 %v3649
        %3756 = vmatprep.subr.mxu0 0.0
        %3757 = vmatpush1.msra.mxu0 %v3648
        %3758 = vmatprep.subr.mxu0 0.0
        %3759 = vmatpush1.msra.mxu0 %v3647
        %3760 = vmatprep.subr.mxu0 0.0
        %3761 = vmatpush1.msra.mxu0 %v3646
        %3762 = vmatprep.subr.mxu0 0.0
        %3763 = vmatpush1.msra.mxu0 %v3645
        %3764 = vmatprep.subr.mxu0 0.0
        %3765 = vmatpush1.msra.mxu0 %v3644
        %3766 = vmatprep.subr.mxu0 0.0
        %3767 = vmatpush1.msra.mxu0 %v3643
        %3768 = vmatprep.subr.mxu0 0.0
        %3769 = vmatpush1.msra.mxu0 %v3642
        %3770 = vmatprep.subr.mxu0 0.0
        %3771 = vmatpush1.msra.mxu0 %v3641
        %3772 = vmatprep.subr.mxu0 0.0
        %3773 = vmatpush1.msra.mxu0 %v3640
        %3774 = vmatprep.subr.mxu0 0.0
        %3775 = vmatpush1.msra.mxu0 %v3639
        %3776 = vmatprep.subr.mxu0 0.0
        %3777 = vmatpush1.msra.mxu0 %v3638
        %3778 = vmatprep.subr.mxu0 0.0
        %3779 = vmatpush1.msra.mxu0 %v3637
        %3780 = vmatprep.subr.mxu0 0.0
        %3781 = vmatpush1.msra.mxu0 %v3636
        %3782 = vmatprep.subr.mxu0 0.0
        %3783 = vmatpush1.msra.mxu0 %v3635
        %3784 = vmatprep.subr.mxu0 0.0
        %3785 = vmatpush2.msra.mxu0 %v3666
        %3786 = vmatprep.subr.mxu0 0.0
        %3787 = vmatpush2.msra.mxu0 %v3665
        %3788 = vmatprep.subr.mxu0 0.0
        %3789 = vmatpush2.msra.mxu0 %v3664
        %3790 = vmatprep.subr.mxu0 0.0
        %3791 = vmatpush2.msra.mxu0 %v3663
        %3792 = vmatprep.subr.mxu0 0.0
        %3793 = vmatpush2.msra.mxu0 %v3662
        %3794 = vmatprep.subr.mxu0 0.0
        %3795 = vmatpush2.msra.mxu0 %v3661
        %3796 = vmatprep.subr.mxu0 0.0
        %3797 = vmatpush2.msra.mxu0 %v3660
        %3798 = vmatprep.subr.mxu0 0.0
        %3799 = vmatpush2.msra.mxu0 %v3659
        %3800 = vmatprep.subr.mxu0 0.0
        %3801 = vmatpush2.msra.mxu0 %v3658
        %3802 = vmatprep.subr.mxu0 0.0
        %3803 = vmatpush2.msra.mxu0 %v3657
        %3804 = vmatprep.subr.mxu0 0.0
        %3805 = vmatpush2.msra.mxu0 %v3656
        %3806 = vmatprep.subr.mxu0 0.0
        %3807 = vmatpush2.msra.mxu0 %v3655
        %3808 = vmatprep.subr.mxu0 0.0
        %3809 = vmatpush2.msra.mxu0 %v3654
        %3810 = vmatprep.subr.mxu0 0.0
        %3811 = vmatpush2.msra.mxu0 %v3653
        %3812 = vmatprep.subr.mxu0 0.0
        %3813 = vmatpush2.msra.mxu0 %v3652
        %3814 = vmatprep.subr.mxu0 0.0
        %3815 = vmatpush2.msra.mxu0 %v3651
        %3816 = vmatprep.mubr.f32.mxu0 %v3590
        %3817 = vmatmul.mubr.f32.gmra.mxu0 %v3589
        %v3818 = vpop.f32.mrf.mxu0
        %v3819 = vadd.f32 %v3734, %v3818
        %v3820 = vpop.f32.mrf.mxu0
        %3821 = vmatprep.mubr.f32.mxu0 %v3594
        %3822 = vmatmul.mubr.f32.gmra.mxu0 %v3593
        %v3823 = vpop.f32.mrf.mxu0
        %v3824 = vadd.f32 %v3739, %v3823
        %v3825 = vpop.f32.mrf.mxu0
        %3826 = vmatprep.mubr.f32.mxu0 %v3598
        %3827 = vmatmul.mubr.f32.gmra.mxu0 %v3597
        %v3828 = vpop.f32.mrf.mxu0
        %v3829 = vadd.f32 %v3744, %v3828
        %v3830 = vpop.f32.mrf.mxu0
        %3831 = vmatprep.mubr.f32.mxu0 %v3602
        %3832 = vmatmul.mubr.f32.gmra.mxu0 %v3601
        %v3833 = vpop.f32.mrf.mxu0
        %v3834 = vadd.f32 %v3749, %v3833
        %v3835 = vpop.f32.mrf.mxu0
        %3836 = vdwg.mxu0
        %3837 = vst [vmem:[#allocation2] sm:$0xff] %v3819
        %3838 = vst [vmem:[#allocation2 + $0x8] sm:$0xff] %v3824
        %3839 = vst [vmem:[#allocation2 + $0x10] sm:$0xff] %v3829
        %3840 = vst [vmem:[#allocation2 + $0x18] sm:$0xff] %v3834
        %v3841 = vld [vmem:[#allocation2] ss:$2 sm:$0xff]
        %s3842 = scalar_lea.vmem [#allocation2], 16
        %v3843 = vld [vmem:[%s3842] ss:$2 sm:$0xff]
        %s3844 = scalar_lea.vmem [#allocation2], 1
        %v3845 = vld [vmem:[%s3844] ss:$2 sm:$0xff]
        %s3846 = scalar_lea.vmem [#allocation2], 17
        %v3847 = vld [vmem:[%s3846] ss:$2 sm:$0xff]
        %v3848 = vmax.f32 %v3841, %v3845
        %v3849 = vmax.f32 %v3843, %v3847
        %3850 = vst [vmem:[%s339] sm:$0xff] %v3848
        %3851 = vst [vmem:[%s339 + $0x8] sm:$0xff] %v3849
        %s3852 = sand.u32 %s165, 1
        %s3853 = scalar_lea.sflag [#allocation5], %s3852
        %s3854 = sand.u32 %s165, 1
        %s3855 = smul.addr %s3854, 16
        %s3856 = scalar_lea.vmem [#allocation14], %s3855
        // Predicated region
        $region69: #{tpu_custom_call.1} parent=43 // pred_check
          %p3857 = pneg %p175
        $region70: #{tpu_custom_call.1} parent=43 // pred_check_branch
          %3859 = sbr.rel (%p3857) target = $region72
        $region71: #{tpu_custom_call.1} parent=43 // pred_region
          %s3860 = smul.u32 2, %s26
          %s3862 = ssub.s32 256, 256
          %3863 = vsyncadd %s3853, %s3862
          %s3864 = smul.addr %s3860, 128
          %s3865 = scalar_lea.hbm %s6, %s3864
          %s3866 = sshll.u32 %s3856, 4
          %s3867 = int_to_ptr.vmem [resolvable:$true] %s3866
          %3872 = dma.vmem_to_hbm [thread:$0]  %s3867, 256, %s3865, %s3853, 128, 128, 8
        $region72: #{tpu_custom_call.1} parent=43 // pred_fallthru
          _
      $region44: #{tpu_custom_call.1} parent=5 // pred_fallthru
        _
      %p3873 = scmp.le.s32.totalorder 2, %s21
      // Predicated region
      $region73: #{tpu_custom_call.1} parent=5 // pred_check
        %p3874 = pneg %p3873
      $region74: #{tpu_custom_call.1} parent=5 // pred_check_branch
        %3876 = sbr.rel (%p3874) target = $region76
      $region75: #{tpu_custom_call.1} parent=5 // pred_region
        %s3877 = ssub.s32 %s21, 2
        // Predicated region
        $region77: #{tpu_custom_call.1} parent=75 // pred_check
          %p3878 = pneg %p181
        $region78: #{tpu_custom_call.1} parent=75 // pred_check_branch
          %3880 = sbr.rel (%p3878) target = $region80
        $region79: #{tpu_custom_call.1} parent=75 // pred_region
          %s3881 = sand.u32 %s166, 1
          %s3882 = scalar_lea.sflag [#allocation5], %s3881
          %s3883 = sand.u32 %s166, 1
          %s3884 = smul.addr %s3883, 16
          %s3885 = scalar_lea.vmem [#allocation14], %s3884
          %3886 = dma.done %s3882, 256
        $region80: #{tpu_custom_call.1} parent=75 // pred_fallthru
          _
      $region76: #{tpu_custom_call.1} parent=5 // pred_fallthru
        _
    $region6: #{tpu_custom_call.1} parent=1 // loop_footer
      %s25 = sadd.s32 1, %s21
    $region7: #{tpu_custom_call.1} parent=1 // loop_footer_branch
      %20 = sbr.rel target = $region3
    $region8: #{tpu_custom_call.1} parent=1 // loop_exit
      _
    %3887 = vsyncpa [#allocation4], 1
    %s3888 = scalar_lea.sflag [#allocation4], 1
    %3889 = vsyncpa %s3888, 1
    %3890 = vsyncpa [#allocation7], 1
    %3891 = vsyncpa [#allocation10], 1
    %3892 = vsyncpa [#allocation13], 1
    %3893 = vsyncpa [#allocation5], 1
    %s3894 = scalar_lea.sflag [#allocation5], 1
    %3895 = vsyncpa %s3894, 1

// kernel: tpu_custom_call.1
$region0: #{tpu_custom_call.1}
  #allocation0 [shape = 'u32[]', space=smem, size = 0x4, offset = 0x4, fixed_abs, tag = 'smem constant byte address 0x4 - core index']
  #allocation1 [shape = 'u32[144,128]{1,0:T(1,128)}', space=vmem, size = 0x12000, scoped, tag = 'internal scratch']
  #allocation2 [shape = 'f32[32,128]{1,0:T(8,128)}', space=vmem, size = 0x4000, scoped, tag = 'scratch operand']
  %s0 = inlined_call_operand.hbm [shape: f32[64,256], index: 0, kind: input, shape index: {}]
  %s1 = inlined_call_operand.hbm [shape: f32[3,256,512], index: 1, kind: input, shape index: {}]
  %s2 = inlined_call_operand.hbm [shape: f32[1,512], index: 2, kind: input, shape index: {}]
  %s3 = inlined_call_operand.hbm [shape: f32[3,512,512], index: 3, kind: input, shape index: {}]
  %s4 = inlined_call_operand.hbm [shape: f32[1,512], index: 4, kind: input, shape index: {}]
  %s5 = inlined_call_operand.hbm [shape: f32[512,128], index: 5, kind: input, shape index: {}]
  %s6 = inlined_call_operand.hbm [shape: f32[32,128], index: 6, kind: output, shape index: {}]
  %s7 = sld [smem:[#allocation0]]
  $region81: #{tpu_custom_call.1} parent=0
    _
  %s9 = ssub.s32 1, %s7
  %s10 = scalar_select 0, %s9, %s7
  $region1: #{tpu_custom_call.1} parent=0
    #allocation3 [shape = 'u8[65536]{0}', space=vmem, size = 0x10000, scoped, tag = 'input window, operand 0']
    #allocation4 [shape = 's32[2]{0}', space=sflag, size = 0x8, scoped, tag = 'scoped memory for tpu_custom_call.1']
    #allocation5 [shape = 's32[2]{0}', space=sflag, size = 0x8, scoped, tag = 'scoped memory for tpu_custom_call.1']
    #allocation6 [shape = 'u8[1572864]{0}', space=vmem, size = 0x180000, scoped, tag = 'input window, operand 1, single buffered']
    #allocation7 [shape = 's32[1]{0}', space=sflag, size = 0x4, scoped, tag = 'scoped memory for tpu_custom_call.1']
    #allocation8 [shape = 'u8[2048]{0}', space=vmem, size = 0x800, scoped, tag = 'input window, operand 2, single buffered']
    #allocation9 [shape = 'u8[3145728]{0}', space=vmem, size = 0x300000, scoped, tag = 'input window, operand 3, single buffered']
    #allocation10 [shape = 's32[1]{0}', space=sflag, size = 0x4, scoped, tag = 'scoped memory for tpu_custom_call.1']
    #allocation11 [shape = 'u8[2048]{0}', space=vmem, size = 0x800, scoped, tag = 'input window, operand 4, single buffered']
    #allocation12 [shape = 'u8[262144]{0}', space=vmem, size = 0x40000, scoped, tag = 'input window, operand 5, single buffered']
    #allocation13 [shape = 's32[1]{0}', space=sflag, size = 0x4, scoped, tag = 'scoped memory for tpu_custom_call.1']
    #allocation14 [shape = 'u8[16384]{0}', space=vmem, size = 0x4000, scoped, tag = 'output window, operand 0']
    %11 = vsyncpa [#allocation4], 0
    %s12 = scalar_lea.sflag [#allocation4], 1
    %13 = vsyncpa %s12, 0
    %14 = vsyncpa [#allocation7], 0
    %15 = vsyncpa [#allocation10], 0
    %16 = vsyncpa [#allocation13], 0
    %17 = vsyncpa [#allocation5], 0
    %s18 = scalar_lea.sflag [#allocation5], 1
    %19 = vsyncpa %s18, 0
    loop: start=0, step=1, limit=4
    $region2: #{tpu_custom_call.1} parent=1 // loop_pre_header
      _
    $region3: #{tpu_custom_call.1} parent=1 // loop_header
      %s21 = sphi 0, %s25
      %p22 = scmp.ge.s32.totalorder %s21, 4
      %s31 = sphi 0, %s33
      %s34 = sphi 0, %s31
      %s35 = sphi 0, %s34
      %s51 = sphi 0, %s35
      %s55 = sphi 0, %s55
      %s57 = sphi 0, %s55
      %s58 = sphi 0, %s57
      %s72 = sphi 0, %s58
      %s76 = sphi 0, %s76
      %s78 = sphi 0, %s76
      %s79 = sphi 0, %s78
      %s93 = sphi 0, %s79
      %s97 = sphi 0, %s97
      %s99 = sphi 0, %s97
      %s100 = sphi 0, %s99
      %s114 = sphi 0, %s100
      %s118 = sphi 0, %s118
      %s120 = sphi 0, %s118
      %s121 = sphi 0, %s120
      %s135 = sphi 0, %s121
      %s139 = sphi 0, %s139
      %s141 = sphi 0, %s139
      %s142 = sphi 0, %s141
      %s156 = sphi 0, %s142
      %s162 = sphi 0, %s164
      %s165 = sphi 0, %s162
      %s166 = sphi 0, %s165
      %s182 = sphi 0, %s166
    $region4: #{tpu_custom_call.1} parent=1 // loop_header_branch
      %24 = sbr.rel (%p22) target = $region8
    $region5: #{tpu_custom_call.1} parent=1 // loop_body
      %s26 = ssub.s32 %s21, 1
      %s27 = ssub.s32 %s21, 2
      %s28 = sadd.s32 %s21, 1
      %s29 = ssub.s32 %s21, %s28
      %p30 = scmp.eq.s32.totalorder %s29, 0
      %s32 = sadd.s32 %s31, 1
      %s33 = scalar_select %p30, %s31, %s32
      %p36 = pneg %p30
      %p37 = scmp.eq.s32.totalorder %s21, 1
      %p38 = por %p36, %p37
      %p39 = scmp.ne.s32.totalorder %s31, %s34
      %p40 = scmp.eq.s32.totalorder %s21, 0
      %p41 = por %p39, %p40
      %p42 = scmp.ne.s32.totalorder %s31, %s34
      %p43 = scmp.eq.s32.totalorder %s26, 1
      %p44 = por %p42, %p43
      %p45 = scmp.ne.s32.totalorder %s34, %s35
      %p46 = scmp.eq.s32.totalorder %s26, 0
      %p47 = por %p45, %p46
      %p48 = scmp.ne.s32.totalorder %s34, %s35
      %p49 = scmp.eq.s32.totalorder %s27, 1
      %p50 = por %p48, %p49
      %p52 = scmp.ne.s32.totalorder %s35, %s51
      %p53 = scmp.eq.s32.totalorder %s27, 0
      %p54 = por %p52, %p53
      %s56 = sadd.s32 %s55, 1
      %p59 = scmp.eq.s32.totalorder %s21, 1
      %p60 = scmp.ne.s32.totalorder %s55, %s57
      %p61 = scmp.eq.s32.totalorder %s21, 0
      %p62 = por %p60, %p61
      %p63 = scmp.ne.s32.totalorder %s55, %s57
      %p64 = scmp.eq.s32.totalorder %s26, 1
      %p65 = por %p63, %p64
      %p66 = scmp.ne.s32.totalorder %s57, %s58
      %p67 = scmp.eq.s32.totalorder %s26, 0
      %p68 = por %p66, %p67
      %p69 = scmp.ne.s32.totalorder %s57, %s58
      %p70 = scmp.eq.s32.totalorder %s27, 1
      %p71 = por %p69, %p70
      %p73 = scmp.ne.s32.totalorder %s58, %s72
      %p74 = scmp.eq.s32.totalorder %s27, 0
      %p75 = por %p73, %p74
      %s77 = sadd.s32 %s76, 1
      %p80 = scmp.eq.s32.totalorder %s21, 1
      %p81 = scmp.ne.s32.totalorder %s76, %s78
      %p82 = scmp.eq.s32.totalorder %s21, 0
      %p83 = por %p81, %p82
      %p84 = scmp.ne.s32.totalorder %s76, %s78
      %p85 = scmp.eq.s32.totalorder %s26, 1
      %p86 = por %p84, %p85
      %p87 = scmp.ne.s32.totalorder %s78, %s79
      %p88 = scmp.eq.s32.totalorder %s26, 0
      %p89 = por %p87, %p88
      %p90 = scmp.ne.s32.totalorder %s78, %s79
      %p91 = scmp.eq.s32.totalorder %s27, 1
      %p92 = por %p90, %p91
      %p94 = scmp.ne.s32.totalorder %s79, %s93
      %p95 = scmp.eq.s32.totalorder %s27, 0
      %p96 = por %p94, %p95
      %s98 = sadd.s32 %s97, 1
      %p101 = scmp.eq.s32.totalorder %s21, 1
      %p102 = scmp.ne.s32.totalorder %s97, %s99
      %p103 = scmp.eq.s32.totalorder %s21, 0
      %p104 = por %p102, %p103
      %p105 = scmp.ne.s32.totalorder %s97, %s99
      %p106 = scmp.eq.s32.totalorder %s26, 1
      %p107 = por %p105, %p106
      %p108 = scmp.ne.s32.totalorder %s99, %s100
      %p109 = scmp.eq.s32.totalorder %s26, 0
      %p110 = por %p108, %p109
      %p111 = scmp.ne.s32.totalorder %s99, %s100
      %p112 = scmp.eq.s32.totalorder %s27, 1
      %p113 = por %p111, %p112
      %p115 = scmp.ne.s32.totalorder %s100, %s114
      %p116 = scmp.eq.s32.totalorder %s27, 0
      %p117 = por %p115, %p116
      %s119 = sadd.s32 %s118, 1
      %p122 = scmp.eq.s32.totalorder %s21, 1
      %p123 = scmp.ne.s32.totalorder %s118, %s120
      %p124 = scmp.eq.s32.totalorder %s21, 0
      %p125 = por %p123, %p124
      %p126 = scmp.ne.s32.totalorder %s118, %s120
      %p127 = scmp.eq.s32.totalorder %s26, 1
      %p128 = por %p126, %p127
      %p129 = scmp.ne.s32.totalorder %s120, %s121
      %p130 = scmp.eq.s32.totalorder %s26, 0
      %p131 = por %p129, %p130
      %p132 = scmp.ne.s32.totalorder %s120, %s121
      %p133 = scmp.eq.s32.totalorder %s27, 1
      %p134 = por %p132, %p133
      %p136 = scmp.ne.s32.totalorder %s121, %s135
      %p137 = scmp.eq.s32.totalorder %s27, 0
      %p138 = por %p136, %p137
      %s140 = sadd.s32 %s139, 1
      %p143 = scmp.eq.s32.totalorder %s21, 1
      %p144 = scmp.ne.s32.totalorder %s139, %s141
      %p145 = scmp.eq.s32.totalorder %s21, 0
      %p146 = por %p144, %p145
      %p147 = scmp.ne.s32.totalorder %s139, %s141
      %p148 = scmp.eq.s32.totalorder %s26, 1
      %p149 = por %p147, %p148
      %p150 = scmp.ne.s32.totalorder %s141, %s142
      %p151 = scmp.eq.s32.totalorder %s26, 0
      %p152 = por %p150, %p151
      %p153 = scmp.ne.s32.totalorder %s141, %s142
      %p154 = scmp.eq.s32.totalorder %s27, 1
      %p155 = por %p153, %p154
      %p157 = scmp.ne.s32.totalorder %s142, %s156
      %p158 = scmp.eq.s32.totalorder %s27, 0
      %p159 = por %p157, %p158
      %s160 = ssub.s32 %s21, %s28
      %p161 = scmp.eq.s32.totalorder %s160, 0
      %s163 = sadd.s32 %s162, 1
      %s164 = scalar_select %p161, %s162, %s163
      %p167 = pneg %p161
      %p168 = scmp.eq.s32.totalorder %s21, 1
      %p169 = por %p167, %p168
      %p170 = scmp.ne.s32.totalorder %s162, %s165
      %p171 = scmp.eq.s32.totalorder %s21, 0
      %p172 = por %p170, %p171
      %p173 = scmp.ne.s32.totalorder %s162, %s165
      %p174 = scmp.eq.s32.totalorder %s26, 1
      %p175 = por %p173, %p174
      %p176 = scmp.ne.s32.totalorder %s165, %s166
      %p177 = scmp.eq.s32.totalorder %s26, 0
      %p178 = por %p176, %p177
      %p179 = scmp.ne.s32.totalorder %s165, %s166
      %p180 = scmp.eq.s32.totalorder %s27, 1
      %p181 = por %p179, %p180
      %p183 = scmp.ne.s32.totalorder %s166, %s182
      %p184 = scmp.eq.s32.totalorder %s27, 0
      %p185 = por %p183, %p184
      %p186 = scmp.le.s32.totalorder 1, %s21
      %p187 = scmp.lt.s32.totalorder %s21, 3
      %p188 = pnand %p186, %p187
      %p189 = pneg %p188
      // Predicated region
      $region9: #{tpu_custom_call.1} parent=5 // pred_check
        _
      $region10: #{tpu_custom_call.1} parent=5 // pred_check_branch
        %191 = sbr.rel (%p188) target = $region12
      $region11: #{tpu_custom_call.1} parent=5 // pred_region
        %s192 = ssub.s32 %s21, 1
        // Predicated region
        $region13: #{tpu_custom_call.1} parent=11 // pred_check
          %p193 = pneg %p68
        $region14: #{tpu_custom_call.1} parent=11 // pred_check_branch
          %195 = sbr.rel (%p193) target = $region16
        $region15: #{tpu_custom_call.1} parent=11 // pred_region
          %s197 = ssub.s32 49152, 49152
          %198 = vsyncadd [#allocation7], %s197
          %s199 = sshll.u32 [#allocation6], 4
          %s200 = int_to_ptr.vmem [resolvable:$true] %s199
          %205 = dma.hbm_to_vmem [thread:$0]  %s1, 49152, %s200, [#allocation7], 512, 512, 32
        $region16: #{tpu_custom_call.1} parent=11 // pred_fallthru
          _
        // Predicated region
        $region17: #{tpu_custom_call.1} parent=11 // pred_check
          %p206 = pneg %p89
        $region18: #{tpu_custom_call.1} parent=11 // pred_check_branch
          %208 = sbr.rel (%p206) target = $region20
        $region19: #{tpu_custom_call.1} parent=11 // pred_region
          %s210 = ssub.s32 64, 64
          %211 = vsyncadd [#allocation7], %s210
          %s213 = sshll.u32 [#allocation8], 4
          %s214 = int_to_ptr.vmem [resolvable:$true] %s213
          %216 = dma.hbm_to_vmem [thread:$0]  %s2, 64, %s214, [#allocation7]
        $region20: #{tpu_custom_call.1} parent=11 // pred_fallthru
          _
        // Predicated region
        $region21: #{tpu_custom_call.1} parent=11 // pred_check
          %p217 = pneg %p110
        $region22: #{tpu_custom_call.1} parent=11 // pred_check_branch
          %219 = sbr.rel (%p217) target = $region24
        $region23: #{tpu_custom_call.1} parent=11 // pred_region
          %s221 = ssub.s32 98304, 98304
          %222 = vsyncadd [#allocation10], %s221
          %s223 = sshll.u32 [#allocation9], 4
          %s224 = int_to_ptr.vmem [resolvable:$true] %s223
          %229 = dma.hbm_to_vmem [thread:$0]  %s3, 98304, %s224, [#allocation10], 512, 512, 32
        $region24: #{tpu_custom_call.1} parent=11 // pred_fallthru
          _
        // Predicated region
        $region25: #{tpu_custom_call.1} parent=11 // pred_check
          %p230 = pneg %p131
        $region26: #{tpu_custom_call.1} parent=11 // pred_check_branch
          %232 = sbr.rel (%p230) target = $region28
        $region27: #{tpu_custom_call.1} parent=11 // pred_region
          %s234 = ssub.s32 64, 64
          %235 = vsyncadd [#allocation10], %s234
          %s237 = sshll.u32 [#allocation11], 4
          %s238 = int_to_ptr.vmem [resolvable:$true] %s237
          %240 = dma.hbm_to_vmem [thread:$0]  %s4, 64, %s238, [#allocation10]
        $region28: #{tpu_custom_call.1} parent=11 // pred_fallthru
          _
        // Predicated region
        $region29: #{tpu_custom_call.1} parent=11 // pred_check
          %p241 = pneg %p152
        $region30: #{tpu_custom_call.1} parent=11 // pred_check_branch
          %243 = sbr.rel (%p241) target = $region32
        $region31: #{tpu_custom_call.1} parent=11 // pred_region
          %s245 = ssub.s32 8192, 8192
          %246 = vsyncadd [#allocation13], %s245
          %s247 = sshll.u32 [#allocation12], 4
          %s248 = int_to_ptr.vmem [resolvable:$true] %s247
          %253 = dma.hbm_to_vmem [thread:$0]  %s5, 8192, %s248, [#allocation13], 128, 128, 8
        $region32: #{tpu_custom_call.1} parent=11 // pred_fallthru
          _
      $region12: #{tpu_custom_call.1} parent=5 // pred_fallthru
        _
      %p254 = scmp.lt.s32.totalorder %s21, 2
      // Predicated region
      $region33: #{tpu_custom_call.1} parent=5 // pred_check
        %p255 = pneg %p254
      $region34: #{tpu_custom_call.1} parent=5 // pred_check_branch
        %257 = sbr.rel (%p255) target = $region36
      $region35: #{tpu_custom_call.1} parent=5 // pred_region
        // Predicated region
        $region37: #{tpu_custom_call.1} parent=35 // pred_check
          %p258 = pneg %p41
        $region38: #{tpu_custom_call.1} parent=35 // pred_check_branch
          %260 = sbr.rel (%p258) target = $region40
        $region39: #{tpu_custom_call.1} parent=35 // pred_region
          %s261 = sand.u32 %s31, 1
          %s262 = scalar_lea.sflag [#allocation4], %s261
          %s263 = sand.u32 %s31, 1
          %s264 = smul.addr %s263, 64
          %s265 = scalar_lea.vmem [#allocation3], %s264
          %s266 = smul.u32 4, %s21
          %s268 = ssub.s32 1024, 1024
          %269 = vsyncadd %s262, %s268
          %s270 = smul.addr %s266, 2
          %s271 = smul.addr %s270, 128
          %s272 = scalar_lea.hbm %s0, %s271
          %s273 = sshll.u32 %s265, 4
          %s274 = int_to_ptr.vmem [resolvable:$true] %s273
          %279 = dma.hbm_to_vmem [thread:$0]  %s272, 1024, %s274, %s262, 256, 256, 16
        $region40: #{tpu_custom_call.1} parent=35 // pred_fallthru
          _
      $region36: #{tpu_custom_call.1} parent=5 // pred_fallthru
        _
      %p280 = scmp.le.s32.totalorder 1, %s21
      %p281 = scmp.lt.s32.totalorder %s21, 3
      %p282 = pnand %p280, %p281
      %p283 = pneg %p282
      // Predicated region
      $region41: #{tpu_custom_call.1} parent=5 // pred_check
        _
      $region42: #{tpu_custom_call.1} parent=5 // pred_check_branch
        %285 = sbr.rel (%p282) target = $region44
      $region43: #{tpu_custom_call.1} parent=5 // pred_region
        %s286 = ssub.s32 %s21, 1
        %s287 = sand.u32 %s34, 1
        %s288 = scalar_lea.sflag [#allocation4], %s287
        %s289 = sand.u32 %s34, 1
        %s290 = smul.addr %s289, 64
        %s291 = scalar_lea.vmem [#allocation3], %s290
        // Predicated region
        $region45: #{tpu_custom_call.1} parent=43 // pred_check
          %p292 = pneg %p47
        $region46: #{tpu_custom_call.1} parent=43 // pred_check_branch
          %294 = sbr.rel (%p292) target = $region48
        $region47: #{tpu_custom_call.1} parent=43 // pred_region
          %295 = dma.done %s288, 1024
        $region48: #{tpu_custom_call.1} parent=43 // pred_fallthru
          _
        // Predicated region
        $region49: #{tpu_custom_call.1} parent=43 // pred_check
          %p296 = pneg %p68
        $region50: #{tpu_custom_call.1} parent=43 // pred_check_branch
          %298 = sbr.rel (%p296) target = $region52
        $region51: #{tpu_custom_call.1} parent=43 // pred_region
          %299 = dma.done [#allocation7], 49152
        $region52: #{tpu_custom_call.1} parent=43 // pred_fallthru
          _
        // Predicated region
        $region53: #{tpu_custom_call.1} parent=43 // pred_check
          %p300 = pneg %p89
        $region54: #{tpu_custom_call.1} parent=43 // pred_check_branch
          %302 = sbr.rel (%p300) target = $region56
        $region55: #{tpu_custom_call.1} parent=43 // pred_region
          %303 = dma.done [#allocation7], 64
        $region56: #{tpu_custom_call.1} parent=43 // pred_fallthru
          _
        // Predicated region
        $region57: #{tpu_custom_call.1} parent=43 // pred_check
          %p304 = pneg %p110
        $region58: #{tpu_custom_call.1} parent=43 // pred_check_branch
          %306 = sbr.rel (%p304) target = $region60
        $region59: #{tpu_custom_call.1} parent=43 // pred_region
          %307 = dma.done [#allocation10], 98304
        $region60: #{tpu_custom_call.1} parent=43 // pred_fallthru
          _
        // Predicated region
        $region61: #{tpu_custom_call.1} parent=43 // pred_check
          %p308 = pneg %p131
        $region62: #{tpu_custom_call.1} parent=43 // pred_check_branch
          %310 = sbr.rel (%p308) target = $region64
        $region63: #{tpu_custom_call.1} parent=43 // pred_region
          %311 = dma.done [#allocation10], 64
        $region64: #{tpu_custom_call.1} parent=43 // pred_fallthru
          _
        // Predicated region
        $region65: #{tpu_custom_call.1} parent=43 // pred_check
          %p312 = pneg %p152
        $region66: #{tpu_custom_call.1} parent=43 // pred_check_branch
          %314 = sbr.rel (%p312) target = $region68
        $region67: #{tpu_custom_call.1} parent=43 // pred_region
          %315 = dma.done [#allocation13], 8192
        $region68: #{tpu_custom_call.1} parent=43 // pred_fallthru
          _
        %s316 = sand.u32 %s34, 1
        %s317 = scalar_lea.sflag [#allocation4], %s316
        %s318 = sand.u32 %s34, 1
        %s319 = smul.addr %s318, 64
        %s320 = scalar_lea.vmem [#allocation3], %s319
        %p321 = pneg %p47
        %p322 = pneg %p44
        %p323 = pneg %p68
        %p324 = pneg %p65
        %p325 = pneg %p89
        %p326 = pneg %p86
        %p327 = pneg %p110
        %p328 = pneg %p107
        %p329 = pneg %p131
        %p330 = pneg %p128
        %p331 = pneg %p152
        %p332 = pneg %p149
        %p333 = pneg %p178
        %p334 = pneg %p175
        %s335 = sand.u32 %s165, 1
        %s336 = scalar_lea.sflag [#allocation5], %s335
        %s337 = sand.u32 %s165, 1
        %s338 = smul.addr %s337, 16
        %s339 = scalar_lea.vmem [#allocation14], %s338
        %s340 = smul.u32 4, %s26
        %s341 = smul.u32 2, %s26
        %v342 = vlaneseq
        %v343 = vshrl.u32 %v342, 7
        %v344 = vadd.s32 %v343, 8
        %v345 = vadd.s32 %v343, 16
        %v346 = vadd.s32 %v343, 24
        %vm347 = vcmp.lt.s32.totalorder %v343, 0
        %v348 = vsub.s32 0, %v343
        %v349 = vsel %vm347, %v348, %v343
        %v350 = vshrl.u32 %v349, 3
        %v351 = vand.u32 %v349, 7
        %v352 = vsub.s32 0, %v351
        %v353 = vsel %vm347, %v352, %v351
        %vm354 = vcmp.lt.s32.totalorder %v344, 0
        %v355 = vsub.s32 0, %v344
        %v356 = vsel %vm354, %v355, %v344
        %v357 = vshrl.u32 %v356, 3
        %v358 = vand.u32 %v356, 7
        %v359 = vsub.s32 0, %v358
        %v360 = vsel %vm354, %v359, %v358
        %vm361 = vcmp.lt.s32.totalorder %v345, 0
        %v362 = vsub.s32 0, %v345
        %v363 = vsel %vm361, %v362, %v345
        %v364 = vshrl.u32 %v363, 3
        %v365 = vand.u32 %v363, 7
        %v366 = vsub.s32 0, %v365
        %v367 = vsel %vm361, %v366, %v365
        %vm368 = vcmp.lt.s32.totalorder %v346, 0
        %v369 = vsub.s32 0, %v346
        %v370 = vsel %vm368, %v369, %v346
        %v371 = vshrl.u32 %v370, 3
        %v372 = vand.u32 %v370, 7
        %v373 = vsub.s32 0, %v372
        %v374 = vsel %vm368, %v373, %v372
        %vm375 = vcmp.ne.s32.totalorder %v353, 0
        %vm376 = vcmp.ne.s32.totalorder %v360, 0
        %vm377 = vcmp.ne.s32.totalorder %v367, 0
        %vm378 = vcmp.ne.s32.totalorder %v374, 0
        %vm379 = vcmp.lt.s32.totalorder %v353, 0
        %vm380 = vcmp.lt.s32.totalorder %v360, 0
        %vm381 = vcmp.lt.s32.totalorder %v367, 0
        %vm382 = vcmp.lt.s32.totalorder %v374, 0
        %vm383 = vmand %vm379, %vm375
        %vm384 = vmand %vm380, %vm376
        %vm385 = vmand %vm381, %vm377
        %vm386 = vmand %vm382, %vm378
        %v387 = vadd.s32 %v353, 8
        %v388 = vadd.s32 %v360, 8
        %v389 = vadd.s32 %v367, 8
        %v390 = vadd.s32 %v374, 8
        %v391 = vsel %vm383, %v387, %v353
        %v392 = vsel %vm384, %v388, %v360
        %v393 = vsel %vm385, %v389, %v367
        %v394 = vsel %vm386, %v390, %v374
        %vm395 = vcmp.eq.s32.totalorder %v391, 0
        %vm396 = vcmp.eq.s32.totalorder %v392, 0
        %vm397 = vcmp.eq.s32.totalorder %v393, 0
        %vm398 = vcmp.eq.s32.totalorder %v394, 0
        %vm399 = vcmp.eq.s32.totalorder %v391, 7
        %vm400 = vcmp.eq.s32.totalorder %v392, 7
        %vm401 = vcmp.eq.s32.totalorder %v393, 7
        %vm402 = vcmp.eq.s32.totalorder %v394, 7
        %v403 = vld [vmem:[%s291] sm:$0xff]
        %v404 = vld [vmem:[%s291 + $0x8] sm:$0xff]
        %v405 = vld [vmem:[%s291 + $0x10] sm:$0xff]
        %v406 = vld [vmem:[%s291 + $0x18] sm:$0xff]
        %v407 = vld [vmem:[%s291 + $0x20] sm:$0xff]
        %v408 = vld [vmem:[%s291 + $0x28] sm:$0xff]
        %v409 = vld [vmem:[%s291 + $0x30] sm:$0xff]
        %v410 = vld [vmem:[%s291 + $0x38] sm:$0xff]
        %v411 = vld [vmem:[#allocation8] sm:$0xf]
        %v412 = vrot.slane %v403, 7
        %v413 = vrot.slane %v404, 7
        %v414 = vrot.slane %v405, 7
        %v415 = vrot.slane %v406, 7
        %v416 = vrot.slane %v407, 7
        %v417 = vrot.slane %v408, 7
        %v418 = vrot.slane %v409, 7
        %v419 = vrot.slane %v410, 7
        %vm420 = vcmp.lt.s32.totalorder %v343, 1
        %v421 = vsel %vm420, %v416, %v418
        %v422 = vsel %vm420, %v417, %v419
        %v423 = vsel %vm420, %v414, %v416
        %v424 = vsel %vm420, %v415, %v417
        %v425 = vsel %vm420, %v412, %v414
        %v426 = vsel %vm420, %v413, %v415
        %v427 = vsel %vm420, %v418, %v412
        %v428 = vsel %vm420, %v419, %v413
        %v429 = vsel %vm395, 1, 0
        %v430 = vsel %vm396, 1, 0
        %v431 = vsel %vm397, 1, 0
        %v432 = vsel %vm398, 1, 0
        %vm433 = vcmp.eq.s32.totalorder %v429, 1
        %vm434 = vcmp.eq.s32.totalorder %v430, 1
        %vm435 = vcmp.eq.s32.totalorder %v431, 1
        %vm436 = vcmp.eq.s32.totalorder %v432, 1
        %v437 = vsel %vm433, 0.0, %v427
        %v438 = vsel %vm433, 0.0, %v428
        %v439 = vsel %vm434, 0.0, %v425
        %v440 = vsel %vm434, 0.0, %v426
        %v441 = vsel %vm435, 0.0, %v423
        %v442 = vsel %vm435, 0.0, %v424
        %v443 = vsel %vm436, 0.0, %v421
        %v444 = vsel %vm436, 0.0, %v422
        %v445 = vrot.slane %v403, 1
        %v446 = vrot.slane %v404, 1
        %v447 = vrot.slane %v405, 1
        %v448 = vrot.slane %v406, 1
        %v449 = vrot.slane %v407, 1
        %v450 = vrot.slane %v408, 1
        %v451 = vrot.slane %v409, 1
        %v452 = vrot.slane %v410, 1
        %vm453 = vcmp.lt.s32.totalorder %v343, 7
        %v454 = vsel %vm453, %v449, %v451
        %v455 = vsel %vm453, %v450, %v452
        %v456 = vsel %vm453, %v447, %v449
        %v457 = vsel %vm453, %v448, %v450
        %v458 = vsel %vm453, %v445, %v447
        %v459 = vsel %vm453, %v446, %v448
        %v460 = vsel %vm453, %v451, %v445
        %v461 = vsel %vm453, %v452, %v446
        %v462 = vsel %vm399, 1, 0
        %v463 = vsel %vm400, 1, 0
        %v464 = vsel %vm401, 1, 0
        %v465 = vsel %vm402, 1, 0
        %vm466 = vcmp.eq.s32.totalorder %v462, 1
        %vm467 = vcmp.eq.s32.totalorder %v463, 1
        %vm468 = vcmp.eq.s32.totalorder %v464, 1
        %vm469 = vcmp.eq.s32.totalorder %v465, 1
        %v470 = vsel %vm466, 0.0, %v458
        %v471 = vsel %vm466, 0.0, %v459
        %v472 = vsel %vm467, 0.0, %v456
        %v473 = vsel %vm467, 0.0, %v457
        %v474 = vsel %vm468, 0.0, %v454
        %v475 = vsel %vm468, 0.0, %v455
        %v476 = vsel %vm469, 0.0, %v460
        %v477 = vsel %vm469, 0.0, %v461
        %v478 = vld [vmem:[#allocation6] sm:$0xff]
        %v479 = vld [vmem:[#allocation6 + $0x8] sm:$0xff]
        %v480 = vld [vmem:[#allocation6 + $0x10] sm:$0xff]
        %v481 = vld [vmem:[#allocation6 + $0x18] sm:$0xff]
        %v482 = vld [vmem:[#allocation6 + $0x20] sm:$0xff]
        %v483 = vld [vmem:[#allocation6 + $0x28] sm:$0xff]
        %v484 = vld [vmem:[#allocation6 + $0x30] sm:$0xff]
        %v485 = vld [vmem:[#allocation6 + $0x38] sm:$0xff]
        %v486 = vld [vmem:[#allocation6 + $0x40] sm:$0xff]
        %v487 = vld [vmem:[#allocation6 + $0x48] sm:$0xff]
        %v488 = vld [vmem:[#allocation6 + $0x50] sm:$0xff]
        %v489 = vld [vmem:[#allocation6 + $0x58] sm:$0xff]
        %v490 = vld [vmem:[#allocation6 + $0x60] sm:$0xff]
        %v491 = vld [vmem:[#allocation6 + $0x68] sm:$0xff]
        %v492 = vld [vmem:[#allocation6 + $0x70] sm:$0xff]
        %v493 = vld [vmem:[#allocation6 + $0x78] sm:$0xff]
        %v494 = vld [vmem:[#allocation6 + $0x80] sm:$0xff]
        %v495 = vld [vmem:[#allocation6 + $0x88] sm:$0xff]
        %v496 = vld [vmem:[#allocation6 + $0x90] sm:$0xff]
        %v497 = vld [vmem:[#allocation6 + $0x98] sm:$0xff]
        %v498 = vld [vmem:[#allocation6 + $0xa0] sm:$0xff]
        %v499 = vld [vmem:[#allocation6 + $0xa8] sm:$0xff]
        %v500 = vld [vmem:[#allocation6 + $0xb0] sm:$0xff]
        %v501 = vld [vmem:[#allocation6 + $0xb8] sm:$0xff]
        %v502 = vld [vmem:[#allocation6 + $0xc0] sm:$0xff]
        %v503 = vld [vmem:[#allocation6 + $0xc8] sm:$0xff]
        %v504 = vld [vmem:[#allocation6 + $0xd0] sm:$0xff]
        %v505 = vld [vmem:[#allocation6 + $0xd8] sm:$0xff]
        %v506 = vld [vmem:[#allocation6 + $0xe0] sm:$0xff]
        %v507 = vld [vmem:[#allocation6 + $0xe8] sm:$0xff]
        %v508 = vld [vmem:[#allocation6 + $0xf0] sm:$0xff]
        %v509 = vld [vmem:[#allocation6 + $0xf8] sm:$0xff]
        %v510 = vld [vmem:[#allocation6 + $0x100] sm:$0xff]
        %v511 = vld [vmem:[#allocation6 + $0x108] sm:$0xff]
        %v512 = vld [vmem:[#allocation6 + $0x110] sm:$0xff]
        %v513 = vld [vmem:[#allocation6 + $0x118] sm:$0xff]
        %v514 = vld [vmem:[#allocation6 + $0x120] sm:$0xff]
        %v515 = vld [vmem:[#allocation6 + $0x128] sm:$0xff]
        %v516 = vld [vmem:[#allocation6 + $0x130] sm:$0xff]
        %v517 = vld [vmem:[#allocation6 + $0x138] sm:$0xff]
        %v518 = vld [vmem:[#allocation6 + $0x140] sm:$0xff]
        %v519 = vld [vmem:[#allocation6 + $0x148] sm:$0xff]
        %v520 = vld [vmem:[#allocation6 + $0x150] sm:$0xff]
        %v521 = vld [vmem:[#allocation6 + $0x158] sm:$0xff]
        %v522 = vld [vmem:[#allocation6 + $0x160] sm:$0xff]
        %v523 = vld [vmem:[#allocation6 + $0x168] sm:$0xff]
        %v524 = vld [vmem:[#allocation6 + $0x170] sm:$0xff]
        %v525 = vld [vmem:[#allocation6 + $0x178] sm:$0xff]
        %v526 = vld [vmem:[#allocation6 + $0x180] sm:$0xff]
        %v527 = vld [vmem:[#allocation6 + $0x188] sm:$0xff]
        %v528 = vld [vmem:[#allocation6 + $0x190] sm:$0xff]
        %v529 = vld [vmem:[#allocation6 + $0x198] sm:$0xff]
        %v530 = vld [vmem:[#allocation6 + $0x1a0] sm:$0xff]
        %v531 = vld [vmem:[#allocation6 + $0x1a8] sm:$0xff]
        %v532 = vld [vmem:[#allocation6 + $0x1b0] sm:$0xff]
        %v533 = vld [vmem:[#allocation6 + $0x1b8] sm:$0xff]
        %v534 = vld [vmem:[#allocation6 + $0x1c0] sm:$0xff]
        %v535 = vld [vmem:[#allocation6 + $0x1c8] sm:$0xff]
        %v536 = vld [vmem:[#allocation6 + $0x1d0] sm:$0xff]
        %v537 = vld [vmem:[#allocation6 + $0x1d8] sm:$0xff]
        %v538 = vld [vmem:[#allocation6 + $0x1e0] sm:$0xff]
        %v539 = vld [vmem:[#allocation6 + $0x1e8] sm:$0xff]
        %v540 = vld [vmem:[#allocation6 + $0x1f0] sm:$0xff]
        %v541 = vld [vmem:[#allocation6 + $0x1f8] sm:$0xff]
        %v542 = vld [vmem:[#allocation6 + $0x200] sm:$0xff]
        %v543 = vld [vmem:[#allocation6 + $0x208] sm:$0xff]
        %v544 = vld [vmem:[#allocation6 + $0x210] sm:$0xff]
        %v545 = vld [vmem:[#allocation6 + $0x218] sm:$0xff]
        %v546 = vld [vmem:[#allocation6 + $0x220] sm:$0xff]
        %v547 = vld [vmem:[#allocation6 + $0x228] sm:$0xff]
        %v548 = vld [vmem:[#allocation6 + $0x230] sm:$0xff]
        %v549 = vld [vmem:[#allocation6 + $0x238] sm:$0xff]
        %v550 = vld [vmem:[#allocation6 + $0x240] sm:$0xff]
        %v551 = vld [vmem:[#allocation6 + $0x248] sm:$0xff]
        %v552 = vld [vmem:[#allocation6 + $0x250] sm:$0xff]
        %v553 = vld [vmem:[#allocation6 + $0x258] sm:$0xff]
        %v554 = vld [vmem:[#allocation6 + $0x260] sm:$0xff]
        %v555 = vld [vmem:[#allocation6 + $0x268] sm:$0xff]
        %v556 = vld [vmem:[#allocation6 + $0x270] sm:$0xff]
        %v557 = vld [vmem:[#allocation6 + $0x278] sm:$0xff]
        %v558 = vld [vmem:[#allocation6 + $0x280] sm:$0xff]
        %v559 = vld [vmem:[#allocation6 + $0x288] sm:$0xff]
        %v560 = vld [vmem:[#allocation6 + $0x290] sm:$0xff]
        %v561 = vld [vmem:[#allocation6 + $0x298] sm:$0xff]
        %v562 = vld [vmem:[#allocation6 + $0x2a0] sm:$0xff]
        %v563 = vld [vmem:[#allocation6 + $0x2a8] sm:$0xff]
        %v564 = vld [vmem:[#allocation6 + $0x2b0] sm:$0xff]
        %v565 = vld [vmem:[#allocation6 + $0x2b8] sm:$0xff]
        %v566 = vld [vmem:[#allocation6 + $0x2c0] sm:$0xff]
        %v567 = vld [vmem:[#allocation6 + $0x2c8] sm:$0xff]
        %v568 = vld [vmem:[#allocation6 + $0x2d0] sm:$0xff]
        %v569 = vld [vmem:[#allocation6 + $0x2d8] sm:$0xff]
        %v570 = vld [vmem:[#allocation6 + $0x2e0] sm:$0xff]
        %v571 = vld [vmem:[#allocation6 + $0x2e8] sm:$0xff]
        %v572 = vld [vmem:[#allocation6 + $0x2f0] sm:$0xff]
        %v573 = vld [vmem:[#allocation6 + $0x2f8] sm:$0xff]
        %v574 = vld [vmem:[#allocation6 + $0x300] sm:$0xff]
        %v575 = vld [vmem:[#allocation6 + $0x308] sm:$0xff]
        %v576 = vld [vmem:[#allocation6 + $0x310] sm:$0xff]
        %v577 = vld [vmem:[#allocation6 + $0x318] sm:$0xff]
        %v578 = vld [vmem:[#allocation6 + $0x320] sm:$0xff]
        %v579 = vld [vmem:[#allocation6 + $0x328] sm:$0xff]
        %v580 = vld [vmem:[#allocation6 + $0x330] sm:$0xff]
        %v581 = vld [vmem:[#allocation6 + $0x338] sm:$0xff]
        %v582 = vld [vmem:[#allocation6 + $0x340] sm:$0xff]
        %v583 = vld [vmem:[#allocation6 + $0x348] sm:$0xff]
        %v584 = vld [vmem:[#allocation6 + $0x350] sm:$0xff]
        %v585 = vld [vmem:[#allocation6 + $0x358] sm:$0xff]
        %v586 = vld [vmem:[#allocation6 + $0x360] sm:$0xff]
        %v587 = vld [vmem:[#allocation6 + $0x368] sm:$0xff]
        %v588 = vld [vmem:[#allocation6 + $0x370] sm:$0xff]
        %v589 = vld [vmem:[#allocation6 + $0x378] sm:$0xff]
        %v590 = vld [vmem:[#allocation6 + $0x380] sm:$0xff]
        %v591 = vld [vmem:[#allocation6 + $0x388] sm:$0xff]
        %v592 = vld [vmem:[#allocation6 + $0x390] sm:$0xff]
        %v593 = vld [vmem:[#allocation6 + $0x398] sm:$0xff]
        %v594 = vld [vmem:[#allocation6 + $0x3a0] sm:$0xff]
        %v595 = vld [vmem:[#allocation6 + $0x3a8] sm:$0xff]
        %v596 = vld [vmem:[#allocation6 + $0x3b0] sm:$0xff]
        %v597 = vld [vmem:[#allocation6 + $0x3b8] sm:$0xff]
        %v598 = vld [vmem:[#allocation6 + $0x3c0] sm:$0xff]
        %v599 = vld [vmem:[#allocation6 + $0x3c8] sm:$0xff]
        %v600 = vld [vmem:[#allocation6 + $0x3d0] sm:$0xff]
        %v601 = vld [vmem:[#allocation6 + $0x3d8] sm:$0xff]
        %v602 = vld [vmem:[#allocation6 + $0x3e0] sm:$0xff]
        %v603 = vld [vmem:[#allocation6 + $0x3e8] sm:$0xff]
        %v604 = vld [vmem:[#allocation6 + $0x3f0] sm:$0xff]
        %v605 = vld [vmem:[#allocation6 + $0x3f8] sm:$0xff]
        %s606 = scalar_lea.vmem [#allocation6], 1024
        %v607 = vld [vmem:[%s606] sm:$0xff]
        %v608 = vld [vmem:[%s606 + $0x8] sm:$0xff]
        %v609 = vld [vmem:[%s606 + $0x10] sm:$0xff]
        %v610 = vld [vmem:[%s606 + $0x18] sm:$0xff]
        %v611 = vld [vmem:[%s606 + $0x20] sm:$0xff]
        %v612 = vld [vmem:[%s606 + $0x28] sm:$0xff]
        %v613 = vld [vmem:[%s606 + $0x30] sm:$0xff]
        %v614 = vld [vmem:[%s606 + $0x38] sm:$0xff]
        %v615 = vld [vmem:[%s606 + $0x40] sm:$0xff]
        %v616 = vld [vmem:[%s606 + $0x48] sm:$0xff]
        %v617 = vld [vmem:[%s606 + $0x50] sm:$0xff]
        %v618 = vld [vmem:[%s606 + $0x58] sm:$0xff]
        %v619 = vld [vmem:[%s606 + $0x60] sm:$0xff]
        %v620 = vld [vmem:[%s606 + $0x68] sm:$0xff]
        %v621 = vld [vmem:[%s606 + $0x70] sm:$0xff]
        %v622 = vld [vmem:[%s606 + $0x78] sm:$0xff]
        %v623 = vld [vmem:[%s606 + $0x80] sm:$0xff]
        %v624 = vld [vmem:[%s606 + $0x88] sm:$0xff]
        %v625 = vld [vmem:[%s606 + $0x90] sm:$0xff]
        %v626 = vld [vmem:[%s606 + $0x98] sm:$0xff]
        %v627 = vld [vmem:[%s606 + $0xa0] sm:$0xff]
        %v628 = vld [vmem:[%s606 + $0xa8] sm:$0xff]
        %v629 = vld [vmem:[%s606 + $0xb0] sm:$0xff]
        %v630 = vld [vmem:[%s606 + $0xb8] sm:$0xff]
        %v631 = vld [vmem:[%s606 + $0xc0] sm:$0xff]
        %v632 = vld [vmem:[%s606 + $0xc8] sm:$0xff]
        %v633 = vld [vmem:[%s606 + $0xd0] sm:$0xff]
        %v634 = vld [vmem:[%s606 + $0xd8] sm:$0xff]
        %v635 = vld [vmem:[%s606 + $0xe0] sm:$0xff]
        %v636 = vld [vmem:[%s606 + $0xe8] sm:$0xff]
        %v637 = vld [vmem:[%s606 + $0xf0] sm:$0xff]
        %v638 = vld [vmem:[%s606 + $0xf8] sm:$0xff]
        %v639 = vld [vmem:[%s606 + $0x100] sm:$0xff]
        %v640 = vld [vmem:[%s606 + $0x108] sm:$0xff]
        %v641 = vld [vmem:[%s606 + $0x110] sm:$0xff]
        %v642 = vld [vmem:[%s606 + $0x118] sm:$0xff]
        %v643 = vld [vmem:[%s606 + $0x120] sm:$0xff]
        %v644 = vld [vmem:[%s606 + $0x128] sm:$0xff]
        %v645 = vld [vmem:[%s606 + $0x130] sm:$0xff]
        %v646 = vld [vmem:[%s606 + $0x138] sm:$0xff]
        %v647 = vld [vmem:[%s606 + $0x140] sm:$0xff]
        %v648 = vld [vmem:[%s606 + $0x148] sm:$0xff]
        %v649 = vld [vmem:[%s606 + $0x150] sm:$0xff]
        %v650 = vld [vmem:[%s606 + $0x158] sm:$0xff]
        %v651 = vld [vmem:[%s606 + $0x160] sm:$0xff]
        %v652 = vld [vmem:[%s606 + $0x168] sm:$0xff]
        %v653 = vld [vmem:[%s606 + $0x170] sm:$0xff]
        %v654 = vld [vmem:[%s606 + $0x178] sm:$0xff]
        %v655 = vld [vmem:[%s606 + $0x180] sm:$0xff]
        %v656 = vld [vmem:[%s606 + $0x188] sm:$0xff]
        %v657 = vld [vmem:[%s606 + $0x190] sm:$0xff]
        %v658 = vld [vmem:[%s606 + $0x198] sm:$0xff]
        %v659 = vld [vmem:[%s606 + $0x1a0] sm:$0xff]
        %v660 = vld [vmem:[%s606 + $0x1a8] sm:$0xff]
        %v661 = vld [vmem:[%s606 + $0x1b0] sm:$0xff]
        %v662 = vld [vmem:[%s606 + $0x1b8] sm:$0xff]
        %v663 = vld [vmem:[%s606 + $0x1c0] sm:$0xff]
        %v664 = vld [vmem:[%s606 + $0x1c8] sm:$0xff]
        %v665 = vld [vmem:[%s606 + $0x1d0] sm:$0xff]
        %v666 = vld [vmem:[%s606 + $0x1d8] sm:$0xff]
        %v667 = vld [vmem:[%s606 + $0x1e0] sm:$0xff]
        %v668 = vld [vmem:[%s606 + $0x1e8] sm:$0xff]
        %v669 = vld [vmem:[%s606 + $0x1f0] sm:$0xff]
        %v670 = vld [vmem:[%s606 + $0x1f8] sm:$0xff]
        %v671 = vld [vmem:[%s606 + $0x200] sm:$0xff]
        %v672 = vld [vmem:[%s606 + $0x208] sm:$0xff]
        %v673 = vld [vmem:[%s606 + $0x210] sm:$0xff]
        %v674 = vld [vmem:[%s606 + $0x218] sm:$0xff]
        %v675 = vld [vmem:[%s606 + $0x220] sm:$0xff]
        %v676 = vld [vmem:[%s606 + $0x228] sm:$0xff]
        %v677 = vld [vmem:[%s606 + $0x230] sm:$0xff]
        %v678 = vld [vmem:[%s606 + $0x238] sm:$0xff]
        %v679 = vld [vmem:[%s606 + $0x240] sm:$0xff]
        %v680 = vld [vmem:[%s606 + $0x248] sm:$0xff]
        %v681 = vld [vmem:[%s606 + $0x250] sm:$0xff]
        %v682 = vld [vmem:[%s606 + $0x258] sm:$0xff]
        %v683 = vld [vmem:[%s606 + $0x260] sm:$0xff]
        %v684 = vld [vmem:[%s606 + $0x268] sm:$0xff]
        %v685 = vld [vmem:[%s606 + $0x270] sm:$0xff]
        %v686 = vld [vmem:[%s606 + $0x278] sm:$0xff]
        %v687 = vld [vmem:[%s606 + $0x280] sm:$0xff]
        %v688 = vld [vmem:[%s606 + $0x288] sm:$0xff]
        %v689 = vld [vmem:[%s606 + $0x290] sm:$0xff]
        %v690 = vld [vmem:[%s606 + $0x298] sm:$0xff]
        %v691 = vld [vmem:[%s606 + $0x2a0] sm:$0xff]
        %v692 = vld [vmem:[%s606 + $0x2a8] sm:$0xff]
        %v693 = vld [vmem:[%s606 + $0x2b0] sm:$0xff]
        %v694 = vld [vmem:[%s606 + $0x2b8] sm:$0xff]
        %v695 = vld [vmem:[%s606 + $0x2c0] sm:$0xff]
        %v696 = vld [vmem:[%s606 + $0x2c8] sm:$0xff]
        %v697 = vld [vmem:[%s606 + $0x2d0] sm:$0xff]
        %v698 = vld [vmem:[%s606 + $0x2d8] sm:$0xff]
        %v699 = vld [vmem:[%s606 + $0x2e0] sm:$0xff]
        %v700 = vld [vmem:[%s606 + $0x2e8] sm:$0xff]
        %v701 = vld [vmem:[%s606 + $0x2f0] sm:$0xff]
        %v702 = vld [vmem:[%s606 + $0x2f8] sm:$0xff]
        %v703 = vld [vmem:[%s606 + $0x300] sm:$0xff]
        %v704 = vld [vmem:[%s606 + $0x308] sm:$0xff]
        %v705 = vld [vmem:[%s606 + $0x310] sm:$0xff]
        %v706 = vld [vmem:[%s606 + $0x318] sm:$0xff]
        %v707 = vld [vmem:[%s606 + $0x320] sm:$0xff]
        %v708 = vld [vmem:[%s606 + $0x328] sm:$0xff]
        %v709 = vld [vmem:[%s606 + $0x330] sm:$0xff]
        %v710 = vld [vmem:[%s606 + $0x338] sm:$0xff]
        %v711 = vld [vmem:[%s606 + $0x340] sm:$0xff]
        %v712 = vld [vmem:[%s606 + $0x348] sm:$0xff]
        %v713 = vld [vmem:[%s606 + $0x350] sm:$0xff]
        %v714 = vld [vmem:[%s606 + $0x358] sm:$0xff]
        %v715 = vld [vmem:[%s606 + $0x360] sm:$0xff]
        %v716 = vld [vmem:[%s606 + $0x368] sm:$0xff]
        %v717 = vld [vmem:[%s606 + $0x370] sm:$0xff]
        %v718 = vld [vmem:[%s606 + $0x378] sm:$0xff]
        %v719 = vld [vmem:[%s606 + $0x380] sm:$0xff]
        %v720 = vld [vmem:[%s606 + $0x388] sm:$0xff]
        %v721 = vld [vmem:[%s606 + $0x390] sm:$0xff]
        %v722 = vld [vmem:[%s606 + $0x398] sm:$0xff]
        %v723 = vld [vmem:[%s606 + $0x3a0] sm:$0xff]
        %v724 = vld [vmem:[%s606 + $0x3a8] sm:$0xff]
        %v725 = vld [vmem:[%s606 + $0x3b0] sm:$0xff]
        %v726 = vld [vmem:[%s606 + $0x3b8] sm:$0xff]
        %v727 = vld [vmem:[%s606 + $0x3c0] sm:$0xff]
        %v728 = vld [vmem:[%s606 + $0x3c8] sm:$0xff]
        %v729 = vld [vmem:[%s606 + $0x3d0] sm:$0xff]
        %v730 = vld [vmem:[%s606 + $0x3d8] sm:$0xff]
        %v731 = vld [vmem:[%s606 + $0x3e0] sm:$0xff]
        %v732 = vld [vmem:[%s606 + $0x3e8] sm:$0xff]
        %v733 = vld [vmem:[%s606 + $0x3f0] sm:$0xff]
        %v734 = vld [vmem:[%s606 + $0x3f8] sm:$0xff]
        %735 = vmatprep.subr.mxu0 %v668
        %736 = vmatpush1.msra.mxu0 %v667
        %737 = vmatprep.subr.mxu0 %v664
        %738 = vmatpush1.msra.mxu0 %v663
        %739 = vmatprep.subr.mxu0 %v660
        %740 = vmatpush1.msra.mxu0 %v659
        %741 = vmatprep.subr.mxu0 %v656
        %742 = vmatpush1.msra.mxu0 %v655
        %743 = vmatprep.subr.mxu0 %v652
        %744 = vmatpush1.msra.mxu0 %v651
        %745 = vmatprep.subr.mxu0 %v648
        %746 = vmatpush1.msra.mxu0 %v647
        %747 = vmatprep.subr.mxu0 %v644
        %748 = vmatpush1.msra.mxu0 %v643
        %749 = vmatprep.subr.mxu0 %v640
        %750 = vmatpush1.msra.mxu0 %v639
        %751 = vmatprep.subr.mxu0 %v636
        %752 = vmatpush1.msra.mxu0 %v635
        %753 = vmatprep.subr.mxu0 %v632
        %754 = vmatpush1.msra.mxu0 %v631
        %755 = vmatprep.subr.mxu0 %v628
        %756 = vmatpush1.msra.mxu0 %v627
        %757 = vmatprep.subr.mxu0 %v624
        %758 = vmatpush1.msra.mxu0 %v623
        %759 = vmatprep.subr.mxu0 %v620
        %760 = vmatpush1.msra.mxu0 %v619
        %761 = vmatprep.subr.mxu0 %v616
        %762 = vmatpush1.msra.mxu0 %v615
        %763 = vmatprep.subr.mxu0 %v612
        %764 = vmatpush1.msra.mxu0 %v611
        %765 = vmatprep.subr.mxu0 %v608
        %766 = vmatpush1.msra.mxu0 %v607
        %767 = vmatprep.subr.mxu0 %v732
        %768 = vmatpush2.msra.mxu0 %v731
        %769 = vmatprep.subr.mxu0 %v728
        %770 = vmatpush2.msra.mxu0 %v727
        %771 = vmatprep.subr.mxu0 %v724
        %772 = vmatpush2.msra.mxu0 %v723
        %773 = vmatprep.subr.mxu0 %v720
        %774 = vmatpush2.msra.mxu0 %v719
        %775 = vmatprep.subr.mxu0 %v716
        %776 = vmatpush2.msra.mxu0 %v715
        %777 = vmatprep.subr.mxu0 %v712
        %778 = vmatpush2.msra.mxu0 %v711
        %779 = vmatprep.subr.mxu0 %v708
        %780 = vmatpush2.msra.mxu0 %v707
        %781 = vmatprep.subr.mxu0 %v704
        %782 = vmatpush2.msra.mxu0 %v703
        %783 = vmatprep.subr.mxu0 %v700
        %784 = vmatpush2.msra.mxu0 %v699
        %785 = vmatprep.subr.mxu0 %v696
        %786 = vmatpush2.msra.mxu0 %v695
        %787 = vmatprep.subr.mxu0 %v692
        %788 = vmatpush2.msra.mxu0 %v691
        %789 = vmatprep.subr.mxu0 %v688
        %790 = vmatpush2.msra.mxu0 %v687
        %791 = vmatprep.subr.mxu0 %v684
        %792 = vmatpush2.msra.mxu0 %v683
        %793 = vmatprep.subr.mxu0 %v680
        %794 = vmatpush2.msra.mxu0 %v679
        %795 = vmatprep.subr.mxu0 %v676
        %796 = vmatpush2.msra.mxu0 %v675
        %797 = vmatprep.subr.mxu0 %v672
        %798 = vmatpush2.msra.mxu0 %v671
        %799 = vmatprep.mubr.f32.mxu0 %v404
        %800 = vmatmul.mubr.f32.gmra.mxu0 %v403
        %v801 = vpop.f32.mrf.mxu0
        %v802 = vadd.f32 0.0, %v801
        %v803 = vpop.f32.mrf.mxu0
        %v804 = vadd.f32 0.0, %v803
        %805 = vmatprep.mubr.f32.mxu0 %v406
        %806 = vmatmul.mubr.f32.gmra.mxu0 %v405
        %v807 = vpop.f32.mrf.mxu0
        %v808 = vadd.f32 0.0, %v807
        %v809 = vpop.f32.mrf.mxu0
        %v810 = vadd.f32 0.0, %v809
        %811 = vmatprep.mubr.f32.mxu0 %v408
        %812 = vmatmul.mubr.f32.gmra.mxu0 %v407
        %v813 = vpop.f32.mrf.mxu0
        %v814 = vadd.f32 0.0, %v813
        %v815 = vpop.f32.mrf.mxu0
        %v816 = vadd.f32 0.0, %v815
        %817 = vmatprep.mubr.f32.mxu0 %v410
        %818 = vmatmul.mubr.f32.gmra.mxu0 %v409
        %v819 = vpop.f32.mrf.mxu0
        %v820 = vadd.f32 0.0, %v819
        %v821 = vpop.f32.mrf.mxu0
        %v822 = vadd.f32 0.0, %v821
        %823 = vdwg.mxu0
        %824 = vmatprep.subr.mxu0 %v670
        %825 = vmatpush1.msra.mxu0 %v669
        %826 = vmatprep.subr.mxu0 %v666
        %827 = vmatpush1.msra.mxu0 %v665
        %828 = vmatprep.subr.mxu0 %v662
        %829 = vmatpush1.msra.mxu0 %v661
        %830 = vmatprep.subr.mxu0 %v658
        %831 = vmatpush1.msra.mxu0 %v657
        %832 = vmatprep.subr.mxu0 %v654
        %833 = vmatpush1.msra.mxu0 %v653
        %834 = vmatprep.subr.mxu0 %v650
        %835 = vmatpush1.msra.mxu0 %v649
        %836 = vmatprep.subr.mxu0 %v646
        %837 = vmatpush1.msra.mxu0 %v645
        %838 = vmatprep.subr.mxu0 %v642
        %839 = vmatpush1.msra.mxu0 %v641
        %840 = vmatprep.subr.mxu0 %v638
        %841 = vmatpush1.msra.mxu0 %v637
        %842 = vmatprep.subr.mxu0 %v634
        %843 = vmatpush1.msra.mxu0 %v633
        %844 = vmatprep.subr.mxu0 %v630
        %845 = vmatpush1.msra.mxu0 %v629
        %846 = vmatprep.subr.mxu0 %v626
        %847 = vmatpush1.msra.mxu0 %v625
        %848 = vmatprep.subr.mxu0 %v622
        %849 = vmatpush1.msra.mxu0 %v621
        %850 = vmatprep.subr.mxu0 %v618
        %851 = vmatpush1.msra.mxu0 %v617
        %852 = vmatprep.subr.mxu0 %v614
        %853 = vmatpush1.msra.mxu0 %v613
        %854 = vmatprep.subr.mxu0 %v610
        %855 = vmatpush1.msra.mxu0 %v609
        %856 = vmatprep.subr.mxu0 %v734
        %857 = vmatpush2.msra.mxu0 %v733
        %858 = vmatprep.subr.mxu0 %v730
        %859 = vmatpush2.msra.mxu0 %v729
        %860 = vmatprep.subr.mxu0 %v726
        %861 = vmatpush2.msra.mxu0 %v725
        %862 = vmatprep.subr.mxu0 %v722
        %863 = vmatpush2.msra.mxu0 %v721
        %864 = vmatprep.subr.mxu0 %v718
        %865 = vmatpush2.msra.mxu0 %v717
        %866 = vmatprep.subr.mxu0 %v714
        %867 = vmatpush2.msra.mxu0 %v713
        %868 = vmatprep.subr.mxu0 %v710
        %869 = vmatpush2.msra.mxu0 %v709
        %870 = vmatprep.subr.mxu0 %v706
        %871 = vmatpush2.msra.mxu0 %v705
        %872 = vmatprep.subr.mxu0 %v702
        %873 = vmatpush2.msra.mxu0 %v701
        %874 = vmatprep.subr.mxu0 %v698
        %875 = vmatpush2.msra.mxu0 %v697
        %876 = vmatprep.subr.mxu0 %v694
        %877 = vmatpush2.msra.mxu0 %v693
        %878 = vmatprep.subr.mxu0 %v690
        %879 = vmatpush2.msra.mxu0 %v689
        %880 = vmatprep.subr.mxu0 %v686
        %881 = vmatpush2.msra.mxu0 %v685
        %882 = vmatprep.subr.mxu0 %v682
        %883 = vmatpush2.msra.mxu0 %v681
        %884 = vmatprep.subr.mxu0 %v678
        %885 = vmatpush2.msra.mxu0 %v677
        %886 = vmatprep.subr.mxu0 %v674
        %887 = vmatpush2.msra.mxu0 %v673
        %888 = vmatprep.mubr.f32.mxu0 %v404
        %889 = vmatmul.mubr.f32.gmra.mxu0 %v403
        %v890 = vpop.f32.mrf.mxu0
        %v891 = vadd.f32 0.0, %v890
        %v892 = vpop.f32.mrf.mxu0
        %v893 = vadd.f32 0.0, %v892
        %894 = vmatprep.mubr.f32.mxu0 %v406
        %895 = vmatmul.mubr.f32.gmra.mxu0 %v405
        %v896 = vpop.f32.mrf.mxu0
        %v897 = vadd.f32 0.0, %v896
        %v898 = vpop.f32.mrf.mxu0
        %v899 = vadd.f32 0.0, %v898
        %900 = vmatprep.mubr.f32.mxu0 %v408
        %901 = vmatmul.mubr.f32.gmra.mxu0 %v407
        %v902 = vpop.f32.mrf.mxu0
        %v903 = vadd.f32 0.0, %v902
        %v904 = vpop.f32.mrf.mxu0
        %v905 = vadd.f32 0.0, %v904
        %906 = vmatprep.mubr.f32.mxu0 %v410
        %907 = vmatmul.mubr.f32.gmra.mxu0 %v409
        %v908 = vpop.f32.mrf.mxu0
        %v909 = vadd.f32 0.0, %v908
        %v910 = vpop.f32.mrf.mxu0
        %v911 = vadd.f32 0.0, %v910
        %912 = vdwg.mxu0
        %913 = vmatprep.subr.mxu0 %v539
        %914 = vmatpush1.msra.mxu0 %v538
        %915 = vmatprep.subr.mxu0 %v535
        %916 = vmatpush1.msra.mxu0 %v534
        %917 = vmatprep.subr.mxu0 %v531
        %918 = vmatpush1.msra.mxu0 %v530
        %919 = vmatprep.subr.mxu0 %v527
        %920 = vmatpush1.msra.mxu0 %v526
        %921 = vmatprep.subr.mxu0 %v523
        %922 = vmatpush1.msra.mxu0 %v522
        %923 = vmatprep.subr.mxu0 %v519
        %924 = vmatpush1.msra.mxu0 %v518
        %925 = vmatprep.subr.mxu0 %v515
        %926 = vmatpush1.msra.mxu0 %v514
        %927 = vmatprep.subr.mxu0 %v511
        %928 = vmatpush1.msra.mxu0 %v510
        %929 = vmatprep.subr.mxu0 %v507
        %930 = vmatpush1.msra.mxu0 %v506
        %931 = vmatprep.subr.mxu0 %v503
        %932 = vmatpush1.msra.mxu0 %v502
        %933 = vmatprep.subr.mxu0 %v499
        %934 = vmatpush1.msra.mxu0 %v498
        %935 = vmatprep.subr.mxu0 %v495
        %936 = vmatpush1.msra.mxu0 %v494
        %937 = vmatprep.subr.mxu0 %v491
        %938 = vmatpush1.msra.mxu0 %v490
        %939 = vmatprep.subr.mxu0 %v487
        %940 = vmatpush1.msra.mxu0 %v486
        %941 = vmatprep.subr.mxu0 %v483
        %942 = vmatpush1.msra.mxu0 %v482
        %943 = vmatprep.subr.mxu0 %v479
        %944 = vmatpush1.msra.mxu0 %v478
        %945 = vmatprep.subr.mxu0 %v603
        %946 = vmatpush2.msra.mxu0 %v602
        %947 = vmatprep.subr.mxu0 %v599
        %948 = vmatpush2.msra.mxu0 %v598
        %949 = vmatprep.subr.mxu0 %v595
        %950 = vmatpush2.msra.mxu0 %v594
        %951 = vmatprep.subr.mxu0 %v591
        %952 = vmatpush2.msra.mxu0 %v590
        %953 = vmatprep.subr.mxu0 %v587
        %954 = vmatpush2.msra.mxu0 %v586
        %955 = vmatprep.subr.mxu0 %v583
        %956 = vmatpush2.msra.mxu0 %v582
        %957 = vmatprep.subr.mxu0 %v579
        %958 = vmatpush2.msra.mxu0 %v578
        %959 = vmatprep.subr.mxu0 %v575
        %960 = vmatpush2.msra.mxu0 %v574
        %961 = vmatprep.subr.mxu0 %v571
        %962 = vmatpush2.msra.mxu0 %v570
        %963 = vmatprep.subr.mxu0 %v567
        %964 = vmatpush2.msra.mxu0 %v566
        %965 = vmatprep.subr.mxu0 %v563
        %966 = vmatpush2.msra.mxu0 %v562
        %967 = vmatprep.subr.mxu0 %v559
        %968 = vmatpush2.msra.mxu0 %v558
        %969 = vmatprep.subr.mxu0 %v555
        %970 = vmatpush2.msra.mxu0 %v554
        %971 = vmatprep.subr.mxu0 %v551
        %972 = vmatpush2.msra.mxu0 %v550
        %973 = vmatprep.subr.mxu0 %v547
        %974 = vmatpush2.msra.mxu0 %v546
        %975 = vmatprep.subr.mxu0 %v543
        %976 = vmatpush2.msra.mxu0 %v542
        %977 = vmatprep.mubr.f32.mxu0 %v438
        %978 = vmatmul.mubr.f32.gmra.mxu0 %v437
        %v979 = vpop.f32.mrf.mxu0
        %v980 = vadd.f32 %v802, %v979
        %v981 = vpop.f32.mrf.mxu0
        %v982 = vadd.f32 %v804, %v981
        %983 = vmatprep.mubr.f32.mxu0 %v440
        %984 = vmatmul.mubr.f32.gmra.mxu0 %v439
        %v985 = vpop.f32.mrf.mxu0
        %v986 = vadd.f32 %v808, %v985
        %v987 = vpop.f32.mrf.mxu0
        %v988 = vadd.f32 %v810, %v987
        %989 = vmatprep.mubr.f32.mxu0 %v442
        %990 = vmatmul.mubr.f32.gmra.mxu0 %v441
        %v991 = vpop.f32.mrf.mxu0
        %v992 = vadd.f32 %v814, %v991
        %v993 = vpop.f32.mrf.mxu0
        %v994 = vadd.f32 %v816, %v993
        %995 = vmatprep.mubr.f32.mxu0 %v444
        %996 = vmatmul.mubr.f32.gmra.mxu0 %v443
        %v997 = vpop.f32.mrf.mxu0
        %v998 = vadd.f32 %v820, %v997
        %v999 = vpop.f32.mrf.mxu0
        %v1000 = vadd.f32 %v822, %v999
        %1001 = vdwg.mxu0
        %1002 = vmatprep.subr.mxu0 %v541
        %1003 = vmatpush1.msra.mxu0 %v540
        %1004 = vmatprep.subr.mxu0 %v537
        %1005 = vmatpush1.msra.mxu0 %v536
        %1006 = vmatprep.subr.mxu0 %v533
        %1007 = vmatpush1.msra.mxu0 %v532
        %1008 = vmatprep.subr.mxu0 %v529
        %1009 = vmatpush1.msra.mxu0 %v528
        %1010 = vmatprep.subr.mxu0 %v525
        %1011 = vmatpush1.msra.mxu0 %v524
        %1012 = vmatprep.subr.mxu0 %v521
        %1013 = vmatpush1.msra.mxu0 %v520
        %1014 = vmatprep.subr.mxu0 %v517
        %1015 = vmatpush1.msra.mxu0 %v516
        %1016 = vmatprep.subr.mxu0 %v513
        %1017 = vmatpush1.msra.mxu0 %v512
        %1018 = vmatprep.subr.mxu0 %v509
        %1019 = vmatpush1.msra.mxu0 %v508
        %1020 = vmatprep.subr.mxu0 %v505
        %1021 = vmatpush1.msra.mxu0 %v504
        %1022 = vmatprep.subr.mxu0 %v501
        %1023 = vmatpush1.msra.mxu0 %v500
        %1024 = vmatprep.subr.mxu0 %v497
        %1025 = vmatpush1.msra.mxu0 %v496
        %1026 = vmatprep.subr.mxu0 %v493
        %1027 = vmatpush1.msra.mxu0 %v492
        %1028 = vmatprep.subr.mxu0 %v489
        %1029 = vmatpush1.msra.mxu0 %v488
        %1030 = vmatprep.subr.mxu0 %v485
        %1031 = vmatpush1.msra.mxu0 %v484
        %1032 = vmatprep.subr.mxu0 %v481
        %1033 = vmatpush1.msra.mxu0 %v480
        %1034 = vmatprep.subr.mxu0 %v605
        %1035 = vmatpush2.msra.mxu0 %v604
        %1036 = vmatprep.subr.mxu0 %v601
        %1037 = vmatpush2.msra.mxu0 %v600
        %1038 = vmatprep.subr.mxu0 %v597
        %1039 = vmatpush2.msra.mxu0 %v596
        %1040 = vmatprep.subr.mxu0 %v593
        %1041 = vmatpush2.msra.mxu0 %v592
        %1042 = vmatprep.subr.mxu0 %v589
        %1043 = vmatpush2.msra.mxu0 %v588
        %1044 = vmatprep.subr.mxu0 %v585
        %1045 = vmatpush2.msra.mxu0 %v584
        %1046 = vmatprep.subr.mxu0 %v581
        %1047 = vmatpush2.msra.mxu0 %v580
        %1048 = vmatprep.subr.mxu0 %v577
        %1049 = vmatpush2.msra.mxu0 %v576
        %1050 = vmatprep.subr.mxu0 %v573
        %1051 = vmatpush2.msra.mxu0 %v572
        %1052 = vmatprep.subr.mxu0 %v569
        %1053 = vmatpush2.msra.mxu0 %v568
        %1054 = vmatprep.subr.mxu0 %v565
        %1055 = vmatpush2.msra.mxu0 %v564
        %1056 = vmatprep.subr.mxu0 %v561
        %1057 = vmatpush2.msra.mxu0 %v560
        %1058 = vmatprep.subr.mxu0 %v557
        %1059 = vmatpush2.msra.mxu0 %v556
        %1060 = vmatprep.subr.mxu0 %v553
        %1061 = vmatpush2.msra.mxu0 %v552
        %1062 = vmatprep.subr.mxu0 %v549
        %1063 = vmatpush2.msra.mxu0 %v548
        %1064 = vmatprep.subr.mxu0 %v545
        %1065 = vmatpush2.msra.mxu0 %v544
        %1066 = vmatprep.mubr.f32.mxu0 %v438
        %1067 = vmatmul.mubr.f32.gmra.mxu0 %v437
        %v1068 = vpop.f32.mrf.mxu0
        %v1069 = vadd.f32 %v891, %v1068
        %v1070 = vpop.f32.mrf.mxu0
        %v1071 = vadd.f32 %v893, %v1070
        %1072 = vmatprep.mubr.f32.mxu0 %v440
        %1073 = vmatmul.mubr.f32.gmra.mxu0 %v439
        %v1074 = vpop.f32.mrf.mxu0
        %v1075 = vadd.f32 %v897, %v1074
        %v1076 = vpop.f32.mrf.mxu0
        %v1077 = vadd.f32 %v899, %v1076
        %1078 = vmatprep.mubr.f32.mxu0 %v442
        %1079 = vmatmul.mubr.f32.gmra.mxu0 %v441
        %v1080 = vpop.f32.mrf.mxu0
        %v1081 = vadd.f32 %v903, %v1080
        %v1082 = vpop.f32.mrf.mxu0
        %v1083 = vadd.f32 %v905, %v1082
        %1084 = vmatprep.mubr.f32.mxu0 %v444
        %1085 = vmatmul.mubr.f32.gmra.mxu0 %v443
        %v1086 = vpop.f32.mrf.mxu0
        %v1087 = vadd.f32 %v909, %v1086
        %v1088 = vpop.f32.mrf.mxu0
        %v1089 = vadd.f32 %v911, %v1088
        %1090 = vdwg.mxu0
        %s1091 = scalar_lea.vmem [#allocation6], 2048
        %v1092 = vld [vmem:[%s1091] sm:$0xff]
        %v1093 = vld [vmem:[%s1091 + $0x8] sm:$0xff]
        %v1094 = vld [vmem:[%s1091 + $0x10] sm:$0xff]
        %v1095 = vld [vmem:[%s1091 + $0x18] sm:$0xff]
        %v1096 = vld [vmem:[%s1091 + $0x20] sm:$0xff]
        %v1097 = vld [vmem:[%s1091 + $0x28] sm:$0xff]
        %v1098 = vld [vmem:[%s1091 + $0x30] sm:$0xff]
        %v1099 = vld [vmem:[%s1091 + $0x38] sm:$0xff]
        %v1100 = vld [vmem:[%s1091 + $0x40] sm:$0xff]
        %v1101 = vld [vmem:[%s1091 + $0x48] sm:$0xff]
        %v1102 = vld [vmem:[%s1091 + $0x50] sm:$0xff]
        %v1103 = vld [vmem:[%s1091 + $0x58] sm:$0xff]
        %v1104 = vld [vmem:[%s1091 + $0x60] sm:$0xff]
        %v1105 = vld [vmem:[%s1091 + $0x68] sm:$0xff]
        %v1106 = vld [vmem:[%s1091 + $0x70] sm:$0xff]
        %v1107 = vld [vmem:[%s1091 + $0x78] sm:$0xff]
        %v1108 = vld [vmem:[%s1091 + $0x80] sm:$0xff]
        %v1109 = vld [vmem:[%s1091 + $0x88] sm:$0xff]
        %v1110 = vld [vmem:[%s1091 + $0x90] sm:$0xff]
        %v1111 = vld [vmem:[%s1091 + $0x98] sm:$0xff]
        %v1112 = vld [vmem:[%s1091 + $0xa0] sm:$0xff]
        %v1113 = vld [vmem:[%s1091 + $0xa8] sm:$0xff]
        %v1114 = vld [vmem:[%s1091 + $0xb0] sm:$0xff]
        %v1115 = vld [vmem:[%s1091 + $0xb8] sm:$0xff]
        %v1116 = vld [vmem:[%s1091 + $0xc0] sm:$0xff]
        %v1117 = vld [vmem:[%s1091 + $0xc8] sm:$0xff]
        %v1118 = vld [vmem:[%s1091 + $0xd0] sm:$0xff]
        %v1119 = vld [vmem:[%s1091 + $0xd8] sm:$0xff]
        %v1120 = vld [vmem:[%s1091 + $0xe0] sm:$0xff]
        %v1121 = vld [vmem:[%s1091 + $0xe8] sm:$0xff]
        %v1122 = vld [vmem:[%s1091 + $0xf0] sm:$0xff]
        %v1123 = vld [vmem:[%s1091 + $0xf8] sm:$0xff]
        %v1124 = vld [vmem:[%s1091 + $0x100] sm:$0xff]
        %v1125 = vld [vmem:[%s1091 + $0x108] sm:$0xff]
        %v1126 = vld [vmem:[%s1091 + $0x110] sm:$0xff]
        %v1127 = vld [vmem:[%s1091 + $0x118] sm:$0xff]
        %v1128 = vld [vmem:[%s1091 + $0x120] sm:$0xff]
        %v1129 = vld [vmem:[%s1091 + $0x128] sm:$0xff]
        %v1130 = vld [vmem:[%s1091 + $0x130] sm:$0xff]
        %v1131 = vld [vmem:[%s1091 + $0x138] sm:$0xff]
        %v1132 = vld [vmem:[%s1091 + $0x140] sm:$0xff]
        %v1133 = vld [vmem:[%s1091 + $0x148] sm:$0xff]
        %v1134 = vld [vmem:[%s1091 + $0x150] sm:$0xff]
        %v1135 = vld [vmem:[%s1091 + $0x158] sm:$0xff]
        %v1136 = vld [vmem:[%s1091 + $0x160] sm:$0xff]
        %v1137 = vld [vmem:[%s1091 + $0x168] sm:$0xff]
        %v1138 = vld [vmem:[%s1091 + $0x170] sm:$0xff]
        %v1139 = vld [vmem:[%s1091 + $0x178] sm:$0xff]
        %v1140 = vld [vmem:[%s1091 + $0x180] sm:$0xff]
        %v1141 = vld [vmem:[%s1091 + $0x188] sm:$0xff]
        %v1142 = vld [vmem:[%s1091 + $0x190] sm:$0xff]
        %v1143 = vld [vmem:[%s1091 + $0x198] sm:$0xff]
        %v1144 = vld [vmem:[%s1091 + $0x1a0] sm:$0xff]
        %v1145 = vld [vmem:[%s1091 + $0x1a8] sm:$0xff]
        %v1146 = vld [vmem:[%s1091 + $0x1b0] sm:$0xff]
        %v1147 = vld [vmem:[%s1091 + $0x1b8] sm:$0xff]
        %v1148 = vld [vmem:[%s1091 + $0x1c0] sm:$0xff]
        %v1149 = vld [vmem:[%s1091 + $0x1c8] sm:$0xff]
        %v1150 = vld [vmem:[%s1091 + $0x1d0] sm:$0xff]
        %v1151 = vld [vmem:[%s1091 + $0x1d8] sm:$0xff]
        %v1152 = vld [vmem:[%s1091 + $0x1e0] sm:$0xff]
        %v1153 = vld [vmem:[%s1091 + $0x1e8] sm:$0xff]
        %v1154 = vld [vmem:[%s1091 + $0x1f0] sm:$0xff]
        %v1155 = vld [vmem:[%s1091 + $0x1f8] sm:$0xff]
        %v1156 = vld [vmem:[%s1091 + $0x200] sm:$0xff]
        %v1157 = vld [vmem:[%s1091 + $0x208] sm:$0xff]
        %v1158 = vld [vmem:[%s1091 + $0x210] sm:$0xff]
        %v1159 = vld [vmem:[%s1091 + $0x218] sm:$0xff]
        %v1160 = vld [vmem:[%s1091 + $0x220] sm:$0xff]
        %v1161 = vld [vmem:[%s1091 + $0x228] sm:$0xff]
        %v1162 = vld [vmem:[%s1091 + $0x230] sm:$0xff]
        %v1163 = vld [vmem:[%s1091 + $0x238] sm:$0xff]
        %v1164 = vld [vmem:[%s1091 + $0x240] sm:$0xff]
        %v1165 = vld [vmem:[%s1091 + $0x248] sm:$0xff]
        %v1166 = vld [vmem:[%s1091 + $0x250] sm:$0xff]
        %v1167 = vld [vmem:[%s1091 + $0x258] sm:$0xff]
        %v1168 = vld [vmem:[%s1091 + $0x260] sm:$0xff]
        %v1169 = vld [vmem:[%s1091 + $0x268] sm:$0xff]
        %v1170 = vld [vmem:[%s1091 + $0x270] sm:$0xff]
        %v1171 = vld [vmem:[%s1091 + $0x278] sm:$0xff]
        %v1172 = vld [vmem:[%s1091 + $0x280] sm:$0xff]
        %v1173 = vld [vmem:[%s1091 + $0x288] sm:$0xff]
        %v1174 = vld [vmem:[%s1091 + $0x290] sm:$0xff]
        %v1175 = vld [vmem:[%s1091 + $0x298] sm:$0xff]
        %v1176 = vld [vmem:[%s1091 + $0x2a0] sm:$0xff]
        %v1177 = vld [vmem:[%s1091 + $0x2a8] sm:$0xff]
        %v1178 = vld [vmem:[%s1091 + $0x2b0] sm:$0xff]
        %v1179 = vld [vmem:[%s1091 + $0x2b8] sm:$0xff]
        %v1180 = vld [vmem:[%s1091 + $0x2c0] sm:$0xff]
        %v1181 = vld [vmem:[%s1091 + $0x2c8] sm:$0xff]
        %v1182 = vld [vmem:[%s1091 + $0x2d0] sm:$0xff]
        %v1183 = vld [vmem:[%s1091 + $0x2d8] sm:$0xff]
        %v1184 = vld [vmem:[%s1091 + $0x2e0] sm:$0xff]
        %v1185 = vld [vmem:[%s1091 + $0x2e8] sm:$0xff]
        %v1186 = vld [vmem:[%s1091 + $0x2f0] sm:$0xff]
        %v1187 = vld [vmem:[%s1091 + $0x2f8] sm:$0xff]
        %v1188 = vld [vmem:[%s1091 + $0x300] sm:$0xff]
        %v1189 = vld [vmem:[%s1091 + $0x308] sm:$0xff]
        %v1190 = vld [vmem:[%s1091 + $0x310] sm:$0xff]
        %v1191 = vld [vmem:[%s1091 + $0x318] sm:$0xff]
        %v1192 = vld [vmem:[%s1091 + $0x320] sm:$0xff]
        %v1193 = vld [vmem:[%s1091 + $0x328] sm:$0xff]
        %v1194 = vld [vmem:[%s1091 + $0x330] sm:$0xff]
        %v1195 = vld [vmem:[%s1091 + $0x338] sm:$0xff]
        %v1196 = vld [vmem:[%s1091 + $0x340] sm:$0xff]
        %v1197 = vld [vmem:[%s1091 + $0x348] sm:$0xff]
        %v1198 = vld [vmem:[%s1091 + $0x350] sm:$0xff]
        %v1199 = vld [vmem:[%s1091 + $0x358] sm:$0xff]
        %v1200 = vld [vmem:[%s1091 + $0x360] sm:$0xff]
        %v1201 = vld [vmem:[%s1091 + $0x368] sm:$0xff]
        %v1202 = vld [vmem:[%s1091 + $0x370] sm:$0xff]
        %v1203 = vld [vmem:[%s1091 + $0x378] sm:$0xff]
        %v1204 = vld [vmem:[%s1091 + $0x380] sm:$0xff]
        %v1205 = vld [vmem:[%s1091 + $0x388] sm:$0xff]
        %v1206 = vld [vmem:[%s1091 + $0x390] sm:$0xff]
        %v1207 = vld [vmem:[%s1091 + $0x398] sm:$0xff]
        %v1208 = vld [vmem:[%s1091 + $0x3a0] sm:$0xff]
        %v1209 = vld [vmem:[%s1091 + $0x3a8] sm:$0xff]
        %v1210 = vld [vmem:[%s1091 + $0x3b0] sm:$0xff]
        %v1211 = vld [vmem:[%s1091 + $0x3b8] sm:$0xff]
        %v1212 = vld [vmem:[%s1091 + $0x3c0] sm:$0xff]
        %v1213 = vld [vmem:[%s1091 + $0x3c8] sm:$0xff]
        %v1214 = vld [vmem:[%s1091 + $0x3d0] sm:$0xff]
        %v1215 = vld [vmem:[%s1091 + $0x3d8] sm:$0xff]
        %v1216 = vld [vmem:[%s1091 + $0x3e0] sm:$0xff]
        %v1217 = vld [vmem:[%s1091 + $0x3e8] sm:$0xff]
        %v1218 = vld [vmem:[%s1091 + $0x3f0] sm:$0xff]
        %v1219 = vld [vmem:[%s1091 + $0x3f8] sm:$0xff]
        %1220 = vmatprep.subr.mxu0 %v1153
        %1221 = vmatpush1.msra.mxu0 %v1152
        %1222 = vmatprep.subr.mxu0 %v1149
        %1223 = vmatpush1.msra.mxu0 %v1148
        %1224 = vmatprep.subr.mxu0 %v1145
        %1225 = vmatpush1.msra.mxu0 %v1144
        %1226 = vmatprep.subr.mxu0 %v1141
        %1227 = vmatpush1.msra.mxu0 %v1140
        %1228 = vmatprep.subr.mxu0 %v1137
        %1229 = vmatpush1.msra.mxu0 %v1136
        %1230 = vmatprep.subr.mxu0 %v1133
        %1231 = vmatpush1.msra.mxu0 %v1132
        %1232 = vmatprep.subr.mxu0 %v1129
        %1233 = vmatpush1.msra.mxu0 %v1128
        %1234 = vmatprep.subr.mxu0 %v1125
        %1235 = vmatpush1.msra.mxu0 %v1124
        %1236 = vmatprep.subr.mxu0 %v1121
        %1237 = vmatpush1.msra.mxu0 %v1120
        %1238 = vmatprep.subr.mxu0 %v1117
        %1239 = vmatpush1.msra.mxu0 %v1116
        %1240 = vmatprep.subr.mxu0 %v1113
        %1241 = vmatpush1.msra.mxu0 %v1112
        %1242 = vmatprep.subr.mxu0 %v1109
        %1243 = vmatpush1.msra.mxu0 %v1108
        %1244 = vmatprep.subr.mxu0 %v1105
        %1245 = vmatpush1.msra.mxu0 %v1104
        %1246 = vmatprep.subr.mxu0 %v1101
        %1247 = vmatpush1.msra.mxu0 %v1100
        %1248 = vmatprep.subr.mxu0 %v1097
        %1249 = vmatpush1.msra.mxu0 %v1096
        %1250 = vmatprep.subr.mxu0 %v1093
        %1251 = vmatpush1.msra.mxu0 %v1092
        %1252 = vmatprep.subr.mxu0 %v1217
        %1253 = vmatpush2.msra.mxu0 %v1216
        %1254 = vmatprep.subr.mxu0 %v1213
        %1255 = vmatpush2.msra.mxu0 %v1212
        %1256 = vmatprep.subr.mxu0 %v1209
        %1257 = vmatpush2.msra.mxu0 %v1208
        %1258 = vmatprep.subr.mxu0 %v1205
        %1259 = vmatpush2.msra.mxu0 %v1204
        %1260 = vmatprep.subr.mxu0 %v1201
        %1261 = vmatpush2.msra.mxu0 %v1200
        %1262 = vmatprep.subr.mxu0 %v1197
        %1263 = vmatpush2.msra.mxu0 %v1196
        %1264 = vmatprep.subr.mxu0 %v1193
        %1265 = vmatpush2.msra.mxu0 %v1192
        %1266 = vmatprep.subr.mxu0 %v1189
        %1267 = vmatpush2.msra.mxu0 %v1188
        %1268 = vmatprep.subr.mxu0 %v1185
        %1269 = vmatpush2.msra.mxu0 %v1184
        %1270 = vmatprep.subr.mxu0 %v1181
        %1271 = vmatpush2.msra.mxu0 %v1180
        %1272 = vmatprep.subr.mxu0 %v1177
        %1273 = vmatpush2.msra.mxu0 %v1176
        %1274 = vmatprep.subr.mxu0 %v1173
        %1275 = vmatpush2.msra.mxu0 %v1172
        %1276 = vmatprep.subr.mxu0 %v1169
        %1277 = vmatpush2.msra.mxu0 %v1168
        %1278 = vmatprep.subr.mxu0 %v1165
        %1279 = vmatpush2.msra.mxu0 %v1164
        %1280 = vmatprep.subr.mxu0 %v1161
        %1281 = vmatpush2.msra.mxu0 %v1160
        %1282 = vmatprep.subr.mxu0 %v1157
        %1283 = vmatpush2.msra.mxu0 %v1156
        %1284 = vmatprep.mubr.f32.mxu0 %v471
        %1285 = vmatmul.mubr.f32.gmra.mxu0 %v470
        %v1286 = vpop.f32.mrf.mxu0
        %v1287 = vadd.f32 0.0, %v1286
        %v1288 = vpop.f32.mrf.mxu0
        %v1289 = vadd.f32 0.0, %v1288
        %1290 = vmatprep.mubr.f32.mxu0 %v473
        %1291 = vmatmul.mubr.f32.gmra.mxu0 %v472
        %v1292 = vpop.f32.mrf.mxu0
        %v1293 = vadd.f32 0.0, %v1292
        %v1294 = vpop.f32.mrf.mxu0
        %v1295 = vadd.f32 0.0, %v1294
        %1296 = vmatprep.mubr.f32.mxu0 %v475
        %1297 = vmatmul.mubr.f32.gmra.mxu0 %v474
        %v1298 = vpop.f32.mrf.mxu0
        %v1299 = vadd.f32 0.0, %v1298
        %v1300 = vpop.f32.mrf.mxu0
        %v1301 = vadd.f32 0.0, %v1300
        %1302 = vmatprep.mubr.f32.mxu0 %v477
        %1303 = vmatmul.mubr.f32.gmra.mxu0 %v476
        %v1304 = vpop.f32.mrf.mxu0
        %v1305 = vadd.f32 0.0, %v1304
        %v1306 = vpop.f32.mrf.mxu0
        %v1307 = vadd.f32 0.0, %v1306
        %1308 = vdwg.mxu0
        %1309 = vmatprep.subr.mxu0 %v1155
        %1310 = vmatpush1.msra.mxu0 %v1154
        %1311 = vmatprep.subr.mxu0 %v1151
        %1312 = vmatpush1.msra.mxu0 %v1150
        %1313 = vmatprep.subr.mxu0 %v1147
        %1314 = vmatpush1.msra.mxu0 %v1146
        %1315 = vmatprep.subr.mxu0 %v1143
        %1316 = vmatpush1.msra.mxu0 %v1142
        %1317 = vmatprep.subr.mxu0 %v1139
        %1318 = vmatpush1.msra.mxu0 %v1138
        %1319 = vmatprep.subr.mxu0 %v1135
        %1320 = vmatpush1.msra.mxu0 %v1134
        %1321 = vmatprep.subr.mxu0 %v1131
        %1322 = vmatpush1.msra.mxu0 %v1130
        %1323 = vmatprep.subr.mxu0 %v1127
        %1324 = vmatpush1.msra.mxu0 %v1126
        %1325 = vmatprep.subr.mxu0 %v1123
        %1326 = vmatpush1.msra.mxu0 %v1122
        %1327 = vmatprep.subr.mxu0 %v1119
        %1328 = vmatpush1.msra.mxu0 %v1118
        %1329 = vmatprep.subr.mxu0 %v1115
        %1330 = vmatpush1.msra.mxu0 %v1114
        %1331 = vmatprep.subr.mxu0 %v1111
        %1332 = vmatpush1.msra.mxu0 %v1110
        %1333 = vmatprep.subr.mxu0 %v1107
        %1334 = vmatpush1.msra.mxu0 %v1106
        %1335 = vmatprep.subr.mxu0 %v1103
        %1336 = vmatpush1.msra.mxu0 %v1102
        %1337 = vmatprep.subr.mxu0 %v1099
        %1338 = vmatpush1.msra.mxu0 %v1098
        %1339 = vmatprep.subr.mxu0 %v1095
        %1340 = vmatpush1.msra.mxu0 %v1094
        %1341 = vmatprep.subr.mxu0 %v1219
        %1342 = vmatpush2.msra.mxu0 %v1218
        %1343 = vmatprep.subr.mxu0 %v1215
        %1344 = vmatpush2.msra.mxu0 %v1214
        %1345 = vmatprep.subr.mxu0 %v1211
        %1346 = vmatpush2.msra.mxu0 %v1210
        %1347 = vmatprep.subr.mxu0 %v1207
        %1348 = vmatpush2.msra.mxu0 %v1206
        %1349 = vmatprep.subr.mxu0 %v1203
        %1350 = vmatpush2.msra.mxu0 %v1202
        %1351 = vmatprep.subr.mxu0 %v1199
        %1352 = vmatpush2.msra.mxu0 %v1198
        %1353 = vmatprep.subr.mxu0 %v1195
        %1354 = vmatpush2.msra.mxu0 %v1194
        %1355 = vmatprep.subr.mxu0 %v1191
        %1356 = vmatpush2.msra.mxu0 %v1190
        %1357 = vmatprep.subr.mxu0 %v1187
        %1358 = vmatpush2.msra.mxu0 %v1186
        %1359 = vmatprep.subr.mxu0 %v1183
        %1360 = vmatpush2.msra.mxu0 %v1182
        %1361 = vmatprep.subr.mxu0 %v1179
        %1362 = vmatpush2.msra.mxu0 %v1178
        %1363 = vmatprep.subr.mxu0 %v1175
        %1364 = vmatpush2.msra.mxu0 %v1174
        %1365 = vmatprep.subr.mxu0 %v1171
        %1366 = vmatpush2.msra.mxu0 %v1170
        %1367 = vmatprep.subr.mxu0 %v1167
        %1368 = vmatpush2.msra.mxu0 %v1166
        %1369 = vmatprep.subr.mxu0 %v1163
        %1370 = vmatpush2.msra.mxu0 %v1162
        %1371 = vmatprep.subr.mxu0 %v1159
        %1372 = vmatpush2.msra.mxu0 %v1158
        %1373 = vmatprep.mubr.f32.mxu0 %v471
        %1374 = vmatmul.mubr.f32.gmra.mxu0 %v470
        %v1375 = vpop.f32.mrf.mxu0
        %v1376 = vadd.f32 0.0, %v1375
        %v1377 = vpop.f32.mrf.mxu0
        %v1378 = vadd.f32 0.0, %v1377
        %1379 = vmatprep.mubr.f32.mxu0 %v473
        %1380 = vmatmul.mubr.f32.gmra.mxu0 %v472
        %v1381 = vpop.f32.mrf.mxu0
        %v1382 = vadd.f32 0.0, %v1381
        %v1383 = vpop.f32.mrf.mxu0
        %v1384 = vadd.f32 0.0, %v1383
        %1385 = vmatprep.mubr.f32.mxu0 %v475
        %1386 = vmatmul.mubr.f32.gmra.mxu0 %v474
        %v1387 = vpop.f32.mrf.mxu0
        %v1388 = vadd.f32 0.0, %v1387
        %v1389 = vpop.f32.mrf.mxu0
        %v1390 = vadd.f32 0.0, %v1389
        %1391 = vmatprep.mubr.f32.mxu0 %v477
        %1392 = vmatmul.mubr.f32.gmra.mxu0 %v476
        %v1393 = vpop.f32.mrf.mxu0
        %v1394 = vadd.f32 0.0, %v1393
        %v1395 = vpop.f32.mrf.mxu0
        %v1396 = vadd.f32 0.0, %v1395
        %1397 = vdwg.mxu0
        %v1398 = vadd.f32 %v980, %v1287
        %v1399 = vadd.f32 %v982, %v1289
        %v1400 = vadd.f32 %v1069, %v1376
        %v1401 = vadd.f32 %v1071, %v1378
        %v1402 = vadd.f32 %v986, %v1293
        %v1403 = vadd.f32 %v988, %v1295
        %v1404 = vadd.f32 %v1075, %v1382
        %v1405 = vadd.f32 %v1077, %v1384
        %v1406 = vadd.f32 %v992, %v1299
        %v1407 = vadd.f32 %v994, %v1301
        %v1408 = vadd.f32 %v1081, %v1388
        %v1409 = vadd.f32 %v1083, %v1390
        %v1410 = vadd.f32 %v998, %v1305
        %v1411 = vadd.f32 %v1000, %v1307
        %v1412 = vadd.f32 %v1087, %v1394
        %v1413 = vadd.f32 %v1089, %v1396
        %v1415 = vlaneseq
        %v1416 = vshrl.u32 %v1415, 7
        %v1417 = vsub.s32 0, %v1416
        %v1418 = vrot.slane %v411, %v1417
        %v1419 = vlaneseq
        %v1420 = vshrl.u32 %v1419, 7
        %v1421 = vsub.s32 1, %v1420
        %v1422 = vrot.slane %v411, %v1421
        %v1423 = vlaneseq
        %v1424 = vshrl.u32 %v1423, 7
        %v1425 = vsub.s32 2, %v1424
        %v1426 = vrot.slane %v411, %v1425
        %v1427 = vlaneseq
        %v1428 = vshrl.u32 %v1427, 7
        %v1429 = vsub.s32 3, %v1428
        %v1430 = vrot.slane %v411, %v1429
        %v1435 = vadd.f32 %v1398, %v1418
        %v1436 = vadd.f32 %v1399, %v1422
        %v1437 = vadd.f32 %v1400, %v1426
        %v1438 = vadd.f32 %v1401, %v1430
        %v1439 = vadd.f32 %v1402, %v1418
        %v1440 = vadd.f32 %v1403, %v1422
        %v1441 = vadd.f32 %v1404, %v1426
        %v1442 = vadd.f32 %v1405, %v1430
        %v1443 = vadd.f32 %v1406, %v1418
        %v1444 = vadd.f32 %v1407, %v1422
        %v1445 = vadd.f32 %v1408, %v1426
        %v1446 = vadd.f32 %v1409, %v1430
        %v1447 = vadd.f32 %v1410, %v1418
        %v1448 = vadd.f32 %v1411, %v1422
        %v1449 = vadd.f32 %v1412, %v1426
        %v1450 = vadd.f32 %v1413, %v1430
        %v1451 = vmax.f32 %v1435, 0.0
        %v1452 = vmax.f32 %v1436, 0.0
        %v1453 = vmax.f32 %v1437, 0.0
        %v1454 = vmax.f32 %v1438, 0.0
        %v1455 = vmax.f32 %v1439, 0.0
        %v1456 = vmax.f32 %v1440, 0.0
        %v1457 = vmax.f32 %v1441, 0.0
        %v1458 = vmax.f32 %v1442, 0.0
        %v1459 = vmax.f32 %v1443, 0.0
        %v1460 = vmax.f32 %v1444, 0.0
        %v1461 = vmax.f32 %v1445, 0.0
        %v1462 = vmax.f32 %v1446, 0.0
        %v1463 = vmax.f32 %v1447, 0.0
        %v1464 = vmax.f32 %v1448, 0.0
        %v1465 = vmax.f32 %v1449, 0.0
        %v1466 = vmax.f32 %v1450, 0.0
        %v1467 = vld [vmem:[#allocation11] sm:$0xf]
        %v1468 = vrot.slane %v1451, 7
        %v1469 = vrot.slane %v1452, 7
        %v1470 = vrot.slane %v1453, 7
        %v1471 = vrot.slane %v1454, 7
        %v1472 = vrot.slane %v1455, 7
        %v1473 = vrot.slane %v1456, 7
        %v1474 = vrot.slane %v1457, 7
        %v1475 = vrot.slane %v1458, 7
        %v1476 = vrot.slane %v1459, 7
        %v1477 = vrot.slane %v1460, 7
        %v1478 = vrot.slane %v1461, 7
        %v1479 = vrot.slane %v1462, 7
        %v1480 = vrot.slane %v1463, 7
        %v1481 = vrot.slane %v1464, 7
        %v1482 = vrot.slane %v1465, 7
        %v1483 = vrot.slane %v1466, 7
        %v1484 = vsel %vm420, %v1476, %v1480
        %v1485 = vsel %vm420, %v1477, %v1481
        %v1486 = vsel %vm420, %v1478, %v1482
        %v1487 = vsel %vm420, %v1479, %v1483
        %v1488 = vsel %vm420, %v1472, %v1476
        %v1489 = vsel %vm420, %v1473, %v1477
        %v1490 = vsel %vm420, %v1474, %v1478
        %v1491 = vsel %vm420, %v1475, %v1479
        %v1492 = vsel %vm420, %v1468, %v1472
        %v1493 = vsel %vm420, %v1469, %v1473
        %v1494 = vsel %vm420, %v1470, %v1474
        %v1495 = vsel %vm420, %v1471, %v1475
        %v1496 = vsel %vm420, %v1480, %v1468
        %v1497 = vsel %vm420, %v1481, %v1469
        %v1498 = vsel %vm420, %v1482, %v1470
        %v1499 = vsel %vm420, %v1483, %v1471
        %v1500 = vsel %vm433, 0.0, %v1496
        %v1501 = vsel %vm433, 0.0, %v1497
        %v1502 = vsel %vm433, 0.0, %v1498
        %v1503 = vsel %vm433, 0.0, %v1499
        %v1504 = vsel %vm434, 0.0, %v1492
        %v1505 = vsel %vm434, 0.0, %v1493
        %v1506 = vsel %vm434, 0.0, %v1494
        %v1507 = vsel %vm434, 0.0, %v1495
        %v1508 = vsel %vm435, 0.0, %v1488
        %v1509 = vsel %vm435, 0.0, %v1489
        %v1510 = vsel %vm435, 0.0, %v1490
        %v1511 = vsel %vm435, 0.0, %v1491
        %v1512 = vsel %vm436, 0.0, %v1484
        %v1513 = vsel %vm436, 0.0, %v1485
        %v1514 = vsel %vm436, 0.0, %v1486
        %v1515 = vsel %vm436, 0.0, %v1487
        %v1516 = vrot.slane %v1451, 1
        %v1517 = vrot.slane %v1452, 1
        %v1518 = vrot.slane %v1453, 1
        %v1519 = vrot.slane %v1454, 1
        %v1520 = vrot.slane %v1455, 1
        %v1521 = vrot.slane %v1456, 1
        %v1522 = vrot.slane %v1457, 1
        %v1523 = vrot.slane %v1458, 1
        %v1524 = vrot.slane %v1459, 1
        %v1525 = vrot.slane %v1460, 1
        %v1526 = vrot.slane %v1461, 1
        %v1527 = vrot.slane %v1462, 1
        %v1528 = vrot.slane %v1463, 1
        %v1529 = vrot.slane %v1464, 1
        %v1530 = vrot.slane %v1465, 1
        %v1531 = vrot.slane %v1466, 1
        %v1532 = vsel %vm453, %v1524, %v1528
        %v1533 = vsel %vm453, %v1525, %v1529
        %v1534 = vsel %vm453, %v1526, %v1530
        %v1535 = vsel %vm453, %v1527, %v1531
        %v1536 = vsel %vm453, %v1520, %v1524
        %v1537 = vsel %vm453, %v1521, %v1525
        %v1538 = vsel %vm453, %v1522, %v1526
        %v1539 = vsel %vm453, %v1523, %v1527
        %v1540 = vsel %vm453, %v1516, %v1520
        %v1541 = vsel %vm453, %v1517, %v1521
        %v1542 = vsel %vm453, %v1518, %v1522
        %v1543 = vsel %vm453, %v1519, %v1523
        %v1544 = vsel %vm453, %v1528, %v1516
        %v1545 = vsel %vm453, %v1529, %v1517
        %v1546 = vsel %vm453, %v1530, %v1518
        %v1547 = vsel %vm453, %v1531, %v1519
        %v1548 = vsel %vm466, 0.0, %v1540
        %v1549 = vsel %vm466, 0.0, %v1541
        %v1550 = vsel %vm466, 0.0, %v1542
        %v1551 = vsel %vm466, 0.0, %v1543
        %v1552 = vsel %vm467, 0.0, %v1536
        %v1553 = vsel %vm467, 0.0, %v1537
        %v1554 = vsel %vm467, 0.0, %v1538
        %v1555 = vsel %vm467, 0.0, %v1539
        %v1556 = vsel %vm468, 0.0, %v1532
        %v1557 = vsel %vm468, 0.0, %v1533
        %v1558 = vsel %vm468, 0.0, %v1534
        %v1559 = vsel %vm468, 0.0, %v1535
        %v1560 = vsel %vm469, 0.0, %v1544
        %v1561 = vsel %vm469, 0.0, %v1545
        %v1562 = vsel %vm469, 0.0, %v1546
        %v1563 = vsel %vm469, 0.0, %v1547
        %v1564 = vld [vmem:[#allocation9] sm:$0xff]
        %v1565 = vld [vmem:[#allocation9 + $0x8] sm:$0xff]
        %v1566 = vld [vmem:[#allocation9 + $0x10] sm:$0xff]
        %v1567 = vld [vmem:[#allocation9 + $0x18] sm:$0xff]
        %v1568 = vld [vmem:[#allocation9 + $0x20] sm:$0xff]
        %v1569 = vld [vmem:[#allocation9 + $0x28] sm:$0xff]
        %v1570 = vld [vmem:[#allocation9 + $0x30] sm:$0xff]
        %v1571 = vld [vmem:[#allocation9 + $0x38] sm:$0xff]
        %v1572 = vld [vmem:[#allocation9 + $0x40] sm:$0xff]
        %v1573 = vld [vmem:[#allocation9 + $0x48] sm:$0xff]
        %v1574 = vld [vmem:[#allocation9 + $0x50] sm:$0xff]
        %v1575 = vld [vmem:[#allocation9 + $0x58] sm:$0xff]
        %v1576 = vld [vmem:[#allocation9 + $0x60] sm:$0xff]
        %v1577 = vld [vmem:[#allocation9 + $0x68] sm:$0xff]
        %v1578 = vld [vmem:[#allocation9 + $0x70] sm:$0xff]
        %v1579 = vld [vmem:[#allocation9 + $0x78] sm:$0xff]
        %v1580 = vld [vmem:[#allocation9 + $0x80] sm:$0xff]
        %v1581 = vld [vmem:[#allocation9 + $0x88] sm:$0xff]
        %v1582 = vld [vmem:[#allocation9 + $0x90] sm:$0xff]
        %v1583 = vld [vmem:[#allocation9 + $0x98] sm:$0xff]
        %v1584 = vld [vmem:[#allocation9 + $0xa0] sm:$0xff]
        %v1585 = vld [vmem:[#allocation9 + $0xa8] sm:$0xff]
        %v1586 = vld [vmem:[#allocation9 + $0xb0] sm:$0xff]
        %v1587 = vld [vmem:[#allocation9 + $0xb8] sm:$0xff]
        %v1588 = vld [vmem:[#allocation9 + $0xc0] sm:$0xff]
        %v1589 = vld [vmem:[#allocation9 + $0xc8] sm:$0xff]
        %v1590 = vld [vmem:[#allocation9 + $0xd0] sm:$0xff]
        %v1591 = vld [vmem:[#allocation9 + $0xd8] sm:$0xff]
        %v1592 = vld [vmem:[#allocation9 + $0xe0] sm:$0xff]
        %v1593 = vld [vmem:[#allocation9 + $0xe8] sm:$0xff]
        %v1594 = vld [vmem:[#allocation9 + $0xf0] sm:$0xff]
        %v1595 = vld [vmem:[#allocation9 + $0xf8] sm:$0xff]
        %v1596 = vld [vmem:[#allocation9 + $0x100] sm:$0xff]
        %v1597 = vld [vmem:[#allocation9 + $0x108] sm:$0xff]
        %v1598 = vld [vmem:[#allocation9 + $0x110] sm:$0xff]
        %v1599 = vld [vmem:[#allocation9 + $0x118] sm:$0xff]
        %v1600 = vld [vmem:[#allocation9 + $0x120] sm:$0xff]
        %v1601 = vld [vmem:[#allocation9 + $0x128] sm:$0xff]
        %v1602 = vld [vmem:[#allocation9 + $0x130] sm:$0xff]
        %v1603 = vld [vmem:[#allocation9 + $0x138] sm:$0xff]
        %v1604 = vld [vmem:[#allocation9 + $0x140] sm:$0xff]
        %v1605 = vld [vmem:[#allocation9 + $0x148] sm:$0xff]
        %v1606 = vld [vmem:[#allocation9 + $0x150] sm:$0xff]
        %v1607 = vld [vmem:[#allocation9 + $0x158] sm:$0xff]
        %v1608 = vld [vmem:[#allocation9 + $0x160] sm:$0xff]
        %v1609 = vld [vmem:[#allocation9 + $0x168] sm:$0xff]
        %v1610 = vld [vmem:[#allocation9 + $0x170] sm:$0xff]
        %v1611 = vld [vmem:[#allocation9 + $0x178] sm:$0xff]
        %v1612 = vld [vmem:[#allocation9 + $0x180] sm:$0xff]
        %v1613 = vld [vmem:[#allocation9 + $0x188] sm:$0xff]
        %v1614 = vld [vmem:[#allocation9 + $0x190] sm:$0xff]
        %v1615 = vld [vmem:[#allocation9 + $0x198] sm:$0xff]
        %v1616 = vld [vmem:[#allocation9 + $0x1a0] sm:$0xff]
        %v1617 = vld [vmem:[#allocation9 + $0x1a8] sm:$0xff]
        %v1618 = vld [vmem:[#allocation9 + $0x1b0] sm:$0xff]
        %v1619 = vld [vmem:[#allocation9 + $0x1b8] sm:$0xff]
        %v1620 = vld [vmem:[#allocation9 + $0x1c0] sm:$0xff]
        %v1621 = vld [vmem:[#allocation9 + $0x1c8] sm:$0xff]
        %v1622 = vld [vmem:[#allocation9 + $0x1d0] sm:$0xff]
        %v1623 = vld [vmem:[#allocation9 + $0x1d8] sm:$0xff]
        %v1624 = vld [vmem:[#allocation9 + $0x1e0] sm:$0xff]
        %v1625 = vld [vmem:[#allocation9 + $0x1e8] sm:$0xff]
        %v1626 = vld [vmem:[#allocation9 + $0x1f0] sm:$0xff]
        %v1627 = vld [vmem:[#allocation9 + $0x1f8] sm:$0xff]
        %v1628 = vld [vmem:[#allocation9 + $0x200] sm:$0xff]
        %v1629 = vld [vmem:[#allocation9 + $0x208] sm:$0xff]
        %v1630 = vld [vmem:[#allocation9 + $0x210] sm:$0xff]
        %v1631 = vld [vmem:[#allocation9 + $0x218] sm:$0xff]
        %v1632 = vld [vmem:[#allocation9 + $0x220] sm:$0xff]
        %v1633 = vld [vmem:[#allocation9 + $0x228] sm:$0xff]
        %v1634 = vld [vmem:[#allocation9 + $0x230] sm:$0xff]
        %v1635 = vld [vmem:[#allocation9 + $0x238] sm:$0xff]
        %v1636 = vld [vmem:[#allocation9 + $0x240] sm:$0xff]
        %v1637 = vld [vmem:[#allocation9 + $0x248] sm:$0xff]
        %v1638 = vld [vmem:[#allocation9 + $0x250] sm:$0xff]
        %v1639 = vld [vmem:[#allocation9 + $0x258] sm:$0xff]
        %v1640 = vld [vmem:[#allocation9 + $0x260] sm:$0xff]
        %v1641 = vld [vmem:[#allocation9 + $0x268] sm:$0xff]
        %v1642 = vld [vmem:[#allocation9 + $0x270] sm:$0xff]
        %v1643 = vld [vmem:[#allocation9 + $0x278] sm:$0xff]
        %v1644 = vld [vmem:[#allocation9 + $0x280] sm:$0xff]
        %v1645 = vld [vmem:[#allocation9 + $0x288] sm:$0xff]
        %v1646 = vld [vmem:[#allocation9 + $0x290] sm:$0xff]
        %v1647 = vld [vmem:[#allocation9 + $0x298] sm:$0xff]
        %v1648 = vld [vmem:[#allocation9 + $0x2a0] sm:$0xff]
        %v1649 = vld [vmem:[#allocation9 + $0x2a8] sm:$0xff]
        %v1650 = vld [vmem:[#allocation9 + $0x2b0] sm:$0xff]
        %v1651 = vld [vmem:[#allocation9 + $0x2b8] sm:$0xff]
        %v1652 = vld [vmem:[#allocation9 + $0x2c0] sm:$0xff]
        %v1653 = vld [vmem:[#allocation9 + $0x2c8] sm:$0xff]
        %v1654 = vld [vmem:[#allocation9 + $0x2d0] sm:$0xff]
        %v1655 = vld [vmem:[#allocation9 + $0x2d8] sm:$0xff]
        %v1656 = vld [vmem:[#allocation9 + $0x2e0] sm:$0xff]
        %v1657 = vld [vmem:[#allocation9 + $0x2e8] sm:$0xff]
        %v1658 = vld [vmem:[#allocation9 + $0x2f0] sm:$0xff]
        %v1659 = vld [vmem:[#allocation9 + $0x2f8] sm:$0xff]
        %v1660 = vld [vmem:[#allocation9 + $0x300] sm:$0xff]
        %v1661 = vld [vmem:[#allocation9 + $0x308] sm:$0xff]
        %v1662 = vld [vmem:[#allocation9 + $0x310] sm:$0xff]
        %v1663 = vld [vmem:[#allocation9 + $0x318] sm:$0xff]
        %v1664 = vld [vmem:[#allocation9 + $0x320] sm:$0xff]
        %v1665 = vld [vmem:[#allocation9 + $0x328] sm:$0xff]
        %v1666 = vld [vmem:[#allocation9 + $0x330] sm:$0xff]
        %v1667 = vld [vmem:[#allocation9 + $0x338] sm:$0xff]
        %v1668 = vld [vmem:[#allocation9 + $0x340] sm:$0xff]
        %v1669 = vld [vmem:[#allocation9 + $0x348] sm:$0xff]
        %v1670 = vld [vmem:[#allocation9 + $0x350] sm:$0xff]
        %v1671 = vld [vmem:[#allocation9 + $0x358] sm:$0xff]
        %v1672 = vld [vmem:[#allocation9 + $0x360] sm:$0xff]
        %v1673 = vld [vmem:[#allocation9 + $0x368] sm:$0xff]
        %v1674 = vld [vmem:[#allocation9 + $0x370] sm:$0xff]
        %v1675 = vld [vmem:[#allocation9 + $0x378] sm:$0xff]
        %v1676 = vld [vmem:[#allocation9 + $0x380] sm:$0xff]
        %v1677 = vld [vmem:[#allocation9 + $0x388] sm:$0xff]
        %v1678 = vld [vmem:[#allocation9 + $0x390] sm:$0xff]
        %v1679 = vld [vmem:[#allocation9 + $0x398] sm:$0xff]
        %v1680 = vld [vmem:[#allocation9 + $0x3a0] sm:$0xff]
        %v1681 = vld [vmem:[#allocation9 + $0x3a8] sm:$0xff]
        %v1682 = vld [vmem:[#allocation9 + $0x3b0] sm:$0xff]
        %v1683 = vld [vmem:[#allocation9 + $0x3b8] sm:$0xff]
        %v1684 = vld [vmem:[#allocation9 + $0x3c0] sm:$0xff]
        %v1685 = vld [vmem:[#allocation9 + $0x3c8] sm:$0xff]
        %v1686 = vld [vmem:[#allocation9 + $0x3d0] sm:$0xff]
        %v1687 = vld [vmem:[#allocation9 + $0x3d8] sm:$0xff]
        %v1688 = vld [vmem:[#allocation9 + $0x3e0] sm:$0xff]
        %v1689 = vld [vmem:[#allocation9 + $0x3e8] sm:$0xff]
        %v1690 = vld [vmem:[#allocation9 + $0x3f0] sm:$0xff]
        %v1691 = vld [vmem:[#allocation9 + $0x3f8] sm:$0xff]
        %v1692 = vld [vmem:[#allocation9 + $0x400] sm:$0xff]
        %v1693 = vld [vmem:[#allocation9 + $0x408] sm:$0xff]
        %v1694 = vld [vmem:[#allocation9 + $0x410] sm:$0xff]
        %v1695 = vld [vmem:[#allocation9 + $0x418] sm:$0xff]
        %v1696 = vld [vmem:[#allocation9 + $0x420] sm:$0xff]
        %v1697 = vld [vmem:[#allocation9 + $0x428] sm:$0xff]
        %v1698 = vld [vmem:[#allocation9 + $0x430] sm:$0xff]
        %v1699 = vld [vmem:[#allocation9 + $0x438] sm:$0xff]
        %v1700 = vld [vmem:[#allocation9 + $0x440] sm:$0xff]
        %v1701 = vld [vmem:[#allocation9 + $0x448] sm:$0xff]
        %v1702 = vld [vmem:[#allocation9 + $0x450] sm:$0xff]
        %v1703 = vld [vmem:[#allocation9 + $0x458] sm:$0xff]
        %v1704 = vld [vmem:[#allocation9 + $0x460] sm:$0xff]
        %v1705 = vld [vmem:[#allocation9 + $0x468] sm:$0xff]
        %v1706 = vld [vmem:[#allocation9 + $0x470] sm:$0xff]
        %v1707 = vld [vmem:[#allocation9 + $0x478] sm:$0xff]
        %v1708 = vld [vmem:[#allocation9 + $0x480] sm:$0xff]
        %v1709 = vld [vmem:[#allocation9 + $0x488] sm:$0xff]
        %v1710 = vld [vmem:[#allocation9 + $0x490] sm:$0xff]
        %v1711 = vld [vmem:[#allocation9 + $0x498] sm:$0xff]
        %v1712 = vld [vmem:[#allocation9 + $0x4a0] sm:$0xff]
        %v1713 = vld [vmem:[#allocation9 + $0x4a8] sm:$0xff]
        %v1714 = vld [vmem:[#allocation9 + $0x4b0] sm:$0xff]
        %v1715 = vld [vmem:[#allocation9 + $0x4b8] sm:$0xff]
        %v1716 = vld [vmem:[#allocation9 + $0x4c0] sm:$0xff]
        %v1717 = vld [vmem:[#allocation9 + $0x4c8] sm:$0xff]
        %v1718 = vld [vmem:[#allocation9 + $0x4d0] sm:$0xff]
        %v1719 = vld [vmem:[#allocation9 + $0x4d8] sm:$0xff]
        %v1720 = vld [vmem:[#allocation9 + $0x4e0] sm:$0xff]
        %v1721 = vld [vmem:[#allocation9 + $0x4e8] sm:$0xff]
        %v1722 = vld [vmem:[#allocation9 + $0x4f0] sm:$0xff]
        %v1723 = vld [vmem:[#allocation9 + $0x4f8] sm:$0xff]
        %v1724 = vld [vmem:[#allocation9 + $0x500] sm:$0xff]
        %v1725 = vld [vmem:[#allocation9 + $0x508] sm:$0xff]
        %v1726 = vld [vmem:[#allocation9 + $0x510] sm:$0xff]
        %v1727 = vld [vmem:[#allocation9 + $0x518] sm:$0xff]
        %v1728 = vld [vmem:[#allocation9 + $0x520] sm:$0xff]
        %v1729 = vld [vmem:[#allocation9 + $0x528] sm:$0xff]
        %v1730 = vld [vmem:[#allocation9 + $0x530] sm:$0xff]
        %v1731 = vld [vmem:[#allocation9 + $0x538] sm:$0xff]
        %v1732 = vld [vmem:[#allocation9 + $0x540] sm:$0xff]
        %v1733 = vld [vmem:[#allocation9 + $0x548] sm:$0xff]
        %v1734 = vld [vmem:[#allocation9 + $0x550] sm:$0xff]
        %v1735 = vld [vmem:[#allocation9 + $0x558] sm:$0xff]
        %v1736 = vld [vmem:[#allocation9 + $0x560] sm:$0xff]
        %v1737 = vld [vmem:[#allocation9 + $0x568] sm:$0xff]
        %v1738 = vld [vmem:[#allocation9 + $0x570] sm:$0xff]
        %v1739 = vld [vmem:[#allocation9 + $0x578] sm:$0xff]
        %v1740 = vld [vmem:[#allocation9 + $0x580] sm:$0xff]
        %v1741 = vld [vmem:[#allocation9 + $0x588] sm:$0xff]
        %v1742 = vld [vmem:[#allocation9 + $0x590] sm:$0xff]
        %v1743 = vld [vmem:[#allocation9 + $0x598] sm:$0xff]
        %v1744 = vld [vmem:[#allocation9 + $0x5a0] sm:$0xff]
        %v1745 = vld [vmem:[#allocation9 + $0x5a8] sm:$0xff]
        %v1746 = vld [vmem:[#allocation9 + $0x5b0] sm:$0xff]
        %v1747 = vld [vmem:[#allocation9 + $0x5b8] sm:$0xff]
        %v1748 = vld [vmem:[#allocation9 + $0x5c0] sm:$0xff]
        %v1749 = vld [vmem:[#allocation9 + $0x5c8] sm:$0xff]
        %v1750 = vld [vmem:[#allocation9 + $0x5d0] sm:$0xff]
        %v1751 = vld [vmem:[#allocation9 + $0x5d8] sm:$0xff]
        %v1752 = vld [vmem:[#allocation9 + $0x5e0] sm:$0xff]
        %v1753 = vld [vmem:[#allocation9 + $0x5e8] sm:$0xff]
        %v1754 = vld [vmem:[#allocation9 + $0x5f0] sm:$0xff]
        %v1755 = vld [vmem:[#allocation9 + $0x5f8] sm:$0xff]
        %v1756 = vld [vmem:[#allocation9 + $0x600] sm:$0xff]
        %v1757 = vld [vmem:[#allocation9 + $0x608] sm:$0xff]
        %v1758 = vld [vmem:[#allocation9 + $0x610] sm:$0xff]
        %v1759 = vld [vmem:[#allocation9 + $0x618] sm:$0xff]
        %v1760 = vld [vmem:[#allocation9 + $0x620] sm:$0xff]
        %v1761 = vld [vmem:[#allocation9 + $0x628] sm:$0xff]
        %v1762 = vld [vmem:[#allocation9 + $0x630] sm:$0xff]
        %v1763 = vld [vmem:[#allocation9 + $0x638] sm:$0xff]
        %v1764 = vld [vmem:[#allocation9 + $0x640] sm:$0xff]
        %v1765 = vld [vmem:[#allocation9 + $0x648] sm:$0xff]
        %v1766 = vld [vmem:[#allocation9 + $0x650] sm:$0xff]
        %v1767 = vld [vmem:[#allocation9 + $0x658] sm:$0xff]
        %v1768 = vld [vmem:[#allocation9 + $0x660] sm:$0xff]
        %v1769 = vld [vmem:[#allocation9 + $0x668] sm:$0xff]
        %v1770 = vld [vmem:[#allocation9 + $0x670] sm:$0xff]
        %v1771 = vld [vmem:[#allocation9 + $0x678] sm:$0xff]
        %v1772 = vld [vmem:[#allocation9 + $0x680] sm:$0xff]
        %v1773 = vld [vmem:[#allocation9 + $0x688] sm:$0xff]
        %v1774 = vld [vmem:[#allocation9 + $0x690] sm:$0xff]
        %v1775 = vld [vmem:[#allocation9 + $0x698] sm:$0xff]
        %v1776 = vld [vmem:[#allocation9 + $0x6a0] sm:$0xff]
        %v1777 = vld [vmem:[#allocation9 + $0x6a8] sm:$0xff]
        %v1778 = vld [vmem:[#allocation9 + $0x6b0] sm:$0xff]
        %v1779 = vld [vmem:[#allocation9 + $0x6b8] sm:$0xff]
        %v1780 = vld [vmem:[#allocation9 + $0x6c0] sm:$0xff]
        %v1781 = vld [vmem:[#allocation9 + $0x6c8] sm:$0xff]
        %v1782 = vld [vmem:[#allocation9 + $0x6d0] sm:$0xff]
        %v1783 = vld [vmem:[#allocation9 + $0x6d8] sm:$0xff]
        %v1784 = vld [vmem:[#allocation9 + $0x6e0] sm:$0xff]
        %v1785 = vld [vmem:[#allocation9 + $0x6e8] sm:$0xff]
        %v1786 = vld [vmem:[#allocation9 + $0x6f0] sm:$0xff]
        %v1787 = vld [vmem:[#allocation9 + $0x6f8] sm:$0xff]
        %v1788 = vld [vmem:[#allocation9 + $0x700] sm:$0xff]
        %v1789 = vld [vmem:[#allocation9 + $0x708] sm:$0xff]
        %v1790 = vld [vmem:[#allocation9 + $0x710] sm:$0xff]
        %v1791 = vld [vmem:[#allocation9 + $0x718] sm:$0xff]
        %v1792 = vld [vmem:[#allocation9 + $0x720] sm:$0xff]
        %v1793 = vld [vmem:[#allocation9 + $0x728] sm:$0xff]
        %v1794 = vld [vmem:[#allocation9 + $0x730] sm:$0xff]
        %v1795 = vld [vmem:[#allocation9 + $0x738] sm:$0xff]
        %v1796 = vld [vmem:[#allocation9 + $0x740] sm:$0xff]
        %v1797 = vld [vmem:[#allocation9 + $0x748] sm:$0xff]
        %v1798 = vld [vmem:[#allocation9 + $0x750] sm:$0xff]
        %v1799 = vld [vmem:[#allocation9 + $0x758] sm:$0xff]
        %v1800 = vld [vmem:[#allocation9 + $0x760] sm:$0xff]
        %v1801 = vld [vmem:[#allocation9 + $0x768] sm:$0xff]
        %v1802 = vld [vmem:[#allocation9 + $0x770] sm:$0xff]
        %v1803 = vld [vmem:[#allocation9 + $0x778] sm:$0xff]
        %v1804 = vld [vmem:[#allocation9 + $0x780] sm:$0xff]
        %v1805 = vld [vmem:[#allocation9 + $0x788] sm:$0xff]
        %v1806 = vld [vmem:[#allocation9 + $0x790] sm:$0xff]
        %v1807 = vld [vmem:[#allocation9 + $0x798] sm:$0xff]
        %v1808 = vld [vmem:[#allocation9 + $0x7a0] sm:$0xff]
        %v1809 = vld [vmem:[#allocation9 + $0x7a8] sm:$0xff]
        %v1810 = vld [vmem:[#allocation9 + $0x7b0] sm:$0xff]
        %v1811 = vld [vmem:[#allocation9 + $0x7b8] sm:$0xff]
        %v1812 = vld [vmem:[#allocation9 + $0x7c0] sm:$0xff]
        %v1813 = vld [vmem:[#allocation9 + $0x7c8] sm:$0xff]
        %v1814 = vld [vmem:[#allocation9 + $0x7d0] sm:$0xff]
        %v1815 = vld [vmem:[#allocation9 + $0x7d8] sm:$0xff]
        %v1816 = vld [vmem:[#allocation9 + $0x7e0] sm:$0xff]
        %v1817 = vld [vmem:[#allocation9 + $0x7e8] sm:$0xff]
        %v1818 = vld [vmem:[#allocation9 + $0x7f0] sm:$0xff]
        %v1819 = vld [vmem:[#allocation9 + $0x7f8] sm:$0xff]
        %s1820 = scalar_lea.vmem [#allocation9], 2048
        %v1821 = vld [vmem:[%s1820] sm:$0xff]
        %v1822 = vld [vmem:[%s1820 + $0x8] sm:$0xff]
        %v1823 = vld [vmem:[%s1820 + $0x10] sm:$0xff]
        %v1824 = vld [vmem:[%s1820 + $0x18] sm:$0xff]
        %v1825 = vld [vmem:[%s1820 + $0x20] sm:$0xff]
        %v1826 = vld [vmem:[%s1820 + $0x28] sm:$0xff]
        %v1827 = vld [vmem:[%s1820 + $0x30] sm:$0xff]
        %v1828 = vld [vmem:[%s1820 + $0x38] sm:$0xff]
        %v1829 = vld [vmem:[%s1820 + $0x40] sm:$0xff]
        %v1830 = vld [vmem:[%s1820 + $0x48] sm:$0xff]
        %v1831 = vld [vmem:[%s1820 + $0x50] sm:$0xff]
        %v1832 = vld [vmem:[%s1820 + $0x58] sm:$0xff]
        %v1833 = vld [vmem:[%s1820 + $0x60] sm:$0xff]
        %v1834 = vld [vmem:[%s1820 + $0x68] sm:$0xff]
        %v1835 = vld [vmem:[%s1820 + $0x70] sm:$0xff]
        %v1836 = vld [vmem:[%s1820 + $0x78] sm:$0xff]
        %v1837 = vld [vmem:[%s1820 + $0x80] sm:$0xff]
        %v1838 = vld [vmem:[%s1820 + $0x88] sm:$0xff]
        %v1839 = vld [vmem:[%s1820 + $0x90] sm:$0xff]
        %v1840 = vld [vmem:[%s1820 + $0x98] sm:$0xff]
        %v1841 = vld [vmem:[%s1820 + $0xa0] sm:$0xff]
        %v1842 = vld [vmem:[%s1820 + $0xa8] sm:$0xff]
        %v1843 = vld [vmem:[%s1820 + $0xb0] sm:$0xff]
        %v1844 = vld [vmem:[%s1820 + $0xb8] sm:$0xff]
        %v1845 = vld [vmem:[%s1820 + $0xc0] sm:$0xff]
        %v1846 = vld [vmem:[%s1820 + $0xc8] sm:$0xff]
        %v1847 = vld [vmem:[%s1820 + $0xd0] sm:$0xff]
        %v1848 = vld [vmem:[%s1820 + $0xd8] sm:$0xff]
        %v1849 = vld [vmem:[%s1820 + $0xe0] sm:$0xff]
        %v1850 = vld [vmem:[%s1820 + $0xe8] sm:$0xff]
        %v1851 = vld [vmem:[%s1820 + $0xf0] sm:$0xff]
        %v1852 = vld [vmem:[%s1820 + $0xf8] sm:$0xff]
        %v1853 = vld [vmem:[%s1820 + $0x100] sm:$0xff]
        %v1854 = vld [vmem:[%s1820 + $0x108] sm:$0xff]
        %v1855 = vld [vmem:[%s1820 + $0x110] sm:$0xff]
        %v1856 = vld [vmem:[%s1820 + $0x118] sm:$0xff]
        %v1857 = vld [vmem:[%s1820 + $0x120] sm:$0xff]
        %v1858 = vld [vmem:[%s1820 + $0x128] sm:$0xff]
        %v1859 = vld [vmem:[%s1820 + $0x130] sm:$0xff]
        %v1860 = vld [vmem:[%s1820 + $0x138] sm:$0xff]
        %v1861 = vld [vmem:[%s1820 + $0x140] sm:$0xff]
        %v1862 = vld [vmem:[%s1820 + $0x148] sm:$0xff]
        %v1863 = vld [vmem:[%s1820 + $0x150] sm:$0xff]
        %v1864 = vld [vmem:[%s1820 + $0x158] sm:$0xff]
        %v1865 = vld [vmem:[%s1820 + $0x160] sm:$0xff]
        %v1866 = vld [vmem:[%s1820 + $0x168] sm:$0xff]
        %v1867 = vld [vmem:[%s1820 + $0x170] sm:$0xff]
        %v1868 = vld [vmem:[%s1820 + $0x178] sm:$0xff]
        %v1869 = vld [vmem:[%s1820 + $0x180] sm:$0xff]
        %v1870 = vld [vmem:[%s1820 + $0x188] sm:$0xff]
        %v1871 = vld [vmem:[%s1820 + $0x190] sm:$0xff]
        %v1872 = vld [vmem:[%s1820 + $0x198] sm:$0xff]
        %v1873 = vld [vmem:[%s1820 + $0x1a0] sm:$0xff]
        %v1874 = vld [vmem:[%s1820 + $0x1a8] sm:$0xff]
        %v1875 = vld [vmem:[%s1820 + $0x1b0] sm:$0xff]
        %v1876 = vld [vmem:[%s1820 + $0x1b8] sm:$0xff]
        %v1877 = vld [vmem:[%s1820 + $0x1c0] sm:$0xff]
        %v1878 = vld [vmem:[%s1820 + $0x1c8] sm:$0xff]
        %v1879 = vld [vmem:[%s1820 + $0x1d0] sm:$0xff]
        %v1880 = vld [vmem:[%s1820 + $0x1d8] sm:$0xff]
        %v1881 = vld [vmem:[%s1820 + $0x1e0] sm:$0xff]
        %v1882 = vld [vmem:[%s1820 + $0x1e8] sm:$0xff]
        %v1883 = vld [vmem:[%s1820 + $0x1f0] sm:$0xff]
        %v1884 = vld [vmem:[%s1820 + $0x1f8] sm:$0xff]
        %v1885 = vld [vmem:[%s1820 + $0x200] sm:$0xff]
        %v1886 = vld [vmem:[%s1820 + $0x208] sm:$0xff]
        %v1887 = vld [vmem:[%s1820 + $0x210] sm:$0xff]
        %v1888 = vld [vmem:[%s1820 + $0x218] sm:$0xff]
        %v1889 = vld [vmem:[%s1820 + $0x220] sm:$0xff]
        %v1890 = vld [vmem:[%s1820 + $0x228] sm:$0xff]
        %v1891 = vld [vmem:[%s1820 + $0x230] sm:$0xff]
        %v1892 = vld [vmem:[%s1820 + $0x238] sm:$0xff]
        %v1893 = vld [vmem:[%s1820 + $0x240] sm:$0xff]
        %v1894 = vld [vmem:[%s1820 + $0x248] sm:$0xff]
        %v1895 = vld [vmem:[%s1820 + $0x250] sm:$0xff]
        %v1896 = vld [vmem:[%s1820 + $0x258] sm:$0xff]
        %v1897 = vld [vmem:[%s1820 + $0x260] sm:$0xff]
        %v1898 = vld [vmem:[%s1820 + $0x268] sm:$0xff]
        %v1899 = vld [vmem:[%s1820 + $0x270] sm:$0xff]
        %v1900 = vld [vmem:[%s1820 + $0x278] sm:$0xff]
        %v1901 = vld [vmem:[%s1820 + $0x280] sm:$0xff]
        %v1902 = vld [vmem:[%s1820 + $0x288] sm:$0xff]
        %v1903 = vld [vmem:[%s1820 + $0x290] sm:$0xff]
        %v1904 = vld [vmem:[%s1820 + $0x298] sm:$0xff]
        %v1905 = vld [vmem:[%s1820 + $0x2a0] sm:$0xff]
        %v1906 = vld [vmem:[%s1820 + $0x2a8] sm:$0xff]
        %v1907 = vld [vmem:[%s1820 + $0x2b0] sm:$0xff]
        %v1908 = vld [vmem:[%s1820 + $0x2b8] sm:$0xff]
        %v1909 = vld [vmem:[%s1820 + $0x2c0] sm:$0xff]
        %v1910 = vld [vmem:[%s1820 + $0x2c8] sm:$0xff]
        %v1911 = vld [vmem:[%s1820 + $0x2d0] sm:$0xff]
        %v1912 = vld [vmem:[%s1820 + $0x2d8] sm:$0xff]
        %v1913 = vld [vmem:[%s1820 + $0x2e0] sm:$0xff]
        %v1914 = vld [vmem:[%s1820 + $0x2e8] sm:$0xff]
        %v1915 = vld [vmem:[%s1820 + $0x2f0] sm:$0xff]
        %v1916 = vld [vmem:[%s1820 + $0x2f8] sm:$0xff]
        %v1917 = vld [vmem:[%s1820 + $0x300] sm:$0xff]
        %v1918 = vld [vmem:[%s1820 + $0x308] sm:$0xff]
        %v1919 = vld [vmem:[%s1820 + $0x310] sm:$0xff]
        %v1920 = vld [vmem:[%s1820 + $0x318] sm:$0xff]
        %v1921 = vld [vmem:[%s1820 + $0x320] sm:$0xff]
        %v1922 = vld [vmem:[%s1820 + $0x328] sm:$0xff]
        %v1923 = vld [vmem:[%s1820 + $0x330] sm:$0xff]
        %v1924 = vld [vmem:[%s1820 + $0x338] sm:$0xff]
        %v1925 = vld [vmem:[%s1820 + $0x340] sm:$0xff]
        %v1926 = vld [vmem:[%s1820 + $0x348] sm:$0xff]
        %v1927 = vld [vmem:[%s1820 + $0x350] sm:$0xff]
        %v1928 = vld [vmem:[%s1820 + $0x358] sm:$0xff]
        %v1929 = vld [vmem:[%s1820 + $0x360] sm:$0xff]
        %v1930 = vld [vmem:[%s1820 + $0x368] sm:$0xff]
        %v1931 = vld [vmem:[%s1820 + $0x370] sm:$0xff]
        %v1932 = vld [vmem:[%s1820 + $0x378] sm:$0xff]
        %v1933 = vld [vmem:[%s1820 + $0x380] sm:$0xff]
        %v1934 = vld [vmem:[%s1820 + $0x388] sm:$0xff]
        %v1935 = vld [vmem:[%s1820 + $0x390] sm:$0xff]
        %v1936 = vld [vmem:[%s1820 + $0x398] sm:$0xff]
        %v1937 = vld [vmem:[%s1820 + $0x3a0] sm:$0xff]
        %v1938 = vld [vmem:[%s1820 + $0x3a8] sm:$0xff]
        %v1939 = vld [vmem:[%s1820 + $0x3b0] sm:$0xff]
        %v1940 = vld [vmem:[%s1820 + $0x3b8] sm:$0xff]
        %v1941 = vld [vmem:[%s1820 + $0x3c0] sm:$0xff]
        %v1942 = vld [vmem:[%s1820 + $0x3c8] sm:$0xff]
        %v1943 = vld [vmem:[%s1820 + $0x3d0] sm:$0xff]
        %v1944 = vld [vmem:[%s1820 + $0x3d8] sm:$0xff]
        %v1945 = vld [vmem:[%s1820 + $0x3e0] sm:$0xff]
        %v1946 = vld [vmem:[%s1820 + $0x3e8] sm:$0xff]
        %v1947 = vld [vmem:[%s1820 + $0x3f0] sm:$0xff]
        %v1948 = vld [vmem:[%s1820 + $0x3f8] sm:$0xff]
        %v1949 = vld [vmem:[%s1820 + $0x400] sm:$0xff]
        %v1950 = vld [vmem:[%s1820 + $0x408] sm:$0xff]
        %v1951 = vld [vmem:[%s1820 + $0x410] sm:$0xff]
        %v1952 = vld [vmem:[%s1820 + $0x418] sm:$0xff]
        %v1953 = vld [vmem:[%s1820 + $0x420] sm:$0xff]
        %v1954 = vld [vmem:[%s1820 + $0x428] sm:$0xff]
        %v1955 = vld [vmem:[%s1820 + $0x430] sm:$0xff]
        %v1956 = vld [vmem:[%s1820 + $0x438] sm:$0xff]
        %v1957 = vld [vmem:[%s1820 + $0x440] sm:$0xff]
        %v1958 = vld [vmem:[%s1820 + $0x448] sm:$0xff]
        %v1959 = vld [vmem:[%s1820 + $0x450] sm:$0xff]
        %v1960 = vld [vmem:[%s1820 + $0x458] sm:$0xff]
        %v1961 = vld [vmem:[%s1820 + $0x460] sm:$0xff]
        %v1962 = vld [vmem:[%s1820 + $0x468] sm:$0xff]
        %v1963 = vld [vmem:[%s1820 + $0x470] sm:$0xff]
        %v1964 = vld [vmem:[%s1820 + $0x478] sm:$0xff]
        %v1965 = vld [vmem:[%s1820 + $0x480] sm:$0xff]
        %v1966 = vld [vmem:[%s1820 + $0x488] sm:$0xff]
        %v1967 = vld [vmem:[%s1820 + $0x490] sm:$0xff]
        %v1968 = vld [vmem:[%s1820 + $0x498] sm:$0xff]
        %v1969 = vld [vmem:[%s1820 + $0x4a0] sm:$0xff]
        %v1970 = vld [vmem:[%s1820 + $0x4a8] sm:$0xff]
        %v1971 = vld [vmem:[%s1820 + $0x4b0] sm:$0xff]
        %v1972 = vld [vmem:[%s1820 + $0x4b8] sm:$0xff]
        %v1973 = vld [vmem:[%s1820 + $0x4c0] sm:$0xff]
        %v1974 = vld [vmem:[%s1820 + $0x4c8] sm:$0xff]
        %v1975 = vld [vmem:[%s1820 + $0x4d0] sm:$0xff]
        %v1976 = vld [vmem:[%s1820 + $0x4d8] sm:$0xff]
        %v1977 = vld [vmem:[%s1820 + $0x4e0] sm:$0xff]
        %v1978 = vld [vmem:[%s1820 + $0x4e8] sm:$0xff]
        %v1979 = vld [vmem:[%s1820 + $0x4f0] sm:$0xff]
        %v1980 = vld [vmem:[%s1820 + $0x4f8] sm:$0xff]
        %v1981 = vld [vmem:[%s1820 + $0x500] sm:$0xff]
        %v1982 = vld [vmem:[%s1820 + $0x508] sm:$0xff]
        %v1983 = vld [vmem:[%s1820 + $0x510] sm:$0xff]
        %v1984 = vld [vmem:[%s1820 + $0x518] sm:$0xff]
        %v1985 = vld [vmem:[%s1820 + $0x520] sm:$0xff]
        %v1986 = vld [vmem:[%s1820 + $0x528] sm:$0xff]
        %v1987 = vld [vmem:[%s1820 + $0x530] sm:$0xff]
        %v1988 = vld [vmem:[%s1820 + $0x538] sm:$0xff]
        %v1989 = vld [vmem:[%s1820 + $0x540] sm:$0xff]
        %v1990 = vld [vmem:[%s1820 + $0x548] sm:$0xff]
        %v1991 = vld [vmem:[%s1820 + $0x550] sm:$0xff]
        %v1992 = vld [vmem:[%s1820 + $0x558] sm:$0xff]
        %v1993 = vld [vmem:[%s1820 + $0x560] sm:$0xff]
        %v1994 = vld [vmem:[%s1820 + $0x568] sm:$0xff]
        %v1995 = vld [vmem:[%s1820 + $0x570] sm:$0xff]
        %v1996 = vld [vmem:[%s1820 + $0x578] sm:$0xff]
        %v1997 = vld [vmem:[%s1820 + $0x580] sm:$0xff]
        %v1998 = vld [vmem:[%s1820 + $0x588] sm:$0xff]
        %v1999 = vld [vmem:[%s1820 + $0x590] sm:$0xff]
        %v2000 = vld [vmem:[%s1820 + $0x598] sm:$0xff]
        %v2001 = vld [vmem:[%s1820 + $0x5a0] sm:$0xff]
        %v2002 = vld [vmem:[%s1820 + $0x5a8] sm:$0xff]
        %v2003 = vld [vmem:[%s1820 + $0x5b0] sm:$0xff]
        %v2004 = vld [vmem:[%s1820 + $0x5b8] sm:$0xff]
        %v2005 = vld [vmem:[%s1820 + $0x5c0] sm:$0xff]
        %v2006 = vld [vmem:[%s1820 + $0x5c8] sm:$0xff]
        %v2007 = vld [vmem:[%s1820 + $0x5d0] sm:$0xff]
        %v2008 = vld [vmem:[%s1820 + $0x5d8] sm:$0xff]
        %v2009 = vld [vmem:[%s1820 + $0x5e0] sm:$0xff]
        %v2010 = vld [vmem:[%s1820 + $0x5e8] sm:$0xff]
        %v2011 = vld [vmem:[%s1820 + $0x5f0] sm:$0xff]
        %v2012 = vld [vmem:[%s1820 + $0x5f8] sm:$0xff]
        %v2013 = vld [vmem:[%s1820 + $0x600] sm:$0xff]
        %v2014 = vld [vmem:[%s1820 + $0x608] sm:$0xff]
        %v2015 = vld [vmem:[%s1820 + $0x610] sm:$0xff]
        %v2016 = vld [vmem:[%s1820 + $0x618] sm:$0xff]
        %v2017 = vld [vmem:[%s1820 + $0x620] sm:$0xff]
        %v2018 = vld [vmem:[%s1820 + $0x628] sm:$0xff]
        %v2019 = vld [vmem:[%s1820 + $0x630] sm:$0xff]
        %v2020 = vld [vmem:[%s1820 + $0x638] sm:$0xff]
        %v2021 = vld [vmem:[%s1820 + $0x640] sm:$0xff]
        %v2022 = vld [vmem:[%s1820 + $0x648] sm:$0xff]
        %v2023 = vld [vmem:[%s1820 + $0x650] sm:$0xff]
        %v2024 = vld [vmem:[%s1820 + $0x658] sm:$0xff]
        %v2025 = vld [vmem:[%s1820 + $0x660] sm:$0xff]
        %v2026 = vld [vmem:[%s1820 + $0x668] sm:$0xff]
        %v2027 = vld [vmem:[%s1820 + $0x670] sm:$0xff]
        %v2028 = vld [vmem:[%s1820 + $0x678] sm:$0xff]
        %v2029 = vld [vmem:[%s1820 + $0x680] sm:$0xff]
        %v2030 = vld [vmem:[%s1820 + $0x688] sm:$0xff]
        %v2031 = vld [vmem:[%s1820 + $0x690] sm:$0xff]
        %v2032 = vld [vmem:[%s1820 + $0x698] sm:$0xff]
        %v2033 = vld [vmem:[%s1820 + $0x6a0] sm:$0xff]
        %v2034 = vld [vmem:[%s1820 + $0x6a8] sm:$0xff]
        %v2035 = vld [vmem:[%s1820 + $0x6b0] sm:$0xff]
        %v2036 = vld [vmem:[%s1820 + $0x6b8] sm:$0xff]
        %v2037 = vld [vmem:[%s1820 + $0x6c0] sm:$0xff]
        %v2038 = vld [vmem:[%s1820 + $0x6c8] sm:$0xff]
        %v2039 = vld [vmem:[%s1820 + $0x6d0] sm:$0xff]
        %v2040 = vld [vmem:[%s1820 + $0x6d8] sm:$0xff]
        %v2041 = vld [vmem:[%s1820 + $0x6e0] sm:$0xff]
        %v2042 = vld [vmem:[%s1820 + $0x6e8] sm:$0xff]
        %v2043 = vld [vmem:[%s1820 + $0x6f0] sm:$0xff]
        %v2044 = vld [vmem:[%s1820 + $0x6f8] sm:$0xff]
        %v2045 = vld [vmem:[%s1820 + $0x700] sm:$0xff]
        %v2046 = vld [vmem:[%s1820 + $0x708] sm:$0xff]
        %v2047 = vld [vmem:[%s1820 + $0x710] sm:$0xff]
        %v2048 = vld [vmem:[%s1820 + $0x718] sm:$0xff]
        %v2049 = vld [vmem:[%s1820 + $0x720] sm:$0xff]
        %v2050 = vld [vmem:[%s1820 + $0x728] sm:$0xff]
        %v2051 = vld [vmem:[%s1820 + $0x730] sm:$0xff]
        %v2052 = vld [vmem:[%s1820 + $0x738] sm:$0xff]
        %v2053 = vld [vmem:[%s1820 + $0x740] sm:$0xff]
        %v2054 = vld [vmem:[%s1820 + $0x748] sm:$0xff]
        %v2055 = vld [vmem:[%s1820 + $0x750] sm:$0xff]
        %v2056 = vld [vmem:[%s1820 + $0x758] sm:$0xff]
        %v2057 = vld [vmem:[%s1820 + $0x760] sm:$0xff]
        %v2058 = vld [vmem:[%s1820 + $0x768] sm:$0xff]
        %v2059 = vld [vmem:[%s1820 + $0x770] sm:$0xff]
        %v2060 = vld [vmem:[%s1820 + $0x778] sm:$0xff]
        %v2061 = vld [vmem:[%s1820 + $0x780] sm:$0xff]
        %v2062 = vld [vmem:[%s1820 + $0x788] sm:$0xff]
        %v2063 = vld [vmem:[%s1820 + $0x790] sm:$0xff]
        %v2064 = vld [vmem:[%s1820 + $0x798] sm:$0xff]
        %v2065 = vld [vmem:[%s1820 + $0x7a0] sm:$0xff]
        %v2066 = vld [vmem:[%s1820 + $0x7a8] sm:$0xff]
        %v2067 = vld [vmem:[%s1820 + $0x7b0] sm:$0xff]
        %v2068 = vld [vmem:[%s1820 + $0x7b8] sm:$0xff]
        %v2069 = vld [vmem:[%s1820 + $0x7c0] sm:$0xff]
        %v2070 = vld [vmem:[%s1820 + $0x7c8] sm:$0xff]
        %v2071 = vld [vmem:[%s1820 + $0x7d0] sm:$0xff]
        %v2072 = vld [vmem:[%s1820 + $0x7d8] sm:$0xff]
        %v2073 = vld [vmem:[%s1820 + $0x7e0] sm:$0xff]
        %v2074 = vld [vmem:[%s1820 + $0x7e8] sm:$0xff]
        %v2075 = vld [vmem:[%s1820 + $0x7f0] sm:$0xff]
        %v2076 = vld [vmem:[%s1820 + $0x7f8] sm:$0xff]
        %2077 = vmatprep.subr.mxu0 %v1882
        %2078 = vmatpush1.msra.mxu0 %v1881
        %2079 = vmatprep.subr.mxu0 %v1878
        %2080 = vmatpush1.msra.mxu0 %v1877
        %2081 = vmatprep.subr.mxu0 %v1874
        %2082 = vmatpush1.msra.mxu0 %v1873
        %2083 = vmatprep.subr.mxu0 %v1870
        %2084 = vmatpush1.msra.mxu0 %v1869
        %2085 = vmatprep.subr.mxu0 %v1866
        %2086 = vmatpush1.msra.mxu0 %v1865
        %2087 = vmatprep.subr.mxu0 %v1862
        %2088 = vmatpush1.msra.mxu0 %v1861
        %2089 = vmatprep.subr.mxu0 %v1858
        %2090 = vmatpush1.msra.mxu0 %v1857
        %2091 = vmatprep.subr.mxu0 %v1854
        %2092 = vmatpush1.msra.mxu0 %v1853
        %2093 = vmatprep.subr.mxu0 %v1850
        %2094 = vmatpush1.msra.mxu0 %v1849
        %2095 = vmatprep.subr.mxu0 %v1846
        %2096 = vmatpush1.msra.mxu0 %v1845
        %2097 = vmatprep.subr.mxu0 %v1842
        %2098 = vmatpush1.msra.mxu0 %v1841
        %2099 = vmatprep.subr.mxu0 %v1838
        %2100 = vmatpush1.msra.mxu0 %v1837
        %2101 = vmatprep.subr.mxu0 %v1834
        %2102 = vmatpush1.msra.mxu0 %v1833
        %2103 = vmatprep.subr.mxu0 %v1830
        %2104 = vmatpush1.msra.mxu0 %v1829
        %2105 = vmatprep.subr.mxu0 %v1826
        %2106 = vmatpush1.msra.mxu0 %v1825
        %2107 = vmatprep.subr.mxu0 %v1822
        %2108 = vmatpush1.msra.mxu0 %v1821
        %2109 = vmatprep.subr.mxu0 %v1946
        %2110 = vmatpush2.msra.mxu0 %v1945
        %2111 = vmatprep.subr.mxu0 %v1942
        %2112 = vmatpush2.msra.mxu0 %v1941
        %2113 = vmatprep.subr.mxu0 %v1938
        %2114 = vmatpush2.msra.mxu0 %v1937
        %2115 = vmatprep.subr.mxu0 %v1934
        %2116 = vmatpush2.msra.mxu0 %v1933
        %2117 = vmatprep.subr.mxu0 %v1930
        %2118 = vmatpush2.msra.mxu0 %v1929
        %2119 = vmatprep.subr.mxu0 %v1926
        %2120 = vmatpush2.msra.mxu0 %v1925
        %2121 = vmatprep.subr.mxu0 %v1922
        %2122 = vmatpush2.msra.mxu0 %v1921
        %2123 = vmatprep.subr.mxu0 %v1918
        %2124 = vmatpush2.msra.mxu0 %v1917
        %2125 = vmatprep.subr.mxu0 %v1914
        %2126 = vmatpush2.msra.mxu0 %v1913
        %2127 = vmatprep.subr.mxu0 %v1910
        %2128 = vmatpush2.msra.mxu0 %v1909
        %2129 = vmatprep.subr.mxu0 %v1906
        %2130 = vmatpush2.msra.mxu0 %v1905
        %2131 = vmatprep.subr.mxu0 %v1902
        %2132 = vmatpush2.msra.mxu0 %v1901
        %2133 = vmatprep.subr.mxu0 %v1898
        %2134 = vmatpush2.msra.mxu0 %v1897
        %2135 = vmatprep.subr.mxu0 %v1894
        %2136 = vmatpush2.msra.mxu0 %v1893
        %2137 = vmatprep.subr.mxu0 %v1890
        %2138 = vmatpush2.msra.mxu0 %v1889
        %2139 = vmatprep.subr.mxu0 %v1886
        %2140 = vmatpush2.msra.mxu0 %v1885
        %2141 = vmatprep.mubr.f32.mxu0 %v1452
        %2142 = vmatmul.mubr.f32.gmra.mxu0 %v1451
        %v2143 = vpop.f32.mrf.mxu0
        %v2144 = vadd.f32 0.0, %v2143
        %v2145 = vpop.f32.mrf.mxu0
        %v2146 = vadd.f32 0.0, %v2145
        %2147 = vmatprep.mubr.f32.mxu0 %v1456
        %2148 = vmatmul.mubr.f32.gmra.mxu0 %v1455
        %v2149 = vpop.f32.mrf.mxu0
        %v2150 = vadd.f32 0.0, %v2149
        %v2151 = vpop.f32.mrf.mxu0
        %v2152 = vadd.f32 0.0, %v2151
        %2153 = vmatprep.mubr.f32.mxu0 %v1460
        %2154 = vmatmul.mubr.f32.gmra.mxu0 %v1459
        %v2155 = vpop.f32.mrf.mxu0
        %v2156 = vadd.f32 0.0, %v2155
        %v2157 = vpop.f32.mrf.mxu0
        %v2158 = vadd.f32 0.0, %v2157
        %2159 = vmatprep.mubr.f32.mxu0 %v1464
        %2160 = vmatmul.mubr.f32.gmra.mxu0 %v1463
        %v2161 = vpop.f32.mrf.mxu0
        %v2162 = vadd.f32 0.0, %v2161
        %v2163 = vpop.f32.mrf.mxu0
        %v2164 = vadd.f32 0.0, %v2163
        %2165 = vdwg.mxu0
        %2166 = vmatprep.subr.mxu0 %v2010
        %2167 = vmatpush1.msra.mxu0 %v2009
        %2168 = vmatprep.subr.mxu0 %v2006
        %2169 = vmatpush1.msra.mxu0 %v2005
        %2170 = vmatprep.subr.mxu0 %v2002
        %2171 = vmatpush1.msra.mxu0 %v2001
        %2172 = vmatprep.subr.mxu0 %v1998
        %2173 = vmatpush1.msra.mxu0 %v1997
        %2174 = vmatprep.subr.mxu0 %v1994
        %2175 = vmatpush1.msra.mxu0 %v1993
        %2176 = vmatprep.subr.mxu0 %v1990
        %2177 = vmatpush1.msra.mxu0 %v1989
        %2178 = vmatprep.subr.mxu0 %v1986
        %2179 = vmatpush1.msra.mxu0 %v1985
        %2180 = vmatprep.subr.mxu0 %v1982
        %2181 = vmatpush1.msra.mxu0 %v1981
        %2182 = vmatprep.subr.mxu0 %v1978
        %2183 = vmatpush1.msra.mxu0 %v1977
        %2184 = vmatprep.subr.mxu0 %v1974
        %2185 = vmatpush1.msra.mxu0 %v1973
        %2186 = vmatprep.subr.mxu0 %v1970
        %2187 = vmatpush1.msra.mxu0 %v1969
        %2188 = vmatprep.subr.mxu0 %v1966
        %2189 = vmatpush1.msra.mxu0 %v1965
        %2190 = vmatprep.subr.mxu0 %v1962
        %2191 = vmatpush1.msra.mxu0 %v1961
        %2192 = vmatprep.subr.mxu0 %v1958
        %2193 = vmatpush1.msra.mxu0 %v1957
        %2194 = vmatprep.subr.mxu0 %v1954
        %2195 = vmatpush1.msra.mxu0 %v1953
        %2196 = vmatprep.subr.mxu0 %v1950
        %2197 = vmatpush1.msra.mxu0 %v1949
        %2198 = vmatprep.subr.mxu0 %v2074
        %2199 = vmatpush2.msra.mxu0 %v2073
        %2200 = vmatprep.subr.mxu0 %v2070
        %2201 = vmatpush2.msra.mxu0 %v2069
        %2202 = vmatprep.subr.mxu0 %v2066
        %2203 = vmatpush2.msra.mxu0 %v2065
        %2204 = vmatprep.subr.mxu0 %v2062
        %2205 = vmatpush2.msra.mxu0 %v2061
        %2206 = vmatprep.subr.mxu0 %v2058
        %2207 = vmatpush2.msra.mxu0 %v2057
        %2208 = vmatprep.subr.mxu0 %v2054
        %2209 = vmatpush2.msra.mxu0 %v2053
        %2210 = vmatprep.subr.mxu0 %v2050
        %2211 = vmatpush2.msra.mxu0 %v2049
        %2212 = vmatprep.subr.mxu0 %v2046
        %2213 = vmatpush2.msra.mxu0 %v2045
        %2214 = vmatprep.subr.mxu0 %v2042
        %2215 = vmatpush2.msra.mxu0 %v2041
        %2216 = vmatprep.subr.mxu0 %v2038
        %2217 = vmatpush2.msra.mxu0 %v2037
        %2218 = vmatprep.subr.mxu0 %v2034
        %2219 = vmatpush2.msra.mxu0 %v2033
        %2220 = vmatprep.subr.mxu0 %v2030
        %2221 = vmatpush2.msra.mxu0 %v2029
        %2222 = vmatprep.subr.mxu0 %v2026
        %2223 = vmatpush2.msra.mxu0 %v2025
        %2224 = vmatprep.subr.mxu0 %v2022
        %2225 = vmatpush2.msra.mxu0 %v2021
        %2226 = vmatprep.subr.mxu0 %v2018
        %2227 = vmatpush2.msra.mxu0 %v2017
        %2228 = vmatprep.subr.mxu0 %v2014
        %2229 = vmatpush2.msra.mxu0 %v2013
        %2230 = vmatprep.mubr.f32.mxu0 %v1454
        %2231 = vmatmul.mubr.f32.gmra.mxu0 %v1453
        %v2232 = vpop.f32.mrf.mxu0
        %v2233 = vadd.f32 %v2144, %v2232
        %v2234 = vpop.f32.mrf.mxu0
        %v2235 = vadd.f32 %v2146, %v2234
        %2236 = vmatprep.mubr.f32.mxu0 %v1458
        %2237 = vmatmul.mubr.f32.gmra.mxu0 %v1457
        %v2238 = vpop.f32.mrf.mxu0
        %v2239 = vadd.f32 %v2150, %v2238
        %v2240 = vpop.f32.mrf.mxu0
        %v2241 = vadd.f32 %v2152, %v2240
        %2242 = vmatprep.mubr.f32.mxu0 %v1462
        %2243 = vmatmul.mubr.f32.gmra.mxu0 %v1461
        %v2244 = vpop.f32.mrf.mxu0
        %v2245 = vadd.f32 %v2156, %v2244
        %v2246 = vpop.f32.mrf.mxu0
        %v2247 = vadd.f32 %v2158, %v2246
        %2248 = vmatprep.mubr.f32.mxu0 %v1466
        %2249 = vmatmul.mubr.f32.gmra.mxu0 %v1465
        %v2250 = vpop.f32.mrf.mxu0
        %v2251 = vadd.f32 %v2162, %v2250
        %v2252 = vpop.f32.mrf.mxu0
        %v2253 = vadd.f32 %v2164, %v2252
        %2254 = vdwg.mxu0
        %2255 = vmatprep.subr.mxu0 %v1884
        %2256 = vmatpush1.msra.mxu0 %v1883
        %2257 = vmatprep.subr.mxu0 %v1880
        %2258 = vmatpush1.msra.mxu0 %v1879
        %2259 = vmatprep.subr.mxu0 %v1876
        %2260 = vmatpush1.msra.mxu0 %v1875
        %2261 = vmatprep.subr.mxu0 %v1872
        %2262 = vmatpush1.msra.mxu0 %v1871
        %2263 = vmatprep.subr.mxu0 %v1868
        %2264 = vmatpush1.msra.mxu0 %v1867
        %2265 = vmatprep.subr.mxu0 %v1864
        %2266 = vmatpush1.msra.mxu0 %v1863
        %2267 = vmatprep.subr.mxu0 %v1860
        %2268 = vmatpush1.msra.mxu0 %v1859
        %2269 = vmatprep.subr.mxu0 %v1856
        %2270 = vmatpush1.msra.mxu0 %v1855
        %2271 = vmatprep.subr.mxu0 %v1852
        %2272 = vmatpush1.msra.mxu0 %v1851
        %2273 = vmatprep.subr.mxu0 %v1848
        %2274 = vmatpush1.msra.mxu0 %v1847
        %2275 = vmatprep.subr.mxu0 %v1844
        %2276 = vmatpush1.msra.mxu0 %v1843
        %2277 = vmatprep.subr.mxu0 %v1840
        %2278 = vmatpush1.msra.mxu0 %v1839
        %2279 = vmatprep.subr.mxu0 %v1836
        %2280 = vmatpush1.msra.mxu0 %v1835
        %2281 = vmatprep.subr.mxu0 %v1832
        %2282 = vmatpush1.msra.mxu0 %v1831
        %2283 = vmatprep.subr.mxu0 %v1828
        %2284 = vmatpush1.msra.mxu0 %v1827
        %2285 = vmatprep.subr.mxu0 %v1824
        %2286 = vmatpush1.msra.mxu0 %v1823
        %2287 = vmatprep.subr.mxu0 %v1948
        %2288 = vmatpush2.msra.mxu0 %v1947
        %2289 = vmatprep.subr.mxu0 %v1944
        %2290 = vmatpush2.msra.mxu0 %v1943
        %2291 = vmatprep.subr.mxu0 %v1940
        %2292 = vmatpush2.msra.mxu0 %v1939
        %2293 = vmatprep.subr.mxu0 %v1936
        %2294 = vmatpush2.msra.mxu0 %v1935
        %2295 = vmatprep.subr.mxu0 %v1932
        %2296 = vmatpush2.msra.mxu0 %v1931
        %2297 = vmatprep.subr.mxu0 %v1928
        %2298 = vmatpush2.msra.mxu0 %v1927
        %2299 = vmatprep.subr.mxu0 %v1924
        %2300 = vmatpush2.msra.mxu0 %v1923
        %2301 = vmatprep.subr.mxu0 %v1920
        %2302 = vmatpush2.msra.mxu0 %v1919
        %2303 = vmatprep.subr.mxu0 %v1916
        %2304 = vmatpush2.msra.mxu0 %v1915
        %2305 = vmatprep.subr.mxu0 %v1912
        %2306 = vmatpush2.msra.mxu0 %v1911
        %2307 = vmatprep.subr.mxu0 %v1908
        %2308 = vmatpush2.msra.mxu0 %v1907
        %2309 = vmatprep.subr.mxu0 %v1904
        %2310 = vmatpush2.msra.mxu0 %v1903
        %2311 = vmatprep.subr.mxu0 %v1900
        %2312 = vmatpush2.msra.mxu0 %v1899
        %2313 = vmatprep.subr.mxu0 %v1896
        %2314 = vmatpush2.msra.mxu0 %v1895
        %2315 = vmatprep.subr.mxu0 %v1892
        %2316 = vmatpush2.msra.mxu0 %v1891
        %2317 = vmatprep.subr.mxu0 %v1888
        %2318 = vmatpush2.msra.mxu0 %v1887
        %2319 = vmatprep.mubr.f32.mxu0 %v1452
        %2320 = vmatmul.mubr.f32.gmra.mxu0 %v1451
        %v2321 = vpop.f32.mrf.mxu0
        %v2322 = vadd.f32 0.0, %v2321
        %v2323 = vpop.f32.mrf.mxu0
        %v2324 = vadd.f32 0.0, %v2323
        %2325 = vmatprep.mubr.f32.mxu0 %v1456
        %2326 = vmatmul.mubr.f32.gmra.mxu0 %v1455
        %v2327 = vpop.f32.mrf.mxu0
        %v2328 = vadd.f32 0.0, %v2327
        %v2329 = vpop.f32.mrf.mxu0
        %v2330 = vadd.f32 0.0, %v2329
        %2331 = vmatprep.mubr.f32.mxu0 %v1460
        %2332 = vmatmul.mubr.f32.gmra.mxu0 %v1459
        %v2333 = vpop.f32.mrf.mxu0
        %v2334 = vadd.f32 0.0, %v2333
        %v2335 = vpop.f32.mrf.mxu0
        %v2336 = vadd.f32 0.0, %v2335
        %2337 = vmatprep.mubr.f32.mxu0 %v1464
        %2338 = vmatmul.mubr.f32.gmra.mxu0 %v1463
        %v2339 = vpop.f32.mrf.mxu0
        %v2340 = vadd.f32 0.0, %v2339
        %v2341 = vpop.f32.mrf.mxu0
        %v2342 = vadd.f32 0.0, %v2341
        %2343 = vdwg.mxu0
        %2344 = vmatprep.subr.mxu0 %v2012
        %2345 = vmatpush1.msra.mxu0 %v2011
        %2346 = vmatprep.subr.mxu0 %v2008
        %2347 = vmatpush1.msra.mxu0 %v2007
        %2348 = vmatprep.subr.mxu0 %v2004
        %2349 = vmatpush1.msra.mxu0 %v2003
        %2350 = vmatprep.subr.mxu0 %v2000
        %2351 = vmatpush1.msra.mxu0 %v1999
        %2352 = vmatprep.subr.mxu0 %v1996
        %2353 = vmatpush1.msra.mxu0 %v1995
        %2354 = vmatprep.subr.mxu0 %v1992
        %2355 = vmatpush1.msra.mxu0 %v1991
        %2356 = vmatprep.subr.mxu0 %v1988
        %2357 = vmatpush1.msra.mxu0 %v1987
        %2358 = vmatprep.subr.mxu0 %v1984
        %2359 = vmatpush1.msra.mxu0 %v1983
        %2360 = vmatprep.subr.mxu0 %v1980
        %2361 = vmatpush1.msra.mxu0 %v1979
        %2362 = vmatprep.subr.mxu0 %v1976
        %2363 = vmatpush1.msra.mxu0 %v1975
        %2364 = vmatprep.subr.mxu0 %v1972
        %2365 = vmatpush1.msra.mxu0 %v1971
        %2366 = vmatprep.subr.mxu0 %v1968
        %2367 = vmatpush1.msra.mxu0 %v1967
        %2368 = vmatprep.subr.mxu0 %v1964
        %2369 = vmatpush1.msra.mxu0 %v1963
        %2370 = vmatprep.subr.mxu0 %v1960
        %2371 = vmatpush1.msra.mxu0 %v1959
        %2372 = vmatprep.subr.mxu0 %v1956
        %2373 = vmatpush1.msra.mxu0 %v1955
        %2374 = vmatprep.subr.mxu0 %v1952
        %2375 = vmatpush1.msra.mxu0 %v1951
        %2376 = vmatprep.subr.mxu0 %v2076
        %2377 = vmatpush2.msra.mxu0 %v2075
        %2378 = vmatprep.subr.mxu0 %v2072
        %2379 = vmatpush2.msra.mxu0 %v2071
        %2380 = vmatprep.subr.mxu0 %v2068
        %2381 = vmatpush2.msra.mxu0 %v2067
        %2382 = vmatprep.subr.mxu0 %v2064
        %2383 = vmatpush2.msra.mxu0 %v2063
        %2384 = vmatprep.subr.mxu0 %v2060
        %2385 = vmatpush2.msra.mxu0 %v2059
        %2386 = vmatprep.subr.mxu0 %v2056
        %2387 = vmatpush2.msra.mxu0 %v2055
        %2388 = vmatprep.subr.mxu0 %v2052
        %2389 = vmatpush2.msra.mxu0 %v2051
        %2390 = vmatprep.subr.mxu0 %v2048
        %2391 = vmatpush2.msra.mxu0 %v2047
        %2392 = vmatprep.subr.mxu0 %v2044
        %2393 = vmatpush2.msra.mxu0 %v2043
        %2394 = vmatprep.subr.mxu0 %v2040
        %2395 = vmatpush2.msra.mxu0 %v2039
        %2396 = vmatprep.subr.mxu0 %v2036
        %2397 = vmatpush2.msra.mxu0 %v2035
        %2398 = vmatprep.subr.mxu0 %v2032
        %2399 = vmatpush2.msra.mxu0 %v2031
        %2400 = vmatprep.subr.mxu0 %v2028
        %2401 = vmatpush2.msra.mxu0 %v2027
        %2402 = vmatprep.subr.mxu0 %v2024
        %2403 = vmatpush2.msra.mxu0 %v2023
        %2404 = vmatprep.subr.mxu0 %v2020
        %2405 = vmatpush2.msra.mxu0 %v2019
        %2406 = vmatprep.subr.mxu0 %v2016
        %2407 = vmatpush2.msra.mxu0 %v2015
        %2408 = vmatprep.mubr.f32.mxu0 %v1454
        %2409 = vmatmul.mubr.f32.gmra.mxu0 %v1453
        %v2410 = vpop.f32.mrf.mxu0
        %v2411 = vadd.f32 %v2322, %v2410
        %v2412 = vpop.f32.mrf.mxu0
        %v2413 = vadd.f32 %v2324, %v2412
        %2414 = vmatprep.mubr.f32.mxu0 %v1458
        %2415 = vmatmul.mubr.f32.gmra.mxu0 %v1457
        %v2416 = vpop.f32.mrf.mxu0
        %v2417 = vadd.f32 %v2328, %v2416
        %v2418 = vpop.f32.mrf.mxu0
        %v2419 = vadd.f32 %v2330, %v2418
        %2420 = vmatprep.mubr.f32.mxu0 %v1462
        %2421 = vmatmul.mubr.f32.gmra.mxu0 %v1461
        %v2422 = vpop.f32.mrf.mxu0
        %v2423 = vadd.f32 %v2334, %v2422
        %v2424 = vpop.f32.mrf.mxu0
        %v2425 = vadd.f32 %v2336, %v2424
        %2426 = vmatprep.mubr.f32.mxu0 %v1466
        %2427 = vmatmul.mubr.f32.gmra.mxu0 %v1465
        %v2428 = vpop.f32.mrf.mxu0
        %v2429 = vadd.f32 %v2340, %v2428
        %v2430 = vpop.f32.mrf.mxu0
        %v2431 = vadd.f32 %v2342, %v2430
        %2432 = vdwg.mxu0
        %2433 = vmatprep.subr.mxu0 %v1625
        %2434 = vmatpush1.msra.mxu0 %v1624
        %2435 = vmatprep.subr.mxu0 %v1621
        %2436 = vmatpush1.msra.mxu0 %v1620
        %2437 = vmatprep.subr.mxu0 %v1617
        %2438 = vmatpush1.msra.mxu0 %v1616
        %2439 = vmatprep.subr.mxu0 %v1613
        %2440 = vmatpush1.msra.mxu0 %v1612
        %2441 = vmatprep.subr.mxu0 %v1609
        %2442 = vmatpush1.msra.mxu0 %v1608
        %2443 = vmatprep.subr.mxu0 %v1605
        %2444 = vmatpush1.msra.mxu0 %v1604
        %2445 = vmatprep.subr.mxu0 %v1601
        %2446 = vmatpush1.msra.mxu0 %v1600
        %2447 = vmatprep.subr.mxu0 %v1597
        %2448 = vmatpush1.msra.mxu0 %v1596
        %2449 = vmatprep.subr.mxu0 %v1593
        %2450 = vmatpush1.msra.mxu0 %v1592
        %2451 = vmatprep.subr.mxu0 %v1589
        %2452 = vmatpush1.msra.mxu0 %v1588
        %2453 = vmatprep.subr.mxu0 %v1585
        %2454 = vmatpush1.msra.mxu0 %v1584
        %2455 = vmatprep.subr.mxu0 %v1581
        %2456 = vmatpush1.msra.mxu0 %v1580
        %2457 = vmatprep.subr.mxu0 %v1577
        %2458 = vmatpush1.msra.mxu0 %v1576
        %2459 = vmatprep.subr.mxu0 %v1573
        %2460 = vmatpush1.msra.mxu0 %v1572
        %2461 = vmatprep.subr.mxu0 %v1569
        %2462 = vmatpush1.msra.mxu0 %v1568
        %2463 = vmatprep.subr.mxu0 %v1565
        %2464 = vmatpush1.msra.mxu0 %v1564
        %2465 = vmatprep.subr.mxu0 %v1689
        %2466 = vmatpush2.msra.mxu0 %v1688
        %2467 = vmatprep.subr.mxu0 %v1685
        %2468 = vmatpush2.msra.mxu0 %v1684
        %2469 = vmatprep.subr.mxu0 %v1681
        %2470 = vmatpush2.msra.mxu0 %v1680
        %2471 = vmatprep.subr.mxu0 %v1677
        %2472 = vmatpush2.msra.mxu0 %v1676
        %2473 = vmatprep.subr.mxu0 %v1673
        %2474 = vmatpush2.msra.mxu0 %v1672
        %2475 = vmatprep.subr.mxu0 %v1669
        %2476 = vmatpush2.msra.mxu0 %v1668
        %2477 = vmatprep.subr.mxu0 %v1665
        %2478 = vmatpush2.msra.mxu0 %v1664
        %2479 = vmatprep.subr.mxu0 %v1661
        %2480 = vmatpush2.msra.mxu0 %v1660
        %2481 = vmatprep.subr.mxu0 %v1657
        %2482 = vmatpush2.msra.mxu0 %v1656
        %2483 = vmatprep.subr.mxu0 %v1653
        %2484 = vmatpush2.msra.mxu0 %v1652
        %2485 = vmatprep.subr.mxu0 %v1649
        %2486 = vmatpush2.msra.mxu0 %v1648
        %2487 = vmatprep.subr.mxu0 %v1645
        %2488 = vmatpush2.msra.mxu0 %v1644
        %2489 = vmatprep.subr.mxu0 %v1641
        %2490 = vmatpush2.msra.mxu0 %v1640
        %2491 = vmatprep.subr.mxu0 %v1637
        %2492 = vmatpush2.msra.mxu0 %v1636
        %2493 = vmatprep.subr.mxu0 %v1633
        %2494 = vmatpush2.msra.mxu0 %v1632
        %2495 = vmatprep.subr.mxu0 %v1629
        %2496 = vmatpush2.msra.mxu0 %v1628
        %2497 = vmatprep.mubr.f32.mxu0 %v1501
        %2498 = vmatmul.mubr.f32.gmra.mxu0 %v1500
        %v2499 = vpop.f32.mrf.mxu0
        %v2500 = vadd.f32 %v2233, %v2499
        %v2501 = vpop.f32.mrf.mxu0
        %v2502 = vadd.f32 %v2235, %v2501
        %2503 = vmatprep.mubr.f32.mxu0 %v1505
        %2504 = vmatmul.mubr.f32.gmra.mxu0 %v1504
        %v2505 = vpop.f32.mrf.mxu0
        %v2506 = vadd.f32 %v2239, %v2505
        %v2507 = vpop.f32.mrf.mxu0
        %v2508 = vadd.f32 %v2241, %v2507
        %2509 = vmatprep.mubr.f32.mxu0 %v1509
        %2510 = vmatmul.mubr.f32.gmra.mxu0 %v1508
        %v2511 = vpop.f32.mrf.mxu0
        %v2512 = vadd.f32 %v2245, %v2511
        %v2513 = vpop.f32.mrf.mxu0
        %v2514 = vadd.f32 %v2247, %v2513
        %2515 = vmatprep.mubr.f32.mxu0 %v1513
        %2516 = vmatmul.mubr.f32.gmra.mxu0 %v1512
        %v2517 = vpop.f32.mrf.mxu0
        %v2518 = vadd.f32 %v2251, %v2517
        %v2519 = vpop.f32.mrf.mxu0
        %v2520 = vadd.f32 %v2253, %v2519
        %2521 = vdwg.mxu0
        %2522 = vmatprep.subr.mxu0 %v1753
        %2523 = vmatpush1.msra.mxu0 %v1752
        %2524 = vmatprep.subr.mxu0 %v1749
        %2525 = vmatpush1.msra.mxu0 %v1748
        %2526 = vmatprep.subr.mxu0 %v1745
        %2527 = vmatpush1.msra.mxu0 %v1744
        %2528 = vmatprep.subr.mxu0 %v1741
        %2529 = vmatpush1.msra.mxu0 %v1740
        %2530 = vmatprep.subr.mxu0 %v1737
        %2531 = vmatpush1.msra.mxu0 %v1736
        %2532 = vmatprep.subr.mxu0 %v1733
        %2533 = vmatpush1.msra.mxu0 %v1732
        %2534 = vmatprep.subr.mxu0 %v1729
        %2535 = vmatpush1.msra.mxu0 %v1728
        %2536 = vmatprep.subr.mxu0 %v1725
        %2537 = vmatpush1.msra.mxu0 %v1724
        %2538 = vmatprep.subr.mxu0 %v1721
        %2539 = vmatpush1.msra.mxu0 %v1720
        %2540 = vmatprep.subr.mxu0 %v1717
        %2541 = vmatpush1.msra.mxu0 %v1716
        %2542 = vmatprep.subr.mxu0 %v1713
        %2543 = vmatpush1.msra.mxu0 %v1712
        %2544 = vmatprep.subr.mxu0 %v1709
        %2545 = vmatpush1.msra.mxu0 %v1708
        %2546 = vmatprep.subr.mxu0 %v1705
        %2547 = vmatpush1.msra.mxu0 %v1704
        %2548 = vmatprep.subr.mxu0 %v1701
        %2549 = vmatpush1.msra.mxu0 %v1700
        %2550 = vmatprep.subr.mxu0 %v1697
        %2551 = vmatpush1.msra.mxu0 %v1696
        %2552 = vmatprep.subr.mxu0 %v1693
        %2553 = vmatpush1.msra.mxu0 %v1692
        %2554 = vmatprep.subr.mxu0 %v1817
        %2555 = vmatpush2.msra.mxu0 %v1816
        %2556 = vmatprep.subr.mxu0 %v1813
        %2557 = vmatpush2.msra.mxu0 %v1812
        %2558 = vmatprep.subr.mxu0 %v1809
        %2559 = vmatpush2.msra.mxu0 %v1808
        %2560 = vmatprep.subr.mxu0 %v1805
        %2561 = vmatpush2.msra.mxu0 %v1804
        %2562 = vmatprep.subr.mxu0 %v1801
        %2563 = vmatpush2.msra.mxu0 %v1800
        %2564 = vmatprep.subr.mxu0 %v1797
        %2565 = vmatpush2.msra.mxu0 %v1796
        %2566 = vmatprep.subr.mxu0 %v1793
        %2567 = vmatpush2.msra.mxu0 %v1792
        %2568 = vmatprep.subr.mxu0 %v1789
        %2569 = vmatpush2.msra.mxu0 %v1788
        %2570 = vmatprep.subr.mxu0 %v1785
        %2571 = vmatpush2.msra.mxu0 %v1784
        %2572 = vmatprep.subr.mxu0 %v1781
        %2573 = vmatpush2.msra.mxu0 %v1780
        %2574 = vmatprep.subr.mxu0 %v1777
        %2575 = vmatpush2.msra.mxu0 %v1776
        %2576 = vmatprep.subr.mxu0 %v1773
        %2577 = vmatpush2.msra.mxu0 %v1772
        %2578 = vmatprep.subr.mxu0 %v1769
        %2579 = vmatpush2.msra.mxu0 %v1768
        %2580 = vmatprep.subr.mxu0 %v1765
        %2581 = vmatpush2.msra.mxu0 %v1764
        %2582 = vmatprep.subr.mxu0 %v1761
        %2583 = vmatpush2.msra.mxu0 %v1760
        %2584 = vmatprep.subr.mxu0 %v1757
        %2585 = vmatpush2.msra.mxu0 %v1756
        %2586 = vmatprep.mubr.f32.mxu0 %v1503
        %2587 = vmatmul.mubr.f32.gmra.mxu0 %v1502
        %v2588 = vpop.f32.mrf.mxu0
        %v2589 = vadd.f32 %v2500, %v2588
        %v2590 = vpop.f32.mrf.mxu0
        %v2591 = vadd.f32 %v2502, %v2590
        %2592 = vmatprep.mubr.f32.mxu0 %v1507
        %2593 = vmatmul.mubr.f32.gmra.mxu0 %v1506
        %v2594 = vpop.f32.mrf.mxu0
        %v2595 = vadd.f32 %v2506, %v2594
        %v2596 = vpop.f32.mrf.mxu0
        %v2597 = vadd.f32 %v2508, %v2596
        %2598 = vmatprep.mubr.f32.mxu0 %v1511
        %2599 = vmatmul.mubr.f32.gmra.mxu0 %v1510
        %v2600 = vpop.f32.mrf.mxu0
        %v2601 = vadd.f32 %v2512, %v2600
        %v2602 = vpop.f32.mrf.mxu0
        %v2603 = vadd.f32 %v2514, %v2602
        %2604 = vmatprep.mubr.f32.mxu0 %v1515
        %2605 = vmatmul.mubr.f32.gmra.mxu0 %v1514
        %v2606 = vpop.f32.mrf.mxu0
        %v2607 = vadd.f32 %v2518, %v2606
        %v2608 = vpop.f32.mrf.mxu0
        %v2609 = vadd.f32 %v2520, %v2608
        %2610 = vdwg.mxu0
        %2611 = vmatprep.subr.mxu0 %v1627
        %2612 = vmatpush1.msra.mxu0 %v1626
        %2613 = vmatprep.subr.mxu0 %v1623
        %2614 = vmatpush1.msra.mxu0 %v1622
        %2615 = vmatprep.subr.mxu0 %v1619
        %2616 = vmatpush1.msra.mxu0 %v1618
        %2617 = vmatprep.subr.mxu0 %v1615
        %2618 = vmatpush1.msra.mxu0 %v1614
        %2619 = vmatprep.subr.mxu0 %v1611
        %2620 = vmatpush1.msra.mxu0 %v1610
        %2621 = vmatprep.subr.mxu0 %v1607
        %2622 = vmatpush1.msra.mxu0 %v1606
        %2623 = vmatprep.subr.mxu0 %v1603
        %2624 = vmatpush1.msra.mxu0 %v1602
        %2625 = vmatprep.subr.mxu0 %v1599
        %2626 = vmatpush1.msra.mxu0 %v1598
        %2627 = vmatprep.subr.mxu0 %v1595
        %2628 = vmatpush1.msra.mxu0 %v1594
        %2629 = vmatprep.subr.mxu0 %v1591
        %2630 = vmatpush1.msra.mxu0 %v1590
        %2631 = vmatprep.subr.mxu0 %v1587
        %2632 = vmatpush1.msra.mxu0 %v1586
        %2633 = vmatprep.subr.mxu0 %v1583
        %2634 = vmatpush1.msra.mxu0 %v1582
        %2635 = vmatprep.subr.mxu0 %v1579
        %2636 = vmatpush1.msra.mxu0 %v1578
        %2637 = vmatprep.subr.mxu0 %v1575
        %2638 = vmatpush1.msra.mxu0 %v1574
        %2639 = vmatprep.subr.mxu0 %v1571
        %2640 = vmatpush1.msra.mxu0 %v1570
        %2641 = vmatprep.subr.mxu0 %v1567
        %2642 = vmatpush1.msra.mxu0 %v1566
        %2643 = vmatprep.subr.mxu0 %v1691
        %2644 = vmatpush2.msra.mxu0 %v1690
        %2645 = vmatprep.subr.mxu0 %v1687
        %2646 = vmatpush2.msra.mxu0 %v1686
        %2647 = vmatprep.subr.mxu0 %v1683
        %2648 = vmatpush2.msra.mxu0 %v1682
        %2649 = vmatprep.subr.mxu0 %v1679
        %2650 = vmatpush2.msra.mxu0 %v1678
        %2651 = vmatprep.subr.mxu0 %v1675
        %2652 = vmatpush2.msra.mxu0 %v1674
        %2653 = vmatprep.subr.mxu0 %v1671
        %2654 = vmatpush2.msra.mxu0 %v1670
        %2655 = vmatprep.subr.mxu0 %v1667
        %2656 = vmatpush2.msra.mxu0 %v1666
        %2657 = vmatprep.subr.mxu0 %v1663
        %2658 = vmatpush2.msra.mxu0 %v1662
        %2659 = vmatprep.subr.mxu0 %v1659
        %2660 = vmatpush2.msra.mxu0 %v1658
        %2661 = vmatprep.subr.mxu0 %v1655
        %2662 = vmatpush2.msra.mxu0 %v1654
        %2663 = vmatprep.subr.mxu0 %v1651
        %2664 = vmatpush2.msra.mxu0 %v1650
        %2665 = vmatprep.subr.mxu0 %v1647
        %2666 = vmatpush2.msra.mxu0 %v1646
        %2667 = vmatprep.subr.mxu0 %v1643
        %2668 = vmatpush2.msra.mxu0 %v1642
        %2669 = vmatprep.subr.mxu0 %v1639
        %2670 = vmatpush2.msra.mxu0 %v1638
        %2671 = vmatprep.subr.mxu0 %v1635
        %2672 = vmatpush2.msra.mxu0 %v1634
        %2673 = vmatprep.subr.mxu0 %v1631
        %2674 = vmatpush2.msra.mxu0 %v1630
        %2675 = vmatprep.mubr.f32.mxu0 %v1501
        %2676 = vmatmul.mubr.f32.gmra.mxu0 %v1500
        %v2677 = vpop.f32.mrf.mxu0
        %v2678 = vadd.f32 %v2411, %v2677
        %v2679 = vpop.f32.mrf.mxu0
        %v2680 = vadd.f32 %v2413, %v2679
        %2681 = vmatprep.mubr.f32.mxu0 %v1505
        %2682 = vmatmul.mubr.f32.gmra.mxu0 %v1504
        %v2683 = vpop.f32.mrf.mxu0
        %v2684 = vadd.f32 %v2417, %v2683
        %v2685 = vpop.f32.mrf.mxu0
        %v2686 = vadd.f32 %v2419, %v2685
        %2687 = vmatprep.mubr.f32.mxu0 %v1509
        %2688 = vmatmul.mubr.f32.gmra.mxu0 %v1508
        %v2689 = vpop.f32.mrf.mxu0
        %v2690 = vadd.f32 %v2423, %v2689
        %v2691 = vpop.f32.mrf.mxu0
        %v2692 = vadd.f32 %v2425, %v2691
        %2693 = vmatprep.mubr.f32.mxu0 %v1513
        %2694 = vmatmul.mubr.f32.gmra.mxu0 %v1512
        %v2695 = vpop.f32.mrf.mxu0
        %v2696 = vadd.f32 %v2429, %v2695
        %v2697 = vpop.f32.mrf.mxu0
        %v2698 = vadd.f32 %v2431, %v2697
        %2699 = vdwg.mxu0
        %2700 = vmatprep.subr.mxu0 %v1755
        %2701 = vmatpush1.msra.mxu0 %v1754
        %2702 = vmatprep.subr.mxu0 %v1751
        %2703 = vmatpush1.msra.mxu0 %v1750
        %2704 = vmatprep.subr.mxu0 %v1747
        %2705 = vmatpush1.msra.mxu0 %v1746
        %2706 = vmatprep.subr.mxu0 %v1743
        %2707 = vmatpush1.msra.mxu0 %v1742
        %2708 = vmatprep.subr.mxu0 %v1739
        %2709 = vmatpush1.msra.mxu0 %v1738
        %2710 = vmatprep.subr.mxu0 %v1735
        %2711 = vmatpush1.msra.mxu0 %v1734
        %2712 = vmatprep.subr.mxu0 %v1731
        %2713 = vmatpush1.msra.mxu0 %v1730
        %2714 = vmatprep.subr.mxu0 %v1727
        %2715 = vmatpush1.msra.mxu0 %v1726
        %2716 = vmatprep.subr.mxu0 %v1723
        %2717 = vmatpush1.msra.mxu0 %v1722
        %2718 = vmatprep.subr.mxu0 %v1719
        %2719 = vmatpush1.msra.mxu0 %v1718
        %2720 = vmatprep.subr.mxu0 %v1715
        %2721 = vmatpush1.msra.mxu0 %v1714
        %2722 = vmatprep.subr.mxu0 %v1711
        %2723 = vmatpush1.msra.mxu0 %v1710
        %2724 = vmatprep.subr.mxu0 %v1707
        %2725 = vmatpush1.msra.mxu0 %v1706
        %2726 = vmatprep.subr.mxu0 %v1703
        %2727 = vmatpush1.msra.mxu0 %v1702
        %2728 = vmatprep.subr.mxu0 %v1699
        %2729 = vmatpush1.msra.mxu0 %v1698
        %2730 = vmatprep.subr.mxu0 %v1695
        %2731 = vmatpush1.msra.mxu0 %v1694
        %2732 = vmatprep.subr.mxu0 %v1819
        %2733 = vmatpush2.msra.mxu0 %v1818
        %2734 = vmatprep.subr.mxu0 %v1815
        %2735 = vmatpush2.msra.mxu0 %v1814
        %2736 = vmatprep.subr.mxu0 %v1811
        %2737 = vmatpush2.msra.mxu0 %v1810
        %2738 = vmatprep.subr.mxu0 %v1807
        %2739 = vmatpush2.msra.mxu0 %v1806
        %2740 = vmatprep.subr.mxu0 %v1803
        %2741 = vmatpush2.msra.mxu0 %v1802
        %2742 = vmatprep.subr.mxu0 %v1799
        %2743 = vmatpush2.msra.mxu0 %v1798
        %2744 = vmatprep.subr.mxu0 %v1795
        %2745 = vmatpush2.msra.mxu0 %v1794
        %2746 = vmatprep.subr.mxu0 %v1791
        %2747 = vmatpush2.msra.mxu0 %v1790
        %2748 = vmatprep.subr.mxu0 %v1787
        %2749 = vmatpush2.msra.mxu0 %v1786
        %2750 = vmatprep.subr.mxu0 %v1783
        %2751 = vmatpush2.msra.mxu0 %v1782
        %2752 = vmatprep.subr.mxu0 %v1779
        %2753 = vmatpush2.msra.mxu0 %v1778
        %2754 = vmatprep.subr.mxu0 %v1775
        %2755 = vmatpush2.msra.mxu0 %v1774
        %2756 = vmatprep.subr.mxu0 %v1771
        %2757 = vmatpush2.msra.mxu0 %v1770
        %2758 = vmatprep.subr.mxu0 %v1767
        %2759 = vmatpush2.msra.mxu0 %v1766
        %2760 = vmatprep.subr.mxu0 %v1763
        %2761 = vmatpush2.msra.mxu0 %v1762
        %2762 = vmatprep.subr.mxu0 %v1759
        %2763 = vmatpush2.msra.mxu0 %v1758
        %2764 = vmatprep.mubr.f32.mxu0 %v1503
        %2765 = vmatmul.mubr.f32.gmra.mxu0 %v1502
        %v2766 = vpop.f32.mrf.mxu0
        %v2767 = vadd.f32 %v2678, %v2766
        %v2768 = vpop.f32.mrf.mxu0
        %v2769 = vadd.f32 %v2680, %v2768
        %2770 = vmatprep.mubr.f32.mxu0 %v1507
        %2771 = vmatmul.mubr.f32.gmra.mxu0 %v1506
        %v2772 = vpop.f32.mrf.mxu0
        %v2773 = vadd.f32 %v2684, %v2772
        %v2774 = vpop.f32.mrf.mxu0
        %v2775 = vadd.f32 %v2686, %v2774
        %2776 = vmatprep.mubr.f32.mxu0 %v1511
        %2777 = vmatmul.mubr.f32.gmra.mxu0 %v1510
        %v2778 = vpop.f32.mrf.mxu0
        %v2779 = vadd.f32 %v2690, %v2778
        %v2780 = vpop.f32.mrf.mxu0
        %v2781 = vadd.f32 %v2692, %v2780
        %2782 = vmatprep.mubr.f32.mxu0 %v1515
        %2783 = vmatmul.mubr.f32.gmra.mxu0 %v1514
        %v2784 = vpop.f32.mrf.mxu0
        %v2785 = vadd.f32 %v2696, %v2784
        %v2786 = vpop.f32.mrf.mxu0
        %v2787 = vadd.f32 %v2698, %v2786
        %2788 = vdwg.mxu0
        %s2789 = scalar_lea.vmem [#allocation9], 4096
        %v2790 = vld [vmem:[%s2789] sm:$0xff]
        %v2791 = vld [vmem:[%s2789 + $0x8] sm:$0xff]
        %v2792 = vld [vmem:[%s2789 + $0x10] sm:$0xff]
        %v2793 = vld [vmem:[%s2789 + $0x18] sm:$0xff]
        %v2794 = vld [vmem:[%s2789 + $0x20] sm:$0xff]
        %v2795 = vld [vmem:[%s2789 + $0x28] sm:$0xff]
        %v2796 = vld [vmem:[%s2789 + $0x30] sm:$0xff]
        %v2797 = vld [vmem:[%s2789 + $0x38] sm:$0xff]
        %v2798 = vld [vmem:[%s2789 + $0x40] sm:$0xff]
        %v2799 = vld [vmem:[%s2789 + $0x48] sm:$0xff]
        %v2800 = vld [vmem:[%s2789 + $0x50] sm:$0xff]
        %v2801 = vld [vmem:[%s2789 + $0x58] sm:$0xff]
        %v2802 = vld [vmem:[%s2789 + $0x60] sm:$0xff]
        %v2803 = vld [vmem:[%s2789 + $0x68] sm:$0xff]
        %v2804 = vld [vmem:[%s2789 + $0x70] sm:$0xff]
        %v2805 = vld [vmem:[%s2789 + $0x78] sm:$0xff]
        %v2806 = vld [vmem:[%s2789 + $0x80] sm:$0xff]
        %v2807 = vld [vmem:[%s2789 + $0x88] sm:$0xff]
        %v2808 = vld [vmem:[%s2789 + $0x90] sm:$0xff]
        %v2809 = vld [vmem:[%s2789 + $0x98] sm:$0xff]
        %v2810 = vld [vmem:[%s2789 + $0xa0] sm:$0xff]
        %v2811 = vld [vmem:[%s2789 + $0xa8] sm:$0xff]
        %v2812 = vld [vmem:[%s2789 + $0xb0] sm:$0xff]
        %v2813 = vld [vmem:[%s2789 + $0xb8] sm:$0xff]
        %v2814 = vld [vmem:[%s2789 + $0xc0] sm:$0xff]
        %v2815 = vld [vmem:[%s2789 + $0xc8] sm:$0xff]
        %v2816 = vld [vmem:[%s2789 + $0xd0] sm:$0xff]
        %v2817 = vld [vmem:[%s2789 + $0xd8] sm:$0xff]
        %v2818 = vld [vmem:[%s2789 + $0xe0] sm:$0xff]
        %v2819 = vld [vmem:[%s2789 + $0xe8] sm:$0xff]
        %v2820 = vld [vmem:[%s2789 + $0xf0] sm:$0xff]
        %v2821 = vld [vmem:[%s2789 + $0xf8] sm:$0xff]
        %v2822 = vld [vmem:[%s2789 + $0x100] sm:$0xff]
        %v2823 = vld [vmem:[%s2789 + $0x108] sm:$0xff]
        %v2824 = vld [vmem:[%s2789 + $0x110] sm:$0xff]
        %v2825 = vld [vmem:[%s2789 + $0x118] sm:$0xff]
        %v2826 = vld [vmem:[%s2789 + $0x120] sm:$0xff]
        %v2827 = vld [vmem:[%s2789 + $0x128] sm:$0xff]
        %v2828 = vld [vmem:[%s2789 + $0x130] sm:$0xff]
        %v2829 = vld [vmem:[%s2789 + $0x138] sm:$0xff]
        %v2830 = vld [vmem:[%s2789 + $0x140] sm:$0xff]
        %v2831 = vld [vmem:[%s2789 + $0x148] sm:$0xff]
        %v2832 = vld [vmem:[%s2789 + $0x150] sm:$0xff]
        %v2833 = vld [vmem:[%s2789 + $0x158] sm:$0xff]
        %v2834 = vld [vmem:[%s2789 + $0x160] sm:$0xff]
        %v2835 = vld [vmem:[%s2789 + $0x168] sm:$0xff]
        %v2836 = vld [vmem:[%s2789 + $0x170] sm:$0xff]
        %v2837 = vld [vmem:[%s2789 + $0x178] sm:$0xff]
        %v2838 = vld [vmem:[%s2789 + $0x180] sm:$0xff]
        %v2839 = vld [vmem:[%s2789 + $0x188] sm:$0xff]
        %v2840 = vld [vmem:[%s2789 + $0x190] sm:$0xff]
        %v2841 = vld [vmem:[%s2789 + $0x198] sm:$0xff]
        %v2842 = vld [vmem:[%s2789 + $0x1a0] sm:$0xff]
        %v2843 = vld [vmem:[%s2789 + $0x1a8] sm:$0xff]
        %v2844 = vld [vmem:[%s2789 + $0x1b0] sm:$0xff]
        %v2845 = vld [vmem:[%s2789 + $0x1b8] sm:$0xff]
        %v2846 = vld [vmem:[%s2789 + $0x1c0] sm:$0xff]
        %v2847 = vld [vmem:[%s2789 + $0x1c8] sm:$0xff]
        %v2848 = vld [vmem:[%s2789 + $0x1d0] sm:$0xff]
        %v2849 = vld [vmem:[%s2789 + $0x1d8] sm:$0xff]
        %v2850 = vld [vmem:[%s2789 + $0x1e0] sm:$0xff]
        %v2851 = vld [vmem:[%s2789 + $0x1e8] sm:$0xff]
        %v2852 = vld [vmem:[%s2789 + $0x1f0] sm:$0xff]
        %v2853 = vld [vmem:[%s2789 + $0x1f8] sm:$0xff]
        %v2854 = vld [vmem:[%s2789 + $0x200] sm:$0xff]
        %v2855 = vld [vmem:[%s2789 + $0x208] sm:$0xff]
        %v2856 = vld [vmem:[%s2789 + $0x210] sm:$0xff]
        %v2857 = vld [vmem:[%s2789 + $0x218] sm:$0xff]
        %v2858 = vld [vmem:[%s2789 + $0x220] sm:$0xff]
        %v2859 = vld [vmem:[%s2789 + $0x228] sm:$0xff]
        %v2860 = vld [vmem:[%s2789 + $0x230] sm:$0xff]
        %v2861 = vld [vmem:[%s2789 + $0x238] sm:$0xff]
        %v2862 = vld [vmem:[%s2789 + $0x240] sm:$0xff]
        %v2863 = vld [vmem:[%s2789 + $0x248] sm:$0xff]
        %v2864 = vld [vmem:[%s2789 + $0x250] sm:$0xff]
        %v2865 = vld [vmem:[%s2789 + $0x258] sm:$0xff]
        %v2866 = vld [vmem:[%s2789 + $0x260] sm:$0xff]
        %v2867 = vld [vmem:[%s2789 + $0x268] sm:$0xff]
        %v2868 = vld [vmem:[%s2789 + $0x270] sm:$0xff]
        %v2869 = vld [vmem:[%s2789 + $0x278] sm:$0xff]
        %v2870 = vld [vmem:[%s2789 + $0x280] sm:$0xff]
        %v2871 = vld [vmem:[%s2789 + $0x288] sm:$0xff]
        %v2872 = vld [vmem:[%s2789 + $0x290] sm:$0xff]
        %v2873 = vld [vmem:[%s2789 + $0x298] sm:$0xff]
        %v2874 = vld [vmem:[%s2789 + $0x2a0] sm:$0xff]
        %v2875 = vld [vmem:[%s2789 + $0x2a8] sm:$0xff]
        %v2876 = vld [vmem:[%s2789 + $0x2b0] sm:$0xff]
        %v2877 = vld [vmem:[%s2789 + $0x2b8] sm:$0xff]
        %v2878 = vld [vmem:[%s2789 + $0x2c0] sm:$0xff]
        %v2879 = vld [vmem:[%s2789 + $0x2c8] sm:$0xff]
        %v2880 = vld [vmem:[%s2789 + $0x2d0] sm:$0xff]
        %v2881 = vld [vmem:[%s2789 + $0x2d8] sm:$0xff]
        %v2882 = vld [vmem:[%s2789 + $0x2e0] sm:$0xff]
        %v2883 = vld [vmem:[%s2789 + $0x2e8] sm:$0xff]
        %v2884 = vld [vmem:[%s2789 + $0x2f0] sm:$0xff]
        %v2885 = vld [vmem:[%s2789 + $0x2f8] sm:$0xff]
        %v2886 = vld [vmem:[%s2789 + $0x300] sm:$0xff]
        %v2887 = vld [vmem:[%s2789 + $0x308] sm:$0xff]
        %v2888 = vld [vmem:[%s2789 + $0x310] sm:$0xff]
        %v2889 = vld [vmem:[%s2789 + $0x318] sm:$0xff]
        %v2890 = vld [vmem:[%s2789 + $0x320] sm:$0xff]
        %v2891 = vld [vmem:[%s2789 + $0x328] sm:$0xff]
        %v2892 = vld [vmem:[%s2789 + $0x330] sm:$0xff]
        %v2893 = vld [vmem:[%s2789 + $0x338] sm:$0xff]
        %v2894 = vld [vmem:[%s2789 + $0x340] sm:$0xff]
        %v2895 = vld [vmem:[%s2789 + $0x348] sm:$0xff]
        %v2896 = vld [vmem:[%s2789 + $0x350] sm:$0xff]
        %v2897 = vld [vmem:[%s2789 + $0x358] sm:$0xff]
        %v2898 = vld [vmem:[%s2789 + $0x360] sm:$0xff]
        %v2899 = vld [vmem:[%s2789 + $0x368] sm:$0xff]
        %v2900 = vld [vmem:[%s2789 + $0x370] sm:$0xff]
        %v2901 = vld [vmem:[%s2789 + $0x378] sm:$0xff]
        %v2902 = vld [vmem:[%s2789 + $0x380] sm:$0xff]
        %v2903 = vld [vmem:[%s2789 + $0x388] sm:$0xff]
        %v2904 = vld [vmem:[%s2789 + $0x390] sm:$0xff]
        %v2905 = vld [vmem:[%s2789 + $0x398] sm:$0xff]
        %v2906 = vld [vmem:[%s2789 + $0x3a0] sm:$0xff]
        %v2907 = vld [vmem:[%s2789 + $0x3a8] sm:$0xff]
        %v2908 = vld [vmem:[%s2789 + $0x3b0] sm:$0xff]
        %v2909 = vld [vmem:[%s2789 + $0x3b8] sm:$0xff]
        %v2910 = vld [vmem:[%s2789 + $0x3c0] sm:$0xff]
        %v2911 = vld [vmem:[%s2789 + $0x3c8] sm:$0xff]
        %v2912 = vld [vmem:[%s2789 + $0x3d0] sm:$0xff]
        %v2913 = vld [vmem:[%s2789 + $0x3d8] sm:$0xff]
        %v2914 = vld [vmem:[%s2789 + $0x3e0] sm:$0xff]
        %v2915 = vld [vmem:[%s2789 + $0x3e8] sm:$0xff]
        %v2916 = vld [vmem:[%s2789 + $0x3f0] sm:$0xff]
        %v2917 = vld [vmem:[%s2789 + $0x3f8] sm:$0xff]
        %v2918 = vld [vmem:[%s2789 + $0x400] sm:$0xff]
        %v2919 = vld [vmem:[%s2789 + $0x408] sm:$0xff]
        %v2920 = vld [vmem:[%s2789 + $0x410] sm:$0xff]
        %v2921 = vld [vmem:[%s2789 + $0x418] sm:$0xff]
        %v2922 = vld [vmem:[%s2789 + $0x420] sm:$0xff]
        %v2923 = vld [vmem:[%s2789 + $0x428] sm:$0xff]
        %v2924 = vld [vmem:[%s2789 + $0x430] sm:$0xff]
        %v2925 = vld [vmem:[%s2789 + $0x438] sm:$0xff]
        %v2926 = vld [vmem:[%s2789 + $0x440] sm:$0xff]
        %v2927 = vld [vmem:[%s2789 + $0x448] sm:$0xff]
        %v2928 = vld [vmem:[%s2789 + $0x450] sm:$0xff]
        %v2929 = vld [vmem:[%s2789 + $0x458] sm:$0xff]
        %v2930 = vld [vmem:[%s2789 + $0x460] sm:$0xff]
        %v2931 = vld [vmem:[%s2789 + $0x468] sm:$0xff]
        %v2932 = vld [vmem:[%s2789 + $0x470] sm:$0xff]
        %v2933 = vld [vmem:[%s2789 + $0x478] sm:$0xff]
        %v2934 = vld [vmem:[%s2789 + $0x480] sm:$0xff]
        %v2935 = vld [vmem:[%s2789 + $0x488] sm:$0xff]
        %v2936 = vld [vmem:[%s2789 + $0x490] sm:$0xff]
        %v2937 = vld [vmem:[%s2789 + $0x498] sm:$0xff]
        %v2938 = vld [vmem:[%s2789 + $0x4a0] sm:$0xff]
        %v2939 = vld [vmem:[%s2789 + $0x4a8] sm:$0xff]
        %v2940 = vld [vmem:[%s2789 + $0x4b0] sm:$0xff]
        %v2941 = vld [vmem:[%s2789 + $0x4b8] sm:$0xff]
        %v2942 = vld [vmem:[%s2789 + $0x4c0] sm:$0xff]
        %v2943 = vld [vmem:[%s2789 + $0x4c8] sm:$0xff]
        %v2944 = vld [vmem:[%s2789 + $0x4d0] sm:$0xff]
        %v2945 = vld [vmem:[%s2789 + $0x4d8] sm:$0xff]
        %v2946 = vld [vmem:[%s2789 + $0x4e0] sm:$0xff]
        %v2947 = vld [vmem:[%s2789 + $0x4e8] sm:$0xff]
        %v2948 = vld [vmem:[%s2789 + $0x4f0] sm:$0xff]
        %v2949 = vld [vmem:[%s2789 + $0x4f8] sm:$0xff]
        %v2950 = vld [vmem:[%s2789 + $0x500] sm:$0xff]
        %v2951 = vld [vmem:[%s2789 + $0x508] sm:$0xff]
        %v2952 = vld [vmem:[%s2789 + $0x510] sm:$0xff]
        %v2953 = vld [vmem:[%s2789 + $0x518] sm:$0xff]
        %v2954 = vld [vmem:[%s2789 + $0x520] sm:$0xff]
        %v2955 = vld [vmem:[%s2789 + $0x528] sm:$0xff]
        %v2956 = vld [vmem:[%s2789 + $0x530] sm:$0xff]
        %v2957 = vld [vmem:[%s2789 + $0x538] sm:$0xff]
        %v2958 = vld [vmem:[%s2789 + $0x540] sm:$0xff]
        %v2959 = vld [vmem:[%s2789 + $0x548] sm:$0xff]
        %v2960 = vld [vmem:[%s2789 + $0x550] sm:$0xff]
        %v2961 = vld [vmem:[%s2789 + $0x558] sm:$0xff]
        %v2962 = vld [vmem:[%s2789 + $0x560] sm:$0xff]
        %v2963 = vld [vmem:[%s2789 + $0x568] sm:$0xff]
        %v2964 = vld [vmem:[%s2789 + $0x570] sm:$0xff]
        %v2965 = vld [vmem:[%s2789 + $0x578] sm:$0xff]
        %v2966 = vld [vmem:[%s2789 + $0x580] sm:$0xff]
        %v2967 = vld [vmem:[%s2789 + $0x588] sm:$0xff]
        %v2968 = vld [vmem:[%s2789 + $0x590] sm:$0xff]
        %v2969 = vld [vmem:[%s2789 + $0x598] sm:$0xff]
        %v2970 = vld [vmem:[%s2789 + $0x5a0] sm:$0xff]
        %v2971 = vld [vmem:[%s2789 + $0x5a8] sm:$0xff]
        %v2972 = vld [vmem:[%s2789 + $0x5b0] sm:$0xff]
        %v2973 = vld [vmem:[%s2789 + $0x5b8] sm:$0xff]
        %v2974 = vld [vmem:[%s2789 + $0x5c0] sm:$0xff]
        %v2975 = vld [vmem:[%s2789 + $0x5c8] sm:$0xff]
        %v2976 = vld [vmem:[%s2789 + $0x5d0] sm:$0xff]
        %v2977 = vld [vmem:[%s2789 + $0x5d8] sm:$0xff]
        %v2978 = vld [vmem:[%s2789 + $0x5e0] sm:$0xff]
        %v2979 = vld [vmem:[%s2789 + $0x5e8] sm:$0xff]
        %v2980 = vld [vmem:[%s2789 + $0x5f0] sm:$0xff]
        %v2981 = vld [vmem:[%s2789 + $0x5f8] sm:$0xff]
        %v2982 = vld [vmem:[%s2789 + $0x600] sm:$0xff]
        %v2983 = vld [vmem:[%s2789 + $0x608] sm:$0xff]
        %v2984 = vld [vmem:[%s2789 + $0x610] sm:$0xff]
        %v2985 = vld [vmem:[%s2789 + $0x618] sm:$0xff]
        %v2986 = vld [vmem:[%s2789 + $0x620] sm:$0xff]
        %v2987 = vld [vmem:[%s2789 + $0x628] sm:$0xff]
        %v2988 = vld [vmem:[%s2789 + $0x630] sm:$0xff]
        %v2989 = vld [vmem:[%s2789 + $0x638] sm:$0xff]
        %v2990 = vld [vmem:[%s2789 + $0x640] sm:$0xff]
        %v2991 = vld [vmem:[%s2789 + $0x648] sm:$0xff]
        %v2992 = vld [vmem:[%s2789 + $0x650] sm:$0xff]
        %v2993 = vld [vmem:[%s2789 + $0x658] sm:$0xff]
        %v2994 = vld [vmem:[%s2789 + $0x660] sm:$0xff]
        %v2995 = vld [vmem:[%s2789 + $0x668] sm:$0xff]
        %v2996 = vld [vmem:[%s2789 + $0x670] sm:$0xff]
        %v2997 = vld [vmem:[%s2789 + $0x678] sm:$0xff]
        %v2998 = vld [vmem:[%s2789 + $0x680] sm:$0xff]
        %v2999 = vld [vmem:[%s2789 + $0x688] sm:$0xff]
        %v3000 = vld [vmem:[%s2789 + $0x690] sm:$0xff]
        %v3001 = vld [vmem:[%s2789 + $0x698] sm:$0xff]
        %v3002 = vld [vmem:[%s2789 + $0x6a0] sm:$0xff]
        %v3003 = vld [vmem:[%s2789 + $0x6a8] sm:$0xff]
        %v3004 = vld [vmem:[%s2789 + $0x6b0] sm:$0xff]
        %v3005 = vld [vmem:[%s2789 + $0x6b8] sm:$0xff]
        %v3006 = vld [vmem:[%s2789 + $0x6c0] sm:$0xff]
        %v3007 = vld [vmem:[%s2789 + $0x6c8] sm:$0xff]
        %v3008 = vld [vmem:[%s2789 + $0x6d0] sm:$0xff]
        %v3009 = vld [vmem:[%s2789 + $0x6d8] sm:$0xff]
        %v3010 = vld [vmem:[%s2789 + $0x6e0] sm:$0xff]
        %v3011 = vld [vmem:[%s2789 + $0x6e8] sm:$0xff]
        %v3012 = vld [vmem:[%s2789 + $0x6f0] sm:$0xff]
        %v3013 = vld [vmem:[%s2789 + $0x6f8] sm:$0xff]
        %v3014 = vld [vmem:[%s2789 + $0x700] sm:$0xff]
        %v3015 = vld [vmem:[%s2789 + $0x708] sm:$0xff]
        %v3016 = vld [vmem:[%s2789 + $0x710] sm:$0xff]
        %v3017 = vld [vmem:[%s2789 + $0x718] sm:$0xff]
        %v3018 = vld [vmem:[%s2789 + $0x720] sm:$0xff]
        %v3019 = vld [vmem:[%s2789 + $0x728] sm:$0xff]
        %v3020 = vld [vmem:[%s2789 + $0x730] sm:$0xff]
        %v3021 = vld [vmem:[%s2789 + $0x738] sm:$0xff]
        %v3022 = vld [vmem:[%s2789 + $0x740] sm:$0xff]
        %v3023 = vld [vmem:[%s2789 + $0x748] sm:$0xff]
        %v3024 = vld [vmem:[%s2789 + $0x750] sm:$0xff]
        %v3025 = vld [vmem:[%s2789 + $0x758] sm:$0xff]
        %v3026 = vld [vmem:[%s2789 + $0x760] sm:$0xff]
        %v3027 = vld [vmem:[%s2789 + $0x768] sm:$0xff]
        %v3028 = vld [vmem:[%s2789 + $0x770] sm:$0xff]
        %v3029 = vld [vmem:[%s2789 + $0x778] sm:$0xff]
        %v3030 = vld [vmem:[%s2789 + $0x780] sm:$0xff]
        %v3031 = vld [vmem:[%s2789 + $0x788] sm:$0xff]
        %v3032 = vld [vmem:[%s2789 + $0x790] sm:$0xff]
        %v3033 = vld [vmem:[%s2789 + $0x798] sm:$0xff]
        %v3034 = vld [vmem:[%s2789 + $0x7a0] sm:$0xff]
        %v3035 = vld [vmem:[%s2789 + $0x7a8] sm:$0xff]
        %v3036 = vld [vmem:[%s2789 + $0x7b0] sm:$0xff]
        %v3037 = vld [vmem:[%s2789 + $0x7b8] sm:$0xff]
        %v3038 = vld [vmem:[%s2789 + $0x7c0] sm:$0xff]
        %v3039 = vld [vmem:[%s2789 + $0x7c8] sm:$0xff]
        %v3040 = vld [vmem:[%s2789 + $0x7d0] sm:$0xff]
        %v3041 = vld [vmem:[%s2789 + $0x7d8] sm:$0xff]
        %v3042 = vld [vmem:[%s2789 + $0x7e0] sm:$0xff]
        %v3043 = vld [vmem:[%s2789 + $0x7e8] sm:$0xff]
        %v3044 = vld [vmem:[%s2789 + $0x7f0] sm:$0xff]
        %v3045 = vld [vmem:[%s2789 + $0x7f8] sm:$0xff]
        %3046 = vmatprep.subr.mxu0 %v2851
        %3047 = vmatpush1.msra.mxu0 %v2850
        %3048 = vmatprep.subr.mxu0 %v2847
        %3049 = vmatpush1.msra.mxu0 %v2846
        %3050 = vmatprep.subr.mxu0 %v2843
        %3051 = vmatpush1.msra.mxu0 %v2842
        %3052 = vmatprep.subr.mxu0 %v2839
        %3053 = vmatpush1.msra.mxu0 %v2838
        %3054 = vmatprep.subr.mxu0 %v2835
        %3055 = vmatpush1.msra.mxu0 %v2834
        %3056 = vmatprep.subr.mxu0 %v2831
        %3057 = vmatpush1.msra.mxu0 %v2830
        %3058 = vmatprep.subr.mxu0 %v2827
        %3059 = vmatpush1.msra.mxu0 %v2826
        %3060 = vmatprep.subr.mxu0 %v2823
        %3061 = vmatpush1.msra.mxu0 %v2822
        %3062 = vmatprep.subr.mxu0 %v2819
        %3063 = vmatpush1.msra.mxu0 %v2818
        %3064 = vmatprep.subr.mxu0 %v2815
        %3065 = vmatpush1.msra.mxu0 %v2814
        %3066 = vmatprep.subr.mxu0 %v2811
        %3067 = vmatpush1.msra.mxu0 %v2810
        %3068 = vmatprep.subr.mxu0 %v2807
        %3069 = vmatpush1.msra.mxu0 %v2806
        %3070 = vmatprep.subr.mxu0 %v2803
        %3071 = vmatpush1.msra.mxu0 %v2802
        %3072 = vmatprep.subr.mxu0 %v2799
        %3073 = vmatpush1.msra.mxu0 %v2798
        %3074 = vmatprep.subr.mxu0 %v2795
        %3075 = vmatpush1.msra.mxu0 %v2794
        %3076 = vmatprep.subr.mxu0 %v2791
        %3077 = vmatpush1.msra.mxu0 %v2790
        %3078 = vmatprep.subr.mxu0 %v2915
        %3079 = vmatpush2.msra.mxu0 %v2914
        %3080 = vmatprep.subr.mxu0 %v2911
        %3081 = vmatpush2.msra.mxu0 %v2910
        %3082 = vmatprep.subr.mxu0 %v2907
        %3083 = vmatpush2.msra.mxu0 %v2906
        %3084 = vmatprep.subr.mxu0 %v2903
        %3085 = vmatpush2.msra.mxu0 %v2902
        %3086 = vmatprep.subr.mxu0 %v2899
        %3087 = vmatpush2.msra.mxu0 %v2898
        %3088 = vmatprep.subr.mxu0 %v2895
        %3089 = vmatpush2.msra.mxu0 %v2894
        %3090 = vmatprep.subr.mxu0 %v2891
        %3091 = vmatpush2.msra.mxu0 %v2890
        %3092 = vmatprep.subr.mxu0 %v2887
        %3093 = vmatpush2.msra.mxu0 %v2886
        %3094 = vmatprep.subr.mxu0 %v2883
        %3095 = vmatpush2.msra.mxu0 %v2882
        %3096 = vmatprep.subr.mxu0 %v2879
        %3097 = vmatpush2.msra.mxu0 %v2878
        %3098 = vmatprep.subr.mxu0 %v2875
        %3099 = vmatpush2.msra.mxu0 %v2874
        %3100 = vmatprep.subr.mxu0 %v2871
        %3101 = vmatpush2.msra.mxu0 %v2870
        %3102 = vmatprep.subr.mxu0 %v2867
        %3103 = vmatpush2.msra.mxu0 %v2866
        %3104 = vmatprep.subr.mxu0 %v2863
        %3105 = vmatpush2.msra.mxu0 %v2862
        %3106 = vmatprep.subr.mxu0 %v2859
        %3107 = vmatpush2.msra.mxu0 %v2858
        %3108 = vmatprep.subr.mxu0 %v2855
        %3109 = vmatpush2.msra.mxu0 %v2854
        %3110 = vmatprep.mubr.f32.mxu0 %v1549
        %3111 = vmatmul.mubr.f32.gmra.mxu0 %v1548
        %v3112 = vpop.f32.mrf.mxu0
        %v3113 = vadd.f32 0.0, %v3112
        %v3114 = vpop.f32.mrf.mxu0
        %v3115 = vadd.f32 0.0, %v3114
        %3116 = vmatprep.mubr.f32.mxu0 %v1553
        %3117 = vmatmul.mubr.f32.gmra.mxu0 %v1552
        %v3118 = vpop.f32.mrf.mxu0
        %v3119 = vadd.f32 0.0, %v3118
        %v3120 = vpop.f32.mrf.mxu0
        %v3121 = vadd.f32 0.0, %v3120
        %3122 = vmatprep.mubr.f32.mxu0 %v1557
        %3123 = vmatmul.mubr.f32.gmra.mxu0 %v1556
        %v3124 = vpop.f32.mrf.mxu0
        %v3125 = vadd.f32 0.0, %v3124
        %v3126 = vpop.f32.mrf.mxu0
        %v3127 = vadd.f32 0.0, %v3126
        %3128 = vmatprep.mubr.f32.mxu0 %v1561
        %3129 = vmatmul.mubr.f32.gmra.mxu0 %v1560
        %v3130 = vpop.f32.mrf.mxu0
        %v3131 = vadd.f32 0.0, %v3130
        %v3132 = vpop.f32.mrf.mxu0
        %v3133 = vadd.f32 0.0, %v3132
        %3134 = vdwg.mxu0
        %3135 = vmatprep.subr.mxu0 %v2979
        %3136 = vmatpush1.msra.mxu0 %v2978
        %3137 = vmatprep.subr.mxu0 %v2975
        %3138 = vmatpush1.msra.mxu0 %v2974
        %3139 = vmatprep.subr.mxu0 %v2971
        %3140 = vmatpush1.msra.mxu0 %v2970
        %3141 = vmatprep.subr.mxu0 %v2967
        %3142 = vmatpush1.msra.mxu0 %v2966
        %3143 = vmatprep.subr.mxu0 %v2963
        %3144 = vmatpush1.msra.mxu0 %v2962
        %3145 = vmatprep.subr.mxu0 %v2959
        %3146 = vmatpush1.msra.mxu0 %v2958
        %3147 = vmatprep.subr.mxu0 %v2955
        %3148 = vmatpush1.msra.mxu0 %v2954
        %3149 = vmatprep.subr.mxu0 %v2951
        %3150 = vmatpush1.msra.mxu0 %v2950
        %3151 = vmatprep.subr.mxu0 %v2947
        %3152 = vmatpush1.msra.mxu0 %v2946
        %3153 = vmatprep.subr.mxu0 %v2943
        %3154 = vmatpush1.msra.mxu0 %v2942
        %3155 = vmatprep.subr.mxu0 %v2939
        %3156 = vmatpush1.msra.mxu0 %v2938
        %3157 = vmatprep.subr.mxu0 %v2935
        %3158 = vmatpush1.msra.mxu0 %v2934
        %3159 = vmatprep.subr.mxu0 %v2931
        %3160 = vmatpush1.msra.mxu0 %v2930
        %3161 = vmatprep.subr.mxu0 %v2927
        %3162 = vmatpush1.msra.mxu0 %v2926
        %3163 = vmatprep.subr.mxu0 %v2923
        %3164 = vmatpush1.msra.mxu0 %v2922
        %3165 = vmatprep.subr.mxu0 %v2919
        %3166 = vmatpush1.msra.mxu0 %v2918
        %3167 = vmatprep.subr.mxu0 %v3043
        %3168 = vmatpush2.msra.mxu0 %v3042
        %3169 = vmatprep.subr.mxu0 %v3039
        %3170 = vmatpush2.msra.mxu0 %v3038
        %3171 = vmatprep.subr.mxu0 %v3035
        %3172 = vmatpush2.msra.mxu0 %v3034
        %3173 = vmatprep.subr.mxu0 %v3031
        %3174 = vmatpush2.msra.mxu0 %v3030
        %3175 = vmatprep.subr.mxu0 %v3027
        %3176 = vmatpush2.msra.mxu0 %v3026
        %3177 = vmatprep.subr.mxu0 %v3023
        %3178 = vmatpush2.msra.mxu0 %v3022
        %3179 = vmatprep.subr.mxu0 %v3019
        %3180 = vmatpush2.msra.mxu0 %v3018
        %3181 = vmatprep.subr.mxu0 %v3015
        %3182 = vmatpush2.msra.mxu0 %v3014
        %3183 = vmatprep.subr.mxu0 %v3011
        %3184 = vmatpush2.msra.mxu0 %v3010
        %3185 = vmatprep.subr.mxu0 %v3007
        %3186 = vmatpush2.msra.mxu0 %v3006
        %3187 = vmatprep.subr.mxu0 %v3003
        %3188 = vmatpush2.msra.mxu0 %v3002
        %3189 = vmatprep.subr.mxu0 %v2999
        %3190 = vmatpush2.msra.mxu0 %v2998
        %3191 = vmatprep.subr.mxu0 %v2995
        %3192 = vmatpush2.msra.mxu0 %v2994
        %3193 = vmatprep.subr.mxu0 %v2991
        %3194 = vmatpush2.msra.mxu0 %v2990
        %3195 = vmatprep.subr.mxu0 %v2987
        %3196 = vmatpush2.msra.mxu0 %v2986
        %3197 = vmatprep.subr.mxu0 %v2983
        %3198 = vmatpush2.msra.mxu0 %v2982
        %3199 = vmatprep.mubr.f32.mxu0 %v1551
        %3200 = vmatmul.mubr.f32.gmra.mxu0 %v1550
        %v3201 = vpop.f32.mrf.mxu0
        %v3202 = vadd.f32 %v3113, %v3201
        %v3203 = vpop.f32.mrf.mxu0
        %v3204 = vadd.f32 %v3115, %v3203
        %3205 = vmatprep.mubr.f32.mxu0 %v1555
        %3206 = vmatmul.mubr.f32.gmra.mxu0 %v1554
        %v3207 = vpop.f32.mrf.mxu0
        %v3208 = vadd.f32 %v3119, %v3207
        %v3209 = vpop.f32.mrf.mxu0
        %v3210 = vadd.f32 %v3121, %v3209
        %3211 = vmatprep.mubr.f32.mxu0 %v1559
        %3212 = vmatmul.mubr.f32.gmra.mxu0 %v1558
        %v3213 = vpop.f32.mrf.mxu0
        %v3214 = vadd.f32 %v3125, %v3213
        %v3215 = vpop.f32.mrf.mxu0
        %v3216 = vadd.f32 %v3127, %v3215
        %3217 = vmatprep.mubr.f32.mxu0 %v1563
        %3218 = vmatmul.mubr.f32.gmra.mxu0 %v1562
        %v3219 = vpop.f32.mrf.mxu0
        %v3220 = vadd.f32 %v3131, %v3219
        %v3221 = vpop.f32.mrf.mxu0
        %v3222 = vadd.f32 %v3133, %v3221
        %3223 = vdwg.mxu0
        %3224 = vmatprep.subr.mxu0 %v2853
        %3225 = vmatpush1.msra.mxu0 %v2852
        %3226 = vmatprep.subr.mxu0 %v2849
        %3227 = vmatpush1.msra.mxu0 %v2848
        %3228 = vmatprep.subr.mxu0 %v2845
        %3229 = vmatpush1.msra.mxu0 %v2844
        %3230 = vmatprep.subr.mxu0 %v2841
        %3231 = vmatpush1.msra.mxu0 %v2840
        %3232 = vmatprep.subr.mxu0 %v2837
        %3233 = vmatpush1.msra.mxu0 %v2836
        %3234 = vmatprep.subr.mxu0 %v2833
        %3235 = vmatpush1.msra.mxu0 %v2832
        %3236 = vmatprep.subr.mxu0 %v2829
        %3237 = vmatpush1.msra.mxu0 %v2828
        %3238 = vmatprep.subr.mxu0 %v2825
        %3239 = vmatpush1.msra.mxu0 %v2824
        %3240 = vmatprep.subr.mxu0 %v2821
        %3241 = vmatpush1.msra.mxu0 %v2820
        %3242 = vmatprep.subr.mxu0 %v2817
        %3243 = vmatpush1.msra.mxu0 %v2816
        %3244 = vmatprep.subr.mxu0 %v2813
        %3245 = vmatpush1.msra.mxu0 %v2812
        %3246 = vmatprep.subr.mxu0 %v2809
        %3247 = vmatpush1.msra.mxu0 %v2808
        %3248 = vmatprep.subr.mxu0 %v2805
        %3249 = vmatpush1.msra.mxu0 %v2804
        %3250 = vmatprep.subr.mxu0 %v2801
        %3251 = vmatpush1.msra.mxu0 %v2800
        %3252 = vmatprep.subr.mxu0 %v2797
        %3253 = vmatpush1.msra.mxu0 %v2796
        %3254 = vmatprep.subr.mxu0 %v2793
        %3255 = vmatpush1.msra.mxu0 %v2792
        %3256 = vmatprep.subr.mxu0 %v2917
        %3257 = vmatpush2.msra.mxu0 %v2916
        %3258 = vmatprep.subr.mxu0 %v2913
        %3259 = vmatpush2.msra.mxu0 %v2912
        %3260 = vmatprep.subr.mxu0 %v2909
        %3261 = vmatpush2.msra.mxu0 %v2908
        %3262 = vmatprep.subr.mxu0 %v2905
        %3263 = vmatpush2.msra.mxu0 %v2904
        %3264 = vmatprep.subr.mxu0 %v2901
        %3265 = vmatpush2.msra.mxu0 %v2900
        %3266 = vmatprep.subr.mxu0 %v2897
        %3267 = vmatpush2.msra.mxu0 %v2896
        %3268 = vmatprep.subr.mxu0 %v2893
        %3269 = vmatpush2.msra.mxu0 %v2892
        %3270 = vmatprep.subr.mxu0 %v2889
        %3271 = vmatpush2.msra.mxu0 %v2888
        %3272 = vmatprep.subr.mxu0 %v2885
        %3273 = vmatpush2.msra.mxu0 %v2884
        %3274 = vmatprep.subr.mxu0 %v2881
        %3275 = vmatpush2.msra.mxu0 %v2880
        %3276 = vmatprep.subr.mxu0 %v2877
        %3277 = vmatpush2.msra.mxu0 %v2876
        %3278 = vmatprep.subr.mxu0 %v2873
        %3279 = vmatpush2.msra.mxu0 %v2872
        %3280 = vmatprep.subr.mxu0 %v2869
        %3281 = vmatpush2.msra.mxu0 %v2868
        %3282 = vmatprep.subr.mxu0 %v2865
        %3283 = vmatpush2.msra.mxu0 %v2864
        %3284 = vmatprep.subr.mxu0 %v2861
        %3285 = vmatpush2.msra.mxu0 %v2860
        %3286 = vmatprep.subr.mxu0 %v2857
        %3287 = vmatpush2.msra.mxu0 %v2856
        %3288 = vmatprep.mubr.f32.mxu0 %v1549
        %3289 = vmatmul.mubr.f32.gmra.mxu0 %v1548
        %v3290 = vpop.f32.mrf.mxu0
        %v3291 = vadd.f32 0.0, %v3290
        %v3292 = vpop.f32.mrf.mxu0
        %v3293 = vadd.f32 0.0, %v3292
        %3294 = vmatprep.mubr.f32.mxu0 %v1553
        %3295 = vmatmul.mubr.f32.gmra.mxu0 %v1552
        %v3296 = vpop.f32.mrf.mxu0
        %v3297 = vadd.f32 0.0, %v3296
        %v3298 = vpop.f32.mrf.mxu0
        %v3299 = vadd.f32 0.0, %v3298
        %3300 = vmatprep.mubr.f32.mxu0 %v1557
        %3301 = vmatmul.mubr.f32.gmra.mxu0 %v1556
        %v3302 = vpop.f32.mrf.mxu0
        %v3303 = vadd.f32 0.0, %v3302
        %v3304 = vpop.f32.mrf.mxu0
        %v3305 = vadd.f32 0.0, %v3304
        %3306 = vmatprep.mubr.f32.mxu0 %v1561
        %3307 = vmatmul.mubr.f32.gmra.mxu0 %v1560
        %v3308 = vpop.f32.mrf.mxu0
        %v3309 = vadd.f32 0.0, %v3308
        %v3310 = vpop.f32.mrf.mxu0
        %v3311 = vadd.f32 0.0, %v3310
        %3312 = vdwg.mxu0
        %3313 = vmatprep.subr.mxu0 %v2981
        %3314 = vmatpush1.msra.mxu0 %v2980
        %3315 = vmatprep.subr.mxu0 %v2977
        %3316 = vmatpush1.msra.mxu0 %v2976
        %3317 = vmatprep.subr.mxu0 %v2973
        %3318 = vmatpush1.msra.mxu0 %v2972
        %3319 = vmatprep.subr.mxu0 %v2969
        %3320 = vmatpush1.msra.mxu0 %v2968
        %3321 = vmatprep.subr.mxu0 %v2965
        %3322 = vmatpush1.msra.mxu0 %v2964
        %3323 = vmatprep.subr.mxu0 %v2961
        %3324 = vmatpush1.msra.mxu0 %v2960
        %3325 = vmatprep.subr.mxu0 %v2957
        %3326 = vmatpush1.msra.mxu0 %v2956
        %3327 = vmatprep.subr.mxu0 %v2953
        %3328 = vmatpush1.msra.mxu0 %v2952
        %3329 = vmatprep.subr.mxu0 %v2949
        %3330 = vmatpush1.msra.mxu0 %v2948
        %3331 = vmatprep.subr.mxu0 %v2945
        %3332 = vmatpush1.msra.mxu0 %v2944
        %3333 = vmatprep.subr.mxu0 %v2941
        %3334 = vmatpush1.msra.mxu0 %v2940
        %3335 = vmatprep.subr.mxu0 %v2937
        %3336 = vmatpush1.msra.mxu0 %v2936
        %3337 = vmatprep.subr.mxu0 %v2933
        %3338 = vmatpush1.msra.mxu0 %v2932
        %3339 = vmatprep.subr.mxu0 %v2929
        %3340 = vmatpush1.msra.mxu0 %v2928
        %3341 = vmatprep.subr.mxu0 %v2925
        %3342 = vmatpush1.msra.mxu0 %v2924
        %3343 = vmatprep.subr.mxu0 %v2921
        %3344 = vmatpush1.msra.mxu0 %v2920
        %3345 = vmatprep.subr.mxu0 %v3045
        %3346 = vmatpush2.msra.mxu0 %v3044
        %3347 = vmatprep.subr.mxu0 %v3041
        %3348 = vmatpush2.msra.mxu0 %v3040
        %3349 = vmatprep.subr.mxu0 %v3037
        %3350 = vmatpush2.msra.mxu0 %v3036
        %3351 = vmatprep.subr.mxu0 %v3033
        %3352 = vmatpush2.msra.mxu0 %v3032
        %3353 = vmatprep.subr.mxu0 %v3029
        %3354 = vmatpush2.msra.mxu0 %v3028
        %3355 = vmatprep.subr.mxu0 %v3025
        %3356 = vmatpush2.msra.mxu0 %v3024
        %3357 = vmatprep.subr.mxu0 %v3021
        %3358 = vmatpush2.msra.mxu0 %v3020
        %3359 = vmatprep.subr.mxu0 %v3017
        %3360 = vmatpush2.msra.mxu0 %v3016
        %3361 = vmatprep.subr.mxu0 %v3013
        %3362 = vmatpush2.msra.mxu0 %v3012
        %3363 = vmatprep.subr.mxu0 %v3009
        %3364 = vmatpush2.msra.mxu0 %v3008
        %3365 = vmatprep.subr.mxu0 %v3005
        %3366 = vmatpush2.msra.mxu0 %v3004
        %3367 = vmatprep.subr.mxu0 %v3001
        %3368 = vmatpush2.msra.mxu0 %v3000
        %3369 = vmatprep.subr.mxu0 %v2997
        %3370 = vmatpush2.msra.mxu0 %v2996
        %3371 = vmatprep.subr.mxu0 %v2993
        %3372 = vmatpush2.msra.mxu0 %v2992
        %3373 = vmatprep.subr.mxu0 %v2989
        %3374 = vmatpush2.msra.mxu0 %v2988
        %3375 = vmatprep.subr.mxu0 %v2985
        %3376 = vmatpush2.msra.mxu0 %v2984
        %3377 = vmatprep.mubr.f32.mxu0 %v1551
        %3378 = vmatmul.mubr.f32.gmra.mxu0 %v1550
        %v3379 = vpop.f32.mrf.mxu0
        %v3380 = vadd.f32 %v3291, %v3379
        %v3381 = vpop.f32.mrf.mxu0
        %v3382 = vadd.f32 %v3293, %v3381
        %3383 = vmatprep.mubr.f32.mxu0 %v1555
        %3384 = vmatmul.mubr.f32.gmra.mxu0 %v1554
        %v3385 = vpop.f32.mrf.mxu0
        %v3386 = vadd.f32 %v3297, %v3385
        %v3387 = vpop.f32.mrf.mxu0
        %v3388 = vadd.f32 %v3299, %v3387
        %3389 = vmatprep.mubr.f32.mxu0 %v1559
        %3390 = vmatmul.mubr.f32.gmra.mxu0 %v1558
        %v3391 = vpop.f32.mrf.mxu0
        %v3392 = vadd.f32 %v3303, %v3391
        %v3393 = vpop.f32.mrf.mxu0
        %v3394 = vadd.f32 %v3305, %v3393
        %3395 = vmatprep.mubr.f32.mxu0 %v1563
        %3396 = vmatmul.mubr.f32.gmra.mxu0 %v1562
        %v3397 = vpop.f32.mrf.mxu0
        %v3398 = vadd.f32 %v3309, %v3397
        %v3399 = vpop.f32.mrf.mxu0
        %v3400 = vadd.f32 %v3311, %v3399
        %3401 = vdwg.mxu0
        %v3402 = vadd.f32 %v2589, %v3202
        %v3403 = vadd.f32 %v2591, %v3204
        %v3404 = vadd.f32 %v2767, %v3380
        %v3405 = vadd.f32 %v2769, %v3382
        %v3406 = vadd.f32 %v2595, %v3208
        %v3407 = vadd.f32 %v2597, %v3210
        %v3408 = vadd.f32 %v2773, %v3386
        %v3409 = vadd.f32 %v2775, %v3388
        %v3410 = vadd.f32 %v2601, %v3214
        %v3411 = vadd.f32 %v2603, %v3216
        %v3412 = vadd.f32 %v2779, %v3392
        %v3413 = vadd.f32 %v2781, %v3394
        %v3414 = vadd.f32 %v2607, %v3220
        %v3415 = vadd.f32 %v2609, %v3222
        %v3416 = vadd.f32 %v2785, %v3398
        %v3417 = vadd.f32 %v2787, %v3400
        %v3419 = vlaneseq
        %v3420 = vshrl.u32 %v3419, 7
        %v3421 = vsub.s32 0, %v3420
        %v3422 = vrot.slane %v1467, %v3421
        %v3423 = vlaneseq
        %v3424 = vshrl.u32 %v3423, 7
        %v3425 = vsub.s32 1, %v3424
        %v3426 = vrot.slane %v1467, %v3425
        %v3427 = vlaneseq
        %v3428 = vshrl.u32 %v3427, 7
        %v3429 = vsub.s32 2, %v3428
        %v3430 = vrot.slane %v1467, %v3429
        %v3431 = vlaneseq
        %v3432 = vshrl.u32 %v3431, 7
        %v3433 = vsub.s32 3, %v3432
        %v3434 = vrot.slane %v1467, %v3433
        %v3439 = vadd.f32 %v3402, %v3422
        %v3440 = vadd.f32 %v3403, %v3426
        %v3441 = vadd.f32 %v3404, %v3430
        %v3442 = vadd.f32 %v3405, %v3434
        %v3443 = vadd.f32 %v3406, %v3422
        %v3444 = vadd.f32 %v3407, %v3426
        %v3445 = vadd.f32 %v3408, %v3430
        %v3446 = vadd.f32 %v3409, %v3434
        %v3447 = vadd.f32 %v3410, %v3422
        %v3448 = vadd.f32 %v3411, %v3426
        %v3449 = vadd.f32 %v3412, %v3430
        %v3450 = vadd.f32 %v3413, %v3434
        %v3451 = vadd.f32 %v3414, %v3422
        %v3452 = vadd.f32 %v3415, %v3426
        %v3453 = vadd.f32 %v3416, %v3430
        %v3454 = vadd.f32 %v3417, %v3434
        %v3455 = vmax.f32 %v3439, 0.0
        %v3456 = vmax.f32 %v3440, 0.0
        %v3457 = vmax.f32 %v3441, 0.0
        %v3458 = vmax.f32 %v3442, 0.0
        %v3459 = vmax.f32 %v3443, 0.0
        %v3460 = vmax.f32 %v3444, 0.0
        %v3461 = vmax.f32 %v3445, 0.0
        %v3462 = vmax.f32 %v3446, 0.0
        %v3463 = vmax.f32 %v3447, 0.0
        %v3464 = vmax.f32 %v3448, 0.0
        %v3465 = vmax.f32 %v3449, 0.0
        %v3466 = vmax.f32 %v3450, 0.0
        %v3467 = vmax.f32 %v3451, 0.0
        %v3468 = vmax.f32 %v3452, 0.0
        %v3469 = vmax.f32 %v3453, 0.0
        %v3470 = vmax.f32 %v3454, 0.0
        %3471 = vrot.lane.b32.xlu0 %v3455, 120
        %v3472 = vpop.permute.xlu0 %3471
        %3473 = vrot.lane.b32.xlu0 %v3459, 120
        %v3474 = vpop.permute.xlu0 %3473
        %3475 = vrot.lane.b32.xlu0 %v3463, 120
        %v3476 = vpop.permute.xlu0 %3475
        %3477 = vrot.lane.b32.xlu0 %v3467, 120
        %v3478 = vpop.permute.xlu0 %3477
        %3479 = vrot.lane.b32.xlu0 %v3456, 120
        %v3480 = vpop.permute.xlu0 %3479
        %3481 = vrot.lane.b32.xlu0 %v3460, 120
        %v3482 = vpop.permute.xlu0 %3481
        %3483 = vrot.lane.b32.xlu0 %v3464, 120
        %v3484 = vpop.permute.xlu0 %3483
        %3485 = vrot.lane.b32.xlu0 %v3468, 120
        %v3486 = vpop.permute.xlu0 %3485
        %3487 = vrot.lane.b32.xlu0 %v3457, 120
        %v3488 = vpop.permute.xlu0 %3487
        %3489 = vrot.lane.b32.xlu0 %v3461, 120
        %v3490 = vpop.permute.xlu0 %3489
        %3491 = vrot.lane.b32.xlu0 %v3465, 120
        %v3492 = vpop.permute.xlu0 %3491
        %3493 = vrot.lane.b32.xlu0 %v3469, 120
        %v3494 = vpop.permute.xlu0 %3493
        %3495 = vrot.lane.b32.xlu0 %v3458, 120
        %v3496 = vpop.permute.xlu0 %3495
        %3497 = vrot.lane.b32.xlu0 %v3462, 120
        %v3498 = vpop.permute.xlu0 %3497
        %3499 = vrot.lane.b32.xlu0 %v3466, 120
        %v3500 = vpop.permute.xlu0 %3499
        %3501 = vrot.lane.b32.xlu0 %v3470, 120
        %v3502 = vpop.permute.xlu0 %3501
        %v3503 = vlaneseq
        %v3504 = vand.u32 %v3503, 127
        %vm3505 = vcmp.lt.s32.totalorder %v3504, 120
        %v3506 = vsel %vm3505, %v3488, %v3496
        %v3507 = vsel %vm3505, %v3490, %v3498
        %v3508 = vsel %vm3505, %v3492, %v3500
        %v3509 = vsel %vm3505, %v3494, %v3502
        %v3510 = vsel %vm3505, %v3480, %v3488
        %v3511 = vsel %vm3505, %v3482, %v3490
        %v3512 = vsel %vm3505, %v3484, %v3492
        %v3513 = vsel %vm3505, %v3486, %v3494
        %v3514 = vsel %vm3505, %v3472, %v3480
        %v3515 = vsel %vm3505, %v3474, %v3482
        %v3516 = vsel %vm3505, %v3476, %v3484
        %v3517 = vsel %vm3505, %v3478, %v3486
        %v3518 = vsel %vm3505, %v3496, %v3472
        %v3519 = vsel %vm3505, %v3498, %v3474
        %v3520 = vsel %vm3505, %v3500, %v3476
        %v3521 = vsel %vm3505, %v3502, %v3478
        %v3522 = vmax.f32 %v3455, %v3514
        %v3523 = vmax.f32 %v3456, %v3510
        %v3524 = vmax.f32 %v3457, %v3506
        %v3525 = vmax.f32 %v3458, %v3518
        %v3526 = vmax.f32 %v3459, %v3515
        %v3527 = vmax.f32 %v3460, %v3511
        %v3528 = vmax.f32 %v3461, %v3507
        %v3529 = vmax.f32 %v3462, %v3519
        %v3530 = vmax.f32 %v3463, %v3516
        %v3531 = vmax.f32 %v3464, %v3512
        %v3532 = vmax.f32 %v3465, %v3508
        %v3533 = vmax.f32 %v3466, %v3520
        %v3534 = vmax.f32 %v3467, %v3517
        %v3535 = vmax.f32 %v3468, %v3513
        %v3536 = vmax.f32 %v3469, %v3509
        %v3537 = vmax.f32 %v3470, %v3521
        %3538 = vrot.lane.b32.xlu0 %v3522, 64
        %v3539 = vpop.permute.xlu0 %3538
        %3540 = vrot.lane.b32.xlu0 %v3526, 64
        %v3541 = vpop.permute.xlu0 %3540
        %3542 = vrot.lane.b32.xlu0 %v3530, 64
        %v3543 = vpop.permute.xlu0 %3542
        %3544 = vrot.lane.b32.xlu0 %v3534, 64
        %v3545 = vpop.permute.xlu0 %3544
        %3546 = vrot.lane.b32.xlu0 %v3523, 64
        %v3547 = vpop.permute.xlu0 %3546
        %3548 = vrot.lane.b32.xlu0 %v3527, 64
        %v3549 = vpop.permute.xlu0 %3548
        %3550 = vrot.lane.b32.xlu0 %v3531, 64
        %v3551 = vpop.permute.xlu0 %3550
        %3552 = vrot.lane.b32.xlu0 %v3535, 64
        %v3553 = vpop.permute.xlu0 %3552
        %3554 = vrot.lane.b32.xlu0 %v3524, 64
        %v3555 = vpop.permute.xlu0 %3554
        %3556 = vrot.lane.b32.xlu0 %v3528, 64
        %v3557 = vpop.permute.xlu0 %3556
        %3558 = vrot.lane.b32.xlu0 %v3532, 64
        %v3559 = vpop.permute.xlu0 %3558
        %3560 = vrot.lane.b32.xlu0 %v3536, 64
        %v3561 = vpop.permute.xlu0 %3560
        %3562 = vrot.lane.b32.xlu0 %v3525, 64
        %v3563 = vpop.permute.xlu0 %3562
        %3564 = vrot.lane.b32.xlu0 %v3529, 64
        %v3565 = vpop.permute.xlu0 %3564
        %3566 = vrot.lane.b32.xlu0 %v3533, 64
        %v3567 = vpop.permute.xlu0 %3566
        %3568 = vrot.lane.b32.xlu0 %v3537, 64
        %v3569 = vpop.permute.xlu0 %3568
        %vm3570 = vcmp.lt.s32.totalorder %v3504, 64
        %v3571 = vsel %vm3570, %v3555, %v3563
        %v3572 = vsel %vm3570, %v3557, %v3565
        %v3573 = vsel %vm3570, %v3559, %v3567
        %v3574 = vsel %vm3570, %v3561, %v3569
        %v3575 = vsel %vm3570, %v3547, %v3555
        %v3576 = vsel %vm3570, %v3549, %v3557
        %v3577 = vsel %vm3570, %v3551, %v3559
        %v3578 = vsel %vm3570, %v3553, %v3561
        %v3579 = vsel %vm3570, %v3539, %v3547
        %v3580 = vsel %vm3570, %v3541, %v3549
        %v3581 = vsel %vm3570, %v3543, %v3551
        %v3582 = vsel %vm3570, %v3545, %v3553
        %v3583 = vsel %vm3570, %v3563, %v3539
        %v3584 = vsel %vm3570, %v3565, %v3541
        %v3585 = vsel %vm3570, %v3567, %v3543
        %v3586 = vsel %vm3570, %v3569, %v3545
        %v3587 = vmax.f32 %v3522, %v3579
        %v3588 = vmax.f32 %v3523, %v3575
        %v3589 = vmax.f32 %v3524, %v3571
        %v3590 = vmax.f32 %v3525, %v3583
        %v3591 = vmax.f32 %v3526, %v3580
        %v3592 = vmax.f32 %v3527, %v3576
        %v3593 = vmax.f32 %v3528, %v3572
        %v3594 = vmax.f32 %v3529, %v3584
        %v3595 = vmax.f32 %v3530, %v3581
        %v3596 = vmax.f32 %v3531, %v3577
        %v3597 = vmax.f32 %v3532, %v3573
        %v3598 = vmax.f32 %v3533, %v3585
        %v3599 = vmax.f32 %v3534, %v3582
        %v3600 = vmax.f32 %v3535, %v3578
        %v3601 = vmax.f32 %v3536, %v3574
        %v3602 = vmax.f32 %v3537, %v3586
        %v3603 = vld [vmem:[#allocation12] sm:$0xff]
        %v3604 = vld [vmem:[#allocation12 + $0x8] sm:$0xff]
        %v3605 = vld [vmem:[#allocation12 + $0x10] sm:$0xff]
        %v3606 = vld [vmem:[#allocation12 + $0x18] sm:$0xff]
        %v3607 = vld [vmem:[#allocation12 + $0x20] sm:$0xff]
        %v3608 = vld [vmem:[#allocation12 + $0x28] sm:$0xff]
        %v3609 = vld [vmem:[#allocation12 + $0x30] sm:$0xff]
        %v3610 = vld [vmem:[#allocation12 + $0x38] sm:$0xff]
        %v3611 = vld [vmem:[#allocation12 + $0x40] sm:$0xff]
        %v3612 = vld [vmem:[#allocation12 + $0x48] sm:$0xff]
        %v3613 = vld [vmem:[#allocation12 + $0x50] sm:$0xff]
        %v3614 = vld [vmem:[#allocation12 + $0x58] sm:$0xff]
        %v3615 = vld [vmem:[#allocation12 + $0x60] sm:$0xff]
        %v3616 = vld [vmem:[#allocation12 + $0x68] sm:$0xff]
        %v3617 = vld [vmem:[#allocation12 + $0x70] sm:$0xff]
        %v3618 = vld [vmem:[#allocation12 + $0x78] sm:$0xff]
        %v3619 = vld [vmem:[#allocation12 + $0x80] sm:$0xff]
        %v3620 = vld [vmem:[#allocation12 + $0x88] sm:$0xff]
        %v3621 = vld [vmem:[#allocation12 + $0x90] sm:$0xff]
        %v3622 = vld [vmem:[#allocation12 + $0x98] sm:$0xff]
        %v3623 = vld [vmem:[#allocation12 + $0xa0] sm:$0xff]
        %v3624 = vld [vmem:[#allocation12 + $0xa8] sm:$0xff]
        %v3625 = vld [vmem:[#allocation12 + $0xb0] sm:$0xff]
        %v3626 = vld [vmem:[#allocation12 + $0xb8] sm:$0xff]
        %v3627 = vld [vmem:[#allocation12 + $0xc0] sm:$0xff]
        %v3628 = vld [vmem:[#allocation12 + $0xc8] sm:$0xff]
        %v3629 = vld [vmem:[#allocation12 + $0xd0] sm:$0xff]
        %v3630 = vld [vmem:[#allocation12 + $0xd8] sm:$0xff]
        %v3631 = vld [vmem:[#allocation12 + $0xe0] sm:$0xff]
        %v3632 = vld [vmem:[#allocation12 + $0xe8] sm:$0xff]
        %v3633 = vld [vmem:[#allocation12 + $0xf0] sm:$0xff]
        %v3634 = vld [vmem:[#allocation12 + $0xf8] sm:$0xff]
        %v3635 = vld [vmem:[#allocation12 + $0x100] sm:$0xff]
        %v3636 = vld [vmem:[#allocation12 + $0x108] sm:$0xff]
        %v3637 = vld [vmem:[#allocation12 + $0x110] sm:$0xff]
        %v3638 = vld [vmem:[#allocation12 + $0x118] sm:$0xff]
        %v3639 = vld [vmem:[#allocation12 + $0x120] sm:$0xff]
        %v3640 = vld [vmem:[#allocation12 + $0x128] sm:$0xff]
        %v3641 = vld [vmem:[#allocation12 + $0x130] sm:$0xff]
        %v3642 = vld [vmem:[#allocation12 + $0x138] sm:$0xff]
        %v3643 = vld [vmem:[#allocation12 + $0x140] sm:$0xff]
        %v3644 = vld [vmem:[#allocation12 + $0x148] sm:$0xff]
        %v3645 = vld [vmem:[#allocation12 + $0x150] sm:$0xff]
        %v3646 = vld [vmem:[#allocation12 + $0x158] sm:$0xff]
        %v3647 = vld [vmem:[#allocation12 + $0x160] sm:$0xff]
        %v3648 = vld [vmem:[#allocation12 + $0x168] sm:$0xff]
        %v3649 = vld [vmem:[#allocation12 + $0x170] sm:$0xff]
        %v3650 = vld [vmem:[#allocation12 + $0x178] sm:$0xff]
        %v3651 = vld [vmem:[#allocation12 + $0x180] sm:$0xff]
        %v3652 = vld [vmem:[#allocation12 + $0x188] sm:$0xff]
        %v3653 = vld [vmem:[#allocation12 + $0x190] sm:$0xff]
        %v3654 = vld [vmem:[#allocation12 + $0x198] sm:$0xff]
        %v3655 = vld [vmem:[#allocation12 + $0x1a0] sm:$0xff]
        %v3656 = vld [vmem:[#allocation12 + $0x1a8] sm:$0xff]
        %v3657 = vld [vmem:[#allocation12 + $0x1b0] sm:$0xff]
        %v3658 = vld [vmem:[#allocation12 + $0x1b8] sm:$0xff]
        %v3659 = vld [vmem:[#allocation12 + $0x1c0] sm:$0xff]
        %v3660 = vld [vmem:[#allocation12 + $0x1c8] sm:$0xff]
        %v3661 = vld [vmem:[#allocation12 + $0x1d0] sm:$0xff]
        %v3662 = vld [vmem:[#allocation12 + $0x1d8] sm:$0xff]
        %v3663 = vld [vmem:[#allocation12 + $0x1e0] sm:$0xff]
        %v3664 = vld [vmem:[#allocation12 + $0x1e8] sm:$0xff]
        %v3665 = vld [vmem:[#allocation12 + $0x1f0] sm:$0xff]
        %v3666 = vld [vmem:[#allocation12 + $0x1f8] sm:$0xff]
        %3667 = vmatprep.subr.mxu0 0.0
        %3668 = vmatpush1.msra.mxu0 %v3618
        %3669 = vmatprep.subr.mxu0 0.0
        %3670 = vmatpush1.msra.mxu0 %v3617
        %3671 = vmatprep.subr.mxu0 0.0
        %3672 = vmatpush1.msra.mxu0 %v3616
        %3673 = vmatprep.subr.mxu0 0.0
        %3674 = vmatpush1.msra.mxu0 %v3615
        %3675 = vmatprep.subr.mxu0 0.0
        %3676 = vmatpush1.msra.mxu0 %v3614
        %3677 = vmatprep.subr.mxu0 0.0
        %3678 = vmatpush1.msra.mxu0 %v3613
        %3679 = vmatprep.subr.mxu0 0.0
        %3680 = vmatpush1.msra.mxu0 %v3612
        %3681 = vmatprep.subr.mxu0 0.0
        %3682 = vmatpush1.msra.mxu0 %v3611
        %3683 = vmatprep.subr.mxu0 0.0
        %3684 = vmatpush1.msra.mxu0 %v3610
        %3685 = vmatprep.subr.mxu0 0.0
        %3686 = vmatpush1.msra.mxu0 %v3609
        %3687 = vmatprep.subr.mxu0 0.0
        %3688 = vmatpush1.msra.mxu0 %v3608
        %3689 = vmatprep.subr.mxu0 0.0
        %3690 = vmatpush1.msra.mxu0 %v3607
        %3691 = vmatprep.subr.mxu0 0.0
        %3692 = vmatpush1.msra.mxu0 %v3606
        %3693 = vmatprep.subr.mxu0 0.0
        %3694 = vmatpush1.msra.mxu0 %v3605
        %3695 = vmatprep.subr.mxu0 0.0
        %3696 = vmatpush1.msra.mxu0 %v3604
        %3697 = vmatprep.subr.mxu0 0.0
        %3698 = vmatpush1.msra.mxu0 %v3603
        %3699 = vmatprep.subr.mxu0 0.0
        %3700 = vmatpush2.msra.mxu0 %v3634
        %3701 = vmatprep.subr.mxu0 0.0
        %3702 = vmatpush2.msra.mxu0 %v3633
        %3703 = vmatprep.subr.mxu0 0.0
        %3704 = vmatpush2.msra.mxu0 %v3632
        %3705 = vmatprep.subr.mxu0 0.0
        %3706 = vmatpush2.msra.mxu0 %v3631
        %3707 = vmatprep.subr.mxu0 0.0
        %3708 = vmatpush2.msra.mxu0 %v3630
        %3709 = vmatprep.subr.mxu0 0.0
        %3710 = vmatpush2.msra.mxu0 %v3629
        %3711 = vmatprep.subr.mxu0 0.0
        %3712 = vmatpush2.msra.mxu0 %v3628
        %3713 = vmatprep.subr.mxu0 0.0
        %3714 = vmatpush2.msra.mxu0 %v3627
        %3715 = vmatprep.subr.mxu0 0.0
        %3716 = vmatpush2.msra.mxu0 %v3626
        %3717 = vmatprep.subr.mxu0 0.0
        %3718 = vmatpush2.msra.mxu0 %v3625
        %3719 = vmatprep.subr.mxu0 0.0
        %3720 = vmatpush2.msra.mxu0 %v3624
        %3721 = vmatprep.subr.mxu0 0.0
        %3722 = vmatpush2.msra.mxu0 %v3623
        %3723 = vmatprep.subr.mxu0 0.0
        %3724 = vmatpush2.msra.mxu0 %v3622
        %3725 = vmatprep.subr.mxu0 0.0
        %3726 = vmatpush2.msra.mxu0 %v3621
        %3727 = vmatprep.subr.mxu0 0.0
        %3728 = vmatpush2.msra.mxu0 %v3620
        %3729 = vmatprep.subr.mxu0 0.0
        %3730 = vmatpush2.msra.mxu0 %v3619
        %3731 = vmatprep.mubr.f32.mxu0 %v3588
        %3732 = vmatmul.mubr.f32.gmra.mxu0 %v3587
        %v3733 = vpop.f32.mrf.mxu0
        %v3734 = vadd.f32 0.0, %v3733
        %v3735 = vpop.f32.mrf.mxu0
        %3736 = vmatprep.mubr.f32.mxu0 %v3592
        %3737 = vmatmul.mubr.f32.gmra.mxu0 %v3591
        %v3738 = vpop.f32.mrf.mxu0
        %v3739 = vadd.f32 0.0, %v3738
        %v3740 = vpop.f32.mrf.mxu0
        %3741 = vmatprep.mubr.f32.mxu0 %v3596
        %3742 = vmatmul.mubr.f32.gmra.mxu0 %v3595
        %v3743 = vpop.f32.mrf.mxu0
        %v3744 = vadd.f32 0.0, %v3743
        %v3745 = vpop.f32.mrf.mxu0
        %3746 = vmatprep.mubr.f32.mxu0 %v3600
        %3747 = vmatmul.mubr.f32.gmra.mxu0 %v3599
        %v3748 = vpop.f32.mrf.mxu0
        %v3749 = vadd.f32 0.0, %v3748
        %v3750 = vpop.f32.mrf.mxu0
        %3751 = vdwg.mxu0
        %3752 = vmatprep.subr.mxu0 0.0
        %3753 = vmatpush1.msra.mxu0 %v3650
        %3754 = vmatprep.subr.mxu0 0.0
        %3755 = vmatpush1.msra.mxu0 %v3649
        %3756 = vmatprep.subr.mxu0 0.0
        %3757 = vmatpush1.msra.mxu0 %v3648
        %3758 = vmatprep.subr.mxu0 0.0
        %3759 = vmatpush1.msra.mxu0 %v3647
        %3760 = vmatprep.subr.mxu0 0.0
        %3761 = vmatpush1.msra.mxu0 %v3646
        %3762 = vmatprep.subr.mxu0 0.0
        %3763 = vmatpush1.msra.mxu0 %v3645
        %3764 = vmatprep.subr.mxu0 0.0
        %3765 = vmatpush1.msra.mxu0 %v3644
        %3766 = vmatprep.subr.mxu0 0.0
        %3767 = vmatpush1.msra.mxu0 %v3643
        %3768 = vmatprep.subr.mxu0 0.0
        %3769 = vmatpush1.msra.mxu0 %v3642
        %3770 = vmatprep.subr.mxu0 0.0
        %3771 = vmatpush1.msra.mxu0 %v3641
        %3772 = vmatprep.subr.mxu0 0.0
        %3773 = vmatpush1.msra.mxu0 %v3640
        %3774 = vmatprep.subr.mxu0 0.0
        %3775 = vmatpush1.msra.mxu0 %v3639
        %3776 = vmatprep.subr.mxu0 0.0
        %3777 = vmatpush1.msra.mxu0 %v3638
        %3778 = vmatprep.subr.mxu0 0.0
        %3779 = vmatpush1.msra.mxu0 %v3637
        %3780 = vmatprep.subr.mxu0 0.0
        %3781 = vmatpush1.msra.mxu0 %v3636
        %3782 = vmatprep.subr.mxu0 0.0
        %3783 = vmatpush1.msra.mxu0 %v3635
        %3784 = vmatprep.subr.mxu0 0.0
        %3785 = vmatpush2.msra.mxu0 %v3666
        %3786 = vmatprep.subr.mxu0 0.0
        %3787 = vmatpush2.msra.mxu0 %v3665
        %3788 = vmatprep.subr.mxu0 0.0
        %3789 = vmatpush2.msra.mxu0 %v3664
        %3790 = vmatprep.subr.mxu0 0.0
        %3791 = vmatpush2.msra.mxu0 %v3663
        %3792 = vmatprep.subr.mxu0 0.0
        %3793 = vmatpush2.msra.mxu0 %v3662
        %3794 = vmatprep.subr.mxu0 0.0
        %3795 = vmatpush2.msra.mxu0 %v3661
        %3796 = vmatprep.subr.mxu0 0.0
        %3797 = vmatpush2.msra.mxu0 %v3660
        %3798 = vmatprep.subr.mxu0 0.0
        %3799 = vmatpush2.msra.mxu0 %v3659
        %3800 = vmatprep.subr.mxu0 0.0
        %3801 = vmatpush2.msra.mxu0 %v3658
        %3802 = vmatprep.subr.mxu0 0.0
        %3803 = vmatpush2.msra.mxu0 %v3657
        %3804 = vmatprep.subr.mxu0 0.0
        %3805 = vmatpush2.msra.mxu0 %v3656
        %3806 = vmatprep.subr.mxu0 0.0
        %3807 = vmatpush2.msra.mxu0 %v3655
        %3808 = vmatprep.subr.mxu0 0.0
        %3809 = vmatpush2.msra.mxu0 %v3654
        %3810 = vmatprep.subr.mxu0 0.0
        %3811 = vmatpush2.msra.mxu0 %v3653
        %3812 = vmatprep.subr.mxu0 0.0
        %3813 = vmatpush2.msra.mxu0 %v3652
        %3814 = vmatprep.subr.mxu0 0.0
        %3815 = vmatpush2.msra.mxu0 %v3651
        %3816 = vmatprep.mubr.f32.mxu0 %v3590
        %3817 = vmatmul.mubr.f32.gmra.mxu0 %v3589
        %v3818 = vpop.f32.mrf.mxu0
        %v3819 = vadd.f32 %v3734, %v3818
        %v3820 = vpop.f32.mrf.mxu0
        %3821 = vmatprep.mubr.f32.mxu0 %v3594
        %3822 = vmatmul.mubr.f32.gmra.mxu0 %v3593
        %v3823 = vpop.f32.mrf.mxu0
        %v3824 = vadd.f32 %v3739, %v3823
        %v3825 = vpop.f32.mrf.mxu0
        %3826 = vmatprep.mubr.f32.mxu0 %v3598
        %3827 = vmatmul.mubr.f32.gmra.mxu0 %v3597
        %v3828 = vpop.f32.mrf.mxu0
        %v3829 = vadd.f32 %v3744, %v3828
        %v3830 = vpop.f32.mrf.mxu0
        %3831 = vmatprep.mubr.f32.mxu0 %v3602
        %3832 = vmatmul.mubr.f32.gmra.mxu0 %v3601
        %v3833 = vpop.f32.mrf.mxu0
        %v3834 = vadd.f32 %v3749, %v3833
        %v3835 = vpop.f32.mrf.mxu0
        %3836 = vdwg.mxu0
        %3837 = vst [vmem:[#allocation2] sm:$0xff] %v3819
        %3838 = vst [vmem:[#allocation2 + $0x8] sm:$0xff] %v3824
        %3839 = vst [vmem:[#allocation2 + $0x10] sm:$0xff] %v3829
        %3840 = vst [vmem:[#allocation2 + $0x18] sm:$0xff] %v3834
        %v3841 = vld [vmem:[#allocation2] ss:$2 sm:$0xff]
        %s3842 = scalar_lea.vmem [#allocation2], 16
        %v3843 = vld [vmem:[%s3842] ss:$2 sm:$0xff]
        %s3844 = scalar_lea.vmem [#allocation2], 1
        %v3845 = vld [vmem:[%s3844] ss:$2 sm:$0xff]
        %s3846 = scalar_lea.vmem [#allocation2], 17
        %v3847 = vld [vmem:[%s3846] ss:$2 sm:$0xff]
        %v3848 = vmax.f32 %v3841, %v3845
        %v3849 = vmax.f32 %v3843, %v3847
        %3850 = vst [vmem:[%s339] sm:$0xff] %v3848
        %3851 = vst [vmem:[%s339 + $0x8] sm:$0xff] %v3849
        %s3852 = sand.u32 %s165, 1
        %s3853 = scalar_lea.sflag [#allocation5], %s3852
        %s3854 = sand.u32 %s165, 1
        %s3855 = smul.addr %s3854, 16
        %s3856 = scalar_lea.vmem [#allocation14], %s3855
        // Predicated region
        $region69: #{tpu_custom_call.1} parent=43 // pred_check
          %p3857 = pneg %p175
        $region70: #{tpu_custom_call.1} parent=43 // pred_check_branch
          %3859 = sbr.rel (%p3857) target = $region72
        $region71: #{tpu_custom_call.1} parent=43 // pred_region
          %s3860 = smul.u32 2, %s26
          %s3862 = ssub.s32 256, 256
          %3863 = vsyncadd %s3853, %s3862
          %s3864 = smul.addr %s3860, 128
          %s3865 = scalar_lea.hbm %s6, %s3864
          %s3866 = sshll.u32 %s3856, 4
          %s3867 = int_to_ptr.vmem [resolvable:$true] %s3866
          %3872 = dma.vmem_to_hbm [thread:$0]  %s3867, 256, %s3865, %s3853, 128, 128, 8
        $region72: #{tpu_custom_call.1} parent=43 // pred_fallthru
          _
      $region44: #{tpu_custom_call.1} parent=5 // pred_fallthru
        _
      %p3873 = scmp.le.s32.totalorder 2, %s21
      // Predicated region
      $region73: #{tpu_custom_call.1} parent=5 // pred_check
        %p3874 = pneg %p3873
      $region74: #{tpu_custom_call.1} parent=5 // pred_check_branch
        %3876 = sbr.rel (%p3874) target = $region76
      $region75: #{tpu_custom_call.1} parent=5 // pred_region
        %s3877 = ssub.s32 %s21, 2
        // Predicated region
        $region77: #{tpu_custom_call.1} parent=75 // pred_check
          %p3878 = pneg %p181
        $region78: #{tpu_custom_call.1} parent=75 // pred_check_branch
          %3880 = sbr.rel (%p3878) target = $region80
        $region79: #{tpu_custom_call.1} parent=75 // pred_region
          %s3881 = sand.u32 %s166, 1
          %s3882 = scalar_lea.sflag [#allocation5], %s3881
          %s3883 = sand.u32 %s166, 1
          %s3884 = smul.addr %s3883, 16
          %s3885 = scalar_lea.vmem [#allocation14], %s3884
          %3886 = dma.done %s3882, 256
        $region80: #{tpu_custom_call.1} parent=75 // pred_fallthru
          _
      $region76: #{tpu_custom_call.1} parent=5 // pred_fallthru
        _
    $region6: #{tpu_custom_call.1} parent=1 // loop_footer
      %s25 = sadd.s32 1, %s21
    $region7: #{tpu_custom_call.1} parent=1 // loop_footer_branch
      %20 = sbr.rel target = $region3
    $region8: #{tpu_custom_call.1} parent=1 // loop_exit
      _
    %3887 = vsyncpa [#allocation4], 1
    %s3888 = scalar_lea.sflag [#allocation4], 1
    %3889 = vsyncpa %s3888, 1
    %3890 = vsyncpa [#allocation7], 1
    %3891 = vsyncpa [#allocation10], 1
    %3892 = vsyncpa [#allocation13], 1
    %3893 = vsyncpa [#allocation5], 1
    %s3894 = scalar_lea.sflag [#allocation5], 1
    %3895 = vsyncpa %s3894, 1

</llo_original>
